<compile_context>
chip_gen: v5e
topology: v5e:2x2
jax: 0.10.0
libtpu: 0.0.40
codegen_flags: <defaults>
</compile_context>

<pallas_src>
import functools

import jax
import jax.numpy as jnp
import numpy as np
from jax.experimental import pallas as pl
from jax.experimental.pallas import tpu as pltpu

VMEM_LIMIT = 32 * 1024 * 1024   # well above actual use; fits v5e/v6e/v7x budgets


def _round_up(x, m):
    return (x + m - 1) // m * m


def _pool2x2(a, h, w, c):
    """2x2/stride-2 max pool.  `a`: (h*w, c) f32, rows in (h, w) order.

    Vectorized epilogue: one reshape+max per spatial axis (no per-pair Python
    loop, no per-pair stores).  Returns (h//2, w//2, c) f32.
    """
    a = a.reshape(h, w // 2, 2, c)
    a = jnp.max(a, axis=2)                     # pool along W  (-2 axis reduce)
    a = a.reshape(h // 2, 2, w // 2, c)
    return jnp.maximum(a[:, 0], a[:, 1])       # pool along H  (plane max)


def _policy_net_kernel(x_ref, w1_ref, b1_ref, w2_ref, b2_ref, w3_ref, b3_ref,
                       wf1_ref, bf1_ref, wf2_ref, bf2_ref, o_ref,
                       pad2_ref, pad3_ref, *, cin_p, hid, ho1, wo1):
    """Full PolicyNet forward for one batch element (grid axis = batch)."""
    c1, c2, c3 = hid, 2 * hid, 4 * hid

    # ---- conv1: k=5, s=2, p=2 over the space-to-depth input, + bias/ReLU/pool.
    # x_ref holds the s2d repack: xs[qh, qw, (rh*2+rw)*cin_p + ci]
    #   == x_padded[2*qh + rh, 2*qw + rw, ci],
    # so tap (ih, iw) is the contiguous slice starting at (ih//2, iw//2) inside
    # the phase (ih%2, iw%2) channel slab -- no strided reads, no im2col copy.
    xs = x_ref[0]                                          # (ho1+2, wo1+2, 4*cin_p)
    acc = jnp.zeros((ho1 * wo1, c1), jnp.float32)
    for ih in range(5):
        for iw in range(5):
            oh, rh = divmod(ih, 2)
            ow, rw = divmod(iw, 2)
            pc = (rh * 2 + rw) * cin_p
            blk = xs[oh:oh + ho1, ow:ow + wo1, pc:pc + cin_p]
            acc += jnp.dot(blk.reshape(ho1 * wo1, cin_p),
                           w1_ref[ih * 5 + iw],
                           preferred_element_type=jnp.float32)
    a = _pool2x2(jnp.maximum(acc + b1_ref[...], 0.0), ho1, wo1, c1)

    # ---- conv2: k=3, s=1, p=1.  Zero-pad in a tiny VMEM scratch, 9 tap matmuls.
    s1h, s1w = ho1 // 2, wo1 // 2
    pad2_ref[...] = jnp.zeros_like(pad2_ref)
    pad2_ref[1:1 + s1h, 1:1 + s1w, :] = a
    acc = jnp.zeros((s1h * s1w, c2), jnp.float32)
    for ih in range(3):
        for iw in range(3):
            blk = pad2_ref[ih:ih + s1h, iw:iw + s1w, :]
            acc += jnp.dot(blk.reshape(s1h * s1w, c1),
                           w2_ref[ih * 3 + iw],
                           preferred_element_type=jnp.float32)
    a = _pool2x2(jnp.maximum(acc + b2_ref[...], 0.0), s1h, s1w, c2)

    # ---- conv3: k=3, s=1, p=1.
    s2h, s2w = s1h // 2, s1w // 2
    pad3_ref[...] = jnp.zeros_like(pad3_ref)
    pad3_ref[1:1 + s2h, 1:1 + s2w, :] = a
    acc = jnp.zeros((s2h * s2w, c3), jnp.float32)
    for ih in range(3):
        for iw in range(3):
            blk = pad3_ref[ih:ih + s2h, iw:iw + s2w, :]
            acc += jnp.dot(blk.reshape(s2h * s2w, c2),
                           w3_ref[ih * 3 + iw],
                           preferred_element_type=jnp.float32)
    a = _pool2x2(jnp.maximum(acc + b3_ref[...], 0.0), s2h, s2w, c3)   # (s3h, s3w, c3)

    # ---- FC head: fc1 + ReLU + (eval) Dropout + fc2 -- hidden never leaves VMEM.
    # fc1's weight is pre-arranged as (s3h*s3w, c3, 512) slabs in (h, w) order,
    # so the real (un-padded) NHWC flatten is consumed with no transpose and no
    # zero-row K work.
    s3h, s3w = s2h // 2, s2w // 2
    hidden = bf1_ref[...]                                  # (1, 512) bias
    for i in range(s3h * s3w):
        yy, xx = divmod(i, s3w)
        row = a[yy, xx:xx + 1, :]                          # (1, c3)
        hidden = hidden + jnp.dot(row, wf1_ref[i],
                                  preferred_element_type=jnp.float32)
    hidden = jnp.maximum(hidden, 0.0)
    # TODO(synk): nn.Dropout(0.5) is identity in eval mode; training-mode
    #             stochastic masking (pltpu.prng_seed / prng_random_bits) is
    #             not implemented.
    y = jnp.dot(hidden, wf2_ref[...],
                preferred_element_type=jnp.float32) + bf2_ref[...]
    o_ref[0] = y


# ---------------------------------------------------------------------------
# Wrapper: one pallas_call for the whole network, grid over the batch.
# ---------------------------------------------------------------------------
def policy_net_forward(x_nchw, p, *, hidden_size, output_size):
    n, c, h, w = x_nchw.shape
    assert h % 2 == 0 and w % 2 == 0
    cin_p = _round_up(c, 8)
    ho1 = (h + 2 * 2 - 5) // 2 + 1
    wo1 = (w + 2 * 2 - 5) // 2 + 1
    assert ho1 % 8 == 0 and wo1 % 8 == 0, "three exact 2x2 pools need /8 conv1 output"
    c1, c2, c3 = hidden_size, hidden_size * 2, hidden_size * 4
    s3h, s3w = ho1 // 8, wo1 // 8

    # NCHW -> NHWC, conv1 zero-padding (p=2), input channels padded to a
    # sublane multiple, then space-to-depth by the conv1 stride (2) so every
    # in-kernel tap read is a contiguous slice (no kh*kw im2col duplication).
    x = jnp.transpose(x_nchw, (0, 2, 3, 1)).astype(jnp.float32)
    x = jnp.pad(x, ((0, 0), (2, 2), (2, 2), (0, cin_p - c)))
    hp2, wp2 = (h + 4) // 2, (w + 4) // 2                  # == ho1 + 2, wo1 + 2
    xs2d = (x.reshape(n, hp2, 2, wp2, 2, cin_p)
             .transpose(0, 1, 3, 2, 4, 5)
             .reshape(n, hp2, wp2, 4 * cin_p))

    kernel = functools.partial(_policy_net_kernel, cin_p=cin_p, hid=hidden_size,
                               ho1=ho1, wo1=wo1)
    out = pl.pallas_call(
        kernel,
        out_shape=jax.ShapeDtypeStruct((n, 1, output_size), jnp.float32),
        grid_spec=pltpu.PrefetchScalarGridSpec(
            num_scalar_prefetch=0,
            grid=(n,),                                     # >=2 parallel tiles (v7x)
            in_specs=[
                pl.BlockSpec((1, hp2, wp2, 4 * cin_p), lambda b: (b, 0, 0, 0)),
                pl.BlockSpec((25, cin_p, c1), lambda b: (0, 0, 0)),
                pl.BlockSpec((1, c1), lambda b: (0, 0)),
                pl.BlockSpec((9, c1, c2), lambda b: (0, 0, 0)),
                pl.BlockSpec((1, c2), lambda b: (0, 0)),
                pl.BlockSpec((9, c2, c3), lambda b: (0, 0, 0)),
                pl.BlockSpec((1, c3), lambda b: (0, 0)),
                pl.BlockSpec((s3h * s3w, c3, 512), lambda b: (0, 0, 0)),
                pl.BlockSpec((1, 512), lambda b: (0, 0)),
                pl.BlockSpec((512, output_size), lambda b: (0, 0)),
                pl.BlockSpec((1, output_size), lambda b: (0, 0)),
            ],
            out_specs=pl.BlockSpec((1, 1, output_size), lambda b: (b, 0, 0)),
            scratch_shapes=[
                pltpu.VMEM((ho1 // 2 + 2, wo1 // 2 + 2, c1), jnp.float32),  # conv2 pad
                pltpu.VMEM((ho1 // 4 + 2, wo1 // 4 + 2, c2), jnp.float32),  # conv3 pad
            ],
        ),
        compiler_params=pltpu.CompilerParams(
            dimension_semantics=("parallel",),
            vmem_limit_bytes=VMEM_LIMIT,
        ),
    )(xs2d, p["c1_w"], p["c1_b"], p["c2_w"], p["c2_b"], p["c3_w"], p["c3_b"],
      p["fc1_w"], p["fc1_b"], p["fc2_w"], p["fc2_b"])
    return out.reshape(n, output_size)


# ---------------------------------------------------------------------------
# Parameters (PyTorch shapes) and one-time host-side prep into kernel layouts.
# ---------------------------------------------------------------------------
def conv_stack_out_hw(h, w):
    h = (h + 2 * 2 - 5) // 2 + 1          # conv1: k=5, s=2, p=2
    w = (w + 2 * 2 - 5) // 2 + 1
    h, w = h // 2, w // 2                 # pool1
    h, w = h // 2, w // 2                 # conv2 'same'; pool2
    h, w = h // 2, w // 2                 # conv3 'same'; pool3
    return h, w


def init_torch_params(key, input_size, output_size, hidden_size, h, w):
    """Deterministic synthetic parameters with the exact PyTorch shapes."""
    ks = jax.random.split(key, 10)

    def rnd(k, shape, fan_in):
        return jax.random.normal(k, shape, jnp.float32) / jnp.sqrt(fan_in)

    h3, w3 = conv_stack_out_hw(h, w)
    fc_in = hidden_size * 4 * h3 * w3
    return {
        "conv1.weight": rnd(ks[0], (hidden_size, input_size, 5, 5), input_size * 25),
        "conv1.bias": rnd(ks[1], (hidden_size,), input_size * 25),
        "conv2.weight": rnd(ks[2], (hidden_size * 2, hidden_size, 3, 3), hidden_size * 9),
        "conv2.bias": rnd(ks[3], (hidden_size * 2,), hidden_size * 9),
        "conv3.weight": rnd(ks[4], (hidden_size * 4, hidden_size * 2, 3, 3), hidden_size * 18),
        "conv3.bias": rnd(ks[5], (hidden_size * 4,), hidden_size * 18),
        "fc1.weight": rnd(ks[6], (512, fc_in), fc_in),
        "fc1.bias": rnd(ks[7], (512,), fc_in),
        "fc2.weight": rnd(ks[8], (output_size, 512), 512),
        "fc2.bias": rnd(ks[9], (output_size,), 512),
    }


def prepare_params(tp, *, input_size, hidden_size, h, w):
    """One-time prep: transpose / (tiny) pad / cast into kernel-friendly layouts."""
    cin_p = _round_up(input_size, 8)

    def prep_conv(wname, bname, k, cin, cin_pad):
        wt = tp[wname]                                     # (cout, cin, k, k)
        cout = wt.shape[0]
        wm = jnp.transpose(wt, (2, 3, 1, 0))               # (k, k, cin, cout)
        wm = jnp.pad(wm, ((0, 0), (0, 0), (0, cin_pad - cin), (0, 0)))
        wm = wm.reshape(k * k, cin_pad, cout).astype(jnp.float32)
        bb = tp[bname].astype(jnp.float32).reshape(1, cout)
        return wm, bb

    p = {}
    p["c1_w"], p["c1_b"] = prep_conv("conv1.weight", "conv1.bias", 5, input_size, cin_p)
    p["c2_w"], p["c2_b"] = prep_conv("conv2.weight", "conv2.bias", 3,
                                     hidden_size, hidden_size)
    p["c3_w"], p["c3_b"] = prep_conv("conv3.weight", "conv3.bias", 3,
                                     hidden_size * 2, hidden_size * 2)

    # fc1: torch flattens NCHW (c, h, w); re-arrange once into (h*w, c, 512)
    # slabs so the kernel consumes conv3's (un-padded) NHWC flatten with no
    # transpose and no zero-row K work.
    h3, w3 = conv_stack_out_hw(h, w)
    c3 = hidden_size * 4
    wf1 = tp["fc1.weight"].reshape(512, c3, h3, w3)
    wf1 = jnp.transpose(wf1, (2, 3, 1, 0)).reshape(h3 * w3, c3, 512)
    p["fc1_w"] = wf1.astype(jnp.float32)
    p["fc1_b"] = tp["fc1.bias"].astype(jnp.float32).reshape(1, 512)
    p["fc2_w"] = jnp.transpose(tp["fc2.weight"]).astype(jnp.float32)     # (512, out)
    p["fc2_b"] = tp["fc2.bias"].astype(jnp.float32).reshape(1, -1)
    return p


# ---------------------------------------------------------------------------
# Pure-JAX reference (for correctness checking against the PyTorch semantics).
# ---------------------------------------------------------------------------
def policy_net_reference(x_nchw, tp):
    x = x_nchw.astype(jnp.float32)

    def conv(x, wname, bname, stride, pad):
        y = jax.lax.conv_general_dilated(
            x, tp[wname], window_strides=(stride, stride),
            padding=[(pad, pad), (pad, pad)],
            dimension_numbers=("NCHW", "OIHW", "NCHW"))
        return jax.nn.relu(y + tp[bname].reshape(1, -1, 1, 1))

    def pool(x):
        return jax.lax.reduce_window(x, -jnp.inf, jax.lax.max,
                                     (1, 1, 2, 2), (1, 1, 2, 2), "VALID")

    x = pool(conv(x, "conv1.weight", "conv1.bias", 2, 2))
    x = pool(conv(x, "conv2.weight", "conv2.bias", 1, 1))
    x = pool(conv(x, "conv3.weight", "conv3.bias", 1, 1))
    x = x.reshape(x.shape[0], -1)
    x = jax.nn.relu(x @ tp["fc1.weight"].T + tp["fc1.bias"])
    return x @ tp["fc2.weight"].T + tp["fc2.bias"]


if __name__ == "__main__":
    key = jax.random.PRNGKey(0)
    k_x, k_p = jax.random.split(key)

    # Small shapes: batch=2, channels=3, 32x32 spatial, hidden=8, 6 outputs.
    B, C, H, W = 2, 3, 32, 32
    hidden, out_size = 8, 6

    x = jax.random.normal(k_x, (B, C, H, W), jnp.float32)
    torch_params = init_torch_params(k_p, C, out_size, hidden, H, W)
    kparams = prepare_params(torch_params, input_size=C, hidden_size=hidden, h=H, w=W)

    fwd = jax.jit(functools.partial(policy_net_forward,
                                    hidden_size=hidden, output_size=out_size))
    y = jax.block_until_ready(fwd(x, kparams))
    assert y.shape == (B, out_size), y.shape

    y_ref = jax.block_until_ready(policy_net_reference(x, torch_params))
    np.testing.assert_allclose(np.asarray(y), np.asarray(y_ref), rtol=5e-2, atol=5e-2)
    print("KERNEL_OK")
</pallas_src>

<mosaic_0001>
module attributes {stable_mosaic.version = 11 : i64} {
  func.func @_policy_net_kernel(%arg0: i32, %arg1: memref<1x18x18x32xf32, #tpu.memory_space<vmem>>, %arg2: memref<25x8x8xf32, #tpu.memory_space<vmem>>, %arg3: memref<1x8xf32, #tpu.memory_space<vmem>>, %arg4: memref<9x8x16xf32, #tpu.memory_space<vmem>>, %arg5: memref<1x16xf32, #tpu.memory_space<vmem>>, %arg6: memref<9x16x32xf32, #tpu.memory_space<vmem>>, %arg7: memref<1x32xf32, #tpu.memory_space<vmem>>, %arg8: memref<4x32x512xf32, #tpu.memory_space<vmem>>, %arg9: memref<1x512xf32, #tpu.memory_space<vmem>>, %arg10: memref<512x6xf32, #tpu.memory_space<vmem>>, %arg11: memref<1x6xf32, #tpu.memory_space<vmem>>, %arg12: memref<1x1x6xf32, #tpu.memory_space<vmem>>, %arg13: memref<10x10x8xf32, #tpu.memory_space<vmem>>, %arg14: memref<6x6x16xf32, #tpu.memory_space<vmem>>) attributes {dimension_semantics = [#tpu.dimension_semantics<parallel>], iteration_bounds = array<i64: 2>, scalar_prefetch = 0 : i64, scratch_operands = 2 : i64, tpu.core_type = #tpu.core_type<tc>, window_params = [{transform_indices = @transform_0, window_bounds = array<i64: 1, 18, 18, 32>}, {pipeline_mode = #tpu.pipeline_mode<synchronous>, transform_indices = @transform_1, window_bounds = array<i64: 25, 8, 8>}, {pipeline_mode = #tpu.pipeline_mode<synchronous>, transform_indices = @transform_2, window_bounds = array<i64: 1, 8>}, {pipeline_mode = #tpu.pipeline_mode<synchronous>, transform_indices = @transform_3, window_bounds = array<i64: 9, 8, 16>}, {pipeline_mode = #tpu.pipeline_mode<synchronous>, transform_indices = @transform_4, window_bounds = array<i64: 1, 16>}, {pipeline_mode = #tpu.pipeline_mode<synchronous>, transform_indices = @transform_5, window_bounds = array<i64: 9, 16, 32>}, {pipeline_mode = #tpu.pipeline_mode<synchronous>, transform_indices = @transform_6, window_bounds = array<i64: 1, 32>}, {pipeline_mode = #tpu.pipeline_mode<synchronous>, transform_indices = @transform_7, window_bounds = array<i64: 4, 32, 512>}, {pipeline_mode = #tpu.pipeline_mode<synchronous>, transform_indices = @transform_8, window_bounds = array<i64: 1, 512>}, {pipeline_mode = #tpu.pipeline_mode<synchronous>, transform_indices = @transform_9, window_bounds = array<i64: 512, 6>}, {pipeline_mode = #tpu.pipeline_mode<synchronous>, transform_indices = @transform_10, window_bounds = array<i64: 1, 6>}, {transform_indices = @transform_11, window_bounds = array<i64: 1, 1, 6>}]} {
    %c0 = arith.constant 0 : index
    %c0_0 = arith.constant 0 : index
    %c0_1 = arith.constant 0 : index
    %c0_2 = arith.constant 0 : index
    %0 = vector.load %arg1[%c0, %c0_0, %c0_1, %c0_2] : memref<1x18x18x32xf32, #tpu.memory_space<vmem>>, vector<1x18x18x32xf32>
    %1 = vector.shape_cast %0 : vector<1x18x18x32xf32> to vector<18x18x32xf32>
    %cst = arith.constant 0.000000e+00 : f32
    %2 = vector.broadcast %cst : f32 to vector<256x8xf32>
    %3 = vector.extract_strided_slice %1 {offsets = [0, 0, 0], sizes = [16, 16, 8], strides = [1, 1, 1]} : vector<18x18x32xf32> to vector<16x16x8xf32>
    %4 = vector.shape_cast %3 : vector<16x16x8xf32> to vector<256x8xf32>
    %c0_3 = arith.constant 0 : index
    %c0_4 = arith.constant 0 : index
    %c0_5 = arith.constant 0 : index
    %5 = vector.load %arg2[%c0_3, %c0_4, %c0_5] : memref<25x8x8xf32, #tpu.memory_space<vmem>>, vector<1x8x8xf32>
    %6 = vector.shape_cast %5 : vector<1x8x8xf32> to vector<8x8xf32>
    %cst_6 = arith.constant dense<0.000000e+00> : vector<256x8xf32>
    %7 = tpu.matmul %4, %6, %cst_6 {dimension_numbers = #tpu.dot_dimension_numbers<[1], [0], [0], [1], [0, 0, 1, 1], [], []>} : vector<256x8xf32>, vector<8x8xf32>, vector<256x8xf32> -> vector<256x8xf32>
    %8 = arith.addf %2, %7 : vector<256x8xf32>
    %9 = vector.extract_strided_slice %1 {offsets = [0, 0, 8], sizes = [16, 16, 8], strides = [1, 1, 1]} : vector<18x18x32xf32> to vector<16x16x8xf32>
    %10 = vector.shape_cast %9 : vector<16x16x8xf32> to vector<256x8xf32>
    %c1 = arith.constant 1 : index
    %c0_7 = arith.constant 0 : index
    %c0_8 = arith.constant 0 : index
    %11 = vector.load %arg2[%c1, %c0_7, %c0_8] : memref<25x8x8xf32, #tpu.memory_space<vmem>>, vector<1x8x8xf32>
    %12 = vector.shape_cast %11 : vector<1x8x8xf32> to vector<8x8xf32>
    %cst_9 = arith.constant dense<0.000000e+00> : vector<256x8xf32>
    %13 = tpu.matmul %10, %12, %cst_9 {dimension_numbers = #tpu.dot_dimension_numbers<[1], [0], [0], [1], [0, 0, 1, 1], [], []>} : vector<256x8xf32>, vector<8x8xf32>, vector<256x8xf32> -> vector<256x8xf32>
    %14 = arith.addf %8, %13 : vector<256x8xf32>
    %15 = vector.extract_strided_slice %1 {offsets = [0, 1, 0], sizes = [16, 16, 8], strides = [1, 1, 1]} : vector<18x18x32xf32> to vector<16x16x8xf32>
    %16 = vector.shape_cast %15 : vector<16x16x8xf32> to vector<256x8xf32>
    %c2 = arith.constant 2 : index
    %c0_10 = arith.constant 0 : index
    %c0_11 = arith.constant 0 : index
    %17 = vector.load %arg2[%c2, %c0_10, %c0_11] : memref<25x8x8xf32, #tpu.memory_space<vmem>>, vector<1x8x8xf32>
    %18 = vector.shape_cast %17 : vector<1x8x8xf32> to vector<8x8xf32>
    %cst_12 = arith.constant dense<0.000000e+00> : vector<256x8xf32>
    %19 = tpu.matmul %16, %18, %cst_12 {dimension_numbers = #tpu.dot_dimension_numbers<[1], [0], [0], [1], [0, 0, 1, 1], [], []>} : vector<256x8xf32>, vector<8x8xf32>, vector<256x8xf32> -> vector<256x8xf32>
    %20 = arith.addf %14, %19 : vector<256x8xf32>
    %21 = vector.extract_strided_slice %1 {offsets = [0, 1, 8], sizes = [16, 16, 8], strides = [1, 1, 1]} : vector<18x18x32xf32> to vector<16x16x8xf32>
    %22 = vector.shape_cast %21 : vector<16x16x8xf32> to vector<256x8xf32>
    %c3 = arith.constant 3 : index
    %c0_13 = arith.constant 0 : index
    %c0_14 = arith.constant 0 : index
    %23 = vector.load %arg2[%c3, %c0_13, %c0_14] : memref<25x8x8xf32, #tpu.memory_space<vmem>>, vector<1x8x8xf32>
    %24 = vector.shape_cast %23 : vector<1x8x8xf32> to vector<8x8xf32>
    %cst_15 = arith.constant dense<0.000000e+00> : vector<256x8xf32>
    %25 = tpu.matmul %22, %24, %cst_15 {dimension_numbers = #tpu.dot_dimension_numbers<[1], [0], [0], [1], [0, 0, 1, 1], [], []>} : vector<256x8xf32>, vector<8x8xf32>, vector<256x8xf32> -> vector<256x8xf32>
    %26 = arith.addf %20, %25 : vector<256x8xf32>
    %27 = vector.extract_strided_slice %1 {offsets = [0, 2, 0], sizes = [16, 16, 8], strides = [1, 1, 1]} : vector<18x18x32xf32> to vector<16x16x8xf32>
    %28 = vector.shape_cast %27 : vector<16x16x8xf32> to vector<256x8xf32>
    %c4 = arith.constant 4 : index
    %c0_16 = arith.constant 0 : index
    %c0_17 = arith.constant 0 : index
    %29 = vector.load %arg2[%c4, %c0_16, %c0_17] : memref<25x8x8xf32, #tpu.memory_space<vmem>>, vector<1x8x8xf32>
    %30 = vector.shape_cast %29 : vector<1x8x8xf32> to vector<8x8xf32>
    %cst_18 = arith.constant dense<0.000000e+00> : vector<256x8xf32>
    %31 = tpu.matmul %28, %30, %cst_18 {dimension_numbers = #tpu.dot_dimension_numbers<[1], [0], [0], [1], [0, 0, 1, 1], [], []>} : vector<256x8xf32>, vector<8x8xf32>, vector<256x8xf32> -> vector<256x8xf32>
    %32 = arith.addf %26, %31 : vector<256x8xf32>
    %33 = vector.extract_strided_slice %1 {offsets = [0, 0, 16], sizes = [16, 16, 8], strides = [1, 1, 1]} : vector<18x18x32xf32> to vector<16x16x8xf32>
    %34 = vector.shape_cast %33 : vector<16x16x8xf32> to vector<256x8xf32>
    %c5 = arith.constant 5 : index
    %c0_19 = arith.constant 0 : index
    %c0_20 = arith.constant 0 : index
    %35 = vector.load %arg2[%c5, %c0_19, %c0_20] : memref<25x8x8xf32, #tpu.memory_space<vmem>>, vector<1x8x8xf32>
    %36 = vector.shape_cast %35 : vector<1x8x8xf32> to vector<8x8xf32>
    %cst_21 = arith.constant dense<0.000000e+00> : vector<256x8xf32>
    %37 = tpu.matmul %34, %36, %cst_21 {dimension_numbers = #tpu.dot_dimension_numbers<[1], [0], [0], [1], [0, 0, 1, 1], [], []>} : vector<256x8xf32>, vector<8x8xf32>, vector<256x8xf32> -> vector<256x8xf32>
    %38 = arith.addf %32, %37 : vector<256x8xf32>
    %39 = vector.extract_strided_slice %1 {offsets = [0, 0, 24], sizes = [16, 16, 8], strides = [1, 1, 1]} : vector<18x18x32xf32> to vector<16x16x8xf32>
    %40 = vector.shape_cast %39 : vector<16x16x8xf32> to vector<256x8xf32>
    %c6 = arith.constant 6 : index
    %c0_22 = arith.constant 0 : index
    %c0_23 = arith.constant 0 : index
    %41 = vector.load %arg2[%c6, %c0_22, %c0_23] : memref<25x8x8xf32, #tpu.memory_space<vmem>>, vector<1x8x8xf32>
    %42 = vector.shape_cast %41 : vector<1x8x8xf32> to vector<8x8xf32>
    %cst_24 = arith.constant dense<0.000000e+00> : vector<256x8xf32>
    %43 = tpu.matmul %40, %42, %cst_24 {dimension_numbers = #tpu.dot_dimension_numbers<[1], [0], [0], [1], [0, 0, 1, 1], [], []>} : vector<256x8xf32>, vector<8x8xf32>, vector<256x8xf32> -> vector<256x8xf32>
    %44 = arith.addf %38, %43 : vector<256x8xf32>
    %45 = vector.extract_strided_slice %1 {offsets = [0, 1, 16], sizes = [16, 16, 8], strides = [1, 1, 1]} : vector<18x18x32xf32> to vector<16x16x8xf32>
    %46 = vector.shape_cast %45 : vector<16x16x8xf32> to vector<256x8xf32>
    %c7 = arith.constant 7 : index
    %c0_25 = arith.constant 0 : index
    %c0_26 = arith.constant 0 : index
    %47 = vector.load %arg2[%c7, %c0_25, %c0_26] : memref<25x8x8xf32, #tpu.memory_space<vmem>>, vector<1x8x8xf32>
    %48 = vector.shape_cast %47 : vector<1x8x8xf32> to vector<8x8xf32>
    %cst_27 = arith.constant dense<0.000000e+00> : vector<256x8xf32>
    %49 = tpu.matmul %46, %48, %cst_27 {dimension_numbers = #tpu.dot_dimension_numbers<[1], [0], [0], [1], [0, 0, 1, 1], [], []>} : vector<256x8xf32>, vector<8x8xf32>, vector<256x8xf32> -> vector<256x8xf32>
    %50 = arith.addf %44, %49 : vector<256x8xf32>
    %51 = vector.extract_strided_slice %1 {offsets = [0, 1, 24], sizes = [16, 16, 8], strides = [1, 1, 1]} : vector<18x18x32xf32> to vector<16x16x8xf32>
    %52 = vector.shape_cast %51 : vector<16x16x8xf32> to vector<256x8xf32>
    %c8 = arith.constant 8 : index
    %c0_28 = arith.constant 0 : index
    %c0_29 = arith.constant 0 : index
    %53 = vector.load %arg2[%c8, %c0_28, %c0_29] : memref<25x8x8xf32, #tpu.memory_space<vmem>>, vector<1x8x8xf32>
    %54 = vector.shape_cast %53 : vector<1x8x8xf32> to vector<8x8xf32>
    %cst_30 = arith.constant dense<0.000000e+00> : vector<256x8xf32>
    %55 = tpu.matmul %52, %54, %cst_30 {dimension_numbers = #tpu.dot_dimension_numbers<[1], [0], [0], [1], [0, 0, 1, 1], [], []>} : vector<256x8xf32>, vector<8x8xf32>, vector<256x8xf32> -> vector<256x8xf32>
    %56 = arith.addf %50, %55 : vector<256x8xf32>
    %57 = vector.extract_strided_slice %1 {offsets = [0, 2, 16], sizes = [16, 16, 8], strides = [1, 1, 1]} : vector<18x18x32xf32> to vector<16x16x8xf32>
    %58 = vector.shape_cast %57 : vector<16x16x8xf32> to vector<256x8xf32>
    %c9 = arith.constant 9 : index
    %c0_31 = arith.constant 0 : index
    %c0_32 = arith.constant 0 : index
    %59 = vector.load %arg2[%c9, %c0_31, %c0_32] : memref<25x8x8xf32, #tpu.memory_space<vmem>>, vector<1x8x8xf32>
    %60 = vector.shape_cast %59 : vector<1x8x8xf32> to vector<8x8xf32>
    %cst_33 = arith.constant dense<0.000000e+00> : vector<256x8xf32>
    %61 = tpu.matmul %58, %60, %cst_33 {dimension_numbers = #tpu.dot_dimension_numbers<[1], [0], [0], [1], [0, 0, 1, 1], [], []>} : vector<256x8xf32>, vector<8x8xf32>, vector<256x8xf32> -> vector<256x8xf32>
    %62 = arith.addf %56, %61 : vector<256x8xf32>
    %63 = vector.extract_strided_slice %1 {offsets = [1, 0, 0], sizes = [16, 16, 8], strides = [1, 1, 1]} : vector<18x18x32xf32> to vector<16x16x8xf32>
    %64 = vector.shape_cast %63 : vector<16x16x8xf32> to vector<256x8xf32>
    %c10 = arith.constant 10 : index
    %c0_34 = arith.constant 0 : index
    %c0_35 = arith.constant 0 : index
    %65 = vector.load %arg2[%c10, %c0_34, %c0_35] : memref<25x8x8xf32, #tpu.memory_space<vmem>>, vector<1x8x8xf32>
    %66 = vector.shape_cast %65 : vector<1x8x8xf32> to vector<8x8xf32>
    %cst_36 = arith.constant dense<0.000000e+00> : vector<256x8xf32>
    %67 = tpu.matmul %64, %66, %cst_36 {dimension_numbers = #tpu.dot_dimension_numbers<[1], [0], [0], [1], [0, 0, 1, 1], [], []>} : vector<256x8xf32>, vector<8x8xf32>, vector<256x8xf32> -> vector<256x8xf32>
    %68 = arith.addf %62, %67 : vector<256x8xf32>
    %69 = vector.extract_strided_slice %1 {offsets = [1, 0, 8], sizes = [16, 16, 8], strides = [1, 1, 1]} : vector<18x18x32xf32> to vector<16x16x8xf32>
    %70 = vector.shape_cast %69 : vector<16x16x8xf32> to vector<256x8xf32>
    %c11 = arith.constant 11 : index
    %c0_37 = arith.constant 0 : index
    %c0_38 = arith.constant 0 : index
    %71 = vector.load %arg2[%c11, %c0_37, %c0_38] : memref<25x8x8xf32, #tpu.memory_space<vmem>>, vector<1x8x8xf32>
    %72 = vector.shape_cast %71 : vector<1x8x8xf32> to vector<8x8xf32>
    %cst_39 = arith.constant dense<0.000000e+00> : vector<256x8xf32>
    %73 = tpu.matmul %70, %72, %cst_39 {dimension_numbers = #tpu.dot_dimension_numbers<[1], [0], [0], [1], [0, 0, 1, 1], [], []>} : vector<256x8xf32>, vector<8x8xf32>, vector<256x8xf32> -> vector<256x8xf32>
    %74 = arith.addf %68, %73 : vector<256x8xf32>
    %75 = vector.extract_strided_slice %1 {offsets = [1, 1, 0], sizes = [16, 16, 8], strides = [1, 1, 1]} : vector<18x18x32xf32> to vector<16x16x8xf32>
    %76 = vector.shape_cast %75 : vector<16x16x8xf32> to vector<256x8xf32>
    %c12 = arith.constant 12 : index
    %c0_40 = arith.constant 0 : index
    %c0_41 = arith.constant 0 : index
    %77 = vector.load %arg2[%c12, %c0_40, %c0_41] : memref<25x8x8xf32, #tpu.memory_space<vmem>>, vector<1x8x8xf32>
    %78 = vector.shape_cast %77 : vector<1x8x8xf32> to vector<8x8xf32>
    %cst_42 = arith.constant dense<0.000000e+00> : vector<256x8xf32>
    %79 = tpu.matmul %76, %78, %cst_42 {dimension_numbers = #tpu.dot_dimension_numbers<[1], [0], [0], [1], [0, 0, 1, 1], [], []>} : vector<256x8xf32>, vector<8x8xf32>, vector<256x8xf32> -> vector<256x8xf32>
    %80 = arith.addf %74, %79 : vector<256x8xf32>
    %81 = vector.extract_strided_slice %1 {offsets = [1, 1, 8], sizes = [16, 16, 8], strides = [1, 1, 1]} : vector<18x18x32xf32> to vector<16x16x8xf32>
    %82 = vector.shape_cast %81 : vector<16x16x8xf32> to vector<256x8xf32>
    %c13 = arith.constant 13 : index
    %c0_43 = arith.constant 0 : index
    %c0_44 = arith.constant 0 : index
    %83 = vector.load %arg2[%c13, %c0_43, %c0_44] : memref<25x8x8xf32, #tpu.memory_space<vmem>>, vector<1x8x8xf32>
    %84 = vector.shape_cast %83 : vector<1x8x8xf32> to vector<8x8xf32>
    %cst_45 = arith.constant dense<0.000000e+00> : vector<256x8xf32>
    %85 = tpu.matmul %82, %84, %cst_45 {dimension_numbers = #tpu.dot_dimension_numbers<[1], [0], [0], [1], [0, 0, 1, 1], [], []>} : vector<256x8xf32>, vector<8x8xf32>, vector<256x8xf32> -> vector<256x8xf32>
    %86 = arith.addf %80, %85 : vector<256x8xf32>
    %87 = vector.extract_strided_slice %1 {offsets = [1, 2, 0], sizes = [16, 16, 8], strides = [1, 1, 1]} : vector<18x18x32xf32> to vector<16x16x8xf32>
    %88 = vector.shape_cast %87 : vector<16x16x8xf32> to vector<256x8xf32>
    %c14 = arith.constant 14 : index
    %c0_46 = arith.constant 0 : index
    %c0_47 = arith.constant 0 : index
    %89 = vector.load %arg2[%c14, %c0_46, %c0_47] : memref<25x8x8xf32, #tpu.memory_space<vmem>>, vector<1x8x8xf32>
    %90 = vector.shape_cast %89 : vector<1x8x8xf32> to vector<8x8xf32>
    %cst_48 = arith.constant dense<0.000000e+00> : vector<256x8xf32>
    %91 = tpu.matmul %88, %90, %cst_48 {dimension_numbers = #tpu.dot_dimension_numbers<[1], [0], [0], [1], [0, 0, 1, 1], [], []>} : vector<256x8xf32>, vector<8x8xf32>, vector<256x8xf32> -> vector<256x8xf32>
    %92 = arith.addf %86, %91 : vector<256x8xf32>
    %93 = vector.extract_strided_slice %1 {offsets = [1, 0, 16], sizes = [16, 16, 8], strides = [1, 1, 1]} : vector<18x18x32xf32> to vector<16x16x8xf32>
    %94 = vector.shape_cast %93 : vector<16x16x8xf32> to vector<256x8xf32>
    %c15 = arith.constant 15 : index
    %c0_49 = arith.constant 0 : index
    %c0_50 = arith.constant 0 : index
    %95 = vector.load %arg2[%c15, %c0_49, %c0_50] : memref<25x8x8xf32, #tpu.memory_space<vmem>>, vector<1x8x8xf32>
    %96 = vector.shape_cast %95 : vector<1x8x8xf32> to vector<8x8xf32>
    %cst_51 = arith.constant dense<0.000000e+00> : vector<256x8xf32>
    %97 = tpu.matmul %94, %96, %cst_51 {dimension_numbers = #tpu.dot_dimension_numbers<[1], [0], [0], [1], [0, 0, 1, 1], [], []>} : vector<256x8xf32>, vector<8x8xf32>, vector<256x8xf32> -> vector<256x8xf32>
    %98 = arith.addf %92, %97 : vector<256x8xf32>
    %99 = vector.extract_strided_slice %1 {offsets = [1, 0, 24], sizes = [16, 16, 8], strides = [1, 1, 1]} : vector<18x18x32xf32> to vector<16x16x8xf32>
    %100 = vector.shape_cast %99 : vector<16x16x8xf32> to vector<256x8xf32>
    %c16 = arith.constant 16 : index
    %c0_52 = arith.constant 0 : index
    %c0_53 = arith.constant 0 : index
    %101 = vector.load %arg2[%c16, %c0_52, %c0_53] : memref<25x8x8xf32, #tpu.memory_space<vmem>>, vector<1x8x8xf32>
    %102 = vector.shape_cast %101 : vector<1x8x8xf32> to vector<8x8xf32>
    %cst_54 = arith.constant dense<0.000000e+00> : vector<256x8xf32>
    %103 = tpu.matmul %100, %102, %cst_54 {dimension_numbers = #tpu.dot_dimension_numbers<[1], [0], [0], [1], [0, 0, 1, 1], [], []>} : vector<256x8xf32>, vector<8x8xf32>, vector<256x8xf32> -> vector<256x8xf32>
    %104 = arith.addf %98, %103 : vector<256x8xf32>
    %105 = vector.extract_strided_slice %1 {offsets = [1, 1, 16], sizes = [16, 16, 8], strides = [1, 1, 1]} : vector<18x18x32xf32> to vector<16x16x8xf32>
    %106 = vector.shape_cast %105 : vector<16x16x8xf32> to vector<256x8xf32>
    %c17 = arith.constant 17 : index
    %c0_55 = arith.constant 0 : index
    %c0_56 = arith.constant 0 : index
    %107 = vector.load %arg2[%c17, %c0_55, %c0_56] : memref<25x8x8xf32, #tpu.memory_space<vmem>>, vector<1x8x8xf32>
    %108 = vector.shape_cast %107 : vector<1x8x8xf32> to vector<8x8xf32>
    %cst_57 = arith.constant dense<0.000000e+00> : vector<256x8xf32>
    %109 = tpu.matmul %106, %108, %cst_57 {dimension_numbers = #tpu.dot_dimension_numbers<[1], [0], [0], [1], [0, 0, 1, 1], [], []>} : vector<256x8xf32>, vector<8x8xf32>, vector<256x8xf32> -> vector<256x8xf32>
    %110 = arith.addf %104, %109 : vector<256x8xf32>
    %111 = vector.extract_strided_slice %1 {offsets = [1, 1, 24], sizes = [16, 16, 8], strides = [1, 1, 1]} : vector<18x18x32xf32> to vector<16x16x8xf32>
    %112 = vector.shape_cast %111 : vector<16x16x8xf32> to vector<256x8xf32>
    %c18 = arith.constant 18 : index
    %c0_58 = arith.constant 0 : index
    %c0_59 = arith.constant 0 : index
    %113 = vector.load %arg2[%c18, %c0_58, %c0_59] : memref<25x8x8xf32, #tpu.memory_space<vmem>>, vector<1x8x8xf32>
    %114 = vector.shape_cast %113 : vector<1x8x8xf32> to vector<8x8xf32>
    %cst_60 = arith.constant dense<0.000000e+00> : vector<256x8xf32>
    %115 = tpu.matmul %112, %114, %cst_60 {dimension_numbers = #tpu.dot_dimension_numbers<[1], [0], [0], [1], [0, 0, 1, 1], [], []>} : vector<256x8xf32>, vector<8x8xf32>, vector<256x8xf32> -> vector<256x8xf32>
    %116 = arith.addf %110, %115 : vector<256x8xf32>
    %117 = vector.extract_strided_slice %1 {offsets = [1, 2, 16], sizes = [16, 16, 8], strides = [1, 1, 1]} : vector<18x18x32xf32> to vector<16x16x8xf32>
    %118 = vector.shape_cast %117 : vector<16x16x8xf32> to vector<256x8xf32>
    %c19 = arith.constant 19 : index
    %c0_61 = arith.constant 0 : index
    %c0_62 = arith.constant 0 : index
    %119 = vector.load %arg2[%c19, %c0_61, %c0_62] : memref<25x8x8xf32, #tpu.memory_space<vmem>>, vector<1x8x8xf32>
    %120 = vector.shape_cast %119 : vector<1x8x8xf32> to vector<8x8xf32>
    %cst_63 = arith.constant dense<0.000000e+00> : vector<256x8xf32>
    %121 = tpu.matmul %118, %120, %cst_63 {dimension_numbers = #tpu.dot_dimension_numbers<[1], [0], [0], [1], [0, 0, 1, 1], [], []>} : vector<256x8xf32>, vector<8x8xf32>, vector<256x8xf32> -> vector<256x8xf32>
    %122 = arith.addf %116, %121 : vector<256x8xf32>
    %123 = vector.extract_strided_slice %1 {offsets = [2, 0, 0], sizes = [16, 16, 8], strides = [1, 1, 1]} : vector<18x18x32xf32> to vector<16x16x8xf32>
    %124 = vector.shape_cast %123 : vector<16x16x8xf32> to vector<256x8xf32>
    %c20 = arith.constant 20 : index
    %c0_64 = arith.constant 0 : index
    %c0_65 = arith.constant 0 : index
    %125 = vector.load %arg2[%c20, %c0_64, %c0_65] : memref<25x8x8xf32, #tpu.memory_space<vmem>>, vector<1x8x8xf32>
    %126 = vector.shape_cast %125 : vector<1x8x8xf32> to vector<8x8xf32>
    %cst_66 = arith.constant dense<0.000000e+00> : vector<256x8xf32>
    %127 = tpu.matmul %124, %126, %cst_66 {dimension_numbers = #tpu.dot_dimension_numbers<[1], [0], [0], [1], [0, 0, 1, 1], [], []>} : vector<256x8xf32>, vector<8x8xf32>, vector<256x8xf32> -> vector<256x8xf32>
    %128 = arith.addf %122, %127 : vector<256x8xf32>
    %129 = vector.extract_strided_slice %1 {offsets = [2, 0, 8], sizes = [16, 16, 8], strides = [1, 1, 1]} : vector<18x18x32xf32> to vector<16x16x8xf32>
    %130 = vector.shape_cast %129 : vector<16x16x8xf32> to vector<256x8xf32>
    %c21 = arith.constant 21 : index
    %c0_67 = arith.constant 0 : index
    %c0_68 = arith.constant 0 : index
    %131 = vector.load %arg2[%c21, %c0_67, %c0_68] : memref<25x8x8xf32, #tpu.memory_space<vmem>>, vector<1x8x8xf32>
    %132 = vector.shape_cast %131 : vector<1x8x8xf32> to vector<8x8xf32>
    %cst_69 = arith.constant dense<0.000000e+00> : vector<256x8xf32>
    %133 = tpu.matmul %130, %132, %cst_69 {dimension_numbers = #tpu.dot_dimension_numbers<[1], [0], [0], [1], [0, 0, 1, 1], [], []>} : vector<256x8xf32>, vector<8x8xf32>, vector<256x8xf32> -> vector<256x8xf32>
    %134 = arith.addf %128, %133 : vector<256x8xf32>
    %135 = vector.extract_strided_slice %1 {offsets = [2, 1, 0], sizes = [16, 16, 8], strides = [1, 1, 1]} : vector<18x18x32xf32> to vector<16x16x8xf32>
    %136 = vector.shape_cast %135 : vector<16x16x8xf32> to vector<256x8xf32>
    %c22 = arith.constant 22 : index
    %c0_70 = arith.constant 0 : index
    %c0_71 = arith.constant 0 : index
    %137 = vector.load %arg2[%c22, %c0_70, %c0_71] : memref<25x8x8xf32, #tpu.memory_space<vmem>>, vector<1x8x8xf32>
    %138 = vector.shape_cast %137 : vector<1x8x8xf32> to vector<8x8xf32>
    %cst_72 = arith.constant dense<0.000000e+00> : vector<256x8xf32>
    %139 = tpu.matmul %136, %138, %cst_72 {dimension_numbers = #tpu.dot_dimension_numbers<[1], [0], [0], [1], [0, 0, 1, 1], [], []>} : vector<256x8xf32>, vector<8x8xf32>, vector<256x8xf32> -> vector<256x8xf32>
    %140 = arith.addf %134, %139 : vector<256x8xf32>
    %141 = vector.extract_strided_slice %1 {offsets = [2, 1, 8], sizes = [16, 16, 8], strides = [1, 1, 1]} : vector<18x18x32xf32> to vector<16x16x8xf32>
    %142 = vector.shape_cast %141 : vector<16x16x8xf32> to vector<256x8xf32>
    %c23 = arith.constant 23 : index
    %c0_73 = arith.constant 0 : index
    %c0_74 = arith.constant 0 : index
    %143 = vector.load %arg2[%c23, %c0_73, %c0_74] : memref<25x8x8xf32, #tpu.memory_space<vmem>>, vector<1x8x8xf32>
    %144 = vector.shape_cast %143 : vector<1x8x8xf32> to vector<8x8xf32>
    %cst_75 = arith.constant dense<0.000000e+00> : vector<256x8xf32>
    %145 = tpu.matmul %142, %144, %cst_75 {dimension_numbers = #tpu.dot_dimension_numbers<[1], [0], [0], [1], [0, 0, 1, 1], [], []>} : vector<256x8xf32>, vector<8x8xf32>, vector<256x8xf32> -> vector<256x8xf32>
    %146 = arith.addf %140, %145 : vector<256x8xf32>
    %147 = vector.extract_strided_slice %1 {offsets = [2, 2, 0], sizes = [16, 16, 8], strides = [1, 1, 1]} : vector<18x18x32xf32> to vector<16x16x8xf32>
    %148 = vector.shape_cast %147 : vector<16x16x8xf32> to vector<256x8xf32>
    %c24 = arith.constant 24 : index
    %c0_76 = arith.constant 0 : index
    %c0_77 = arith.constant 0 : index
    %149 = vector.load %arg2[%c24, %c0_76, %c0_77] : memref<25x8x8xf32, #tpu.memory_space<vmem>>, vector<1x8x8xf32>
    %150 = vector.shape_cast %149 : vector<1x8x8xf32> to vector<8x8xf32>
    %cst_78 = arith.constant dense<0.000000e+00> : vector<256x8xf32>
    %151 = tpu.matmul %148, %150, %cst_78 {dimension_numbers = #tpu.dot_dimension_numbers<[1], [0], [0], [1], [0, 0, 1, 1], [], []>} : vector<256x8xf32>, vector<8x8xf32>, vector<256x8xf32> -> vector<256x8xf32>
    %152 = arith.addf %146, %151 : vector<256x8xf32>
    %c0_79 = arith.constant 0 : index
    %c0_80 = arith.constant 0 : index
    %153 = vector.load %arg3[%c0_79, %c0_80] : memref<1x8xf32, #tpu.memory_space<vmem>>, vector<1x8xf32>
    %154 = vector.broadcast %153 : vector<1x8xf32> to vector<256x8xf32>
    %155 = arith.addf %152, %154 : vector<256x8xf32>
    %cst_81 = arith.constant 0.000000e+00 : f32
    %156 = vector.broadcast %cst_81 : f32 to vector<256x8xf32>
    %157 = arith.maximumf %155, %156 : vector<256x8xf32>
    %158 = vector.shape_cast %157 : vector<256x8xf32> to vector<16x8x2x8xf32>
    %cst_82 = arith.constant dense<0xFF800000> : vector<16x8x8xf32>
    %159 = vector.multi_reduction <maximumf>, %158, %cst_82 [2] : vector<16x8x2x8xf32> to vector<16x8x8xf32>
    %160 = vector.shape_cast %159 : vector<16x8x8xf32> to vector<8x2x8x8xf32>
    %161 = vector.extract_strided_slice %160 {offsets = [0, 0, 0, 0], sizes = [8, 1, 8, 8], strides = [1, 1, 1, 1]} : vector<8x2x8x8xf32> to vector<8x1x8x8xf32>
    %162 = vector.shape_cast %161 : vector<8x1x8x8xf32> to vector<8x8x8xf32>
    %163 = vector.extract_strided_slice %160 {offsets = [0, 1, 0, 0], sizes = [8, 1, 8, 8], strides = [1, 1, 1, 1]} : vector<8x2x8x8xf32> to vector<8x1x8x8xf32>
    %164 = vector.shape_cast %163 : vector<8x1x8x8xf32> to vector<8x8x8xf32>
    %165 = arith.maximumf %162, %164 : vector<8x8x8xf32>
    %cst_83 = arith.constant 0.000000e+00 : f32
    %166 = vector.broadcast %cst_83 : f32 to vector<10x10x8xf32>
    %c0_84 = arith.constant 0 : index
    %c0_85 = arith.constant 0 : index
    %c0_86 = arith.constant 0 : index
    %167 = vector.load %arg13[%c0_84, %c0_85, %c0_86] : memref<10x10x8xf32, #tpu.memory_space<vmem>>, vector<10x10x8xf32>
    tpu.vector_store %arg13[%c0_84, %c0_85, %c0_86], %166 {strides = array<i32>} : memref<10x10x8xf32, #tpu.memory_space<vmem>>, vector<10x10x8xf32>,
    %c1_87 = arith.constant 1 : index
    %c1_88 = arith.constant 1 : index
    %c0_89 = arith.constant 0 : index
    %168 = vector.load %arg13[%c1_87, %c1_88, %c0_89] : memref<10x10x8xf32, #tpu.memory_space<vmem>>, vector<8x8x8xf32>
    tpu.vector_store %arg13[%c1_87, %c1_88, %c0_89], %165 {strides = array<i32>} : memref<10x10x8xf32, #tpu.memory_space<vmem>>, vector<8x8x8xf32>,
    %cst_90 = arith.constant 0.000000e+00 : f32
    %169 = vector.broadcast %cst_90 : f32 to vector<64x16xf32>
    %c0_91 = arith.constant 0 : index
    %c0_92 = arith.constant 0 : index
    %c0_93 = arith.constant 0 : index
    %170 = vector.load %arg13[%c0_91, %c0_92, %c0_93] : memref<10x10x8xf32, #tpu.memory_space<vmem>>, vector<8x8x8xf32>
    %171 = vector.shape_cast %170 : vector<8x8x8xf32> to vector<64x8xf32>
    %c0_94 = arith.constant 0 : index
    %c0_95 = arith.constant 0 : index
    %c0_96 = arith.constant 0 : index
    %172 = vector.load %arg4[%c0_94, %c0_95, %c0_96] : memref<9x8x16xf32, #tpu.memory_space<vmem>>, vector<1x8x16xf32>
    %173 = vector.shape_cast %172 : vector<1x8x16xf32> to vector<8x16xf32>
    %cst_97 = arith.constant dense<0.000000e+00> : vector<64x16xf32>
    %174 = tpu.matmul %171, %173, %cst_97 {dimension_numbers = #tpu.dot_dimension_numbers<[1], [0], [0], [1], [0, 0, 1, 1], [], []>} : vector<64x8xf32>, vector<8x16xf32>, vector<64x16xf32> -> vector<64x16xf32>
    %175 = arith.addf %169, %174 : vector<64x16xf32>
    %c0_98 = arith.constant 0 : index
    %c1_99 = arith.constant 1 : index
    %c0_100 = arith.constant 0 : index
    %176 = vector.load %arg13[%c0_98, %c1_99, %c0_100] : memref<10x10x8xf32, #tpu.memory_space<vmem>>, vector<8x8x8xf32>
    %177 = vector.shape_cast %176 : vector<8x8x8xf32> to vector<64x8xf32>
    %c1_101 = arith.constant 1 : index
    %c0_102 = arith.constant 0 : index
    %c0_103 = arith.constant 0 : index
    %178 = vector.load %arg4[%c1_101, %c0_102, %c0_103] : memref<9x8x16xf32, #tpu.memory_space<vmem>>, vector<1x8x16xf32>
    %179 = vector.shape_cast %178 : vector<1x8x16xf32> to vector<8x16xf32>
    %cst_104 = arith.constant dense<0.000000e+00> : vector<64x16xf32>
    %180 = tpu.matmul %177, %179, %cst_104 {dimension_numbers = #tpu.dot_dimension_numbers<[1], [0], [0], [1], [0, 0, 1, 1], [], []>} : vector<64x8xf32>, vector<8x16xf32>, vector<64x16xf32> -> vector<64x16xf32>
    %181 = arith.addf %175, %180 : vector<64x16xf32>
    %c0_105 = arith.constant 0 : index
    %c2_106 = arith.constant 2 : index
    %c0_107 = arith.constant 0 : index
    %182 = vector.load %arg13[%c0_105, %c2_106, %c0_107] : memref<10x10x8xf32, #tpu.memory_space<vmem>>, vector<8x8x8xf32>
    %183 = vector.shape_cast %182 : vector<8x8x8xf32> to vector<64x8xf32>
    %c2_108 = arith.constant 2 : index
    %c0_109 = arith.constant 0 : index
    %c0_110 = arith.constant 0 : index
    %184 = vector.load %arg4[%c2_108, %c0_109, %c0_110] : memref<9x8x16xf32, #tpu.memory_space<vmem>>, vector<1x8x16xf32>
    %185 = vector.shape_cast %184 : vector<1x8x16xf32> to vector<8x16xf32>
    %cst_111 = arith.constant dense<0.000000e+00> : vector<64x16xf32>
    %186 = tpu.matmul %183, %185, %cst_111 {dimension_numbers = #tpu.dot_dimension_numbers<[1], [0], [0], [1], [0, 0, 1, 1], [], []>} : vector<64x8xf32>, vector<8x16xf32>, vector<64x16xf32> -> vector<64x16xf32>
    %187 = arith.addf %181, %186 : vector<64x16xf32>
    %c1_112 = arith.constant 1 : index
    %c0_113 = arith.constant 0 : index
    %c0_114 = arith.constant 0 : index
    %188 = vector.load %arg13[%c1_112, %c0_113, %c0_114] : memref<10x10x8xf32, #tpu.memory_space<vmem>>, vector<8x8x8xf32>
    %189 = vector.shape_cast %188 : vector<8x8x8xf32> to vector<64x8xf32>
    %c3_115 = arith.constant 3 : index
    %c0_116 = arith.constant 0 : index
    %c0_117 = arith.constant 0 : index
    %190 = vector.load %arg4[%c3_115, %c0_116, %c0_117] : memref<9x8x16xf32, #tpu.memory_space<vmem>>, vector<1x8x16xf32>
    %191 = vector.shape_cast %190 : vector<1x8x16xf32> to vector<8x16xf32>
    %cst_118 = arith.constant dense<0.000000e+00> : vector<64x16xf32>
    %192 = tpu.matmul %189, %191, %cst_118 {dimension_numbers = #tpu.dot_dimension_numbers<[1], [0], [0], [1], [0, 0, 1, 1], [], []>} : vector<64x8xf32>, vector<8x16xf32>, vector<64x16xf32> -> vector<64x16xf32>
    %193 = arith.addf %187, %192 : vector<64x16xf32>
    %c1_119 = arith.constant 1 : index
    %c1_120 = arith.constant 1 : index
    %c0_121 = arith.constant 0 : index
    %194 = vector.load %arg13[%c1_119, %c1_120, %c0_121] : memref<10x10x8xf32, #tpu.memory_space<vmem>>, vector<8x8x8xf32>
    %195 = vector.shape_cast %194 : vector<8x8x8xf32> to vector<64x8xf32>
    %c4_122 = arith.constant 4 : index
    %c0_123 = arith.constant 0 : index
    %c0_124 = arith.constant 0 : index
    %196 = vector.load %arg4[%c4_122, %c0_123, %c0_124] : memref<9x8x16xf32, #tpu.memory_space<vmem>>, vector<1x8x16xf32>
    %197 = vector.shape_cast %196 : vector<1x8x16xf32> to vector<8x16xf32>
    %cst_125 = arith.constant dense<0.000000e+00> : vector<64x16xf32>
    %198 = tpu.matmul %195, %197, %cst_125 {dimension_numbers = #tpu.dot_dimension_numbers<[1], [0], [0], [1], [0, 0, 1, 1], [], []>} : vector<64x8xf32>, vector<8x16xf32>, vector<64x16xf32> -> vector<64x16xf32>
    %199 = arith.addf %193, %198 : vector<64x16xf32>
    %c1_126 = arith.constant 1 : index
    %c2_127 = arith.constant 2 : index
    %c0_128 = arith.constant 0 : index
    %200 = vector.load %arg13[%c1_126, %c2_127, %c0_128] : memref<10x10x8xf32, #tpu.memory_space<vmem>>, vector<8x8x8xf32>
    %201 = vector.shape_cast %200 : vector<8x8x8xf32> to vector<64x8xf32>
    %c5_129 = arith.constant 5 : index
    %c0_130 = arith.constant 0 : index
    %c0_131 = arith.constant 0 : index
    %202 = vector.load %arg4[%c5_129, %c0_130, %c0_131] : memref<9x8x16xf32, #tpu.memory_space<vmem>>, vector<1x8x16xf32>
    %203 = vector.shape_cast %202 : vector<1x8x16xf32> to vector<8x16xf32>
    %cst_132 = arith.constant dense<0.000000e+00> : vector<64x16xf32>
    %204 = tpu.matmul %201, %203, %cst_132 {dimension_numbers = #tpu.dot_dimension_numbers<[1], [0], [0], [1], [0, 0, 1, 1], [], []>} : vector<64x8xf32>, vector<8x16xf32>, vector<64x16xf32> -> vector<64x16xf32>
    %205 = arith.addf %199, %204 : vector<64x16xf32>
    %c2_133 = arith.constant 2 : index
    %c0_134 = arith.constant 0 : index
    %c0_135 = arith.constant 0 : index
    %206 = vector.load %arg13[%c2_133, %c0_134, %c0_135] : memref<10x10x8xf32, #tpu.memory_space<vmem>>, vector<8x8x8xf32>
    %207 = vector.shape_cast %206 : vector<8x8x8xf32> to vector<64x8xf32>
    %c6_136 = arith.constant 6 : index
    %c0_137 = arith.constant 0 : index
    %c0_138 = arith.constant 0 : index
    %208 = vector.load %arg4[%c6_136, %c0_137, %c0_138] : memref<9x8x16xf32, #tpu.memory_space<vmem>>, vector<1x8x16xf32>
    %209 = vector.shape_cast %208 : vector<1x8x16xf32> to vector<8x16xf32>
    %cst_139 = arith.constant dense<0.000000e+00> : vector<64x16xf32>
    %210 = tpu.matmul %207, %209, %cst_139 {dimension_numbers = #tpu.dot_dimension_numbers<[1], [0], [0], [1], [0, 0, 1, 1], [], []>} : vector<64x8xf32>, vector<8x16xf32>, vector<64x16xf32> -> vector<64x16xf32>
    %211 = arith.addf %205, %210 : vector<64x16xf32>
    %c2_140 = arith.constant 2 : index
    %c1_141 = arith.constant 1 : index
    %c0_142 = arith.constant 0 : index
    %212 = vector.load %arg13[%c2_140, %c1_141, %c0_142] : memref<10x10x8xf32, #tpu.memory_space<vmem>>, vector<8x8x8xf32>
    %213 = vector.shape_cast %212 : vector<8x8x8xf32> to vector<64x8xf32>
    %c7_143 = arith.constant 7 : index
    %c0_144 = arith.constant 0 : index
    %c0_145 = arith.constant 0 : index
    %214 = vector.load %arg4[%c7_143, %c0_144, %c0_145] : memref<9x8x16xf32, #tpu.memory_space<vmem>>, vector<1x8x16xf32>
    %215 = vector.shape_cast %214 : vector<1x8x16xf32> to vector<8x16xf32>
    %cst_146 = arith.constant dense<0.000000e+00> : vector<64x16xf32>
    %216 = tpu.matmul %213, %215, %cst_146 {dimension_numbers = #tpu.dot_dimension_numbers<[1], [0], [0], [1], [0, 0, 1, 1], [], []>} : vector<64x8xf32>, vector<8x16xf32>, vector<64x16xf32> -> vector<64x16xf32>
    %217 = arith.addf %211, %216 : vector<64x16xf32>
    %c2_147 = arith.constant 2 : index
    %c2_148 = arith.constant 2 : index
    %c0_149 = arith.constant 0 : index
    %218 = vector.load %arg13[%c2_147, %c2_148, %c0_149] : memref<10x10x8xf32, #tpu.memory_space<vmem>>, vector<8x8x8xf32>
    %219 = vector.shape_cast %218 : vector<8x8x8xf32> to vector<64x8xf32>
    %c8_150 = arith.constant 8 : index
    %c0_151 = arith.constant 0 : index
    %c0_152 = arith.constant 0 : index
    %220 = vector.load %arg4[%c8_150, %c0_151, %c0_152] : memref<9x8x16xf32, #tpu.memory_space<vmem>>, vector<1x8x16xf32>
    %221 = vector.shape_cast %220 : vector<1x8x16xf32> to vector<8x16xf32>
    %cst_153 = arith.constant dense<0.000000e+00> : vector<64x16xf32>
    %222 = tpu.matmul %219, %221, %cst_153 {dimension_numbers = #tpu.dot_dimension_numbers<[1], [0], [0], [1], [0, 0, 1, 1], [], []>} : vector<64x8xf32>, vector<8x16xf32>, vector<64x16xf32> -> vector<64x16xf32>
    %223 = arith.addf %217, %222 : vector<64x16xf32>
    %c0_154 = arith.constant 0 : index
    %c0_155 = arith.constant 0 : index
    %224 = vector.load %arg5[%c0_154, %c0_155] : memref<1x16xf32, #tpu.memory_space<vmem>>, vector<1x16xf32>
    %225 = vector.broadcast %224 : vector<1x16xf32> to vector<64x16xf32>
    %226 = arith.addf %223, %225 : vector<64x16xf32>
    %cst_156 = arith.constant 0.000000e+00 : f32
    %227 = vector.broadcast %cst_156 : f32 to vector<64x16xf32>
    %228 = arith.maximumf %226, %227 : vector<64x16xf32>
    %229 = vector.shape_cast %228 : vector<64x16xf32> to vector<8x4x2x16xf32>
    %cst_157 = arith.constant dense<0xFF800000> : vector<8x4x16xf32>
    %230 = vector.multi_reduction <maximumf>, %229, %cst_157 [2] : vector<8x4x2x16xf32> to vector<8x4x16xf32>
    %231 = vector.shape_cast %230 : vector<8x4x16xf32> to vector<4x2x4x16xf32>
    %232 = vector.extract_strided_slice %231 {offsets = [0, 0, 0, 0], sizes = [4, 1, 4, 16], strides = [1, 1, 1, 1]} : vector<4x2x4x16xf32> to vector<4x1x4x16xf32>
    %233 = vector.shape_cast %232 : vector<4x1x4x16xf32> to vector<4x4x16xf32>
    %234 = vector.extract_strided_slice %231 {offsets = [0, 1, 0, 0], sizes = [4, 1, 4, 16], strides = [1, 1, 1, 1]} : vector<4x2x4x16xf32> to vector<4x1x4x16xf32>
    %235 = vector.shape_cast %234 : vector<4x1x4x16xf32> to vector<4x4x16xf32>
    %236 = arith.maximumf %233, %235 : vector<4x4x16xf32>
    %cst_158 = arith.constant 0.000000e+00 : f32
    %237 = vector.broadcast %cst_158 : f32 to vector<6x6x16xf32>
    %c0_159 = arith.constant 0 : index
    %c0_160 = arith.constant 0 : index
    %c0_161 = arith.constant 0 : index
    %238 = vector.load %arg14[%c0_159, %c0_160, %c0_161] : memref<6x6x16xf32, #tpu.memory_space<vmem>>, vector<6x6x16xf32>
    tpu.vector_store %arg14[%c0_159, %c0_160, %c0_161], %237 {strides = array<i32>} : memref<6x6x16xf32, #tpu.memory_space<vmem>>, vector<6x6x16xf32>,
    %c1_162 = arith.constant 1 : index
    %c1_163 = arith.constant 1 : index
    %c0_164 = arith.constant 0 : index
    %239 = vector.load %arg14[%c1_162, %c1_163, %c0_164] : memref<6x6x16xf32, #tpu.memory_space<vmem>>, vector<4x4x16xf32>
    tpu.vector_store %arg14[%c1_162, %c1_163, %c0_164], %236 {strides = array<i32>} : memref<6x6x16xf32, #tpu.memory_space<vmem>>, vector<4x4x16xf32>,
    %cst_165 = arith.constant 0.000000e+00 : f32
    %240 = vector.broadcast %cst_165 : f32 to vector<16x32xf32>
    %c0_166 = arith.constant 0 : index
    %c0_167 = arith.constant 0 : index
    %c0_168 = arith.constant 0 : index
    %241 = vector.load %arg14[%c0_166, %c0_167, %c0_168] : memref<6x6x16xf32, #tpu.memory_space<vmem>>, vector<4x4x16xf32>
    %242 = vector.shape_cast %241 : vector<4x4x16xf32> to vector<16x16xf32>
    %c0_169 = arith.constant 0 : index
    %c0_170 = arith.constant 0 : index
    %c0_171 = arith.constant 0 : index
    %243 = vector.load %arg6[%c0_169, %c0_170, %c0_171] : memref<9x16x32xf32, #tpu.memory_space<vmem>>, vector<1x16x32xf32>
    %244 = vector.shape_cast %243 : vector<1x16x32xf32> to vector<16x32xf32>
    %cst_172 = arith.constant dense<0.000000e+00> : vector<16x32xf32>
    %245 = tpu.matmul %242, %244, %cst_172 {dimension_numbers = #tpu.dot_dimension_numbers<[1], [0], [0], [1], [0, 0, 1, 1], [], []>} : vector<16x16xf32>, vector<16x32xf32>, vector<16x32xf32> -> vector<16x32xf32>
    %246 = arith.addf %240, %245 : vector<16x32xf32>
    %c0_173 = arith.constant 0 : index
    %c1_174 = arith.constant 1 : index
    %c0_175 = arith.constant 0 : index
    %247 = vector.load %arg14[%c0_173, %c1_174, %c0_175] : memref<6x6x16xf32, #tpu.memory_space<vmem>>, vector<4x4x16xf32>
    %248 = vector.shape_cast %247 : vector<4x4x16xf32> to vector<16x16xf32>
    %c1_176 = arith.constant 1 : index
    %c0_177 = arith.constant 0 : index
    %c0_178 = arith.constant 0 : index
    %249 = vector.load %arg6[%c1_176, %c0_177, %c0_178] : memref<9x16x32xf32, #tpu.memory_space<vmem>>, vector<1x16x32xf32>
    %250 = vector.shape_cast %249 : vector<1x16x32xf32> to vector<16x32xf32>
    %cst_179 = arith.constant dense<0.000000e+00> : vector<16x32xf32>
    %251 = tpu.matmul %248, %250, %cst_179 {dimension_numbers = #tpu.dot_dimension_numbers<[1], [0], [0], [1], [0, 0, 1, 1], [], []>} : vector<16x16xf32>, vector<16x32xf32>, vector<16x32xf32> -> vector<16x32xf32>
    %252 = arith.addf %246, %251 : vector<16x32xf32>
    %c0_180 = arith.constant 0 : index
    %c2_181 = arith.constant 2 : index
    %c0_182 = arith.constant 0 : index
    %253 = vector.load %arg14[%c0_180, %c2_181, %c0_182] : memref<6x6x16xf32, #tpu.memory_space<vmem>>, vector<4x4x16xf32>
    %254 = vector.shape_cast %253 : vector<4x4x16xf32> to vector<16x16xf32>
    %c2_183 = arith.constant 2 : index
    %c0_184 = arith.constant 0 : index
    %c0_185 = arith.constant 0 : index
    %255 = vector.load %arg6[%c2_183, %c0_184, %c0_185] : memref<9x16x32xf32, #tpu.memory_space<vmem>>, vector<1x16x32xf32>
    %256 = vector.shape_cast %255 : vector<1x16x32xf32> to vector<16x32xf32>
    %cst_186 = arith.constant dense<0.000000e+00> : vector<16x32xf32>
    %257 = tpu.matmul %254, %256, %cst_186 {dimension_numbers = #tpu.dot_dimension_numbers<[1], [0], [0], [1], [0, 0, 1, 1], [], []>} : vector<16x16xf32>, vector<16x32xf32>, vector<16x32xf32> -> vector<16x32xf32>
    %258 = arith.addf %252, %257 : vector<16x32xf32>
    %c1_187 = arith.constant 1 : index
    %c0_188 = arith.constant 0 : index
    %c0_189 = arith.constant 0 : index
    %259 = vector.load %arg14[%c1_187, %c0_188, %c0_189] : memref<6x6x16xf32, #tpu.memory_space<vmem>>, vector<4x4x16xf32>
    %260 = vector.shape_cast %259 : vector<4x4x16xf32> to vector<16x16xf32>
    %c3_190 = arith.constant 3 : index
    %c0_191 = arith.constant 0 : index
    %c0_192 = arith.constant 0 : index
    %261 = vector.load %arg6[%c3_190, %c0_191, %c0_192] : memref<9x16x32xf32, #tpu.memory_space<vmem>>, vector<1x16x32xf32>
    %262 = vector.shape_cast %261 : vector<1x16x32xf32> to vector<16x32xf32>
    %cst_193 = arith.constant dense<0.000000e+00> : vector<16x32xf32>
    %263 = tpu.matmul %260, %262, %cst_193 {dimension_numbers = #tpu.dot_dimension_numbers<[1], [0], [0], [1], [0, 0, 1, 1], [], []>} : vector<16x16xf32>, vector<16x32xf32>, vector<16x32xf32> -> vector<16x32xf32>
    %264 = arith.addf %258, %263 : vector<16x32xf32>
    %c1_194 = arith.constant 1 : index
    %c1_195 = arith.constant 1 : index
    %c0_196 = arith.constant 0 : index
    %265 = vector.load %arg14[%c1_194, %c1_195, %c0_196] : memref<6x6x16xf32, #tpu.memory_space<vmem>>, vector<4x4x16xf32>
    %266 = vector.shape_cast %265 : vector<4x4x16xf32> to vector<16x16xf32>
    %c4_197 = arith.constant 4 : index
    %c0_198 = arith.constant 0 : index
    %c0_199 = arith.constant 0 : index
    %267 = vector.load %arg6[%c4_197, %c0_198, %c0_199] : memref<9x16x32xf32, #tpu.memory_space<vmem>>, vector<1x16x32xf32>
    %268 = vector.shape_cast %267 : vector<1x16x32xf32> to vector<16x32xf32>
    %cst_200 = arith.constant dense<0.000000e+00> : vector<16x32xf32>
    %269 = tpu.matmul %266, %268, %cst_200 {dimension_numbers = #tpu.dot_dimension_numbers<[1], [0], [0], [1], [0, 0, 1, 1], [], []>} : vector<16x16xf32>, vector<16x32xf32>, vector<16x32xf32> -> vector<16x32xf32>
    %270 = arith.addf %264, %269 : vector<16x32xf32>
    %c1_201 = arith.constant 1 : index
    %c2_202 = arith.constant 2 : index
    %c0_203 = arith.constant 0 : index
    %271 = vector.load %arg14[%c1_201, %c2_202, %c0_203] : memref<6x6x16xf32, #tpu.memory_space<vmem>>, vector<4x4x16xf32>
    %272 = vector.shape_cast %271 : vector<4x4x16xf32> to vector<16x16xf32>
    %c5_204 = arith.constant 5 : index
    %c0_205 = arith.constant 0 : index
    %c0_206 = arith.constant 0 : index
    %273 = vector.load %arg6[%c5_204, %c0_205, %c0_206] : memref<9x16x32xf32, #tpu.memory_space<vmem>>, vector<1x16x32xf32>
    %274 = vector.shape_cast %273 : vector<1x16x32xf32> to vector<16x32xf32>
    %cst_207 = arith.constant dense<0.000000e+00> : vector<16x32xf32>
    %275 = tpu.matmul %272, %274, %cst_207 {dimension_numbers = #tpu.dot_dimension_numbers<[1], [0], [0], [1], [0, 0, 1, 1], [], []>} : vector<16x16xf32>, vector<16x32xf32>, vector<16x32xf32> -> vector<16x32xf32>
    %276 = arith.addf %270, %275 : vector<16x32xf32>
    %c2_208 = arith.constant 2 : index
    %c0_209 = arith.constant 0 : index
    %c0_210 = arith.constant 0 : index
    %277 = vector.load %arg14[%c2_208, %c0_209, %c0_210] : memref<6x6x16xf32, #tpu.memory_space<vmem>>, vector<4x4x16xf32>
    %278 = vector.shape_cast %277 : vector<4x4x16xf32> to vector<16x16xf32>
    %c6_211 = arith.constant 6 : index
    %c0_212 = arith.constant 0 : index
    %c0_213 = arith.constant 0 : index
    %279 = vector.load %arg6[%c6_211, %c0_212, %c0_213] : memref<9x16x32xf32, #tpu.memory_space<vmem>>, vector<1x16x32xf32>
    %280 = vector.shape_cast %279 : vector<1x16x32xf32> to vector<16x32xf32>
    %cst_214 = arith.constant dense<0.000000e+00> : vector<16x32xf32>
    %281 = tpu.matmul %278, %280, %cst_214 {dimension_numbers = #tpu.dot_dimension_numbers<[1], [0], [0], [1], [0, 0, 1, 1], [], []>} : vector<16x16xf32>, vector<16x32xf32>, vector<16x32xf32> -> vector<16x32xf32>
    %282 = arith.addf %276, %281 : vector<16x32xf32>
    %c2_215 = arith.constant 2 : index
    %c1_216 = arith.constant 1 : index
    %c0_217 = arith.constant 0 : index
    %283 = vector.load %arg14[%c2_215, %c1_216, %c0_217] : memref<6x6x16xf32, #tpu.memory_space<vmem>>, vector<4x4x16xf32>
    %284 = vector.shape_cast %283 : vector<4x4x16xf32> to vector<16x16xf32>
    %c7_218 = arith.constant 7 : index
    %c0_219 = arith.constant 0 : index
    %c0_220 = arith.constant 0 : index
    %285 = vector.load %arg6[%c7_218, %c0_219, %c0_220] : memref<9x16x32xf32, #tpu.memory_space<vmem>>, vector<1x16x32xf32>
    %286 = vector.shape_cast %285 : vector<1x16x32xf32> to vector<16x32xf32>
    %cst_221 = arith.constant dense<0.000000e+00> : vector<16x32xf32>
    %287 = tpu.matmul %284, %286, %cst_221 {dimension_numbers = #tpu.dot_dimension_numbers<[1], [0], [0], [1], [0, 0, 1, 1], [], []>} : vector<16x16xf32>, vector<16x32xf32>, vector<16x32xf32> -> vector<16x32xf32>
    %288 = arith.addf %282, %287 : vector<16x32xf32>
    %c2_222 = arith.constant 2 : index
    %c2_223 = arith.constant 2 : index
    %c0_224 = arith.constant 0 : index
    %289 = vector.load %arg14[%c2_222, %c2_223, %c0_224] : memref<6x6x16xf32, #tpu.memory_space<vmem>>, vector<4x4x16xf32>
    %290 = vector.shape_cast %289 : vector<4x4x16xf32> to vector<16x16xf32>
    %c8_225 = arith.constant 8 : index
    %c0_226 = arith.constant 0 : index
    %c0_227 = arith.constant 0 : index
    %291 = vector.load %arg6[%c8_225, %c0_226, %c0_227] : memref<9x16x32xf32, #tpu.memory_space<vmem>>, vector<1x16x32xf32>
    %292 = vector.shape_cast %291 : vector<1x16x32xf32> to vector<16x32xf32>
    %cst_228 = arith.constant dense<0.000000e+00> : vector<16x32xf32>
    %293 = tpu.matmul %290, %292, %cst_228 {dimension_numbers = #tpu.dot_dimension_numbers<[1], [0], [0], [1], [0, 0, 1, 1], [], []>} : vector<16x16xf32>, vector<16x32xf32>, vector<16x32xf32> -> vector<16x32xf32>
    %294 = arith.addf %288, %293 : vector<16x32xf32>
    %c0_229 = arith.constant 0 : index
    %c0_230 = arith.constant 0 : index
    %295 = vector.load %arg7[%c0_229, %c0_230] : memref<1x32xf32, #tpu.memory_space<vmem>>, vector<1x32xf32>
    %296 = vector.broadcast %295 : vector<1x32xf32> to vector<16x32xf32>
    %297 = arith.addf %294, %296 : vector<16x32xf32>
    %cst_231 = arith.constant 0.000000e+00 : f32
    %298 = vector.broadcast %cst_231 : f32 to vector<16x32xf32>
    %299 = arith.maximumf %297, %298 : vector<16x32xf32>
    %300 = vector.shape_cast %299 : vector<16x32xf32> to vector<4x2x2x32xf32>
    %cst_232 = arith.constant dense<0xFF800000> : vector<4x2x32xf32>
    %301 = vector.multi_reduction <maximumf>, %300, %cst_232 [2] : vector<4x2x2x32xf32> to vector<4x2x32xf32>
    %302 = vector.shape_cast %301 : vector<4x2x32xf32> to vector<2x2x2x32xf32>
    %303 = vector.extract_strided_slice %302 {offsets = [0, 0, 0, 0], sizes = [2, 1, 2, 32], strides = [1, 1, 1, 1]} : vector<2x2x2x32xf32> to vector<2x1x2x32xf32>
    %304 = vector.shape_cast %303 : vector<2x1x2x32xf32> to vector<2x2x32xf32>
    %305 = vector.extract_strided_slice %302 {offsets = [0, 1, 0, 0], sizes = [2, 1, 2, 32], strides = [1, 1, 1, 1]} : vector<2x2x2x32xf32> to vector<2x1x2x32xf32>
    %306 = vector.shape_cast %305 : vector<2x1x2x32xf32> to vector<2x2x32xf32>
    %307 = arith.maximumf %304, %306 : vector<2x2x32xf32>
    %c0_233 = arith.constant 0 : index
    %c0_234 = arith.constant 0 : index
    %308 = vector.load %arg9[%c0_233, %c0_234] : memref<1x512xf32, #tpu.memory_space<vmem>>, vector<1x512xf32>
    %309 = vector.extract_strided_slice %307 {offsets = [0, 0, 0], sizes = [1, 1, 32], strides = [1, 1, 1]} : vector<2x2x32xf32> to vector<1x1x32xf32>
    %310 = vector.shape_cast %309 : vector<1x1x32xf32> to vector<1x32xf32>
    %c0_235 = arith.constant 0 : index
    %c0_236 = arith.constant 0 : index
    %c0_237 = arith.constant 0 : index
    %311 = vector.load %arg8[%c0_235, %c0_236, %c0_237] : memref<4x32x512xf32, #tpu.memory_space<vmem>>, vector<1x32x512xf32>
    %312 = vector.shape_cast %311 : vector<1x32x512xf32> to vector<32x512xf32>
    %cst_238 = arith.constant dense<0.000000e+00> : vector<1x512xf32>
    %313 = tpu.matmul %310, %312, %cst_238 {dimension_numbers = #tpu.dot_dimension_numbers<[1], [0], [0], [1], [0, 0, 1, 1], [], []>} : vector<1x32xf32>, vector<32x512xf32>, vector<1x512xf32> -> vector<1x512xf32>
    %314 = arith.addf %308, %313 : vector<1x512xf32>
    %315 = vector.extract_strided_slice %307 {offsets = [0, 1, 0], sizes = [1, 1, 32], strides = [1, 1, 1]} : vector<2x2x32xf32> to vector<1x1x32xf32>
    %316 = vector.shape_cast %315 : vector<1x1x32xf32> to vector<1x32xf32>
    %c1_239 = arith.constant 1 : index
    %c0_240 = arith.constant 0 : index
    %c0_241 = arith.constant 0 : index
    %317 = vector.load %arg8[%c1_239, %c0_240, %c0_241] : memref<4x32x512xf32, #tpu.memory_space<vmem>>, vector<1x32x512xf32>
    %318 = vector.shape_cast %317 : vector<1x32x512xf32> to vector<32x512xf32>
    %cst_242 = arith.constant dense<0.000000e+00> : vector<1x512xf32>
    %319 = tpu.matmul %316, %318, %cst_242 {dimension_numbers = #tpu.dot_dimension_numbers<[1], [0], [0], [1], [0, 0, 1, 1], [], []>} : vector<1x32xf32>, vector<32x512xf32>, vector<1x512xf32> -> vector<1x512xf32>
    %320 = arith.addf %314, %319 : vector<1x512xf32>
    %321 = vector.extract_strided_slice %307 {offsets = [1, 0, 0], sizes = [1, 1, 32], strides = [1, 1, 1]} : vector<2x2x32xf32> to vector<1x1x32xf32>
    %322 = vector.shape_cast %321 : vector<1x1x32xf32> to vector<1x32xf32>
    %c2_243 = arith.constant 2 : index
    %c0_244 = arith.constant 0 : index
    %c0_245 = arith.constant 0 : index
    %323 = vector.load %arg8[%c2_243, %c0_244, %c0_245] : memref<4x32x512xf32, #tpu.memory_space<vmem>>, vector<1x32x512xf32>
    %324 = vector.shape_cast %323 : vector<1x32x512xf32> to vector<32x512xf32>
    %cst_246 = arith.constant dense<0.000000e+00> : vector<1x512xf32>
    %325 = tpu.matmul %322, %324, %cst_246 {dimension_numbers = #tpu.dot_dimension_numbers<[1], [0], [0], [1], [0, 0, 1, 1], [], []>} : vector<1x32xf32>, vector<32x512xf32>, vector<1x512xf32> -> vector<1x512xf32>
    %326 = arith.addf %320, %325 : vector<1x512xf32>
    %327 = vector.extract_strided_slice %307 {offsets = [1, 1, 0], sizes = [1, 1, 32], strides = [1, 1, 1]} : vector<2x2x32xf32> to vector<1x1x32xf32>
    %328 = vector.shape_cast %327 : vector<1x1x32xf32> to vector<1x32xf32>
    %c3_247 = arith.constant 3 : index
    %c0_248 = arith.constant 0 : index
    %c0_249 = arith.constant 0 : index
    %329 = vector.load %arg8[%c3_247, %c0_248, %c0_249] : memref<4x32x512xf32, #tpu.memory_space<vmem>>, vector<1x32x512xf32>
    %330 = vector.shape_cast %329 : vector<1x32x512xf32> to vector<32x512xf32>
    %cst_250 = arith.constant dense<0.000000e+00> : vector<1x512xf32>
    %331 = tpu.matmul %328, %330, %cst_250 {dimension_numbers = #tpu.dot_dimension_numbers<[1], [0], [0], [1], [0, 0, 1, 1], [], []>} : vector<1x32xf32>, vector<32x512xf32>, vector<1x512xf32> -> vector<1x512xf32>
    %332 = arith.addf %326, %331 : vector<1x512xf32>
    %cst_251 = arith.constant 0.000000e+00 : f32
    %333 = vector.broadcast %cst_251 : f32 to vector<1x512xf32>
    %334 = arith.maximumf %332, %333 : vector<1x512xf32>
    %c0_252 = arith.constant 0 : index
    %c0_253 = arith.constant 0 : index
    %335 = vector.load %arg10[%c0_252, %c0_253] : memref<512x6xf32, #tpu.memory_space<vmem>>, vector<512x6xf32>
    %cst_254 = arith.constant dense<0.000000e+00> : vector<1x6xf32>
    %336 = tpu.matmul %334, %335, %cst_254 {dimension_numbers = #tpu.dot_dimension_numbers<[1], [0], [0], [1], [0, 0, 1, 1], [], []>} : vector<1x512xf32>, vector<512x6xf32>, vector<1x6xf32> -> vector<1x6xf32>
    %c0_255 = arith.constant 0 : index
    %c0_256 = arith.constant 0 : index
    %337 = vector.load %arg11[%c0_255, %c0_256] : memref<1x6xf32, #tpu.memory_space<vmem>>, vector<1x6xf32>
    %338 = arith.addf %336, %337 : vector<1x6xf32>
    %c0_257 = arith.constant 0 : index
    %c0_258 = arith.constant 0 : index
    %c0_259 = arith.constant 0 : index
    %339 = vector.load %arg12[%c0_257, %c0_258, %c0_259] : memref<1x1x6xf32, #tpu.memory_space<vmem>>, vector<1x1x6xf32>
    %340 = vector.shape_cast %339 : vector<1x1x6xf32> to vector<1x6xf32>
    %341 = vector.shape_cast %338 : vector<1x6xf32> to vector<1x1x6xf32>
    tpu.vector_store %arg12[%c0_257, %c0_258, %c0_259], %341 {strides = array<i32>} : memref<1x1x6xf32, #tpu.memory_space<vmem>>, vector<1x1x6xf32>,
    return
  }
  func.func @transform_0(%arg0: i32) -> (i32, i32, i32, i32) {
    %c0_i32 = arith.constant 0 : i32
    %c0_i32_0 = arith.constant 0 : i32
    %c0_i32_1 = arith.constant 0 : i32
    %c0_i32_2 = arith.constant 0 : i32
    return %arg0, %c0_i32, %c0_i32_0, %c0_i32_1 : i32, i32, i32, i32
  }
  func.func @transform_1(%arg0: i32) -> (i32, i32, i32) {
    %c0_i32 = arith.constant 0 : i32
    %c0_i32_0 = arith.constant 0 : i32
    %c0_i32_1 = arith.constant 0 : i32
    %c0_i32_2 = arith.constant 0 : i32
    return %c0_i32, %c0_i32_0, %c0_i32_1 : i32, i32, i32
  }
  func.func @transform_2(%arg0: i32) -> (i32, i32) {
    %c0_i32 = arith.constant 0 : i32
    %c0_i32_0 = arith.constant 0 : i32
    %c0_i32_1 = arith.constant 0 : i32
    return %c0_i32, %c0_i32_0 : i32, i32
  }
  func.func @transform_3(%arg0: i32) -> (i32, i32, i32) {
    %c0_i32 = arith.constant 0 : i32
    %c0_i32_0 = arith.constant 0 : i32
    %c0_i32_1 = arith.constant 0 : i32
    %c0_i32_2 = arith.constant 0 : i32
    return %c0_i32, %c0_i32_0, %c0_i32_1 : i32, i32, i32
  }
  func.func @transform_4(%arg0: i32) -> (i32, i32) {
    %c0_i32 = arith.constant 0 : i32
    %c0_i32_0 = arith.constant 0 : i32
    %c0_i32_1 = arith.constant 0 : i32
    return %c0_i32, %c0_i32_0 : i32, i32
  }
  func.func @transform_5(%arg0: i32) -> (i32, i32, i32) {
    %c0_i32 = arith.constant 0 : i32
    %c0_i32_0 = arith.constant 0 : i32
    %c0_i32_1 = arith.constant 0 : i32
    %c0_i32_2 = arith.constant 0 : i32
    return %c0_i32, %c0_i32_0, %c0_i32_1 : i32, i32, i32
  }
  func.func @transform_6(%arg0: i32) -> (i32, i32) {
    %c0_i32 = arith.constant 0 : i32
    %c0_i32_0 = arith.constant 0 : i32
    %c0_i32_1 = arith.constant 0 : i32
    return %c0_i32, %c0_i32_0 : i32, i32
  }
  func.func @transform_7(%arg0: i32) -> (i32, i32, i32) {
    %c0_i32 = arith.constant 0 : i32
    %c0_i32_0 = arith.constant 0 : i32
    %c0_i32_1 = arith.constant 0 : i32
    %c0_i32_2 = arith.constant 0 : i32
    return %c0_i32, %c0_i32_0, %c0_i32_1 : i32, i32, i32
  }
  func.func @transform_8(%arg0: i32) -> (i32, i32) {
    %c0_i32 = arith.constant 0 : i32
    %c0_i32_0 = arith.constant 0 : i32
    %c0_i32_1 = arith.constant 0 : i32
    return %c0_i32, %c0_i32_0 : i32, i32
  }
  func.func @transform_9(%arg0: i32) -> (i32, i32) {
    %c0_i32 = arith.constant 0 : i32
    %c0_i32_0 = arith.constant 0 : i32
    %c0_i32_1 = arith.constant 0 : i32
    return %c0_i32, %c0_i32_0 : i32, i32
  }
  func.func @transform_10(%arg0: i32) -> (i32, i32) {
    %c0_i32 = arith.constant 0 : i32
    %c0_i32_0 = arith.constant 0 : i32
    %c0_i32_1 = arith.constant 0 : i32
    return %c0_i32, %c0_i32_0 : i32, i32
  }
  func.func @transform_11(%arg0: i32) -> (i32, i32, i32) {
    %c0_i32 = arith.constant 0 : i32
    %c0_i32_0 = arith.constant 0 : i32
    %c0_i32_1 = arith.constant 0 : i32
    return %arg0, %c0_i32, %c0_i32_0 : i32, i32, i32
  }
}

</mosaic_0001>

<llo_original>
// kernel: policy_net_forward.1
$region0: #{policy_net_forward.1}
  #allocation0 [shape = 'u32[]', space=smem, size = 0x4, offset = 0x4, fixed_abs, tag = 'smem constant byte address 0x4 - core index']
  #allocation1 [shape = 'u32[72,128]{1,0:T(1,128)}', space=vmem, size = 0x9000, scoped, tag = 'internal scratch']
  #allocation2 [shape = 'f32[10,10,8]{2,1,0:T(8,128)}', space=vmem, size = 0x14000, scoped, tag = 'scratch operand']
  #allocation3 [shape = 'f32[6,6,16]{2,1,0:T(8,128)}', space=vmem, size = 0x6000, scoped, tag = 'scratch operand']
  %s0 = inlined_call_operand.vmem [shape: f32[2,18,18,32], index: 0, kind: input, shape index: {}]
  %s1 = inlined_call_operand.vmem [shape: f32[25,8,8], index: 1, kind: input, shape index: {}]
  %s2 = inlined_call_operand.vmem [shape: f32[1,8], index: 2, kind: input, shape index: {}]
  %s3 = inlined_call_operand.vmem [shape: f32[9,8,16], index: 3, kind: input, shape index: {}]
  %s4 = inlined_call_operand.vmem [shape: f32[1,16], index: 4, kind: input, shape index: {}]
  %s5 = inlined_call_operand.vmem [shape: f32[9,16,32], index: 5, kind: input, shape index: {}]
  %s6 = inlined_call_operand.vmem [shape: f32[1,32], index: 6, kind: input, shape index: {}]
  %s7 = inlined_call_operand.vmem [shape: f32[4,32,512], index: 7, kind: input, shape index: {}]
  %s8 = inlined_call_operand.vmem [shape: f32[1,512], index: 8, kind: input, shape index: {}]
  %s9 = inlined_call_operand.vmem [shape: f32[512,6], index: 9, kind: input, shape index: {}]
  %s10 = inlined_call_operand.vmem [shape: f32[1,6], index: 10, kind: input, shape index: {}]
  %s11 = inlined_call_operand.hbm [shape: f32[2,1,6], index: 11, kind: output, shape index: {}]
  %s12 = sld [smem:[#allocation0]]
  $region77: #{policy_net_forward.1} parent=0
    _
  %s14 = ssub.s32 1, %s12
  %s15 = scalar_select 0, %s14, %s12
  $region1: #{policy_net_forward.1} parent=0
    #allocation4 [shape = 'u8[1024]{0}', space=vmem, size = 0x400, scoped, tag = 'output window, operand 0']
    #allocation5 [shape = 's32[2]{0}', space=sflag, size = 0x8, scoped, tag = 'scoped memory for policy_net_forward.1']
    %16 = vsyncpa [#allocation5], 0
    %s17 = scalar_lea.sflag [#allocation5], 1
    %18 = vsyncpa %s17, 0
    loop: start=0, step=1, limit=4
    $region2: #{policy_net_forward.1} parent=1 // loop_pre_header
      _
    $region3: #{policy_net_forward.1} parent=1 // loop_header
      %s20 = sphi 0, %s24
      %p21 = scmp.ge.s32.totalorder %s20, 4
      %s30 = sphi 0, %s32
      %s33 = sphi 0, %s30
      %s34 = sphi 0, %s33
      %s50 = sphi 0, %s34
      %s54 = sphi 0, %s54
      %s56 = sphi 0, %s54
      %s57 = sphi 0, %s56
      %s71 = sphi 0, %s57
      %s75 = sphi 0, %s75
      %s77 = sphi 0, %s75
      %s78 = sphi 0, %s77
      %s92 = sphi 0, %s78
      %s96 = sphi 0, %s96
      %s98 = sphi 0, %s96
      %s99 = sphi 0, %s98
      %s113 = sphi 0, %s99
      %s117 = sphi 0, %s117
      %s119 = sphi 0, %s117
      %s120 = sphi 0, %s119
      %s134 = sphi 0, %s120
      %s138 = sphi 0, %s138
      %s140 = sphi 0, %s138
      %s141 = sphi 0, %s140
      %s155 = sphi 0, %s141
      %s159 = sphi 0, %s159
      %s161 = sphi 0, %s159
      %s162 = sphi 0, %s161
      %s176 = sphi 0, %s162
      %s180 = sphi 0, %s180
      %s182 = sphi 0, %s180
      %s183 = sphi 0, %s182
      %s197 = sphi 0, %s183
      %s201 = sphi 0, %s201
      %s203 = sphi 0, %s201
      %s204 = sphi 0, %s203
      %s218 = sphi 0, %s204
      %s222 = sphi 0, %s222
      %s224 = sphi 0, %s222
      %s225 = sphi 0, %s224
      %s239 = sphi 0, %s225
      %s243 = sphi 0, %s243
      %s245 = sphi 0, %s243
      %s246 = sphi 0, %s245
      %s260 = sphi 0, %s246
      %s266 = sphi 0, %s268
      %s269 = sphi 0, %s266
      %s270 = sphi 0, %s269
      %s286 = sphi 0, %s270
    $region4: #{policy_net_forward.1} parent=1 // loop_header_branch
      %23 = sbr.rel (%p21) target = $region8
    $region5: #{policy_net_forward.1} parent=1 // loop_body
      %s25 = ssub.s32 %s20, 1
      %s26 = ssub.s32 %s20, 2
      %s27 = sadd.s32 %s20, 1
      %s28 = ssub.s32 %s20, %s27
      %p29 = scmp.eq.s32.totalorder %s28, 0
      %s31 = sadd.s32 %s30, 1
      %s32 = scalar_select %p29, %s30, %s31
      %p35 = pneg %p29
      %p36 = scmp.eq.s32.totalorder %s20, 1
      %p37 = por %p35, %p36
      %p38 = scmp.ne.s32.totalorder %s30, %s33
      %p39 = scmp.eq.s32.totalorder %s20, 0
      %p40 = por %p38, %p39
      %p41 = scmp.ne.s32.totalorder %s30, %s33
      %p42 = scmp.eq.s32.totalorder %s25, 1
      %p43 = por %p41, %p42
      %p44 = scmp.ne.s32.totalorder %s33, %s34
      %p45 = scmp.eq.s32.totalorder %s25, 0
      %p46 = por %p44, %p45
      %p47 = scmp.ne.s32.totalorder %s33, %s34
      %p48 = scmp.eq.s32.totalorder %s26, 1
      %p49 = por %p47, %p48
      %p51 = scmp.ne.s32.totalorder %s34, %s50
      %p52 = scmp.eq.s32.totalorder %s26, 0
      %p53 = por %p51, %p52
      %s55 = sadd.s32 %s54, 1
      %p58 = scmp.eq.s32.totalorder %s20, 1
      %p59 = scmp.ne.s32.totalorder %s54, %s56
      %p60 = scmp.eq.s32.totalorder %s20, 0
      %p61 = por %p59, %p60
      %p62 = scmp.ne.s32.totalorder %s54, %s56
      %p63 = scmp.eq.s32.totalorder %s25, 1
      %p64 = por %p62, %p63
      %p65 = scmp.ne.s32.totalorder %s56, %s57
      %p66 = scmp.eq.s32.totalorder %s25, 0
      %p67 = por %p65, %p66
      %p68 = scmp.ne.s32.totalorder %s56, %s57
      %p69 = scmp.eq.s32.totalorder %s26, 1
      %p70 = por %p68, %p69
      %p72 = scmp.ne.s32.totalorder %s57, %s71
      %p73 = scmp.eq.s32.totalorder %s26, 0
      %p74 = por %p72, %p73
      %s76 = sadd.s32 %s75, 1
      %p79 = scmp.eq.s32.totalorder %s20, 1
      %p80 = scmp.ne.s32.totalorder %s75, %s77
      %p81 = scmp.eq.s32.totalorder %s20, 0
      %p82 = por %p80, %p81
      %p83 = scmp.ne.s32.totalorder %s75, %s77
      %p84 = scmp.eq.s32.totalorder %s25, 1
      %p85 = por %p83, %p84
      %p86 = scmp.ne.s32.totalorder %s77, %s78
      %p87 = scmp.eq.s32.totalorder %s25, 0
      %p88 = por %p86, %p87
      %p89 = scmp.ne.s32.totalorder %s77, %s78
      %p90 = scmp.eq.s32.totalorder %s26, 1
      %p91 = por %p89, %p90
      %p93 = scmp.ne.s32.totalorder %s78, %s92
      %p94 = scmp.eq.s32.totalorder %s26, 0
      %p95 = por %p93, %p94
      %s97 = sadd.s32 %s96, 1
      %p100 = scmp.eq.s32.totalorder %s20, 1
      %p101 = scmp.ne.s32.totalorder %s96, %s98
      %p102 = scmp.eq.s32.totalorder %s20, 0
      %p103 = por %p101, %p102
      %p104 = scmp.ne.s32.totalorder %s96, %s98
      %p105 = scmp.eq.s32.totalorder %s25, 1
      %p106 = por %p104, %p105
      %p107 = scmp.ne.s32.totalorder %s98, %s99
      %p108 = scmp.eq.s32.totalorder %s25, 0
      %p109 = por %p107, %p108
      %p110 = scmp.ne.s32.totalorder %s98, %s99
      %p111 = scmp.eq.s32.totalorder %s26, 1
      %p112 = por %p110, %p111
      %p114 = scmp.ne.s32.totalorder %s99, %s113
      %p115 = scmp.eq.s32.totalorder %s26, 0
      %p116 = por %p114, %p115
      %s118 = sadd.s32 %s117, 1
      %p121 = scmp.eq.s32.totalorder %s20, 1
      %p122 = scmp.ne.s32.totalorder %s117, %s119
      %p123 = scmp.eq.s32.totalorder %s20, 0
      %p124 = por %p122, %p123
      %p125 = scmp.ne.s32.totalorder %s117, %s119
      %p126 = scmp.eq.s32.totalorder %s25, 1
      %p127 = por %p125, %p126
      %p128 = scmp.ne.s32.totalorder %s119, %s120
      %p129 = scmp.eq.s32.totalorder %s25, 0
      %p130 = por %p128, %p129
      %p131 = scmp.ne.s32.totalorder %s119, %s120
      %p132 = scmp.eq.s32.totalorder %s26, 1
      %p133 = por %p131, %p132
      %p135 = scmp.ne.s32.totalorder %s120, %s134
      %p136 = scmp.eq.s32.totalorder %s26, 0
      %p137 = por %p135, %p136
      %s139 = sadd.s32 %s138, 1
      %p142 = scmp.eq.s32.totalorder %s20, 1
      %p143 = scmp.ne.s32.totalorder %s138, %s140
      %p144 = scmp.eq.s32.totalorder %s20, 0
      %p145 = por %p143, %p144
      %p146 = scmp.ne.s32.totalorder %s138, %s140
      %p147 = scmp.eq.s32.totalorder %s25, 1
      %p148 = por %p146, %p147
      %p149 = scmp.ne.s32.totalorder %s140, %s141
      %p150 = scmp.eq.s32.totalorder %s25, 0
      %p151 = por %p149, %p150
      %p152 = scmp.ne.s32.totalorder %s140, %s141
      %p153 = scmp.eq.s32.totalorder %s26, 1
      %p154 = por %p152, %p153
      %p156 = scmp.ne.s32.totalorder %s141, %s155
      %p157 = scmp.eq.s32.totalorder %s26, 0
      %p158 = por %p156, %p157
      %s160 = sadd.s32 %s159, 1
      %p163 = scmp.eq.s32.totalorder %s20, 1
      %p164 = scmp.ne.s32.totalorder %s159, %s161
      %p165 = scmp.eq.s32.totalorder %s20, 0
      %p166 = por %p164, %p165
      %p167 = scmp.ne.s32.totalorder %s159, %s161
      %p168 = scmp.eq.s32.totalorder %s25, 1
      %p169 = por %p167, %p168
      %p170 = scmp.ne.s32.totalorder %s161, %s162
      %p171 = scmp.eq.s32.totalorder %s25, 0
      %p172 = por %p170, %p171
      %p173 = scmp.ne.s32.totalorder %s161, %s162
      %p174 = scmp.eq.s32.totalorder %s26, 1
      %p175 = por %p173, %p174
      %p177 = scmp.ne.s32.totalorder %s162, %s176
      %p178 = scmp.eq.s32.totalorder %s26, 0
      %p179 = por %p177, %p178
      %s181 = sadd.s32 %s180, 1
      %p184 = scmp.eq.s32.totalorder %s20, 1
      %p185 = scmp.ne.s32.totalorder %s180, %s182
      %p186 = scmp.eq.s32.totalorder %s20, 0
      %p187 = por %p185, %p186
      %p188 = scmp.ne.s32.totalorder %s180, %s182
      %p189 = scmp.eq.s32.totalorder %s25, 1
      %p190 = por %p188, %p189
      %p191 = scmp.ne.s32.totalorder %s182, %s183
      %p192 = scmp.eq.s32.totalorder %s25, 0
      %p193 = por %p191, %p192
      %p194 = scmp.ne.s32.totalorder %s182, %s183
      %p195 = scmp.eq.s32.totalorder %s26, 1
      %p196 = por %p194, %p195
      %p198 = scmp.ne.s32.totalorder %s183, %s197
      %p199 = scmp.eq.s32.totalorder %s26, 0
      %p200 = por %p198, %p199
      %s202 = sadd.s32 %s201, 1
      %p205 = scmp.eq.s32.totalorder %s20, 1
      %p206 = scmp.ne.s32.totalorder %s201, %s203
      %p207 = scmp.eq.s32.totalorder %s20, 0
      %p208 = por %p206, %p207
      %p209 = scmp.ne.s32.totalorder %s201, %s203
      %p210 = scmp.eq.s32.totalorder %s25, 1
      %p211 = por %p209, %p210
      %p212 = scmp.ne.s32.totalorder %s203, %s204
      %p213 = scmp.eq.s32.totalorder %s25, 0
      %p214 = por %p212, %p213
      %p215 = scmp.ne.s32.totalorder %s203, %s204
      %p216 = scmp.eq.s32.totalorder %s26, 1
      %p217 = por %p215, %p216
      %p219 = scmp.ne.s32.totalorder %s204, %s218
      %p220 = scmp.eq.s32.totalorder %s26, 0
      %p221 = por %p219, %p220
      %s223 = sadd.s32 %s222, 1
      %p226 = scmp.eq.s32.totalorder %s20, 1
      %p227 = scmp.ne.s32.totalorder %s222, %s224
      %p228 = scmp.eq.s32.totalorder %s20, 0
      %p229 = por %p227, %p228
      %p230 = scmp.ne.s32.totalorder %s222, %s224
      %p231 = scmp.eq.s32.totalorder %s25, 1
      %p232 = por %p230, %p231
      %p233 = scmp.ne.s32.totalorder %s224, %s225
      %p234 = scmp.eq.s32.totalorder %s25, 0
      %p235 = por %p233, %p234
      %p236 = scmp.ne.s32.totalorder %s224, %s225
      %p237 = scmp.eq.s32.totalorder %s26, 1
      %p238 = por %p236, %p237
      %p240 = scmp.ne.s32.totalorder %s225, %s239
      %p241 = scmp.eq.s32.totalorder %s26, 0
      %p242 = por %p240, %p241
      %s244 = sadd.s32 %s243, 1
      %p247 = scmp.eq.s32.totalorder %s20, 1
      %p248 = scmp.ne.s32.totalorder %s243, %s245
      %p249 = scmp.eq.s32.totalorder %s20, 0
      %p250 = por %p248, %p249
      %p251 = scmp.ne.s32.totalorder %s243, %s245
      %p252 = scmp.eq.s32.totalorder %s25, 1
      %p253 = por %p251, %p252
      %p254 = scmp.ne.s32.totalorder %s245, %s246
      %p255 = scmp.eq.s32.totalorder %s25, 0
      %p256 = por %p254, %p255
      %p257 = scmp.ne.s32.totalorder %s245, %s246
      %p258 = scmp.eq.s32.totalorder %s26, 1
      %p259 = por %p257, %p258
      %p261 = scmp.ne.s32.totalorder %s246, %s260
      %p262 = scmp.eq.s32.totalorder %s26, 0
      %p263 = por %p261, %p262
      %s264 = ssub.s32 %s20, %s27
      %p265 = scmp.eq.s32.totalorder %s264, 0
      %s267 = sadd.s32 %s266, 1
      %s268 = scalar_select %p265, %s266, %s267
      %p271 = pneg %p265
      %p272 = scmp.eq.s32.totalorder %s20, 1
      %p273 = por %p271, %p272
      %p274 = scmp.ne.s32.totalorder %s266, %s269
      %p275 = scmp.eq.s32.totalorder %s20, 0
      %p276 = por %p274, %p275
      %p277 = scmp.ne.s32.totalorder %s266, %s269
      %p278 = scmp.eq.s32.totalorder %s25, 1
      %p279 = por %p277, %p278
      %p280 = scmp.ne.s32.totalorder %s269, %s270
      %p281 = scmp.eq.s32.totalorder %s25, 0
      %p282 = por %p280, %p281
      %p283 = scmp.ne.s32.totalorder %s269, %s270
      %p284 = scmp.eq.s32.totalorder %s26, 1
      %p285 = por %p283, %p284
      %p287 = scmp.ne.s32.totalorder %s270, %s286
      %p288 = scmp.eq.s32.totalorder %s26, 0
      %p289 = por %p287, %p288
      %p290 = scmp.le.s32.totalorder 1, %s20
      %p291 = scmp.lt.s32.totalorder %s20, 3
      %p292 = pnand %p290, %p291
      %p293 = pneg %p292
      // Predicated region
      $region9: #{policy_net_forward.1} parent=5 // pred_check
        _
      $region10: #{policy_net_forward.1} parent=5 // pred_check_branch
        %295 = sbr.rel (%p292) target = $region12
      $region11: #{policy_net_forward.1} parent=5 // pred_region
        %s296 = ssub.s32 %s20, 1
        // Predicated region
        $region13: #{policy_net_forward.1} parent=11 // pred_check
          %p297 = pneg %p67
        $region14: #{policy_net_forward.1} parent=11 // pred_check_branch
          %299 = sbr.rel (%p297) target = $region16
        $region15: #{policy_net_forward.1} parent=11 // pred_region
          _
        $region16: #{policy_net_forward.1} parent=11 // pred_fallthru
          _
        // Predicated region
        $region17: #{policy_net_forward.1} parent=11 // pred_check
          %p300 = pneg %p88
        $region18: #{policy_net_forward.1} parent=11 // pred_check_branch
          %302 = sbr.rel (%p300) target = $region20
        $region19: #{policy_net_forward.1} parent=11 // pred_region
          _
        $region20: #{policy_net_forward.1} parent=11 // pred_fallthru
          _
        // Predicated region
        $region21: #{policy_net_forward.1} parent=11 // pred_check
          %p303 = pneg %p109
        $region22: #{policy_net_forward.1} parent=11 // pred_check_branch
          %305 = sbr.rel (%p303) target = $region24
        $region23: #{policy_net_forward.1} parent=11 // pred_region
          _
        $region24: #{policy_net_forward.1} parent=11 // pred_fallthru
          _
        // Predicated region
        $region25: #{policy_net_forward.1} parent=11 // pred_check
          %p306 = pneg %p130
        $region26: #{policy_net_forward.1} parent=11 // pred_check_branch
          %308 = sbr.rel (%p306) target = $region28
        $region27: #{policy_net_forward.1} parent=11 // pred_region
          _
        $region28: #{policy_net_forward.1} parent=11 // pred_fallthru
          _
        // Predicated region
        $region29: #{policy_net_forward.1} parent=11 // pred_check
          %p309 = pneg %p151
        $region30: #{policy_net_forward.1} parent=11 // pred_check_branch
          %311 = sbr.rel (%p309) target = $region32
        $region31: #{policy_net_forward.1} parent=11 // pred_region
          _
        $region32: #{policy_net_forward.1} parent=11 // pred_fallthru
          _
        // Predicated region
        $region33: #{policy_net_forward.1} parent=11 // pred_check
          %p312 = pneg %p172
        $region34: #{policy_net_forward.1} parent=11 // pred_check_branch
          %314 = sbr.rel (%p312) target = $region36
        $region35: #{policy_net_forward.1} parent=11 // pred_region
          _
        $region36: #{policy_net_forward.1} parent=11 // pred_fallthru
          _
        // Predicated region
        $region37: #{policy_net_forward.1} parent=11 // pred_check
          %p315 = pneg %p193
        $region38: #{policy_net_forward.1} parent=11 // pred_check_branch
          %317 = sbr.rel (%p315) target = $region40
        $region39: #{policy_net_forward.1} parent=11 // pred_region
          _
        $region40: #{policy_net_forward.1} parent=11 // pred_fallthru
          _
        // Predicated region
        $region41: #{policy_net_forward.1} parent=11 // pred_check
          %p318 = pneg %p214
        $region42: #{policy_net_forward.1} parent=11 // pred_check_branch
          %320 = sbr.rel (%p318) target = $region44
        $region43: #{policy_net_forward.1} parent=11 // pred_region
          _
        $region44: #{policy_net_forward.1} parent=11 // pred_fallthru
          _
        // Predicated region
        $region45: #{policy_net_forward.1} parent=11 // pred_check
          %p321 = pneg %p235
        $region46: #{policy_net_forward.1} parent=11 // pred_check_branch
          %323 = sbr.rel (%p321) target = $region48
        $region47: #{policy_net_forward.1} parent=11 // pred_region
          _
        $region48: #{policy_net_forward.1} parent=11 // pred_fallthru
          _
        // Predicated region
        $region49: #{policy_net_forward.1} parent=11 // pred_check
          %p324 = pneg %p256
        $region50: #{policy_net_forward.1} parent=11 // pred_check_branch
          %326 = sbr.rel (%p324) target = $region52
        $region51: #{policy_net_forward.1} parent=11 // pred_region
          _
        $region52: #{policy_net_forward.1} parent=11 // pred_fallthru
          _
      $region12: #{policy_net_forward.1} parent=5 // pred_fallthru
        _
      %p327 = scmp.lt.s32.totalorder %s20, 2
      // Predicated region
      $region53: #{policy_net_forward.1} parent=5 // pred_check
        %p328 = pneg %p327
      $region54: #{policy_net_forward.1} parent=5 // pred_check_branch
        %330 = sbr.rel (%p328) target = $region56
      $region55: #{policy_net_forward.1} parent=5 // pred_region
        // Predicated region
        $region57: #{policy_net_forward.1} parent=55 // pred_check
          %p331 = pneg %p40
        $region58: #{policy_net_forward.1} parent=55 // pred_check_branch
          %333 = sbr.rel (%p331) target = $region60
        $region59: #{policy_net_forward.1} parent=55 // pred_region
          %p334 = scmp.lt.s32.totalorder %s20, 1
          %s335 = scalar_select %p334, %s20, 1
          %s336 = smul.addr %s335, 54
          %s337 = smul.addr %s336, 8
          %s338 = scalar_lea.vmem %s0, %s337
        $region60: #{policy_net_forward.1} parent=55 // pred_fallthru
          _
      $region56: #{policy_net_forward.1} parent=5 // pred_fallthru
        _
      %p339 = scmp.le.s32.totalorder 1, %s20
      %p340 = scmp.lt.s32.totalorder %s20, 3
      %p341 = pnand %p339, %p340
      %p342 = pneg %p341
      // Predicated region
      $region61: #{policy_net_forward.1} parent=5 // pred_check
        _
      $region62: #{policy_net_forward.1} parent=5 // pred_check_branch
        %344 = sbr.rel (%p341) target = $region64
      $region63: #{policy_net_forward.1} parent=5 // pred_region
        %s345 = ssub.s32 %s20, 1
        %p346 = scmp.lt.s32.totalorder %s25, 1
        %s347 = scalar_select %p346, %s25, 1
        %s348 = smul.addr %s347, 54
        %s349 = smul.addr %s348, 8
        %s350 = scalar_lea.vmem %s0, %s349
        %p351 = pneg %p46
        %p352 = pneg %p43
        %p353 = pneg %p67
        %p354 = pneg %p64
        %p355 = pneg %p88
        %p356 = pneg %p85
        %p357 = pneg %p109
        %p358 = pneg %p106
        %p359 = pneg %p130
        %p360 = pneg %p127
        %p361 = pneg %p151
        %p362 = pneg %p148
        %p363 = pneg %p172
        %p364 = pneg %p169
        %p365 = pneg %p193
        %p366 = pneg %p190
        %p367 = pneg %p214
        %p368 = pneg %p211
        %p369 = pneg %p235
        %p370 = pneg %p232
        %p371 = pneg %p256
        %p372 = pneg %p253
        %p373 = pneg %p282
        %p374 = pneg %p279
        %s375 = sand.u32 %s269, 1
        %s376 = scalar_lea.sflag [#allocation5], %s375
        %s377 = sand.u32 %s269, 1
        %s378 = scalar_lea.vmem [#allocation4], %s377
        %p379 = scmp.lt.s32.totalorder %s25, 1
        %s380 = scalar_select %p379, %s25, 1
        %s381 = smul.addr %s380, 54
        %s382 = smul.addr %s381, 8
        %s383 = scalar_lea.vmem %s0, %s382
        %v384 = vld [vmem:[%s383] sm:$0xff]
        %v385 = vld [vmem:[%s383 + $0x8] sm:$0xff]
        %v386 = vld [vmem:[%s383 + $0x10] sm:$0x3]
        %v387 = vld [vmem:[%s383 + $0x18] sm:$0xff]
        %v388 = vld [vmem:[%s383 + $0x20] sm:$0xff]
        %v389 = vld [vmem:[%s383 + $0x28] sm:$0x3]
        %v390 = vld [vmem:[%s383 + $0x30] sm:$0xff]
        %v391 = vld [vmem:[%s383 + $0x38] sm:$0xff]
        %v392 = vld [vmem:[%s383 + $0x40] sm:$0x3]
        %v393 = vld [vmem:[%s383 + $0x48] sm:$0xff]
        %v394 = vld [vmem:[%s383 + $0x50] sm:$0xff]
        %v395 = vld [vmem:[%s383 + $0x58] sm:$0x3]
        %v396 = vld [vmem:[%s383 + $0x60] sm:$0xff]
        %v397 = vld [vmem:[%s383 + $0x68] sm:$0xff]
        %v398 = vld [vmem:[%s383 + $0x70] sm:$0x3]
        %v399 = vld [vmem:[%s383 + $0x78] sm:$0xff]
        %v400 = vld [vmem:[%s383 + $0x80] sm:$0xff]
        %v401 = vld [vmem:[%s383 + $0x88] sm:$0x3]
        %v402 = vld [vmem:[%s383 + $0x90] sm:$0xff]
        %v403 = vld [vmem:[%s383 + $0x98] sm:$0xff]
        %v404 = vld [vmem:[%s383 + $0xa0] sm:$0x3]
        %v405 = vld [vmem:[%s383 + $0xa8] sm:$0xff]
        %v406 = vld [vmem:[%s383 + $0xb0] sm:$0xff]
        %v407 = vld [vmem:[%s383 + $0xb8] sm:$0x3]
        %v408 = vld [vmem:[%s383 + $0xc0] sm:$0xff]
        %v409 = vld [vmem:[%s383 + $0xc8] sm:$0xff]
        %v410 = vld [vmem:[%s383 + $0xd0] sm:$0x3]
        %v411 = vld [vmem:[%s383 + $0xd8] sm:$0xff]
        %v412 = vld [vmem:[%s383 + $0xe0] sm:$0xff]
        %v413 = vld [vmem:[%s383 + $0xe8] sm:$0x3]
        %v414 = vld [vmem:[%s383 + $0xf0] sm:$0xff]
        %v415 = vld [vmem:[%s383 + $0xf8] sm:$0xff]
        %v416 = vld [vmem:[%s383 + $0x100] sm:$0x3]
        %v417 = vld [vmem:[%s383 + $0x108] sm:$0xff]
        %v418 = vld [vmem:[%s383 + $0x110] sm:$0xff]
        %v419 = vld [vmem:[%s383 + $0x118] sm:$0x3]
        %v420 = vld [vmem:[%s383 + $0x120] sm:$0xff]
        %v421 = vld [vmem:[%s383 + $0x128] sm:$0xff]
        %v422 = vld [vmem:[%s383 + $0x130] sm:$0x3]
        %v423 = vld [vmem:[%s383 + $0x138] sm:$0xff]
        %v424 = vld [vmem:[%s383 + $0x140] sm:$0xff]
        %v425 = vld [vmem:[%s383 + $0x148] sm:$0x3]
        %v426 = vld [vmem:[%s383 + $0x150] sm:$0xff]
        %v427 = vld [vmem:[%s383 + $0x158] sm:$0xff]
        %v428 = vld [vmem:[%s383 + $0x160] sm:$0x3]
        %v429 = vld [vmem:[%s383 + $0x168] sm:$0xff]
        %v430 = vld [vmem:[%s383 + $0x170] sm:$0xff]
        %v431 = vld [vmem:[%s383 + $0x178] sm:$0x3]
        %v432 = vld [vmem:[%s383 + $0x180] sm:$0xff]
        %v433 = vld [vmem:[%s383 + $0x188] sm:$0xff]
        %v434 = vld [vmem:[%s383 + $0x190] sm:$0x3]
        %v435 = vld [vmem:[%s383 + $0x198] sm:$0xff]
        %v436 = vld [vmem:[%s383 + $0x1a0] sm:$0xff]
        %v437 = vld [vmem:[%s383 + $0x1a8] sm:$0x3]
        %v438 = vld [vmem:[%s1] sm:$0xff]
        %s439 = scalar_lea.vmem %s1, 8
        %v440 = vld [vmem:[%s439] sm:$0xff]
        %473 = vrot.lane.b32.xlu0 %v384, 120
        %v474 = vpop.permute.xlu0 %473
        %475 = vrot.lane.b32.xlu0 %v385, 120
        %v476 = vpop.permute.xlu0 %475
        %477 = vrot.lane.b32.xlu0 %v387, 120
        %v478 = vpop.permute.xlu0 %477
        %479 = vrot.lane.b32.xlu0 %v388, 120
        %v480 = vpop.permute.xlu0 %479
        %481 = vrot.lane.b32.xlu0 %v390, 120
        %v482 = vpop.permute.xlu0 %481
        %483 = vrot.lane.b32.xlu0 %v391, 120
        %v484 = vpop.permute.xlu0 %483
        %485 = vrot.lane.b32.xlu0 %v393, 120
        %v486 = vpop.permute.xlu0 %485
        %487 = vrot.lane.b32.xlu0 %v394, 120
        %v488 = vpop.permute.xlu0 %487
        %489 = vrot.lane.b32.xlu0 %v396, 120
        %v490 = vpop.permute.xlu0 %489
        %491 = vrot.lane.b32.xlu0 %v397, 120
        %v492 = vpop.permute.xlu0 %491
        %493 = vrot.lane.b32.xlu0 %v399, 120
        %v494 = vpop.permute.xlu0 %493
        %495 = vrot.lane.b32.xlu0 %v400, 120
        %v496 = vpop.permute.xlu0 %495
        %497 = vrot.lane.b32.xlu0 %v402, 120
        %v498 = vpop.permute.xlu0 %497
        %499 = vrot.lane.b32.xlu0 %v403, 120
        %v500 = vpop.permute.xlu0 %499
        %501 = vrot.lane.b32.xlu0 %v405, 120
        %v502 = vpop.permute.xlu0 %501
        %503 = vrot.lane.b32.xlu0 %v406, 120
        %v504 = vpop.permute.xlu0 %503
        %505 = vrot.lane.b32.xlu0 %v408, 120
        %v506 = vpop.permute.xlu0 %505
        %507 = vrot.lane.b32.xlu0 %v409, 120
        %v508 = vpop.permute.xlu0 %507
        %509 = vrot.lane.b32.xlu0 %v411, 120
        %v510 = vpop.permute.xlu0 %509
        %511 = vrot.lane.b32.xlu0 %v412, 120
        %v512 = vpop.permute.xlu0 %511
        %513 = vrot.lane.b32.xlu0 %v414, 120
        %v514 = vpop.permute.xlu0 %513
        %515 = vrot.lane.b32.xlu0 %v415, 120
        %v516 = vpop.permute.xlu0 %515
        %517 = vrot.lane.b32.xlu0 %v417, 120
        %v518 = vpop.permute.xlu0 %517
        %519 = vrot.lane.b32.xlu0 %v418, 120
        %v520 = vpop.permute.xlu0 %519
        %521 = vrot.lane.b32.xlu0 %v420, 120
        %v522 = vpop.permute.xlu0 %521
        %523 = vrot.lane.b32.xlu0 %v421, 120
        %v524 = vpop.permute.xlu0 %523
        %525 = vrot.lane.b32.xlu0 %v423, 120
        %v526 = vpop.permute.xlu0 %525
        %527 = vrot.lane.b32.xlu0 %v424, 120
        %v528 = vpop.permute.xlu0 %527
        %529 = vrot.lane.b32.xlu0 %v426, 120
        %v530 = vpop.permute.xlu0 %529
        %531 = vrot.lane.b32.xlu0 %v427, 120
        %v532 = vpop.permute.xlu0 %531
        %533 = vrot.lane.b32.xlu0 %v429, 120
        %v534 = vpop.permute.xlu0 %533
        %535 = vrot.lane.b32.xlu0 %v430, 120
        %v536 = vpop.permute.xlu0 %535
        %vm537 = vcmask 64512
        %v538 = vsel %vm537, %v474, 0
        %v540 = vsel %vm537, %v476, 0
        %v542 = vsel %vm537, %v478, 0
        %v544 = vsel %vm537, %v480, 0
        %v546 = vsel %vm537, %v482, 0
        %v548 = vsel %vm537, %v484, 0
        %v550 = vsel %vm537, %v486, 0
        %v552 = vsel %vm537, %v488, 0
        %v554 = vsel %vm537, %v490, 0
        %v556 = vsel %vm537, %v492, 0
        %v558 = vsel %vm537, %v494, 0
        %v560 = vsel %vm537, %v496, 0
        %v562 = vsel %vm537, %v498, 0
        %v564 = vsel %vm537, %v500, 0
        %v566 = vsel %vm537, %v502, 0
        %v568 = vsel %vm537, %v504, 0
        %v570 = vsel %vm537, %v506, 0
        %v572 = vsel %vm537, %v508, 0
        %v574 = vsel %vm537, %v510, 0
        %v576 = vsel %vm537, %v512, 0
        %v578 = vsel %vm537, %v514, 0
        %v580 = vsel %vm537, %v516, 0
        %v582 = vsel %vm537, %v518, 0
        %v584 = vsel %vm537, %v520, 0
        %v586 = vsel %vm537, %v522, 0
        %v588 = vsel %vm537, %v524, 0
        %v590 = vsel %vm537, %v526, 0
        %v592 = vsel %vm537, %v528, 0
        %v594 = vsel %vm537, %v530, 0
        %v596 = vsel %vm537, %v532, 0
        %v598 = vsel %vm537, %v534, 0
        %v600 = vsel %vm537, %v536, 0
        %602 = vmatpush.msra.mxu0 0.0
        %603 = vmatpush.msra.mxu0 0.0
        %604 = vmatpush.msra.mxu0 0.0
        %605 = vmatpush.msra.mxu0 0.0
        %606 = vmatpush.msra.mxu0 0.0
        %607 = vmatpush.msra.mxu0 0.0
        %608 = vmatpush.msra.mxu0 0.0
        %609 = vmatpush.msra.mxu0 0.0
        %610 = vmatpush.msra.mxu0 0.0
        %611 = vmatpush.msra.mxu0 0.0
        %612 = vmatpush.msra.mxu0 0.0
        %613 = vmatpush.msra.mxu0 0.0
        %614 = vmatpush.msra.mxu0 0.0
        %615 = vmatpush.msra.mxu0 0.0
        %616 = vmatpush.msra.mxu0 0.0
        %617 = vmatpush.msra.mxu0 %v440
        %618 = vmatmul.f32.gmra.mxu0 %v538
        %v619 = vpop.f32.mrf.mxu0
        %v620 = vadd.f32 0.0, %v619
        %621 = vmatmul.f32.gmra.mxu0 %v540
        %v622 = vpop.f32.mrf.mxu0
        %v623 = vadd.f32 0.0, %v622
        %624 = vmatmul.f32.gmra.mxu0 %v542
        %v625 = vpop.f32.mrf.mxu0
        %v626 = vadd.f32 0.0, %v625
        %627 = vmatmul.f32.gmra.mxu0 %v544
        %v628 = vpop.f32.mrf.mxu0
        %v629 = vadd.f32 0.0, %v628
        %630 = vmatmul.f32.gmra.mxu0 %v546
        %v631 = vpop.f32.mrf.mxu0
        %v632 = vadd.f32 0.0, %v631
        %633 = vmatmul.f32.gmra.mxu0 %v548
        %v634 = vpop.f32.mrf.mxu0
        %v635 = vadd.f32 0.0, %v634
        %636 = vmatmul.f32.gmra.mxu0 %v550
        %v637 = vpop.f32.mrf.mxu0
        %v638 = vadd.f32 0.0, %v637
        %639 = vmatmul.f32.gmra.mxu0 %v552
        %v640 = vpop.f32.mrf.mxu0
        %v641 = vadd.f32 0.0, %v640
        %642 = vmatmul.f32.gmra.mxu0 %v554
        %v643 = vpop.f32.mrf.mxu0
        %v644 = vadd.f32 0.0, %v643
        %645 = vmatmul.f32.gmra.mxu0 %v556
        %v646 = vpop.f32.mrf.mxu0
        %v647 = vadd.f32 0.0, %v646
        %648 = vmatmul.f32.gmra.mxu0 %v558
        %v649 = vpop.f32.mrf.mxu0
        %v650 = vadd.f32 0.0, %v649
        %651 = vmatmul.f32.gmra.mxu0 %v560
        %v652 = vpop.f32.mrf.mxu0
        %v653 = vadd.f32 0.0, %v652
        %654 = vmatmul.f32.gmra.mxu0 %v562
        %v655 = vpop.f32.mrf.mxu0
        %v656 = vadd.f32 0.0, %v655
        %657 = vmatmul.f32.gmra.mxu0 %v564
        %v658 = vpop.f32.mrf.mxu0
        %v659 = vadd.f32 0.0, %v658
        %660 = vmatmul.f32.gmra.mxu0 %v566
        %v661 = vpop.f32.mrf.mxu0
        %v662 = vadd.f32 0.0, %v661
        %663 = vmatmul.f32.gmra.mxu0 %v568
        %v664 = vpop.f32.mrf.mxu0
        %v665 = vadd.f32 0.0, %v664
        %666 = vmatmul.f32.gmra.mxu0 %v570
        %v667 = vpop.f32.mrf.mxu0
        %v668 = vadd.f32 0.0, %v667
        %669 = vmatmul.f32.gmra.mxu0 %v572
        %v670 = vpop.f32.mrf.mxu0
        %v671 = vadd.f32 0.0, %v670
        %672 = vmatmul.f32.gmra.mxu0 %v574
        %v673 = vpop.f32.mrf.mxu0
        %v674 = vadd.f32 0.0, %v673
        %675 = vmatmul.f32.gmra.mxu0 %v576
        %v676 = vpop.f32.mrf.mxu0
        %v677 = vadd.f32 0.0, %v676
        %678 = vmatmul.f32.gmra.mxu0 %v578
        %v679 = vpop.f32.mrf.mxu0
        %v680 = vadd.f32 0.0, %v679
        %681 = vmatmul.f32.gmra.mxu0 %v580
        %v682 = vpop.f32.mrf.mxu0
        %v683 = vadd.f32 0.0, %v682
        %684 = vmatmul.f32.gmra.mxu0 %v582
        %v685 = vpop.f32.mrf.mxu0
        %v686 = vadd.f32 0.0, %v685
        %687 = vmatmul.f32.gmra.mxu0 %v584
        %v688 = vpop.f32.mrf.mxu0
        %v689 = vadd.f32 0.0, %v688
        %690 = vmatmul.f32.gmra.mxu0 %v586
        %v691 = vpop.f32.mrf.mxu0
        %v692 = vadd.f32 0.0, %v691
        %693 = vmatmul.f32.gmra.mxu0 %v588
        %v694 = vpop.f32.mrf.mxu0
        %v695 = vadd.f32 0.0, %v694
        %696 = vmatmul.f32.gmra.mxu0 %v590
        %v697 = vpop.f32.mrf.mxu0
        %v698 = vadd.f32 0.0, %v697
        %699 = vmatmul.f32.gmra.mxu0 %v592
        %v700 = vpop.f32.mrf.mxu0
        %v701 = vadd.f32 0.0, %v700
        %702 = vmatmul.f32.gmra.mxu0 %v594
        %v703 = vpop.f32.mrf.mxu0
        %v704 = vadd.f32 0.0, %v703
        %705 = vmatmul.f32.gmra.mxu0 %v596
        %v706 = vpop.f32.mrf.mxu0
        %v707 = vadd.f32 0.0, %v706
        %708 = vmatmul.f32.gmra.mxu0 %v598
        %v709 = vpop.f32.mrf.mxu0
        %v710 = vadd.f32 0.0, %v709
        %711 = vmatmul.f32.gmra.mxu0 %v600
        %v712 = vpop.f32.mrf.mxu0
        %v713 = vadd.f32 0.0, %v712
        %714 = vdwg.mxu0
        %v715 = vsel %vm537, %v384, 0
        %v717 = vsel %vm537, %v385, 0
        %v719 = vsel %vm537, %v387, 0
        %v721 = vsel %vm537, %v388, 0
        %v723 = vsel %vm537, %v390, 0
        %v725 = vsel %vm537, %v391, 0
        %v727 = vsel %vm537, %v393, 0
        %v729 = vsel %vm537, %v394, 0
        %v731 = vsel %vm537, %v396, 0
        %v733 = vsel %vm537, %v397, 0
        %v735 = vsel %vm537, %v399, 0
        %v737 = vsel %vm537, %v400, 0
        %v739 = vsel %vm537, %v402, 0
        %v741 = vsel %vm537, %v403, 0
        %v743 = vsel %vm537, %v405, 0
        %v745 = vsel %vm537, %v406, 0
        %v747 = vsel %vm537, %v408, 0
        %v749 = vsel %vm537, %v409, 0
        %v751 = vsel %vm537, %v411, 0
        %v753 = vsel %vm537, %v412, 0
        %v755 = vsel %vm537, %v414, 0
        %v757 = vsel %vm537, %v415, 0
        %v759 = vsel %vm537, %v417, 0
        %v761 = vsel %vm537, %v418, 0
        %v763 = vsel %vm537, %v420, 0
        %v765 = vsel %vm537, %v421, 0
        %v767 = vsel %vm537, %v423, 0
        %v769 = vsel %vm537, %v424, 0
        %v771 = vsel %vm537, %v426, 0
        %v773 = vsel %vm537, %v427, 0
        %v775 = vsel %vm537, %v429, 0
        %v777 = vsel %vm537, %v430, 0
        %779 = vmatpush.msra.mxu0 0.0
        %780 = vmatpush.msra.mxu0 0.0
        %781 = vmatpush.msra.mxu0 0.0
        %782 = vmatpush.msra.mxu0 0.0
        %783 = vmatpush.msra.mxu0 0.0
        %784 = vmatpush.msra.mxu0 0.0
        %785 = vmatpush.msra.mxu0 0.0
        %786 = vmatpush.msra.mxu0 0.0
        %787 = vmatpush.msra.mxu0 0.0
        %788 = vmatpush.msra.mxu0 0.0
        %789 = vmatpush.msra.mxu0 0.0
        %790 = vmatpush.msra.mxu0 0.0
        %791 = vmatpush.msra.mxu0 0.0
        %792 = vmatpush.msra.mxu0 0.0
        %793 = vmatpush.msra.mxu0 0.0
        %794 = vmatpush.msra.mxu0 %v438
        %795 = vmatmul.f32.gmra.mxu0 %v715
        %v796 = vpop.f32.mrf.mxu0
        %v797 = vadd.f32 %v620, %v796
        %798 = vmatmul.f32.gmra.mxu0 %v717
        %v799 = vpop.f32.mrf.mxu0
        %v800 = vadd.f32 %v623, %v799
        %801 = vmatmul.f32.gmra.mxu0 %v719
        %v802 = vpop.f32.mrf.mxu0
        %v803 = vadd.f32 %v626, %v802
        %804 = vmatmul.f32.gmra.mxu0 %v721
        %v805 = vpop.f32.mrf.mxu0
        %v806 = vadd.f32 %v629, %v805
        %807 = vmatmul.f32.gmra.mxu0 %v723
        %v808 = vpop.f32.mrf.mxu0
        %v809 = vadd.f32 %v632, %v808
        %810 = vmatmul.f32.gmra.mxu0 %v725
        %v811 = vpop.f32.mrf.mxu0
        %v812 = vadd.f32 %v635, %v811
        %813 = vmatmul.f32.gmra.mxu0 %v727
        %v814 = vpop.f32.mrf.mxu0
        %v815 = vadd.f32 %v638, %v814
        %816 = vmatmul.f32.gmra.mxu0 %v729
        %v817 = vpop.f32.mrf.mxu0
        %v818 = vadd.f32 %v641, %v817
        %819 = vmatmul.f32.gmra.mxu0 %v731
        %v820 = vpop.f32.mrf.mxu0
        %v821 = vadd.f32 %v644, %v820
        %822 = vmatmul.f32.gmra.mxu0 %v733
        %v823 = vpop.f32.mrf.mxu0
        %v824 = vadd.f32 %v647, %v823
        %825 = vmatmul.f32.gmra.mxu0 %v735
        %v826 = vpop.f32.mrf.mxu0
        %v827 = vadd.f32 %v650, %v826
        %828 = vmatmul.f32.gmra.mxu0 %v737
        %v829 = vpop.f32.mrf.mxu0
        %v830 = vadd.f32 %v653, %v829
        %831 = vmatmul.f32.gmra.mxu0 %v739
        %v832 = vpop.f32.mrf.mxu0
        %v833 = vadd.f32 %v656, %v832
        %834 = vmatmul.f32.gmra.mxu0 %v741
        %v835 = vpop.f32.mrf.mxu0
        %v836 = vadd.f32 %v659, %v835
        %837 = vmatmul.f32.gmra.mxu0 %v743
        %v838 = vpop.f32.mrf.mxu0
        %v839 = vadd.f32 %v662, %v838
        %840 = vmatmul.f32.gmra.mxu0 %v745
        %v841 = vpop.f32.mrf.mxu0
        %v842 = vadd.f32 %v665, %v841
        %843 = vmatmul.f32.gmra.mxu0 %v747
        %v844 = vpop.f32.mrf.mxu0
        %v845 = vadd.f32 %v668, %v844
        %846 = vmatmul.f32.gmra.mxu0 %v749
        %v847 = vpop.f32.mrf.mxu0
        %v848 = vadd.f32 %v671, %v847
        %849 = vmatmul.f32.gmra.mxu0 %v751
        %v850 = vpop.f32.mrf.mxu0
        %v851 = vadd.f32 %v674, %v850
        %852 = vmatmul.f32.gmra.mxu0 %v753
        %v853 = vpop.f32.mrf.mxu0
        %v854 = vadd.f32 %v677, %v853
        %855 = vmatmul.f32.gmra.mxu0 %v755
        %v856 = vpop.f32.mrf.mxu0
        %v857 = vadd.f32 %v680, %v856
        %858 = vmatmul.f32.gmra.mxu0 %v757
        %v859 = vpop.f32.mrf.mxu0
        %v860 = vadd.f32 %v683, %v859
        %861 = vmatmul.f32.gmra.mxu0 %v759
        %v862 = vpop.f32.mrf.mxu0
        %v863 = vadd.f32 %v686, %v862
        %864 = vmatmul.f32.gmra.mxu0 %v761
        %v865 = vpop.f32.mrf.mxu0
        %v866 = vadd.f32 %v689, %v865
        %867 = vmatmul.f32.gmra.mxu0 %v763
        %v868 = vpop.f32.mrf.mxu0
        %v869 = vadd.f32 %v692, %v868
        %870 = vmatmul.f32.gmra.mxu0 %v765
        %v871 = vpop.f32.mrf.mxu0
        %v872 = vadd.f32 %v695, %v871
        %873 = vmatmul.f32.gmra.mxu0 %v767
        %v874 = vpop.f32.mrf.mxu0
        %v875 = vadd.f32 %v698, %v874
        %876 = vmatmul.f32.gmra.mxu0 %v769
        %v877 = vpop.f32.mrf.mxu0
        %v878 = vadd.f32 %v701, %v877
        %879 = vmatmul.f32.gmra.mxu0 %v771
        %v880 = vpop.f32.mrf.mxu0
        %v881 = vadd.f32 %v704, %v880
        %882 = vmatmul.f32.gmra.mxu0 %v773
        %v883 = vpop.f32.mrf.mxu0
        %v884 = vadd.f32 %v707, %v883
        %885 = vmatmul.f32.gmra.mxu0 %v775
        %v886 = vpop.f32.mrf.mxu0
        %v887 = vadd.f32 %v710, %v886
        %888 = vmatmul.f32.gmra.mxu0 %v777
        %v889 = vpop.f32.mrf.mxu0
        %v890 = vadd.f32 %v713, %v889
        %891 = vdwg.mxu0
        %vm908 = vcmask 1046528
        %v909 = vrot.slane %v384, 1
        %v910 = vrot.slane %v385, 1
        %v911 = vsel %vm908, %v909, %v910
        %v912 = vrot.slane %v386, 1
        %v913 = vsel %vm908, %v910, %v912
        %v914 = vrot.slane %v387, 1
        %v915 = vrot.slane %v388, 1
        %v916 = vsel %vm908, %v914, %v915
        %v917 = vrot.slane %v389, 1
        %v918 = vsel %vm908, %v915, %v917
        %v919 = vrot.slane %v390, 1
        %v920 = vrot.slane %v391, 1
        %v921 = vsel %vm908, %v919, %v920
        %v922 = vrot.slane %v392, 1
        %v923 = vsel %vm908, %v920, %v922
        %v924 = vrot.slane %v393, 1
        %v925 = vrot.slane %v394, 1
        %v926 = vsel %vm908, %v924, %v925
        %v927 = vrot.slane %v395, 1
        %v928 = vsel %vm908, %v925, %v927
        %v929 = vrot.slane %v396, 1
        %v930 = vrot.slane %v397, 1
        %v931 = vsel %vm908, %v929, %v930
        %v932 = vrot.slane %v398, 1
        %v933 = vsel %vm908, %v930, %v932
        %v934 = vrot.slane %v399, 1
        %v935 = vrot.slane %v400, 1
        %v936 = vsel %vm908, %v934, %v935
        %v937 = vrot.slane %v401, 1
        %v938 = vsel %vm908, %v935, %v937
        %v939 = vrot.slane %v402, 1
        %v940 = vrot.slane %v403, 1
        %v941 = vsel %vm908, %v939, %v940
        %v942 = vrot.slane %v404, 1
        %v943 = vsel %vm908, %v940, %v942
        %v944 = vrot.slane %v405, 1
        %v945 = vrot.slane %v406, 1
        %v946 = vsel %vm908, %v944, %v945
        %v947 = vrot.slane %v407, 1
        %v948 = vsel %vm908, %v945, %v947
        %v949 = vrot.slane %v408, 1
        %v950 = vrot.slane %v409, 1
        %v951 = vsel %vm908, %v949, %v950
        %v952 = vrot.slane %v410, 1
        %v953 = vsel %vm908, %v950, %v952
        %v954 = vrot.slane %v411, 1
        %v955 = vrot.slane %v412, 1
        %v956 = vsel %vm908, %v954, %v955
        %v957 = vrot.slane %v413, 1
        %v958 = vsel %vm908, %v955, %v957
        %v959 = vrot.slane %v414, 1
        %v960 = vrot.slane %v415, 1
        %v961 = vsel %vm908, %v959, %v960
        %v962 = vrot.slane %v416, 1
        %v963 = vsel %vm908, %v960, %v962
        %v964 = vrot.slane %v417, 1
        %v965 = vrot.slane %v418, 1
        %v966 = vsel %vm908, %v964, %v965
        %v967 = vrot.slane %v419, 1
        %v968 = vsel %vm908, %v965, %v967
        %v969 = vrot.slane %v420, 1
        %v970 = vrot.slane %v421, 1
        %v971 = vsel %vm908, %v969, %v970
        %v972 = vrot.slane %v422, 1
        %v973 = vsel %vm908, %v970, %v972
        %v974 = vrot.slane %v423, 1
        %v975 = vrot.slane %v424, 1
        %v976 = vsel %vm908, %v974, %v975
        %v977 = vrot.slane %v425, 1
        %v978 = vsel %vm908, %v975, %v977
        %v979 = vrot.slane %v426, 1
        %v980 = vrot.slane %v427, 1
        %v981 = vsel %vm908, %v979, %v980
        %v982 = vrot.slane %v428, 1
        %v983 = vsel %vm908, %v980, %v982
        %v984 = vrot.slane %v429, 1
        %v985 = vrot.slane %v430, 1
        %v986 = vsel %vm908, %v984, %v985
        %v987 = vrot.slane %v431, 1
        %v988 = vsel %vm908, %v985, %v987
        %s989 = scalar_lea.vmem %s1, 16
        %v990 = vld [vmem:[%s989] sm:$0xff]
        %v991 = vsel %vm537, %v911, 0
        %v993 = vsel %vm537, %v913, 0
        %v995 = vsel %vm537, %v916, 0
        %v997 = vsel %vm537, %v918, 0
        %v999 = vsel %vm537, %v921, 0
        %v1001 = vsel %vm537, %v923, 0
        %v1003 = vsel %vm537, %v926, 0
        %v1005 = vsel %vm537, %v928, 0
        %v1007 = vsel %vm537, %v931, 0
        %v1009 = vsel %vm537, %v933, 0
        %v1011 = vsel %vm537, %v936, 0
        %v1013 = vsel %vm537, %v938, 0
        %v1015 = vsel %vm537, %v941, 0
        %v1017 = vsel %vm537, %v943, 0
        %v1019 = vsel %vm537, %v946, 0
        %v1021 = vsel %vm537, %v948, 0
        %v1023 = vsel %vm537, %v951, 0
        %v1025 = vsel %vm537, %v953, 0
        %v1027 = vsel %vm537, %v956, 0
        %v1029 = vsel %vm537, %v958, 0
        %v1031 = vsel %vm537, %v961, 0
        %v1033 = vsel %vm537, %v963, 0
        %v1035 = vsel %vm537, %v966, 0
        %v1037 = vsel %vm537, %v968, 0
        %v1039 = vsel %vm537, %v971, 0
        %v1041 = vsel %vm537, %v973, 0
        %v1043 = vsel %vm537, %v976, 0
        %v1045 = vsel %vm537, %v978, 0
        %v1047 = vsel %vm537, %v981, 0
        %v1049 = vsel %vm537, %v983, 0
        %v1051 = vsel %vm537, %v986, 0
        %v1053 = vsel %vm537, %v988, 0
        %1055 = vmatpush.msra.mxu0 0.0
        %1056 = vmatpush.msra.mxu0 0.0
        %1057 = vmatpush.msra.mxu0 0.0
        %1058 = vmatpush.msra.mxu0 0.0
        %1059 = vmatpush.msra.mxu0 0.0
        %1060 = vmatpush.msra.mxu0 0.0
        %1061 = vmatpush.msra.mxu0 0.0
        %1062 = vmatpush.msra.mxu0 0.0
        %1063 = vmatpush.msra.mxu0 0.0
        %1064 = vmatpush.msra.mxu0 0.0
        %1065 = vmatpush.msra.mxu0 0.0
        %1066 = vmatpush.msra.mxu0 0.0
        %1067 = vmatpush.msra.mxu0 0.0
        %1068 = vmatpush.msra.mxu0 0.0
        %1069 = vmatpush.msra.mxu0 0.0
        %1070 = vmatpush.msra.mxu0 %v990
        %1071 = vmatmul.f32.gmra.mxu0 %v991
        %v1072 = vpop.f32.mrf.mxu0
        %v1073 = vadd.f32 0.0, %v1072
        %1074 = vmatmul.f32.gmra.mxu0 %v993
        %v1075 = vpop.f32.mrf.mxu0
        %v1076 = vadd.f32 0.0, %v1075
        %1077 = vmatmul.f32.gmra.mxu0 %v995
        %v1078 = vpop.f32.mrf.mxu0
        %v1079 = vadd.f32 0.0, %v1078
        %1080 = vmatmul.f32.gmra.mxu0 %v997
        %v1081 = vpop.f32.mrf.mxu0
        %v1082 = vadd.f32 0.0, %v1081
        %1083 = vmatmul.f32.gmra.mxu0 %v999
        %v1084 = vpop.f32.mrf.mxu0
        %v1085 = vadd.f32 0.0, %v1084
        %1086 = vmatmul.f32.gmra.mxu0 %v1001
        %v1087 = vpop.f32.mrf.mxu0
        %v1088 = vadd.f32 0.0, %v1087
        %1089 = vmatmul.f32.gmra.mxu0 %v1003
        %v1090 = vpop.f32.mrf.mxu0
        %v1091 = vadd.f32 0.0, %v1090
        %1092 = vmatmul.f32.gmra.mxu0 %v1005
        %v1093 = vpop.f32.mrf.mxu0
        %v1094 = vadd.f32 0.0, %v1093
        %1095 = vmatmul.f32.gmra.mxu0 %v1007
        %v1096 = vpop.f32.mrf.mxu0
        %v1097 = vadd.f32 0.0, %v1096
        %1098 = vmatmul.f32.gmra.mxu0 %v1009
        %v1099 = vpop.f32.mrf.mxu0
        %v1100 = vadd.f32 0.0, %v1099
        %1101 = vmatmul.f32.gmra.mxu0 %v1011
        %v1102 = vpop.f32.mrf.mxu0
        %v1103 = vadd.f32 0.0, %v1102
        %1104 = vmatmul.f32.gmra.mxu0 %v1013
        %v1105 = vpop.f32.mrf.mxu0
        %v1106 = vadd.f32 0.0, %v1105
        %1107 = vmatmul.f32.gmra.mxu0 %v1015
        %v1108 = vpop.f32.mrf.mxu0
        %v1109 = vadd.f32 0.0, %v1108
        %1110 = vmatmul.f32.gmra.mxu0 %v1017
        %v1111 = vpop.f32.mrf.mxu0
        %v1112 = vadd.f32 0.0, %v1111
        %1113 = vmatmul.f32.gmra.mxu0 %v1019
        %v1114 = vpop.f32.mrf.mxu0
        %v1115 = vadd.f32 0.0, %v1114
        %1116 = vmatmul.f32.gmra.mxu0 %v1021
        %v1117 = vpop.f32.mrf.mxu0
        %v1118 = vadd.f32 0.0, %v1117
        %1119 = vmatmul.f32.gmra.mxu0 %v1023
        %v1120 = vpop.f32.mrf.mxu0
        %v1121 = vadd.f32 0.0, %v1120
        %1122 = vmatmul.f32.gmra.mxu0 %v1025
        %v1123 = vpop.f32.mrf.mxu0
        %v1124 = vadd.f32 0.0, %v1123
        %1125 = vmatmul.f32.gmra.mxu0 %v1027
        %v1126 = vpop.f32.mrf.mxu0
        %v1127 = vadd.f32 0.0, %v1126
        %1128 = vmatmul.f32.gmra.mxu0 %v1029
        %v1129 = vpop.f32.mrf.mxu0
        %v1130 = vadd.f32 0.0, %v1129
        %1131 = vmatmul.f32.gmra.mxu0 %v1031
        %v1132 = vpop.f32.mrf.mxu0
        %v1133 = vadd.f32 0.0, %v1132
        %1134 = vmatmul.f32.gmra.mxu0 %v1033
        %v1135 = vpop.f32.mrf.mxu0
        %v1136 = vadd.f32 0.0, %v1135
        %1137 = vmatmul.f32.gmra.mxu0 %v1035
        %v1138 = vpop.f32.mrf.mxu0
        %v1139 = vadd.f32 0.0, %v1138
        %1140 = vmatmul.f32.gmra.mxu0 %v1037
        %v1141 = vpop.f32.mrf.mxu0
        %v1142 = vadd.f32 0.0, %v1141
        %1143 = vmatmul.f32.gmra.mxu0 %v1039
        %v1144 = vpop.f32.mrf.mxu0
        %v1145 = vadd.f32 0.0, %v1144
        %1146 = vmatmul.f32.gmra.mxu0 %v1041
        %v1147 = vpop.f32.mrf.mxu0
        %v1148 = vadd.f32 0.0, %v1147
        %1149 = vmatmul.f32.gmra.mxu0 %v1043
        %v1150 = vpop.f32.mrf.mxu0
        %v1151 = vadd.f32 0.0, %v1150
        %1152 = vmatmul.f32.gmra.mxu0 %v1045
        %v1153 = vpop.f32.mrf.mxu0
        %v1154 = vadd.f32 0.0, %v1153
        %1155 = vmatmul.f32.gmra.mxu0 %v1047
        %v1156 = vpop.f32.mrf.mxu0
        %v1157 = vadd.f32 0.0, %v1156
        %1158 = vmatmul.f32.gmra.mxu0 %v1049
        %v1159 = vpop.f32.mrf.mxu0
        %v1160 = vadd.f32 0.0, %v1159
        %1161 = vmatmul.f32.gmra.mxu0 %v1051
        %v1162 = vpop.f32.mrf.mxu0
        %v1163 = vadd.f32 0.0, %v1162
        %1164 = vmatmul.f32.gmra.mxu0 %v1053
        %v1165 = vpop.f32.mrf.mxu0
        %v1166 = vadd.f32 0.0, %v1165
        %1167 = vdwg.mxu0
        %v1168 = vadd.f32 %v797, %v1073
        %v1169 = vadd.f32 %v800, %v1076
        %v1170 = vadd.f32 %v803, %v1079
        %v1171 = vadd.f32 %v806, %v1082
        %v1172 = vadd.f32 %v809, %v1085
        %v1173 = vadd.f32 %v812, %v1088
        %v1174 = vadd.f32 %v815, %v1091
        %v1175 = vadd.f32 %v818, %v1094
        %v1176 = vadd.f32 %v821, %v1097
        %v1177 = vadd.f32 %v824, %v1100
        %v1178 = vadd.f32 %v827, %v1103
        %v1179 = vadd.f32 %v830, %v1106
        %v1180 = vadd.f32 %v833, %v1109
        %v1181 = vadd.f32 %v836, %v1112
        %v1182 = vadd.f32 %v839, %v1115
        %v1183 = vadd.f32 %v842, %v1118
        %v1184 = vadd.f32 %v845, %v1121
        %v1185 = vadd.f32 %v848, %v1124
        %v1186 = vadd.f32 %v851, %v1127
        %v1187 = vadd.f32 %v854, %v1130
        %v1188 = vadd.f32 %v857, %v1133
        %v1189 = vadd.f32 %v860, %v1136
        %v1190 = vadd.f32 %v863, %v1139
        %v1191 = vadd.f32 %v866, %v1142
        %v1192 = vadd.f32 %v869, %v1145
        %v1193 = vadd.f32 %v872, %v1148
        %v1194 = vadd.f32 %v875, %v1151
        %v1195 = vadd.f32 %v878, %v1154
        %v1196 = vadd.f32 %v881, %v1157
        %v1197 = vadd.f32 %v884, %v1160
        %v1198 = vadd.f32 %v887, %v1163
        %v1199 = vadd.f32 %v890, %v1166
        %s1200 = scalar_lea.vmem %s1, 24
        %v1201 = vld [vmem:[%s1200] sm:$0xff]
        %1202 = vrot.lane.b32.xlu0 %v911, 120
        %v1203 = vpop.permute.xlu0 %1202
        %1204 = vrot.lane.b32.xlu0 %v913, 120
        %v1205 = vpop.permute.xlu0 %1204
        %1206 = vrot.lane.b32.xlu0 %v916, 120
        %v1207 = vpop.permute.xlu0 %1206
        %1208 = vrot.lane.b32.xlu0 %v918, 120
        %v1209 = vpop.permute.xlu0 %1208
        %1210 = vrot.lane.b32.xlu0 %v921, 120
        %v1211 = vpop.permute.xlu0 %1210
        %1212 = vrot.lane.b32.xlu0 %v923, 120
        %v1213 = vpop.permute.xlu0 %1212
        %1214 = vrot.lane.b32.xlu0 %v926, 120
        %v1215 = vpop.permute.xlu0 %1214
        %1216 = vrot.lane.b32.xlu0 %v928, 120
        %v1217 = vpop.permute.xlu0 %1216
        %1218 = vrot.lane.b32.xlu0 %v931, 120
        %v1219 = vpop.permute.xlu0 %1218
        %1220 = vrot.lane.b32.xlu0 %v933, 120
        %v1221 = vpop.permute.xlu0 %1220
        %1222 = vrot.lane.b32.xlu0 %v936, 120
        %v1223 = vpop.permute.xlu0 %1222
        %1224 = vrot.lane.b32.xlu0 %v938, 120
        %v1225 = vpop.permute.xlu0 %1224
        %1226 = vrot.lane.b32.xlu0 %v941, 120
        %v1227 = vpop.permute.xlu0 %1226
        %1228 = vrot.lane.b32.xlu0 %v943, 120
        %v1229 = vpop.permute.xlu0 %1228
        %1230 = vrot.lane.b32.xlu0 %v946, 120
        %v1231 = vpop.permute.xlu0 %1230
        %1232 = vrot.lane.b32.xlu0 %v948, 120
        %v1233 = vpop.permute.xlu0 %1232
        %1234 = vrot.lane.b32.xlu0 %v951, 120
        %v1235 = vpop.permute.xlu0 %1234
        %1236 = vrot.lane.b32.xlu0 %v953, 120
        %v1237 = vpop.permute.xlu0 %1236
        %1238 = vrot.lane.b32.xlu0 %v956, 120
        %v1239 = vpop.permute.xlu0 %1238
        %1240 = vrot.lane.b32.xlu0 %v958, 120
        %v1241 = vpop.permute.xlu0 %1240
        %1242 = vrot.lane.b32.xlu0 %v961, 120
        %v1243 = vpop.permute.xlu0 %1242
        %1244 = vrot.lane.b32.xlu0 %v963, 120
        %v1245 = vpop.permute.xlu0 %1244
        %1246 = vrot.lane.b32.xlu0 %v966, 120
        %v1247 = vpop.permute.xlu0 %1246
        %1248 = vrot.lane.b32.xlu0 %v968, 120
        %v1249 = vpop.permute.xlu0 %1248
        %1250 = vrot.lane.b32.xlu0 %v971, 120
        %v1251 = vpop.permute.xlu0 %1250
        %1252 = vrot.lane.b32.xlu0 %v973, 120
        %v1253 = vpop.permute.xlu0 %1252
        %1254 = vrot.lane.b32.xlu0 %v976, 120
        %v1255 = vpop.permute.xlu0 %1254
        %1256 = vrot.lane.b32.xlu0 %v978, 120
        %v1257 = vpop.permute.xlu0 %1256
        %1258 = vrot.lane.b32.xlu0 %v981, 120
        %v1259 = vpop.permute.xlu0 %1258
        %1260 = vrot.lane.b32.xlu0 %v983, 120
        %v1261 = vpop.permute.xlu0 %1260
        %1262 = vrot.lane.b32.xlu0 %v986, 120
        %v1263 = vpop.permute.xlu0 %1262
        %1264 = vrot.lane.b32.xlu0 %v988, 120
        %v1265 = vpop.permute.xlu0 %1264
        %v1266 = vsel %vm537, %v1203, 0
        %v1268 = vsel %vm537, %v1205, 0
        %v1270 = vsel %vm537, %v1207, 0
        %v1272 = vsel %vm537, %v1209, 0
        %v1274 = vsel %vm537, %v1211, 0
        %v1276 = vsel %vm537, %v1213, 0
        %v1278 = vsel %vm537, %v1215, 0
        %v1280 = vsel %vm537, %v1217, 0
        %v1282 = vsel %vm537, %v1219, 0
        %v1284 = vsel %vm537, %v1221, 0
        %v1286 = vsel %vm537, %v1223, 0
        %v1288 = vsel %vm537, %v1225, 0
        %v1290 = vsel %vm537, %v1227, 0
        %v1292 = vsel %vm537, %v1229, 0
        %v1294 = vsel %vm537, %v1231, 0
        %v1296 = vsel %vm537, %v1233, 0
        %v1298 = vsel %vm537, %v1235, 0
        %v1300 = vsel %vm537, %v1237, 0
        %v1302 = vsel %vm537, %v1239, 0
        %v1304 = vsel %vm537, %v1241, 0
        %v1306 = vsel %vm537, %v1243, 0
        %v1308 = vsel %vm537, %v1245, 0
        %v1310 = vsel %vm537, %v1247, 0
        %v1312 = vsel %vm537, %v1249, 0
        %v1314 = vsel %vm537, %v1251, 0
        %v1316 = vsel %vm537, %v1253, 0
        %v1318 = vsel %vm537, %v1255, 0
        %v1320 = vsel %vm537, %v1257, 0
        %v1322 = vsel %vm537, %v1259, 0
        %v1324 = vsel %vm537, %v1261, 0
        %v1326 = vsel %vm537, %v1263, 0
        %v1328 = vsel %vm537, %v1265, 0
        %1330 = vmatpush.msra.mxu0 0.0
        %1331 = vmatpush.msra.mxu0 0.0
        %1332 = vmatpush.msra.mxu0 0.0
        %1333 = vmatpush.msra.mxu0 0.0
        %1334 = vmatpush.msra.mxu0 0.0
        %1335 = vmatpush.msra.mxu0 0.0
        %1336 = vmatpush.msra.mxu0 0.0
        %1337 = vmatpush.msra.mxu0 0.0
        %1338 = vmatpush.msra.mxu0 0.0
        %1339 = vmatpush.msra.mxu0 0.0
        %1340 = vmatpush.msra.mxu0 0.0
        %1341 = vmatpush.msra.mxu0 0.0
        %1342 = vmatpush.msra.mxu0 0.0
        %1343 = vmatpush.msra.mxu0 0.0
        %1344 = vmatpush.msra.mxu0 0.0
        %1345 = vmatpush.msra.mxu0 %v1201
        %1346 = vmatmul.f32.gmra.mxu0 %v1266
        %v1347 = vpop.f32.mrf.mxu0
        %v1348 = vadd.f32 0.0, %v1347
        %1349 = vmatmul.f32.gmra.mxu0 %v1268
        %v1350 = vpop.f32.mrf.mxu0
        %v1351 = vadd.f32 0.0, %v1350
        %1352 = vmatmul.f32.gmra.mxu0 %v1270
        %v1353 = vpop.f32.mrf.mxu0
        %v1354 = vadd.f32 0.0, %v1353
        %1355 = vmatmul.f32.gmra.mxu0 %v1272
        %v1356 = vpop.f32.mrf.mxu0
        %v1357 = vadd.f32 0.0, %v1356
        %1358 = vmatmul.f32.gmra.mxu0 %v1274
        %v1359 = vpop.f32.mrf.mxu0
        %v1360 = vadd.f32 0.0, %v1359
        %1361 = vmatmul.f32.gmra.mxu0 %v1276
        %v1362 = vpop.f32.mrf.mxu0
        %v1363 = vadd.f32 0.0, %v1362
        %1364 = vmatmul.f32.gmra.mxu0 %v1278
        %v1365 = vpop.f32.mrf.mxu0
        %v1366 = vadd.f32 0.0, %v1365
        %1367 = vmatmul.f32.gmra.mxu0 %v1280
        %v1368 = vpop.f32.mrf.mxu0
        %v1369 = vadd.f32 0.0, %v1368
        %1370 = vmatmul.f32.gmra.mxu0 %v1282
        %v1371 = vpop.f32.mrf.mxu0
        %v1372 = vadd.f32 0.0, %v1371
        %1373 = vmatmul.f32.gmra.mxu0 %v1284
        %v1374 = vpop.f32.mrf.mxu0
        %v1375 = vadd.f32 0.0, %v1374
        %1376 = vmatmul.f32.gmra.mxu0 %v1286
        %v1377 = vpop.f32.mrf.mxu0
        %v1378 = vadd.f32 0.0, %v1377
        %1379 = vmatmul.f32.gmra.mxu0 %v1288
        %v1380 = vpop.f32.mrf.mxu0
        %v1381 = vadd.f32 0.0, %v1380
        %1382 = vmatmul.f32.gmra.mxu0 %v1290
        %v1383 = vpop.f32.mrf.mxu0
        %v1384 = vadd.f32 0.0, %v1383
        %1385 = vmatmul.f32.gmra.mxu0 %v1292
        %v1386 = vpop.f32.mrf.mxu0
        %v1387 = vadd.f32 0.0, %v1386
        %1388 = vmatmul.f32.gmra.mxu0 %v1294
        %v1389 = vpop.f32.mrf.mxu0
        %v1390 = vadd.f32 0.0, %v1389
        %1391 = vmatmul.f32.gmra.mxu0 %v1296
        %v1392 = vpop.f32.mrf.mxu0
        %v1393 = vadd.f32 0.0, %v1392
        %1394 = vmatmul.f32.gmra.mxu0 %v1298
        %v1395 = vpop.f32.mrf.mxu0
        %v1396 = vadd.f32 0.0, %v1395
        %1397 = vmatmul.f32.gmra.mxu0 %v1300
        %v1398 = vpop.f32.mrf.mxu0
        %v1399 = vadd.f32 0.0, %v1398
        %1400 = vmatmul.f32.gmra.mxu0 %v1302
        %v1401 = vpop.f32.mrf.mxu0
        %v1402 = vadd.f32 0.0, %v1401
        %1403 = vmatmul.f32.gmra.mxu0 %v1304
        %v1404 = vpop.f32.mrf.mxu0
        %v1405 = vadd.f32 0.0, %v1404
        %1406 = vmatmul.f32.gmra.mxu0 %v1306
        %v1407 = vpop.f32.mrf.mxu0
        %v1408 = vadd.f32 0.0, %v1407
        %1409 = vmatmul.f32.gmra.mxu0 %v1308
        %v1410 = vpop.f32.mrf.mxu0
        %v1411 = vadd.f32 0.0, %v1410
        %1412 = vmatmul.f32.gmra.mxu0 %v1310
        %v1413 = vpop.f32.mrf.mxu0
        %v1414 = vadd.f32 0.0, %v1413
        %1415 = vmatmul.f32.gmra.mxu0 %v1312
        %v1416 = vpop.f32.mrf.mxu0
        %v1417 = vadd.f32 0.0, %v1416
        %1418 = vmatmul.f32.gmra.mxu0 %v1314
        %v1419 = vpop.f32.mrf.mxu0
        %v1420 = vadd.f32 0.0, %v1419
        %1421 = vmatmul.f32.gmra.mxu0 %v1316
        %v1422 = vpop.f32.mrf.mxu0
        %v1423 = vadd.f32 0.0, %v1422
        %1424 = vmatmul.f32.gmra.mxu0 %v1318
        %v1425 = vpop.f32.mrf.mxu0
        %v1426 = vadd.f32 0.0, %v1425
        %1427 = vmatmul.f32.gmra.mxu0 %v1320
        %v1428 = vpop.f32.mrf.mxu0
        %v1429 = vadd.f32 0.0, %v1428
        %1430 = vmatmul.f32.gmra.mxu0 %v1322
        %v1431 = vpop.f32.mrf.mxu0
        %v1432 = vadd.f32 0.0, %v1431
        %1433 = vmatmul.f32.gmra.mxu0 %v1324
        %v1434 = vpop.f32.mrf.mxu0
        %v1435 = vadd.f32 0.0, %v1434
        %1436 = vmatmul.f32.gmra.mxu0 %v1326
        %v1437 = vpop.f32.mrf.mxu0
        %v1438 = vadd.f32 0.0, %v1437
        %1439 = vmatmul.f32.gmra.mxu0 %v1328
        %v1440 = vpop.f32.mrf.mxu0
        %v1441 = vadd.f32 0.0, %v1440
        %1442 = vdwg.mxu0
        %v1443 = vadd.f32 %v1168, %v1348
        %v1444 = vadd.f32 %v1169, %v1351
        %v1445 = vadd.f32 %v1170, %v1354
        %v1446 = vadd.f32 %v1171, %v1357
        %v1447 = vadd.f32 %v1172, %v1360
        %v1448 = vadd.f32 %v1173, %v1363
        %v1449 = vadd.f32 %v1174, %v1366
        %v1450 = vadd.f32 %v1175, %v1369
        %v1451 = vadd.f32 %v1176, %v1372
        %v1452 = vadd.f32 %v1177, %v1375
        %v1453 = vadd.f32 %v1178, %v1378
        %v1454 = vadd.f32 %v1179, %v1381
        %v1455 = vadd.f32 %v1180, %v1384
        %v1456 = vadd.f32 %v1181, %v1387
        %v1457 = vadd.f32 %v1182, %v1390
        %v1458 = vadd.f32 %v1183, %v1393
        %v1459 = vadd.f32 %v1184, %v1396
        %v1460 = vadd.f32 %v1185, %v1399
        %v1461 = vadd.f32 %v1186, %v1402
        %v1462 = vadd.f32 %v1187, %v1405
        %v1463 = vadd.f32 %v1188, %v1408
        %v1464 = vadd.f32 %v1189, %v1411
        %v1465 = vadd.f32 %v1190, %v1414
        %v1466 = vadd.f32 %v1191, %v1417
        %v1467 = vadd.f32 %v1192, %v1420
        %v1468 = vadd.f32 %v1193, %v1423
        %v1469 = vadd.f32 %v1194, %v1426
        %v1470 = vadd.f32 %v1195, %v1429
        %v1471 = vadd.f32 %v1196, %v1432
        %v1472 = vadd.f32 %v1197, %v1435
        %v1473 = vadd.f32 %v1198, %v1438
        %v1474 = vadd.f32 %v1199, %v1441
        %vm1475 = vcmask 1045504
        %v1476 = vrot.slane %v384, 2
        %v1477 = vrot.slane %v385, 2
        %v1478 = vsel %vm1475, %v1476, %v1477
        %v1479 = vrot.slane %v386, 2
        %v1480 = vsel %vm1475, %v1477, %v1479
        %v1481 = vrot.slane %v387, 2
        %v1482 = vrot.slane %v388, 2
        %v1483 = vsel %vm1475, %v1481, %v1482
        %v1484 = vrot.slane %v389, 2
        %v1485 = vsel %vm1475, %v1482, %v1484
        %v1486 = vrot.slane %v390, 2
        %v1487 = vrot.slane %v391, 2
        %v1488 = vsel %vm1475, %v1486, %v1487
        %v1489 = vrot.slane %v392, 2
        %v1490 = vsel %vm1475, %v1487, %v1489
        %v1491 = vrot.slane %v393, 2
        %v1492 = vrot.slane %v394, 2
        %v1493 = vsel %vm1475, %v1491, %v1492
        %v1494 = vrot.slane %v395, 2
        %v1495 = vsel %vm1475, %v1492, %v1494
        %v1496 = vrot.slane %v396, 2
        %v1497 = vrot.slane %v397, 2
        %v1498 = vsel %vm1475, %v1496, %v1497
        %v1499 = vrot.slane %v398, 2
        %v1500 = vsel %vm1475, %v1497, %v1499
        %v1501 = vrot.slane %v399, 2
        %v1502 = vrot.slane %v400, 2
        %v1503 = vsel %vm1475, %v1501, %v1502
        %v1504 = vrot.slane %v401, 2
        %v1505 = vsel %vm1475, %v1502, %v1504
        %v1506 = vrot.slane %v402, 2
        %v1507 = vrot.slane %v403, 2
        %v1508 = vsel %vm1475, %v1506, %v1507
        %v1509 = vrot.slane %v404, 2
        %v1510 = vsel %vm1475, %v1507, %v1509
        %v1511 = vrot.slane %v405, 2
        %v1512 = vrot.slane %v406, 2
        %v1513 = vsel %vm1475, %v1511, %v1512
        %v1514 = vrot.slane %v407, 2
        %v1515 = vsel %vm1475, %v1512, %v1514
        %v1516 = vrot.slane %v408, 2
        %v1517 = vrot.slane %v409, 2
        %v1518 = vsel %vm1475, %v1516, %v1517
        %v1519 = vrot.slane %v410, 2
        %v1520 = vsel %vm1475, %v1517, %v1519
        %v1521 = vrot.slane %v411, 2
        %v1522 = vrot.slane %v412, 2
        %v1523 = vsel %vm1475, %v1521, %v1522
        %v1524 = vrot.slane %v413, 2
        %v1525 = vsel %vm1475, %v1522, %v1524
        %v1526 = vrot.slane %v414, 2
        %v1527 = vrot.slane %v415, 2
        %v1528 = vsel %vm1475, %v1526, %v1527
        %v1529 = vrot.slane %v416, 2
        %v1530 = vsel %vm1475, %v1527, %v1529
        %v1531 = vrot.slane %v417, 2
        %v1532 = vrot.slane %v418, 2
        %v1533 = vsel %vm1475, %v1531, %v1532
        %v1534 = vrot.slane %v419, 2
        %v1535 = vsel %vm1475, %v1532, %v1534
        %v1536 = vrot.slane %v420, 2
        %v1537 = vrot.slane %v421, 2
        %v1538 = vsel %vm1475, %v1536, %v1537
        %v1539 = vrot.slane %v422, 2
        %v1540 = vsel %vm1475, %v1537, %v1539
        %v1541 = vrot.slane %v423, 2
        %v1542 = vrot.slane %v424, 2
        %v1543 = vsel %vm1475, %v1541, %v1542
        %v1544 = vrot.slane %v425, 2
        %v1545 = vsel %vm1475, %v1542, %v1544
        %v1546 = vrot.slane %v426, 2
        %v1547 = vrot.slane %v427, 2
        %v1548 = vsel %vm1475, %v1546, %v1547
        %v1549 = vrot.slane %v428, 2
        %v1550 = vsel %vm1475, %v1547, %v1549
        %v1551 = vrot.slane %v429, 2
        %v1552 = vrot.slane %v430, 2
        %v1553 = vsel %vm1475, %v1551, %v1552
        %v1554 = vrot.slane %v431, 2
        %v1555 = vsel %vm1475, %v1552, %v1554
        %s1556 = scalar_lea.vmem %s1, 32
        %v1557 = vld [vmem:[%s1556] sm:$0xff]
        %v1558 = vsel %vm537, %v1478, 0
        %v1560 = vsel %vm537, %v1480, 0
        %v1562 = vsel %vm537, %v1483, 0
        %v1564 = vsel %vm537, %v1485, 0
        %v1566 = vsel %vm537, %v1488, 0
        %v1568 = vsel %vm537, %v1490, 0
        %v1570 = vsel %vm537, %v1493, 0
        %v1572 = vsel %vm537, %v1495, 0
        %v1574 = vsel %vm537, %v1498, 0
        %v1576 = vsel %vm537, %v1500, 0
        %v1578 = vsel %vm537, %v1503, 0
        %v1580 = vsel %vm537, %v1505, 0
        %v1582 = vsel %vm537, %v1508, 0
        %v1584 = vsel %vm537, %v1510, 0
        %v1586 = vsel %vm537, %v1513, 0
        %v1588 = vsel %vm537, %v1515, 0
        %v1590 = vsel %vm537, %v1518, 0
        %v1592 = vsel %vm537, %v1520, 0
        %v1594 = vsel %vm537, %v1523, 0
        %v1596 = vsel %vm537, %v1525, 0
        %v1598 = vsel %vm537, %v1528, 0
        %v1600 = vsel %vm537, %v1530, 0
        %v1602 = vsel %vm537, %v1533, 0
        %v1604 = vsel %vm537, %v1535, 0
        %v1606 = vsel %vm537, %v1538, 0
        %v1608 = vsel %vm537, %v1540, 0
        %v1610 = vsel %vm537, %v1543, 0
        %v1612 = vsel %vm537, %v1545, 0
        %v1614 = vsel %vm537, %v1548, 0
        %v1616 = vsel %vm537, %v1550, 0
        %v1618 = vsel %vm537, %v1553, 0
        %v1620 = vsel %vm537, %v1555, 0
        %1622 = vmatpush.msra.mxu0 0.0
        %1623 = vmatpush.msra.mxu0 0.0
        %1624 = vmatpush.msra.mxu0 0.0
        %1625 = vmatpush.msra.mxu0 0.0
        %1626 = vmatpush.msra.mxu0 0.0
        %1627 = vmatpush.msra.mxu0 0.0
        %1628 = vmatpush.msra.mxu0 0.0
        %1629 = vmatpush.msra.mxu0 0.0
        %1630 = vmatpush.msra.mxu0 0.0
        %1631 = vmatpush.msra.mxu0 0.0
        %1632 = vmatpush.msra.mxu0 0.0
        %1633 = vmatpush.msra.mxu0 0.0
        %1634 = vmatpush.msra.mxu0 0.0
        %1635 = vmatpush.msra.mxu0 0.0
        %1636 = vmatpush.msra.mxu0 0.0
        %1637 = vmatpush.msra.mxu0 %v1557
        %1638 = vmatmul.f32.gmra.mxu0 %v1558
        %v1639 = vpop.f32.mrf.mxu0
        %v1640 = vadd.f32 0.0, %v1639
        %1641 = vmatmul.f32.gmra.mxu0 %v1560
        %v1642 = vpop.f32.mrf.mxu0
        %v1643 = vadd.f32 0.0, %v1642
        %1644 = vmatmul.f32.gmra.mxu0 %v1562
        %v1645 = vpop.f32.mrf.mxu0
        %v1646 = vadd.f32 0.0, %v1645
        %1647 = vmatmul.f32.gmra.mxu0 %v1564
        %v1648 = vpop.f32.mrf.mxu0
        %v1649 = vadd.f32 0.0, %v1648
        %1650 = vmatmul.f32.gmra.mxu0 %v1566
        %v1651 = vpop.f32.mrf.mxu0
        %v1652 = vadd.f32 0.0, %v1651
        %1653 = vmatmul.f32.gmra.mxu0 %v1568
        %v1654 = vpop.f32.mrf.mxu0
        %v1655 = vadd.f32 0.0, %v1654
        %1656 = vmatmul.f32.gmra.mxu0 %v1570
        %v1657 = vpop.f32.mrf.mxu0
        %v1658 = vadd.f32 0.0, %v1657
        %1659 = vmatmul.f32.gmra.mxu0 %v1572
        %v1660 = vpop.f32.mrf.mxu0
        %v1661 = vadd.f32 0.0, %v1660
        %1662 = vmatmul.f32.gmra.mxu0 %v1574
        %v1663 = vpop.f32.mrf.mxu0
        %v1664 = vadd.f32 0.0, %v1663
        %1665 = vmatmul.f32.gmra.mxu0 %v1576
        %v1666 = vpop.f32.mrf.mxu0
        %v1667 = vadd.f32 0.0, %v1666
        %1668 = vmatmul.f32.gmra.mxu0 %v1578
        %v1669 = vpop.f32.mrf.mxu0
        %v1670 = vadd.f32 0.0, %v1669
        %1671 = vmatmul.f32.gmra.mxu0 %v1580
        %v1672 = vpop.f32.mrf.mxu0
        %v1673 = vadd.f32 0.0, %v1672
        %1674 = vmatmul.f32.gmra.mxu0 %v1582
        %v1675 = vpop.f32.mrf.mxu0
        %v1676 = vadd.f32 0.0, %v1675
        %1677 = vmatmul.f32.gmra.mxu0 %v1584
        %v1678 = vpop.f32.mrf.mxu0
        %v1679 = vadd.f32 0.0, %v1678
        %1680 = vmatmul.f32.gmra.mxu0 %v1586
        %v1681 = vpop.f32.mrf.mxu0
        %v1682 = vadd.f32 0.0, %v1681
        %1683 = vmatmul.f32.gmra.mxu0 %v1588
        %v1684 = vpop.f32.mrf.mxu0
        %v1685 = vadd.f32 0.0, %v1684
        %1686 = vmatmul.f32.gmra.mxu0 %v1590
        %v1687 = vpop.f32.mrf.mxu0
        %v1688 = vadd.f32 0.0, %v1687
        %1689 = vmatmul.f32.gmra.mxu0 %v1592
        %v1690 = vpop.f32.mrf.mxu0
        %v1691 = vadd.f32 0.0, %v1690
        %1692 = vmatmul.f32.gmra.mxu0 %v1594
        %v1693 = vpop.f32.mrf.mxu0
        %v1694 = vadd.f32 0.0, %v1693
        %1695 = vmatmul.f32.gmra.mxu0 %v1596
        %v1696 = vpop.f32.mrf.mxu0
        %v1697 = vadd.f32 0.0, %v1696
        %1698 = vmatmul.f32.gmra.mxu0 %v1598
        %v1699 = vpop.f32.mrf.mxu0
        %v1700 = vadd.f32 0.0, %v1699
        %1701 = vmatmul.f32.gmra.mxu0 %v1600
        %v1702 = vpop.f32.mrf.mxu0
        %v1703 = vadd.f32 0.0, %v1702
        %1704 = vmatmul.f32.gmra.mxu0 %v1602
        %v1705 = vpop.f32.mrf.mxu0
        %v1706 = vadd.f32 0.0, %v1705
        %1707 = vmatmul.f32.gmra.mxu0 %v1604
        %v1708 = vpop.f32.mrf.mxu0
        %v1709 = vadd.f32 0.0, %v1708
        %1710 = vmatmul.f32.gmra.mxu0 %v1606
        %v1711 = vpop.f32.mrf.mxu0
        %v1712 = vadd.f32 0.0, %v1711
        %1713 = vmatmul.f32.gmra.mxu0 %v1608
        %v1714 = vpop.f32.mrf.mxu0
        %v1715 = vadd.f32 0.0, %v1714
        %1716 = vmatmul.f32.gmra.mxu0 %v1610
        %v1717 = vpop.f32.mrf.mxu0
        %v1718 = vadd.f32 0.0, %v1717
        %1719 = vmatmul.f32.gmra.mxu0 %v1612
        %v1720 = vpop.f32.mrf.mxu0
        %v1721 = vadd.f32 0.0, %v1720
        %1722 = vmatmul.f32.gmra.mxu0 %v1614
        %v1723 = vpop.f32.mrf.mxu0
        %v1724 = vadd.f32 0.0, %v1723
        %1725 = vmatmul.f32.gmra.mxu0 %v1616
        %v1726 = vpop.f32.mrf.mxu0
        %v1727 = vadd.f32 0.0, %v1726
        %1728 = vmatmul.f32.gmra.mxu0 %v1618
        %v1729 = vpop.f32.mrf.mxu0
        %v1730 = vadd.f32 0.0, %v1729
        %1731 = vmatmul.f32.gmra.mxu0 %v1620
        %v1732 = vpop.f32.mrf.mxu0
        %v1733 = vadd.f32 0.0, %v1732
        %1734 = vdwg.mxu0
        %v1735 = vadd.f32 %v1443, %v1640
        %v1736 = vadd.f32 %v1444, %v1643
        %v1737 = vadd.f32 %v1445, %v1646
        %v1738 = vadd.f32 %v1446, %v1649
        %v1739 = vadd.f32 %v1447, %v1652
        %v1740 = vadd.f32 %v1448, %v1655
        %v1741 = vadd.f32 %v1449, %v1658
        %v1742 = vadd.f32 %v1450, %v1661
        %v1743 = vadd.f32 %v1451, %v1664
        %v1744 = vadd.f32 %v1452, %v1667
        %v1745 = vadd.f32 %v1453, %v1670
        %v1746 = vadd.f32 %v1454, %v1673
        %v1747 = vadd.f32 %v1455, %v1676
        %v1748 = vadd.f32 %v1456, %v1679
        %v1749 = vadd.f32 %v1457, %v1682
        %v1750 = vadd.f32 %v1458, %v1685
        %v1751 = vadd.f32 %v1459, %v1688
        %v1752 = vadd.f32 %v1460, %v1691
        %v1753 = vadd.f32 %v1461, %v1694
        %v1754 = vadd.f32 %v1462, %v1697
        %v1755 = vadd.f32 %v1463, %v1700
        %v1756 = vadd.f32 %v1464, %v1703
        %v1757 = vadd.f32 %v1465, %v1706
        %v1758 = vadd.f32 %v1466, %v1709
        %v1759 = vadd.f32 %v1467, %v1712
        %v1760 = vadd.f32 %v1468, %v1715
        %v1761 = vadd.f32 %v1469, %v1718
        %v1762 = vadd.f32 %v1470, %v1721
        %v1763 = vadd.f32 %v1471, %v1724
        %v1764 = vadd.f32 %v1472, %v1727
        %v1765 = vadd.f32 %v1473, %v1730
        %v1766 = vadd.f32 %v1474, %v1733
        %s1767 = scalar_lea.vmem %s1, 40
        %v1768 = vld [vmem:[%s1767] sm:$0xff]
        %1769 = vrot.lane.b32.xlu0 %v384, 112
        %v1770 = vpop.permute.xlu0 %1769
        %1771 = vrot.lane.b32.xlu0 %v385, 112
        %v1772 = vpop.permute.xlu0 %1771
        %1773 = vrot.lane.b32.xlu0 %v387, 112
        %v1774 = vpop.permute.xlu0 %1773
        %1775 = vrot.lane.b32.xlu0 %v388, 112
        %v1776 = vpop.permute.xlu0 %1775
        %1777 = vrot.lane.b32.xlu0 %v390, 112
        %v1778 = vpop.permute.xlu0 %1777
        %1779 = vrot.lane.b32.xlu0 %v391, 112
        %v1780 = vpop.permute.xlu0 %1779
        %1781 = vrot.lane.b32.xlu0 %v393, 112
        %v1782 = vpop.permute.xlu0 %1781
        %1783 = vrot.lane.b32.xlu0 %v394, 112
        %v1784 = vpop.permute.xlu0 %1783
        %1785 = vrot.lane.b32.xlu0 %v396, 112
        %v1786 = vpop.permute.xlu0 %1785
        %1787 = vrot.lane.b32.xlu0 %v397, 112
        %v1788 = vpop.permute.xlu0 %1787
        %1789 = vrot.lane.b32.xlu0 %v399, 112
        %v1790 = vpop.permute.xlu0 %1789
        %1791 = vrot.lane.b32.xlu0 %v400, 112
        %v1792 = vpop.permute.xlu0 %1791
        %1793 = vrot.lane.b32.xlu0 %v402, 112
        %v1794 = vpop.permute.xlu0 %1793
        %1795 = vrot.lane.b32.xlu0 %v403, 112
        %v1796 = vpop.permute.xlu0 %1795
        %1797 = vrot.lane.b32.xlu0 %v405, 112
        %v1798 = vpop.permute.xlu0 %1797
        %1799 = vrot.lane.b32.xlu0 %v406, 112
        %v1800 = vpop.permute.xlu0 %1799
        %1801 = vrot.lane.b32.xlu0 %v408, 112
        %v1802 = vpop.permute.xlu0 %1801
        %1803 = vrot.lane.b32.xlu0 %v409, 112
        %v1804 = vpop.permute.xlu0 %1803
        %1805 = vrot.lane.b32.xlu0 %v411, 112
        %v1806 = vpop.permute.xlu0 %1805
        %1807 = vrot.lane.b32.xlu0 %v412, 112
        %v1808 = vpop.permute.xlu0 %1807
        %1809 = vrot.lane.b32.xlu0 %v414, 112
        %v1810 = vpop.permute.xlu0 %1809
        %1811 = vrot.lane.b32.xlu0 %v415, 112
        %v1812 = vpop.permute.xlu0 %1811
        %1813 = vrot.lane.b32.xlu0 %v417, 112
        %v1814 = vpop.permute.xlu0 %1813
        %1815 = vrot.lane.b32.xlu0 %v418, 112
        %v1816 = vpop.permute.xlu0 %1815
        %1817 = vrot.lane.b32.xlu0 %v420, 112
        %v1818 = vpop.permute.xlu0 %1817
        %1819 = vrot.lane.b32.xlu0 %v421, 112
        %v1820 = vpop.permute.xlu0 %1819
        %1821 = vrot.lane.b32.xlu0 %v423, 112
        %v1822 = vpop.permute.xlu0 %1821
        %1823 = vrot.lane.b32.xlu0 %v424, 112
        %v1824 = vpop.permute.xlu0 %1823
        %1825 = vrot.lane.b32.xlu0 %v426, 112
        %v1826 = vpop.permute.xlu0 %1825
        %1827 = vrot.lane.b32.xlu0 %v427, 112
        %v1828 = vpop.permute.xlu0 %1827
        %1829 = vrot.lane.b32.xlu0 %v429, 112
        %v1830 = vpop.permute.xlu0 %1829
        %1831 = vrot.lane.b32.xlu0 %v430, 112
        %v1832 = vpop.permute.xlu0 %1831
        %v1833 = vsel %vm537, %v1770, 0
        %v1835 = vsel %vm537, %v1772, 0
        %v1837 = vsel %vm537, %v1774, 0
        %v1839 = vsel %vm537, %v1776, 0
        %v1841 = vsel %vm537, %v1778, 0
        %v1843 = vsel %vm537, %v1780, 0
        %v1845 = vsel %vm537, %v1782, 0
        %v1847 = vsel %vm537, %v1784, 0
        %v1849 = vsel %vm537, %v1786, 0
        %v1851 = vsel %vm537, %v1788, 0
        %v1853 = vsel %vm537, %v1790, 0
        %v1855 = vsel %vm537, %v1792, 0
        %v1857 = vsel %vm537, %v1794, 0
        %v1859 = vsel %vm537, %v1796, 0
        %v1861 = vsel %vm537, %v1798, 0
        %v1863 = vsel %vm537, %v1800, 0
        %v1865 = vsel %vm537, %v1802, 0
        %v1867 = vsel %vm537, %v1804, 0
        %v1869 = vsel %vm537, %v1806, 0
        %v1871 = vsel %vm537, %v1808, 0
        %v1873 = vsel %vm537, %v1810, 0
        %v1875 = vsel %vm537, %v1812, 0
        %v1877 = vsel %vm537, %v1814, 0
        %v1879 = vsel %vm537, %v1816, 0
        %v1881 = vsel %vm537, %v1818, 0
        %v1883 = vsel %vm537, %v1820, 0
        %v1885 = vsel %vm537, %v1822, 0
        %v1887 = vsel %vm537, %v1824, 0
        %v1889 = vsel %vm537, %v1826, 0
        %v1891 = vsel %vm537, %v1828, 0
        %v1893 = vsel %vm537, %v1830, 0
        %v1895 = vsel %vm537, %v1832, 0
        %1897 = vmatpush.msra.mxu0 0.0
        %1898 = vmatpush.msra.mxu0 0.0
        %1899 = vmatpush.msra.mxu0 0.0
        %1900 = vmatpush.msra.mxu0 0.0
        %1901 = vmatpush.msra.mxu0 0.0
        %1902 = vmatpush.msra.mxu0 0.0
        %1903 = vmatpush.msra.mxu0 0.0
        %1904 = vmatpush.msra.mxu0 0.0
        %1905 = vmatpush.msra.mxu0 0.0
        %1906 = vmatpush.msra.mxu0 0.0
        %1907 = vmatpush.msra.mxu0 0.0
        %1908 = vmatpush.msra.mxu0 0.0
        %1909 = vmatpush.msra.mxu0 0.0
        %1910 = vmatpush.msra.mxu0 0.0
        %1911 = vmatpush.msra.mxu0 0.0
        %1912 = vmatpush.msra.mxu0 %v1768
        %1913 = vmatmul.f32.gmra.mxu0 %v1833
        %v1914 = vpop.f32.mrf.mxu0
        %v1915 = vadd.f32 0.0, %v1914
        %1916 = vmatmul.f32.gmra.mxu0 %v1835
        %v1917 = vpop.f32.mrf.mxu0
        %v1918 = vadd.f32 0.0, %v1917
        %1919 = vmatmul.f32.gmra.mxu0 %v1837
        %v1920 = vpop.f32.mrf.mxu0
        %v1921 = vadd.f32 0.0, %v1920
        %1922 = vmatmul.f32.gmra.mxu0 %v1839
        %v1923 = vpop.f32.mrf.mxu0
        %v1924 = vadd.f32 0.0, %v1923
        %1925 = vmatmul.f32.gmra.mxu0 %v1841
        %v1926 = vpop.f32.mrf.mxu0
        %v1927 = vadd.f32 0.0, %v1926
        %1928 = vmatmul.f32.gmra.mxu0 %v1843
        %v1929 = vpop.f32.mrf.mxu0
        %v1930 = vadd.f32 0.0, %v1929
        %1931 = vmatmul.f32.gmra.mxu0 %v1845
        %v1932 = vpop.f32.mrf.mxu0
        %v1933 = vadd.f32 0.0, %v1932
        %1934 = vmatmul.f32.gmra.mxu0 %v1847
        %v1935 = vpop.f32.mrf.mxu0
        %v1936 = vadd.f32 0.0, %v1935
        %1937 = vmatmul.f32.gmra.mxu0 %v1849
        %v1938 = vpop.f32.mrf.mxu0
        %v1939 = vadd.f32 0.0, %v1938
        %1940 = vmatmul.f32.gmra.mxu0 %v1851
        %v1941 = vpop.f32.mrf.mxu0
        %v1942 = vadd.f32 0.0, %v1941
        %1943 = vmatmul.f32.gmra.mxu0 %v1853
        %v1944 = vpop.f32.mrf.mxu0
        %v1945 = vadd.f32 0.0, %v1944
        %1946 = vmatmul.f32.gmra.mxu0 %v1855
        %v1947 = vpop.f32.mrf.mxu0
        %v1948 = vadd.f32 0.0, %v1947
        %1949 = vmatmul.f32.gmra.mxu0 %v1857
        %v1950 = vpop.f32.mrf.mxu0
        %v1951 = vadd.f32 0.0, %v1950
        %1952 = vmatmul.f32.gmra.mxu0 %v1859
        %v1953 = vpop.f32.mrf.mxu0
        %v1954 = vadd.f32 0.0, %v1953
        %1955 = vmatmul.f32.gmra.mxu0 %v1861
        %v1956 = vpop.f32.mrf.mxu0
        %v1957 = vadd.f32 0.0, %v1956
        %1958 = vmatmul.f32.gmra.mxu0 %v1863
        %v1959 = vpop.f32.mrf.mxu0
        %v1960 = vadd.f32 0.0, %v1959
        %1961 = vmatmul.f32.gmra.mxu0 %v1865
        %v1962 = vpop.f32.mrf.mxu0
        %v1963 = vadd.f32 0.0, %v1962
        %1964 = vmatmul.f32.gmra.mxu0 %v1867
        %v1965 = vpop.f32.mrf.mxu0
        %v1966 = vadd.f32 0.0, %v1965
        %1967 = vmatmul.f32.gmra.mxu0 %v1869
        %v1968 = vpop.f32.mrf.mxu0
        %v1969 = vadd.f32 0.0, %v1968
        %1970 = vmatmul.f32.gmra.mxu0 %v1871
        %v1971 = vpop.f32.mrf.mxu0
        %v1972 = vadd.f32 0.0, %v1971
        %1973 = vmatmul.f32.gmra.mxu0 %v1873
        %v1974 = vpop.f32.mrf.mxu0
        %v1975 = vadd.f32 0.0, %v1974
        %1976 = vmatmul.f32.gmra.mxu0 %v1875
        %v1977 = vpop.f32.mrf.mxu0
        %v1978 = vadd.f32 0.0, %v1977
        %1979 = vmatmul.f32.gmra.mxu0 %v1877
        %v1980 = vpop.f32.mrf.mxu0
        %v1981 = vadd.f32 0.0, %v1980
        %1982 = vmatmul.f32.gmra.mxu0 %v1879
        %v1983 = vpop.f32.mrf.mxu0
        %v1984 = vadd.f32 0.0, %v1983
        %1985 = vmatmul.f32.gmra.mxu0 %v1881
        %v1986 = vpop.f32.mrf.mxu0
        %v1987 = vadd.f32 0.0, %v1986
        %1988 = vmatmul.f32.gmra.mxu0 %v1883
        %v1989 = vpop.f32.mrf.mxu0
        %v1990 = vadd.f32 0.0, %v1989
        %1991 = vmatmul.f32.gmra.mxu0 %v1885
        %v1992 = vpop.f32.mrf.mxu0
        %v1993 = vadd.f32 0.0, %v1992
        %1994 = vmatmul.f32.gmra.mxu0 %v1887
        %v1995 = vpop.f32.mrf.mxu0
        %v1996 = vadd.f32 0.0, %v1995
        %1997 = vmatmul.f32.gmra.mxu0 %v1889
        %v1998 = vpop.f32.mrf.mxu0
        %v1999 = vadd.f32 0.0, %v1998
        %2000 = vmatmul.f32.gmra.mxu0 %v1891
        %v2001 = vpop.f32.mrf.mxu0
        %v2002 = vadd.f32 0.0, %v2001
        %2003 = vmatmul.f32.gmra.mxu0 %v1893
        %v2004 = vpop.f32.mrf.mxu0
        %v2005 = vadd.f32 0.0, %v2004
        %2006 = vmatmul.f32.gmra.mxu0 %v1895
        %v2007 = vpop.f32.mrf.mxu0
        %v2008 = vadd.f32 0.0, %v2007
        %2009 = vdwg.mxu0
        %v2010 = vadd.f32 %v1735, %v1915
        %v2011 = vadd.f32 %v1736, %v1918
        %v2012 = vadd.f32 %v1737, %v1921
        %v2013 = vadd.f32 %v1738, %v1924
        %v2014 = vadd.f32 %v1739, %v1927
        %v2015 = vadd.f32 %v1740, %v1930
        %v2016 = vadd.f32 %v1741, %v1933
        %v2017 = vadd.f32 %v1742, %v1936
        %v2018 = vadd.f32 %v1743, %v1939
        %v2019 = vadd.f32 %v1744, %v1942
        %v2020 = vadd.f32 %v1745, %v1945
        %v2021 = vadd.f32 %v1746, %v1948
        %v2022 = vadd.f32 %v1747, %v1951
        %v2023 = vadd.f32 %v1748, %v1954
        %v2024 = vadd.f32 %v1749, %v1957
        %v2025 = vadd.f32 %v1750, %v1960
        %v2026 = vadd.f32 %v1751, %v1963
        %v2027 = vadd.f32 %v1752, %v1966
        %v2028 = vadd.f32 %v1753, %v1969
        %v2029 = vadd.f32 %v1754, %v1972
        %v2030 = vadd.f32 %v1755, %v1975
        %v2031 = vadd.f32 %v1756, %v1978
        %v2032 = vadd.f32 %v1757, %v1981
        %v2033 = vadd.f32 %v1758, %v1984
        %v2034 = vadd.f32 %v1759, %v1987
        %v2035 = vadd.f32 %v1760, %v1990
        %v2036 = vadd.f32 %v1761, %v1993
        %v2037 = vadd.f32 %v1762, %v1996
        %v2038 = vadd.f32 %v1763, %v1999
        %v2039 = vadd.f32 %v1764, %v2002
        %v2040 = vadd.f32 %v1765, %v2005
        %v2041 = vadd.f32 %v1766, %v2008
        %s2042 = scalar_lea.vmem %s1, 48
        %v2043 = vld [vmem:[%s2042] sm:$0xff]
        %2044 = vrot.lane.b32.xlu0 %v384, 104
        %v2045 = vpop.permute.xlu0 %2044
        %2046 = vrot.lane.b32.xlu0 %v385, 104
        %v2047 = vpop.permute.xlu0 %2046
        %2048 = vrot.lane.b32.xlu0 %v387, 104
        %v2049 = vpop.permute.xlu0 %2048
        %2050 = vrot.lane.b32.xlu0 %v388, 104
        %v2051 = vpop.permute.xlu0 %2050
        %2052 = vrot.lane.b32.xlu0 %v390, 104
        %v2053 = vpop.permute.xlu0 %2052
        %2054 = vrot.lane.b32.xlu0 %v391, 104
        %v2055 = vpop.permute.xlu0 %2054
        %2056 = vrot.lane.b32.xlu0 %v393, 104
        %v2057 = vpop.permute.xlu0 %2056
        %2058 = vrot.lane.b32.xlu0 %v394, 104
        %v2059 = vpop.permute.xlu0 %2058
        %2060 = vrot.lane.b32.xlu0 %v396, 104
        %v2061 = vpop.permute.xlu0 %2060
        %2062 = vrot.lane.b32.xlu0 %v397, 104
        %v2063 = vpop.permute.xlu0 %2062
        %2064 = vrot.lane.b32.xlu0 %v399, 104
        %v2065 = vpop.permute.xlu0 %2064
        %2066 = vrot.lane.b32.xlu0 %v400, 104
        %v2067 = vpop.permute.xlu0 %2066
        %2068 = vrot.lane.b32.xlu0 %v402, 104
        %v2069 = vpop.permute.xlu0 %2068
        %2070 = vrot.lane.b32.xlu0 %v403, 104
        %v2071 = vpop.permute.xlu0 %2070
        %2072 = vrot.lane.b32.xlu0 %v405, 104
        %v2073 = vpop.permute.xlu0 %2072
        %2074 = vrot.lane.b32.xlu0 %v406, 104
        %v2075 = vpop.permute.xlu0 %2074
        %2076 = vrot.lane.b32.xlu0 %v408, 104
        %v2077 = vpop.permute.xlu0 %2076
        %2078 = vrot.lane.b32.xlu0 %v409, 104
        %v2079 = vpop.permute.xlu0 %2078
        %2080 = vrot.lane.b32.xlu0 %v411, 104
        %v2081 = vpop.permute.xlu0 %2080
        %2082 = vrot.lane.b32.xlu0 %v412, 104
        %v2083 = vpop.permute.xlu0 %2082
        %2084 = vrot.lane.b32.xlu0 %v414, 104
        %v2085 = vpop.permute.xlu0 %2084
        %2086 = vrot.lane.b32.xlu0 %v415, 104
        %v2087 = vpop.permute.xlu0 %2086
        %2088 = vrot.lane.b32.xlu0 %v417, 104
        %v2089 = vpop.permute.xlu0 %2088
        %2090 = vrot.lane.b32.xlu0 %v418, 104
        %v2091 = vpop.permute.xlu0 %2090
        %2092 = vrot.lane.b32.xlu0 %v420, 104
        %v2093 = vpop.permute.xlu0 %2092
        %2094 = vrot.lane.b32.xlu0 %v421, 104
        %v2095 = vpop.permute.xlu0 %2094
        %2096 = vrot.lane.b32.xlu0 %v423, 104
        %v2097 = vpop.permute.xlu0 %2096
        %2098 = vrot.lane.b32.xlu0 %v424, 104
        %v2099 = vpop.permute.xlu0 %2098
        %2100 = vrot.lane.b32.xlu0 %v426, 104
        %v2101 = vpop.permute.xlu0 %2100
        %2102 = vrot.lane.b32.xlu0 %v427, 104
        %v2103 = vpop.permute.xlu0 %2102
        %2104 = vrot.lane.b32.xlu0 %v429, 104
        %v2105 = vpop.permute.xlu0 %2104
        %2106 = vrot.lane.b32.xlu0 %v430, 104
        %v2107 = vpop.permute.xlu0 %2106
        %v2108 = vsel %vm537, %v2045, 0
        %v2110 = vsel %vm537, %v2047, 0
        %v2112 = vsel %vm537, %v2049, 0
        %v2114 = vsel %vm537, %v2051, 0
        %v2116 = vsel %vm537, %v2053, 0
        %v2118 = vsel %vm537, %v2055, 0
        %v2120 = vsel %vm537, %v2057, 0
        %v2122 = vsel %vm537, %v2059, 0
        %v2124 = vsel %vm537, %v2061, 0
        %v2126 = vsel %vm537, %v2063, 0
        %v2128 = vsel %vm537, %v2065, 0
        %v2130 = vsel %vm537, %v2067, 0
        %v2132 = vsel %vm537, %v2069, 0
        %v2134 = vsel %vm537, %v2071, 0
        %v2136 = vsel %vm537, %v2073, 0
        %v2138 = vsel %vm537, %v2075, 0
        %v2140 = vsel %vm537, %v2077, 0
        %v2142 = vsel %vm537, %v2079, 0
        %v2144 = vsel %vm537, %v2081, 0
        %v2146 = vsel %vm537, %v2083, 0
        %v2148 = vsel %vm537, %v2085, 0
        %v2150 = vsel %vm537, %v2087, 0
        %v2152 = vsel %vm537, %v2089, 0
        %v2154 = vsel %vm537, %v2091, 0
        %v2156 = vsel %vm537, %v2093, 0
        %v2158 = vsel %vm537, %v2095, 0
        %v2160 = vsel %vm537, %v2097, 0
        %v2162 = vsel %vm537, %v2099, 0
        %v2164 = vsel %vm537, %v2101, 0
        %v2166 = vsel %vm537, %v2103, 0
        %v2168 = vsel %vm537, %v2105, 0
        %v2170 = vsel %vm537, %v2107, 0
        %2172 = vmatpush.msra.mxu0 0.0
        %2173 = vmatpush.msra.mxu0 0.0
        %2174 = vmatpush.msra.mxu0 0.0
        %2175 = vmatpush.msra.mxu0 0.0
        %2176 = vmatpush.msra.mxu0 0.0
        %2177 = vmatpush.msra.mxu0 0.0
        %2178 = vmatpush.msra.mxu0 0.0
        %2179 = vmatpush.msra.mxu0 0.0
        %2180 = vmatpush.msra.mxu0 0.0
        %2181 = vmatpush.msra.mxu0 0.0
        %2182 = vmatpush.msra.mxu0 0.0
        %2183 = vmatpush.msra.mxu0 0.0
        %2184 = vmatpush.msra.mxu0 0.0
        %2185 = vmatpush.msra.mxu0 0.0
        %2186 = vmatpush.msra.mxu0 0.0
        %2187 = vmatpush.msra.mxu0 %v2043
        %2188 = vmatmul.f32.gmra.mxu0 %v2108
        %v2189 = vpop.f32.mrf.mxu0
        %v2190 = vadd.f32 0.0, %v2189
        %2191 = vmatmul.f32.gmra.mxu0 %v2110
        %v2192 = vpop.f32.mrf.mxu0
        %v2193 = vadd.f32 0.0, %v2192
        %2194 = vmatmul.f32.gmra.mxu0 %v2112
        %v2195 = vpop.f32.mrf.mxu0
        %v2196 = vadd.f32 0.0, %v2195
        %2197 = vmatmul.f32.gmra.mxu0 %v2114
        %v2198 = vpop.f32.mrf.mxu0
        %v2199 = vadd.f32 0.0, %v2198
        %2200 = vmatmul.f32.gmra.mxu0 %v2116
        %v2201 = vpop.f32.mrf.mxu0
        %v2202 = vadd.f32 0.0, %v2201
        %2203 = vmatmul.f32.gmra.mxu0 %v2118
        %v2204 = vpop.f32.mrf.mxu0
        %v2205 = vadd.f32 0.0, %v2204
        %2206 = vmatmul.f32.gmra.mxu0 %v2120
        %v2207 = vpop.f32.mrf.mxu0
        %v2208 = vadd.f32 0.0, %v2207
        %2209 = vmatmul.f32.gmra.mxu0 %v2122
        %v2210 = vpop.f32.mrf.mxu0
        %v2211 = vadd.f32 0.0, %v2210
        %2212 = vmatmul.f32.gmra.mxu0 %v2124
        %v2213 = vpop.f32.mrf.mxu0
        %v2214 = vadd.f32 0.0, %v2213
        %2215 = vmatmul.f32.gmra.mxu0 %v2126
        %v2216 = vpop.f32.mrf.mxu0
        %v2217 = vadd.f32 0.0, %v2216
        %2218 = vmatmul.f32.gmra.mxu0 %v2128
        %v2219 = vpop.f32.mrf.mxu0
        %v2220 = vadd.f32 0.0, %v2219
        %2221 = vmatmul.f32.gmra.mxu0 %v2130
        %v2222 = vpop.f32.mrf.mxu0
        %v2223 = vadd.f32 0.0, %v2222
        %2224 = vmatmul.f32.gmra.mxu0 %v2132
        %v2225 = vpop.f32.mrf.mxu0
        %v2226 = vadd.f32 0.0, %v2225
        %2227 = vmatmul.f32.gmra.mxu0 %v2134
        %v2228 = vpop.f32.mrf.mxu0
        %v2229 = vadd.f32 0.0, %v2228
        %2230 = vmatmul.f32.gmra.mxu0 %v2136
        %v2231 = vpop.f32.mrf.mxu0
        %v2232 = vadd.f32 0.0, %v2231
        %2233 = vmatmul.f32.gmra.mxu0 %v2138
        %v2234 = vpop.f32.mrf.mxu0
        %v2235 = vadd.f32 0.0, %v2234
        %2236 = vmatmul.f32.gmra.mxu0 %v2140
        %v2237 = vpop.f32.mrf.mxu0
        %v2238 = vadd.f32 0.0, %v2237
        %2239 = vmatmul.f32.gmra.mxu0 %v2142
        %v2240 = vpop.f32.mrf.mxu0
        %v2241 = vadd.f32 0.0, %v2240
        %2242 = vmatmul.f32.gmra.mxu0 %v2144
        %v2243 = vpop.f32.mrf.mxu0
        %v2244 = vadd.f32 0.0, %v2243
        %2245 = vmatmul.f32.gmra.mxu0 %v2146
        %v2246 = vpop.f32.mrf.mxu0
        %v2247 = vadd.f32 0.0, %v2246
        %2248 = vmatmul.f32.gmra.mxu0 %v2148
        %v2249 = vpop.f32.mrf.mxu0
        %v2250 = vadd.f32 0.0, %v2249
        %2251 = vmatmul.f32.gmra.mxu0 %v2150
        %v2252 = vpop.f32.mrf.mxu0
        %v2253 = vadd.f32 0.0, %v2252
        %2254 = vmatmul.f32.gmra.mxu0 %v2152
        %v2255 = vpop.f32.mrf.mxu0
        %v2256 = vadd.f32 0.0, %v2255
        %2257 = vmatmul.f32.gmra.mxu0 %v2154
        %v2258 = vpop.f32.mrf.mxu0
        %v2259 = vadd.f32 0.0, %v2258
        %2260 = vmatmul.f32.gmra.mxu0 %v2156
        %v2261 = vpop.f32.mrf.mxu0
        %v2262 = vadd.f32 0.0, %v2261
        %2263 = vmatmul.f32.gmra.mxu0 %v2158
        %v2264 = vpop.f32.mrf.mxu0
        %v2265 = vadd.f32 0.0, %v2264
        %2266 = vmatmul.f32.gmra.mxu0 %v2160
        %v2267 = vpop.f32.mrf.mxu0
        %v2268 = vadd.f32 0.0, %v2267
        %2269 = vmatmul.f32.gmra.mxu0 %v2162
        %v2270 = vpop.f32.mrf.mxu0
        %v2271 = vadd.f32 0.0, %v2270
        %2272 = vmatmul.f32.gmra.mxu0 %v2164
        %v2273 = vpop.f32.mrf.mxu0
        %v2274 = vadd.f32 0.0, %v2273
        %2275 = vmatmul.f32.gmra.mxu0 %v2166
        %v2276 = vpop.f32.mrf.mxu0
        %v2277 = vadd.f32 0.0, %v2276
        %2278 = vmatmul.f32.gmra.mxu0 %v2168
        %v2279 = vpop.f32.mrf.mxu0
        %v2280 = vadd.f32 0.0, %v2279
        %2281 = vmatmul.f32.gmra.mxu0 %v2170
        %v2282 = vpop.f32.mrf.mxu0
        %v2283 = vadd.f32 0.0, %v2282
        %2284 = vdwg.mxu0
        %v2285 = vadd.f32 %v2010, %v2190
        %v2286 = vadd.f32 %v2011, %v2193
        %v2287 = vadd.f32 %v2012, %v2196
        %v2288 = vadd.f32 %v2013, %v2199
        %v2289 = vadd.f32 %v2014, %v2202
        %v2290 = vadd.f32 %v2015, %v2205
        %v2291 = vadd.f32 %v2016, %v2208
        %v2292 = vadd.f32 %v2017, %v2211
        %v2293 = vadd.f32 %v2018, %v2214
        %v2294 = vadd.f32 %v2019, %v2217
        %v2295 = vadd.f32 %v2020, %v2220
        %v2296 = vadd.f32 %v2021, %v2223
        %v2297 = vadd.f32 %v2022, %v2226
        %v2298 = vadd.f32 %v2023, %v2229
        %v2299 = vadd.f32 %v2024, %v2232
        %v2300 = vadd.f32 %v2025, %v2235
        %v2301 = vadd.f32 %v2026, %v2238
        %v2302 = vadd.f32 %v2027, %v2241
        %v2303 = vadd.f32 %v2028, %v2244
        %v2304 = vadd.f32 %v2029, %v2247
        %v2305 = vadd.f32 %v2030, %v2250
        %v2306 = vadd.f32 %v2031, %v2253
        %v2307 = vadd.f32 %v2032, %v2256
        %v2308 = vadd.f32 %v2033, %v2259
        %v2309 = vadd.f32 %v2034, %v2262
        %v2310 = vadd.f32 %v2035, %v2265
        %v2311 = vadd.f32 %v2036, %v2268
        %v2312 = vadd.f32 %v2037, %v2271
        %v2313 = vadd.f32 %v2038, %v2274
        %v2314 = vadd.f32 %v2039, %v2277
        %v2315 = vadd.f32 %v2040, %v2280
        %v2316 = vadd.f32 %v2041, %v2283
        %s2317 = scalar_lea.vmem %s1, 56
        %v2318 = vld [vmem:[%s2317] sm:$0xff]
        %2319 = vrot.lane.b32.xlu0 %v911, 112
        %v2320 = vpop.permute.xlu0 %2319
        %2321 = vrot.lane.b32.xlu0 %v913, 112
        %v2322 = vpop.permute.xlu0 %2321
        %2323 = vrot.lane.b32.xlu0 %v916, 112
        %v2324 = vpop.permute.xlu0 %2323
        %2325 = vrot.lane.b32.xlu0 %v918, 112
        %v2326 = vpop.permute.xlu0 %2325
        %2327 = vrot.lane.b32.xlu0 %v921, 112
        %v2328 = vpop.permute.xlu0 %2327
        %2329 = vrot.lane.b32.xlu0 %v923, 112
        %v2330 = vpop.permute.xlu0 %2329
        %2331 = vrot.lane.b32.xlu0 %v926, 112
        %v2332 = vpop.permute.xlu0 %2331
        %2333 = vrot.lane.b32.xlu0 %v928, 112
        %v2334 = vpop.permute.xlu0 %2333
        %2335 = vrot.lane.b32.xlu0 %v931, 112
        %v2336 = vpop.permute.xlu0 %2335
        %2337 = vrot.lane.b32.xlu0 %v933, 112
        %v2338 = vpop.permute.xlu0 %2337
        %2339 = vrot.lane.b32.xlu0 %v936, 112
        %v2340 = vpop.permute.xlu0 %2339
        %2341 = vrot.lane.b32.xlu0 %v938, 112
        %v2342 = vpop.permute.xlu0 %2341
        %2343 = vrot.lane.b32.xlu0 %v941, 112
        %v2344 = vpop.permute.xlu0 %2343
        %2345 = vrot.lane.b32.xlu0 %v943, 112
        %v2346 = vpop.permute.xlu0 %2345
        %2347 = vrot.lane.b32.xlu0 %v946, 112
        %v2348 = vpop.permute.xlu0 %2347
        %2349 = vrot.lane.b32.xlu0 %v948, 112
        %v2350 = vpop.permute.xlu0 %2349
        %2351 = vrot.lane.b32.xlu0 %v951, 112
        %v2352 = vpop.permute.xlu0 %2351
        %2353 = vrot.lane.b32.xlu0 %v953, 112
        %v2354 = vpop.permute.xlu0 %2353
        %2355 = vrot.lane.b32.xlu0 %v956, 112
        %v2356 = vpop.permute.xlu0 %2355
        %2357 = vrot.lane.b32.xlu0 %v958, 112
        %v2358 = vpop.permute.xlu0 %2357
        %2359 = vrot.lane.b32.xlu0 %v961, 112
        %v2360 = vpop.permute.xlu0 %2359
        %2361 = vrot.lane.b32.xlu0 %v963, 112
        %v2362 = vpop.permute.xlu0 %2361
        %2363 = vrot.lane.b32.xlu0 %v966, 112
        %v2364 = vpop.permute.xlu0 %2363
        %2365 = vrot.lane.b32.xlu0 %v968, 112
        %v2366 = vpop.permute.xlu0 %2365
        %2367 = vrot.lane.b32.xlu0 %v971, 112
        %v2368 = vpop.permute.xlu0 %2367
        %2369 = vrot.lane.b32.xlu0 %v973, 112
        %v2370 = vpop.permute.xlu0 %2369
        %2371 = vrot.lane.b32.xlu0 %v976, 112
        %v2372 = vpop.permute.xlu0 %2371
        %2373 = vrot.lane.b32.xlu0 %v978, 112
        %v2374 = vpop.permute.xlu0 %2373
        %2375 = vrot.lane.b32.xlu0 %v981, 112
        %v2376 = vpop.permute.xlu0 %2375
        %2377 = vrot.lane.b32.xlu0 %v983, 112
        %v2378 = vpop.permute.xlu0 %2377
        %2379 = vrot.lane.b32.xlu0 %v986, 112
        %v2380 = vpop.permute.xlu0 %2379
        %2381 = vrot.lane.b32.xlu0 %v988, 112
        %v2382 = vpop.permute.xlu0 %2381
        %v2383 = vsel %vm537, %v2320, 0
        %v2385 = vsel %vm537, %v2322, 0
        %v2387 = vsel %vm537, %v2324, 0
        %v2389 = vsel %vm537, %v2326, 0
        %v2391 = vsel %vm537, %v2328, 0
        %v2393 = vsel %vm537, %v2330, 0
        %v2395 = vsel %vm537, %v2332, 0
        %v2397 = vsel %vm537, %v2334, 0
        %v2399 = vsel %vm537, %v2336, 0
        %v2401 = vsel %vm537, %v2338, 0
        %v2403 = vsel %vm537, %v2340, 0
        %v2405 = vsel %vm537, %v2342, 0
        %v2407 = vsel %vm537, %v2344, 0
        %v2409 = vsel %vm537, %v2346, 0
        %v2411 = vsel %vm537, %v2348, 0
        %v2413 = vsel %vm537, %v2350, 0
        %v2415 = vsel %vm537, %v2352, 0
        %v2417 = vsel %vm537, %v2354, 0
        %v2419 = vsel %vm537, %v2356, 0
        %v2421 = vsel %vm537, %v2358, 0
        %v2423 = vsel %vm537, %v2360, 0
        %v2425 = vsel %vm537, %v2362, 0
        %v2427 = vsel %vm537, %v2364, 0
        %v2429 = vsel %vm537, %v2366, 0
        %v2431 = vsel %vm537, %v2368, 0
        %v2433 = vsel %vm537, %v2370, 0
        %v2435 = vsel %vm537, %v2372, 0
        %v2437 = vsel %vm537, %v2374, 0
        %v2439 = vsel %vm537, %v2376, 0
        %v2441 = vsel %vm537, %v2378, 0
        %v2443 = vsel %vm537, %v2380, 0
        %v2445 = vsel %vm537, %v2382, 0
        %2447 = vmatpush.msra.mxu0 0.0
        %2448 = vmatpush.msra.mxu0 0.0
        %2449 = vmatpush.msra.mxu0 0.0
        %2450 = vmatpush.msra.mxu0 0.0
        %2451 = vmatpush.msra.mxu0 0.0
        %2452 = vmatpush.msra.mxu0 0.0
        %2453 = vmatpush.msra.mxu0 0.0
        %2454 = vmatpush.msra.mxu0 0.0
        %2455 = vmatpush.msra.mxu0 0.0
        %2456 = vmatpush.msra.mxu0 0.0
        %2457 = vmatpush.msra.mxu0 0.0
        %2458 = vmatpush.msra.mxu0 0.0
        %2459 = vmatpush.msra.mxu0 0.0
        %2460 = vmatpush.msra.mxu0 0.0
        %2461 = vmatpush.msra.mxu0 0.0
        %2462 = vmatpush.msra.mxu0 %v2318
        %2463 = vmatmul.f32.gmra.mxu0 %v2383
        %v2464 = vpop.f32.mrf.mxu0
        %v2465 = vadd.f32 0.0, %v2464
        %2466 = vmatmul.f32.gmra.mxu0 %v2385
        %v2467 = vpop.f32.mrf.mxu0
        %v2468 = vadd.f32 0.0, %v2467
        %2469 = vmatmul.f32.gmra.mxu0 %v2387
        %v2470 = vpop.f32.mrf.mxu0
        %v2471 = vadd.f32 0.0, %v2470
        %2472 = vmatmul.f32.gmra.mxu0 %v2389
        %v2473 = vpop.f32.mrf.mxu0
        %v2474 = vadd.f32 0.0, %v2473
        %2475 = vmatmul.f32.gmra.mxu0 %v2391
        %v2476 = vpop.f32.mrf.mxu0
        %v2477 = vadd.f32 0.0, %v2476
        %2478 = vmatmul.f32.gmra.mxu0 %v2393
        %v2479 = vpop.f32.mrf.mxu0
        %v2480 = vadd.f32 0.0, %v2479
        %2481 = vmatmul.f32.gmra.mxu0 %v2395
        %v2482 = vpop.f32.mrf.mxu0
        %v2483 = vadd.f32 0.0, %v2482
        %2484 = vmatmul.f32.gmra.mxu0 %v2397
        %v2485 = vpop.f32.mrf.mxu0
        %v2486 = vadd.f32 0.0, %v2485
        %2487 = vmatmul.f32.gmra.mxu0 %v2399
        %v2488 = vpop.f32.mrf.mxu0
        %v2489 = vadd.f32 0.0, %v2488
        %2490 = vmatmul.f32.gmra.mxu0 %v2401
        %v2491 = vpop.f32.mrf.mxu0
        %v2492 = vadd.f32 0.0, %v2491
        %2493 = vmatmul.f32.gmra.mxu0 %v2403
        %v2494 = vpop.f32.mrf.mxu0
        %v2495 = vadd.f32 0.0, %v2494
        %2496 = vmatmul.f32.gmra.mxu0 %v2405
        %v2497 = vpop.f32.mrf.mxu0
        %v2498 = vadd.f32 0.0, %v2497
        %2499 = vmatmul.f32.gmra.mxu0 %v2407
        %v2500 = vpop.f32.mrf.mxu0
        %v2501 = vadd.f32 0.0, %v2500
        %2502 = vmatmul.f32.gmra.mxu0 %v2409
        %v2503 = vpop.f32.mrf.mxu0
        %v2504 = vadd.f32 0.0, %v2503
        %2505 = vmatmul.f32.gmra.mxu0 %v2411
        %v2506 = vpop.f32.mrf.mxu0
        %v2507 = vadd.f32 0.0, %v2506
        %2508 = vmatmul.f32.gmra.mxu0 %v2413
        %v2509 = vpop.f32.mrf.mxu0
        %v2510 = vadd.f32 0.0, %v2509
        %2511 = vmatmul.f32.gmra.mxu0 %v2415
        %v2512 = vpop.f32.mrf.mxu0
        %v2513 = vadd.f32 0.0, %v2512
        %2514 = vmatmul.f32.gmra.mxu0 %v2417
        %v2515 = vpop.f32.mrf.mxu0
        %v2516 = vadd.f32 0.0, %v2515
        %2517 = vmatmul.f32.gmra.mxu0 %v2419
        %v2518 = vpop.f32.mrf.mxu0
        %v2519 = vadd.f32 0.0, %v2518
        %2520 = vmatmul.f32.gmra.mxu0 %v2421
        %v2521 = vpop.f32.mrf.mxu0
        %v2522 = vadd.f32 0.0, %v2521
        %2523 = vmatmul.f32.gmra.mxu0 %v2423
        %v2524 = vpop.f32.mrf.mxu0
        %v2525 = vadd.f32 0.0, %v2524
        %2526 = vmatmul.f32.gmra.mxu0 %v2425
        %v2527 = vpop.f32.mrf.mxu0
        %v2528 = vadd.f32 0.0, %v2527
        %2529 = vmatmul.f32.gmra.mxu0 %v2427
        %v2530 = vpop.f32.mrf.mxu0
        %v2531 = vadd.f32 0.0, %v2530
        %2532 = vmatmul.f32.gmra.mxu0 %v2429
        %v2533 = vpop.f32.mrf.mxu0
        %v2534 = vadd.f32 0.0, %v2533
        %2535 = vmatmul.f32.gmra.mxu0 %v2431
        %v2536 = vpop.f32.mrf.mxu0
        %v2537 = vadd.f32 0.0, %v2536
        %2538 = vmatmul.f32.gmra.mxu0 %v2433
        %v2539 = vpop.f32.mrf.mxu0
        %v2540 = vadd.f32 0.0, %v2539
        %2541 = vmatmul.f32.gmra.mxu0 %v2435
        %v2542 = vpop.f32.mrf.mxu0
        %v2543 = vadd.f32 0.0, %v2542
        %2544 = vmatmul.f32.gmra.mxu0 %v2437
        %v2545 = vpop.f32.mrf.mxu0
        %v2546 = vadd.f32 0.0, %v2545
        %2547 = vmatmul.f32.gmra.mxu0 %v2439
        %v2548 = vpop.f32.mrf.mxu0
        %v2549 = vadd.f32 0.0, %v2548
        %2550 = vmatmul.f32.gmra.mxu0 %v2441
        %v2551 = vpop.f32.mrf.mxu0
        %v2552 = vadd.f32 0.0, %v2551
        %2553 = vmatmul.f32.gmra.mxu0 %v2443
        %v2554 = vpop.f32.mrf.mxu0
        %v2555 = vadd.f32 0.0, %v2554
        %2556 = vmatmul.f32.gmra.mxu0 %v2445
        %v2557 = vpop.f32.mrf.mxu0
        %v2558 = vadd.f32 0.0, %v2557
        %2559 = vdwg.mxu0
        %v2560 = vadd.f32 %v2285, %v2465
        %v2561 = vadd.f32 %v2286, %v2468
        %v2562 = vadd.f32 %v2287, %v2471
        %v2563 = vadd.f32 %v2288, %v2474
        %v2564 = vadd.f32 %v2289, %v2477
        %v2565 = vadd.f32 %v2290, %v2480
        %v2566 = vadd.f32 %v2291, %v2483
        %v2567 = vadd.f32 %v2292, %v2486
        %v2568 = vadd.f32 %v2293, %v2489
        %v2569 = vadd.f32 %v2294, %v2492
        %v2570 = vadd.f32 %v2295, %v2495
        %v2571 = vadd.f32 %v2296, %v2498
        %v2572 = vadd.f32 %v2297, %v2501
        %v2573 = vadd.f32 %v2298, %v2504
        %v2574 = vadd.f32 %v2299, %v2507
        %v2575 = vadd.f32 %v2300, %v2510
        %v2576 = vadd.f32 %v2301, %v2513
        %v2577 = vadd.f32 %v2302, %v2516
        %v2578 = vadd.f32 %v2303, %v2519
        %v2579 = vadd.f32 %v2304, %v2522
        %v2580 = vadd.f32 %v2305, %v2525
        %v2581 = vadd.f32 %v2306, %v2528
        %v2582 = vadd.f32 %v2307, %v2531
        %v2583 = vadd.f32 %v2308, %v2534
        %v2584 = vadd.f32 %v2309, %v2537
        %v2585 = vadd.f32 %v2310, %v2540
        %v2586 = vadd.f32 %v2311, %v2543
        %v2587 = vadd.f32 %v2312, %v2546
        %v2588 = vadd.f32 %v2313, %v2549
        %v2589 = vadd.f32 %v2314, %v2552
        %v2590 = vadd.f32 %v2315, %v2555
        %v2591 = vadd.f32 %v2316, %v2558
        %s2592 = scalar_lea.vmem %s1, 64
        %v2593 = vld [vmem:[%s2592] sm:$0xff]
        %2594 = vrot.lane.b32.xlu0 %v911, 104
        %v2595 = vpop.permute.xlu0 %2594
        %2596 = vrot.lane.b32.xlu0 %v913, 104
        %v2597 = vpop.permute.xlu0 %2596
        %2598 = vrot.lane.b32.xlu0 %v916, 104
        %v2599 = vpop.permute.xlu0 %2598
        %2600 = vrot.lane.b32.xlu0 %v918, 104
        %v2601 = vpop.permute.xlu0 %2600
        %2602 = vrot.lane.b32.xlu0 %v921, 104
        %v2603 = vpop.permute.xlu0 %2602
        %2604 = vrot.lane.b32.xlu0 %v923, 104
        %v2605 = vpop.permute.xlu0 %2604
        %2606 = vrot.lane.b32.xlu0 %v926, 104
        %v2607 = vpop.permute.xlu0 %2606
        %2608 = vrot.lane.b32.xlu0 %v928, 104
        %v2609 = vpop.permute.xlu0 %2608
        %2610 = vrot.lane.b32.xlu0 %v931, 104
        %v2611 = vpop.permute.xlu0 %2610
        %2612 = vrot.lane.b32.xlu0 %v933, 104
        %v2613 = vpop.permute.xlu0 %2612
        %2614 = vrot.lane.b32.xlu0 %v936, 104
        %v2615 = vpop.permute.xlu0 %2614
        %2616 = vrot.lane.b32.xlu0 %v938, 104
        %v2617 = vpop.permute.xlu0 %2616
        %2618 = vrot.lane.b32.xlu0 %v941, 104
        %v2619 = vpop.permute.xlu0 %2618
        %2620 = vrot.lane.b32.xlu0 %v943, 104
        %v2621 = vpop.permute.xlu0 %2620
        %2622 = vrot.lane.b32.xlu0 %v946, 104
        %v2623 = vpop.permute.xlu0 %2622
        %2624 = vrot.lane.b32.xlu0 %v948, 104
        %v2625 = vpop.permute.xlu0 %2624
        %2626 = vrot.lane.b32.xlu0 %v951, 104
        %v2627 = vpop.permute.xlu0 %2626
        %2628 = vrot.lane.b32.xlu0 %v953, 104
        %v2629 = vpop.permute.xlu0 %2628
        %2630 = vrot.lane.b32.xlu0 %v956, 104
        %v2631 = vpop.permute.xlu0 %2630
        %2632 = vrot.lane.b32.xlu0 %v958, 104
        %v2633 = vpop.permute.xlu0 %2632
        %2634 = vrot.lane.b32.xlu0 %v961, 104
        %v2635 = vpop.permute.xlu0 %2634
        %2636 = vrot.lane.b32.xlu0 %v963, 104
        %v2637 = vpop.permute.xlu0 %2636
        %2638 = vrot.lane.b32.xlu0 %v966, 104
        %v2639 = vpop.permute.xlu0 %2638
        %2640 = vrot.lane.b32.xlu0 %v968, 104
        %v2641 = vpop.permute.xlu0 %2640
        %2642 = vrot.lane.b32.xlu0 %v971, 104
        %v2643 = vpop.permute.xlu0 %2642
        %2644 = vrot.lane.b32.xlu0 %v973, 104
        %v2645 = vpop.permute.xlu0 %2644
        %2646 = vrot.lane.b32.xlu0 %v976, 104
        %v2647 = vpop.permute.xlu0 %2646
        %2648 = vrot.lane.b32.xlu0 %v978, 104
        %v2649 = vpop.permute.xlu0 %2648
        %2650 = vrot.lane.b32.xlu0 %v981, 104
        %v2651 = vpop.permute.xlu0 %2650
        %2652 = vrot.lane.b32.xlu0 %v983, 104
        %v2653 = vpop.permute.xlu0 %2652
        %2654 = vrot.lane.b32.xlu0 %v986, 104
        %v2655 = vpop.permute.xlu0 %2654
        %2656 = vrot.lane.b32.xlu0 %v988, 104
        %v2657 = vpop.permute.xlu0 %2656
        %v2658 = vsel %vm537, %v2595, 0
        %v2660 = vsel %vm537, %v2597, 0
        %v2662 = vsel %vm537, %v2599, 0
        %v2664 = vsel %vm537, %v2601, 0
        %v2666 = vsel %vm537, %v2603, 0
        %v2668 = vsel %vm537, %v2605, 0
        %v2670 = vsel %vm537, %v2607, 0
        %v2672 = vsel %vm537, %v2609, 0
        %v2674 = vsel %vm537, %v2611, 0
        %v2676 = vsel %vm537, %v2613, 0
        %v2678 = vsel %vm537, %v2615, 0
        %v2680 = vsel %vm537, %v2617, 0
        %v2682 = vsel %vm537, %v2619, 0
        %v2684 = vsel %vm537, %v2621, 0
        %v2686 = vsel %vm537, %v2623, 0
        %v2688 = vsel %vm537, %v2625, 0
        %v2690 = vsel %vm537, %v2627, 0
        %v2692 = vsel %vm537, %v2629, 0
        %v2694 = vsel %vm537, %v2631, 0
        %v2696 = vsel %vm537, %v2633, 0
        %v2698 = vsel %vm537, %v2635, 0
        %v2700 = vsel %vm537, %v2637, 0
        %v2702 = vsel %vm537, %v2639, 0
        %v2704 = vsel %vm537, %v2641, 0
        %v2706 = vsel %vm537, %v2643, 0
        %v2708 = vsel %vm537, %v2645, 0
        %v2710 = vsel %vm537, %v2647, 0
        %v2712 = vsel %vm537, %v2649, 0
        %v2714 = vsel %vm537, %v2651, 0
        %v2716 = vsel %vm537, %v2653, 0
        %v2718 = vsel %vm537, %v2655, 0
        %v2720 = vsel %vm537, %v2657, 0
        %2722 = vmatpush.msra.mxu0 0.0
        %2723 = vmatpush.msra.mxu0 0.0
        %2724 = vmatpush.msra.mxu0 0.0
        %2725 = vmatpush.msra.mxu0 0.0
        %2726 = vmatpush.msra.mxu0 0.0
        %2727 = vmatpush.msra.mxu0 0.0
        %2728 = vmatpush.msra.mxu0 0.0
        %2729 = vmatpush.msra.mxu0 0.0
        %2730 = vmatpush.msra.mxu0 0.0
        %2731 = vmatpush.msra.mxu0 0.0
        %2732 = vmatpush.msra.mxu0 0.0
        %2733 = vmatpush.msra.mxu0 0.0
        %2734 = vmatpush.msra.mxu0 0.0
        %2735 = vmatpush.msra.mxu0 0.0
        %2736 = vmatpush.msra.mxu0 0.0
        %2737 = vmatpush.msra.mxu0 %v2593
        %2738 = vmatmul.f32.gmra.mxu0 %v2658
        %v2739 = vpop.f32.mrf.mxu0
        %v2740 = vadd.f32 0.0, %v2739
        %2741 = vmatmul.f32.gmra.mxu0 %v2660
        %v2742 = vpop.f32.mrf.mxu0
        %v2743 = vadd.f32 0.0, %v2742
        %2744 = vmatmul.f32.gmra.mxu0 %v2662
        %v2745 = vpop.f32.mrf.mxu0
        %v2746 = vadd.f32 0.0, %v2745
        %2747 = vmatmul.f32.gmra.mxu0 %v2664
        %v2748 = vpop.f32.mrf.mxu0
        %v2749 = vadd.f32 0.0, %v2748
        %2750 = vmatmul.f32.gmra.mxu0 %v2666
        %v2751 = vpop.f32.mrf.mxu0
        %v2752 = vadd.f32 0.0, %v2751
        %2753 = vmatmul.f32.gmra.mxu0 %v2668
        %v2754 = vpop.f32.mrf.mxu0
        %v2755 = vadd.f32 0.0, %v2754
        %2756 = vmatmul.f32.gmra.mxu0 %v2670
        %v2757 = vpop.f32.mrf.mxu0
        %v2758 = vadd.f32 0.0, %v2757
        %2759 = vmatmul.f32.gmra.mxu0 %v2672
        %v2760 = vpop.f32.mrf.mxu0
        %v2761 = vadd.f32 0.0, %v2760
        %2762 = vmatmul.f32.gmra.mxu0 %v2674
        %v2763 = vpop.f32.mrf.mxu0
        %v2764 = vadd.f32 0.0, %v2763
        %2765 = vmatmul.f32.gmra.mxu0 %v2676
        %v2766 = vpop.f32.mrf.mxu0
        %v2767 = vadd.f32 0.0, %v2766
        %2768 = vmatmul.f32.gmra.mxu0 %v2678
        %v2769 = vpop.f32.mrf.mxu0
        %v2770 = vadd.f32 0.0, %v2769
        %2771 = vmatmul.f32.gmra.mxu0 %v2680
        %v2772 = vpop.f32.mrf.mxu0
        %v2773 = vadd.f32 0.0, %v2772
        %2774 = vmatmul.f32.gmra.mxu0 %v2682
        %v2775 = vpop.f32.mrf.mxu0
        %v2776 = vadd.f32 0.0, %v2775
        %2777 = vmatmul.f32.gmra.mxu0 %v2684
        %v2778 = vpop.f32.mrf.mxu0
        %v2779 = vadd.f32 0.0, %v2778
        %2780 = vmatmul.f32.gmra.mxu0 %v2686
        %v2781 = vpop.f32.mrf.mxu0
        %v2782 = vadd.f32 0.0, %v2781
        %2783 = vmatmul.f32.gmra.mxu0 %v2688
        %v2784 = vpop.f32.mrf.mxu0
        %v2785 = vadd.f32 0.0, %v2784
        %2786 = vmatmul.f32.gmra.mxu0 %v2690
        %v2787 = vpop.f32.mrf.mxu0
        %v2788 = vadd.f32 0.0, %v2787
        %2789 = vmatmul.f32.gmra.mxu0 %v2692
        %v2790 = vpop.f32.mrf.mxu0
        %v2791 = vadd.f32 0.0, %v2790
        %2792 = vmatmul.f32.gmra.mxu0 %v2694
        %v2793 = vpop.f32.mrf.mxu0
        %v2794 = vadd.f32 0.0, %v2793
        %2795 = vmatmul.f32.gmra.mxu0 %v2696
        %v2796 = vpop.f32.mrf.mxu0
        %v2797 = vadd.f32 0.0, %v2796
        %2798 = vmatmul.f32.gmra.mxu0 %v2698
        %v2799 = vpop.f32.mrf.mxu0
        %v2800 = vadd.f32 0.0, %v2799
        %2801 = vmatmul.f32.gmra.mxu0 %v2700
        %v2802 = vpop.f32.mrf.mxu0
        %v2803 = vadd.f32 0.0, %v2802
        %2804 = vmatmul.f32.gmra.mxu0 %v2702
        %v2805 = vpop.f32.mrf.mxu0
        %v2806 = vadd.f32 0.0, %v2805
        %2807 = vmatmul.f32.gmra.mxu0 %v2704
        %v2808 = vpop.f32.mrf.mxu0
        %v2809 = vadd.f32 0.0, %v2808
        %2810 = vmatmul.f32.gmra.mxu0 %v2706
        %v2811 = vpop.f32.mrf.mxu0
        %v2812 = vadd.f32 0.0, %v2811
        %2813 = vmatmul.f32.gmra.mxu0 %v2708
        %v2814 = vpop.f32.mrf.mxu0
        %v2815 = vadd.f32 0.0, %v2814
        %2816 = vmatmul.f32.gmra.mxu0 %v2710
        %v2817 = vpop.f32.mrf.mxu0
        %v2818 = vadd.f32 0.0, %v2817
        %2819 = vmatmul.f32.gmra.mxu0 %v2712
        %v2820 = vpop.f32.mrf.mxu0
        %v2821 = vadd.f32 0.0, %v2820
        %2822 = vmatmul.f32.gmra.mxu0 %v2714
        %v2823 = vpop.f32.mrf.mxu0
        %v2824 = vadd.f32 0.0, %v2823
        %2825 = vmatmul.f32.gmra.mxu0 %v2716
        %v2826 = vpop.f32.mrf.mxu0
        %v2827 = vadd.f32 0.0, %v2826
        %2828 = vmatmul.f32.gmra.mxu0 %v2718
        %v2829 = vpop.f32.mrf.mxu0
        %v2830 = vadd.f32 0.0, %v2829
        %2831 = vmatmul.f32.gmra.mxu0 %v2720
        %v2832 = vpop.f32.mrf.mxu0
        %v2833 = vadd.f32 0.0, %v2832
        %2834 = vdwg.mxu0
        %v2835 = vadd.f32 %v2560, %v2740
        %v2836 = vadd.f32 %v2561, %v2743
        %v2837 = vadd.f32 %v2562, %v2746
        %v2838 = vadd.f32 %v2563, %v2749
        %v2839 = vadd.f32 %v2564, %v2752
        %v2840 = vadd.f32 %v2565, %v2755
        %v2841 = vadd.f32 %v2566, %v2758
        %v2842 = vadd.f32 %v2567, %v2761
        %v2843 = vadd.f32 %v2568, %v2764
        %v2844 = vadd.f32 %v2569, %v2767
        %v2845 = vadd.f32 %v2570, %v2770
        %v2846 = vadd.f32 %v2571, %v2773
        %v2847 = vadd.f32 %v2572, %v2776
        %v2848 = vadd.f32 %v2573, %v2779
        %v2849 = vadd.f32 %v2574, %v2782
        %v2850 = vadd.f32 %v2575, %v2785
        %v2851 = vadd.f32 %v2576, %v2788
        %v2852 = vadd.f32 %v2577, %v2791
        %v2853 = vadd.f32 %v2578, %v2794
        %v2854 = vadd.f32 %v2579, %v2797
        %v2855 = vadd.f32 %v2580, %v2800
        %v2856 = vadd.f32 %v2581, %v2803
        %v2857 = vadd.f32 %v2582, %v2806
        %v2858 = vadd.f32 %v2583, %v2809
        %v2859 = vadd.f32 %v2584, %v2812
        %v2860 = vadd.f32 %v2585, %v2815
        %v2861 = vadd.f32 %v2586, %v2818
        %v2862 = vadd.f32 %v2587, %v2821
        %v2863 = vadd.f32 %v2588, %v2824
        %v2864 = vadd.f32 %v2589, %v2827
        %v2865 = vadd.f32 %v2590, %v2830
        %v2866 = vadd.f32 %v2591, %v2833
        %s2867 = scalar_lea.vmem %s1, 72
        %v2868 = vld [vmem:[%s2867] sm:$0xff]
        %2869 = vrot.lane.b32.xlu0 %v1478, 112
        %v2870 = vpop.permute.xlu0 %2869
        %2871 = vrot.lane.b32.xlu0 %v1480, 112
        %v2872 = vpop.permute.xlu0 %2871
        %2873 = vrot.lane.b32.xlu0 %v1483, 112
        %v2874 = vpop.permute.xlu0 %2873
        %2875 = vrot.lane.b32.xlu0 %v1485, 112
        %v2876 = vpop.permute.xlu0 %2875
        %2877 = vrot.lane.b32.xlu0 %v1488, 112
        %v2878 = vpop.permute.xlu0 %2877
        %2879 = vrot.lane.b32.xlu0 %v1490, 112
        %v2880 = vpop.permute.xlu0 %2879
        %2881 = vrot.lane.b32.xlu0 %v1493, 112
        %v2882 = vpop.permute.xlu0 %2881
        %2883 = vrot.lane.b32.xlu0 %v1495, 112
        %v2884 = vpop.permute.xlu0 %2883
        %2885 = vrot.lane.b32.xlu0 %v1498, 112
        %v2886 = vpop.permute.xlu0 %2885
        %2887 = vrot.lane.b32.xlu0 %v1500, 112
        %v2888 = vpop.permute.xlu0 %2887
        %2889 = vrot.lane.b32.xlu0 %v1503, 112
        %v2890 = vpop.permute.xlu0 %2889
        %2891 = vrot.lane.b32.xlu0 %v1505, 112
        %v2892 = vpop.permute.xlu0 %2891
        %2893 = vrot.lane.b32.xlu0 %v1508, 112
        %v2894 = vpop.permute.xlu0 %2893
        %2895 = vrot.lane.b32.xlu0 %v1510, 112
        %v2896 = vpop.permute.xlu0 %2895
        %2897 = vrot.lane.b32.xlu0 %v1513, 112
        %v2898 = vpop.permute.xlu0 %2897
        %2899 = vrot.lane.b32.xlu0 %v1515, 112
        %v2900 = vpop.permute.xlu0 %2899
        %2901 = vrot.lane.b32.xlu0 %v1518, 112
        %v2902 = vpop.permute.xlu0 %2901
        %2903 = vrot.lane.b32.xlu0 %v1520, 112
        %v2904 = vpop.permute.xlu0 %2903
        %2905 = vrot.lane.b32.xlu0 %v1523, 112
        %v2906 = vpop.permute.xlu0 %2905
        %2907 = vrot.lane.b32.xlu0 %v1525, 112
        %v2908 = vpop.permute.xlu0 %2907
        %2909 = vrot.lane.b32.xlu0 %v1528, 112
        %v2910 = vpop.permute.xlu0 %2909
        %2911 = vrot.lane.b32.xlu0 %v1530, 112
        %v2912 = vpop.permute.xlu0 %2911
        %2913 = vrot.lane.b32.xlu0 %v1533, 112
        %v2914 = vpop.permute.xlu0 %2913
        %2915 = vrot.lane.b32.xlu0 %v1535, 112
        %v2916 = vpop.permute.xlu0 %2915
        %2917 = vrot.lane.b32.xlu0 %v1538, 112
        %v2918 = vpop.permute.xlu0 %2917
        %2919 = vrot.lane.b32.xlu0 %v1540, 112
        %v2920 = vpop.permute.xlu0 %2919
        %2921 = vrot.lane.b32.xlu0 %v1543, 112
        %v2922 = vpop.permute.xlu0 %2921
        %2923 = vrot.lane.b32.xlu0 %v1545, 112
        %v2924 = vpop.permute.xlu0 %2923
        %2925 = vrot.lane.b32.xlu0 %v1548, 112
        %v2926 = vpop.permute.xlu0 %2925
        %2927 = vrot.lane.b32.xlu0 %v1550, 112
        %v2928 = vpop.permute.xlu0 %2927
        %2929 = vrot.lane.b32.xlu0 %v1553, 112
        %v2930 = vpop.permute.xlu0 %2929
        %2931 = vrot.lane.b32.xlu0 %v1555, 112
        %v2932 = vpop.permute.xlu0 %2931
        %v2933 = vsel %vm537, %v2870, 0
        %v2935 = vsel %vm537, %v2872, 0
        %v2937 = vsel %vm537, %v2874, 0
        %v2939 = vsel %vm537, %v2876, 0
        %v2941 = vsel %vm537, %v2878, 0
        %v2943 = vsel %vm537, %v2880, 0
        %v2945 = vsel %vm537, %v2882, 0
        %v2947 = vsel %vm537, %v2884, 0
        %v2949 = vsel %vm537, %v2886, 0
        %v2951 = vsel %vm537, %v2888, 0
        %v2953 = vsel %vm537, %v2890, 0
        %v2955 = vsel %vm537, %v2892, 0
        %v2957 = vsel %vm537, %v2894, 0
        %v2959 = vsel %vm537, %v2896, 0
        %v2961 = vsel %vm537, %v2898, 0
        %v2963 = vsel %vm537, %v2900, 0
        %v2965 = vsel %vm537, %v2902, 0
        %v2967 = vsel %vm537, %v2904, 0
        %v2969 = vsel %vm537, %v2906, 0
        %v2971 = vsel %vm537, %v2908, 0
        %v2973 = vsel %vm537, %v2910, 0
        %v2975 = vsel %vm537, %v2912, 0
        %v2977 = vsel %vm537, %v2914, 0
        %v2979 = vsel %vm537, %v2916, 0
        %v2981 = vsel %vm537, %v2918, 0
        %v2983 = vsel %vm537, %v2920, 0
        %v2985 = vsel %vm537, %v2922, 0
        %v2987 = vsel %vm537, %v2924, 0
        %v2989 = vsel %vm537, %v2926, 0
        %v2991 = vsel %vm537, %v2928, 0
        %v2993 = vsel %vm537, %v2930, 0
        %v2995 = vsel %vm537, %v2932, 0
        %2997 = vmatpush.msra.mxu0 0.0
        %2998 = vmatpush.msra.mxu0 0.0
        %2999 = vmatpush.msra.mxu0 0.0
        %3000 = vmatpush.msra.mxu0 0.0
        %3001 = vmatpush.msra.mxu0 0.0
        %3002 = vmatpush.msra.mxu0 0.0
        %3003 = vmatpush.msra.mxu0 0.0
        %3004 = vmatpush.msra.mxu0 0.0
        %3005 = vmatpush.msra.mxu0 0.0
        %3006 = vmatpush.msra.mxu0 0.0
        %3007 = vmatpush.msra.mxu0 0.0
        %3008 = vmatpush.msra.mxu0 0.0
        %3009 = vmatpush.msra.mxu0 0.0
        %3010 = vmatpush.msra.mxu0 0.0
        %3011 = vmatpush.msra.mxu0 0.0
        %3012 = vmatpush.msra.mxu0 %v2868
        %3013 = vmatmul.f32.gmra.mxu0 %v2933
        %v3014 = vpop.f32.mrf.mxu0
        %v3015 = vadd.f32 0.0, %v3014
        %3016 = vmatmul.f32.gmra.mxu0 %v2935
        %v3017 = vpop.f32.mrf.mxu0
        %v3018 = vadd.f32 0.0, %v3017
        %3019 = vmatmul.f32.gmra.mxu0 %v2937
        %v3020 = vpop.f32.mrf.mxu0
        %v3021 = vadd.f32 0.0, %v3020
        %3022 = vmatmul.f32.gmra.mxu0 %v2939
        %v3023 = vpop.f32.mrf.mxu0
        %v3024 = vadd.f32 0.0, %v3023
        %3025 = vmatmul.f32.gmra.mxu0 %v2941
        %v3026 = vpop.f32.mrf.mxu0
        %v3027 = vadd.f32 0.0, %v3026
        %3028 = vmatmul.f32.gmra.mxu0 %v2943
        %v3029 = vpop.f32.mrf.mxu0
        %v3030 = vadd.f32 0.0, %v3029
        %3031 = vmatmul.f32.gmra.mxu0 %v2945
        %v3032 = vpop.f32.mrf.mxu0
        %v3033 = vadd.f32 0.0, %v3032
        %3034 = vmatmul.f32.gmra.mxu0 %v2947
        %v3035 = vpop.f32.mrf.mxu0
        %v3036 = vadd.f32 0.0, %v3035
        %3037 = vmatmul.f32.gmra.mxu0 %v2949
        %v3038 = vpop.f32.mrf.mxu0
        %v3039 = vadd.f32 0.0, %v3038
        %3040 = vmatmul.f32.gmra.mxu0 %v2951
        %v3041 = vpop.f32.mrf.mxu0
        %v3042 = vadd.f32 0.0, %v3041
        %3043 = vmatmul.f32.gmra.mxu0 %v2953
        %v3044 = vpop.f32.mrf.mxu0
        %v3045 = vadd.f32 0.0, %v3044
        %3046 = vmatmul.f32.gmra.mxu0 %v2955
        %v3047 = vpop.f32.mrf.mxu0
        %v3048 = vadd.f32 0.0, %v3047
        %3049 = vmatmul.f32.gmra.mxu0 %v2957
        %v3050 = vpop.f32.mrf.mxu0
        %v3051 = vadd.f32 0.0, %v3050
        %3052 = vmatmul.f32.gmra.mxu0 %v2959
        %v3053 = vpop.f32.mrf.mxu0
        %v3054 = vadd.f32 0.0, %v3053
        %3055 = vmatmul.f32.gmra.mxu0 %v2961
        %v3056 = vpop.f32.mrf.mxu0
        %v3057 = vadd.f32 0.0, %v3056
        %3058 = vmatmul.f32.gmra.mxu0 %v2963
        %v3059 = vpop.f32.mrf.mxu0
        %v3060 = vadd.f32 0.0, %v3059
        %3061 = vmatmul.f32.gmra.mxu0 %v2965
        %v3062 = vpop.f32.mrf.mxu0
        %v3063 = vadd.f32 0.0, %v3062
        %3064 = vmatmul.f32.gmra.mxu0 %v2967
        %v3065 = vpop.f32.mrf.mxu0
        %v3066 = vadd.f32 0.0, %v3065
        %3067 = vmatmul.f32.gmra.mxu0 %v2969
        %v3068 = vpop.f32.mrf.mxu0
        %v3069 = vadd.f32 0.0, %v3068
        %3070 = vmatmul.f32.gmra.mxu0 %v2971
        %v3071 = vpop.f32.mrf.mxu0
        %v3072 = vadd.f32 0.0, %v3071
        %3073 = vmatmul.f32.gmra.mxu0 %v2973
        %v3074 = vpop.f32.mrf.mxu0
        %v3075 = vadd.f32 0.0, %v3074
        %3076 = vmatmul.f32.gmra.mxu0 %v2975
        %v3077 = vpop.f32.mrf.mxu0
        %v3078 = vadd.f32 0.0, %v3077
        %3079 = vmatmul.f32.gmra.mxu0 %v2977
        %v3080 = vpop.f32.mrf.mxu0
        %v3081 = vadd.f32 0.0, %v3080
        %3082 = vmatmul.f32.gmra.mxu0 %v2979
        %v3083 = vpop.f32.mrf.mxu0
        %v3084 = vadd.f32 0.0, %v3083
        %3085 = vmatmul.f32.gmra.mxu0 %v2981
        %v3086 = vpop.f32.mrf.mxu0
        %v3087 = vadd.f32 0.0, %v3086
        %3088 = vmatmul.f32.gmra.mxu0 %v2983
        %v3089 = vpop.f32.mrf.mxu0
        %v3090 = vadd.f32 0.0, %v3089
        %3091 = vmatmul.f32.gmra.mxu0 %v2985
        %v3092 = vpop.f32.mrf.mxu0
        %v3093 = vadd.f32 0.0, %v3092
        %3094 = vmatmul.f32.gmra.mxu0 %v2987
        %v3095 = vpop.f32.mrf.mxu0
        %v3096 = vadd.f32 0.0, %v3095
        %3097 = vmatmul.f32.gmra.mxu0 %v2989
        %v3098 = vpop.f32.mrf.mxu0
        %v3099 = vadd.f32 0.0, %v3098
        %3100 = vmatmul.f32.gmra.mxu0 %v2991
        %v3101 = vpop.f32.mrf.mxu0
        %v3102 = vadd.f32 0.0, %v3101
        %3103 = vmatmul.f32.gmra.mxu0 %v2993
        %v3104 = vpop.f32.mrf.mxu0
        %v3105 = vadd.f32 0.0, %v3104
        %3106 = vmatmul.f32.gmra.mxu0 %v2995
        %v3107 = vpop.f32.mrf.mxu0
        %v3108 = vadd.f32 0.0, %v3107
        %3109 = vdwg.mxu0
        %v3110 = vadd.f32 %v2835, %v3015
        %v3111 = vadd.f32 %v2836, %v3018
        %v3112 = vadd.f32 %v2837, %v3021
        %v3113 = vadd.f32 %v2838, %v3024
        %v3114 = vadd.f32 %v2839, %v3027
        %v3115 = vadd.f32 %v2840, %v3030
        %v3116 = vadd.f32 %v2841, %v3033
        %v3117 = vadd.f32 %v2842, %v3036
        %v3118 = vadd.f32 %v2843, %v3039
        %v3119 = vadd.f32 %v2844, %v3042
        %v3120 = vadd.f32 %v2845, %v3045
        %v3121 = vadd.f32 %v2846, %v3048
        %v3122 = vadd.f32 %v2847, %v3051
        %v3123 = vadd.f32 %v2848, %v3054
        %v3124 = vadd.f32 %v2849, %v3057
        %v3125 = vadd.f32 %v2850, %v3060
        %v3126 = vadd.f32 %v2851, %v3063
        %v3127 = vadd.f32 %v2852, %v3066
        %v3128 = vadd.f32 %v2853, %v3069
        %v3129 = vadd.f32 %v2854, %v3072
        %v3130 = vadd.f32 %v2855, %v3075
        %v3131 = vadd.f32 %v2856, %v3078
        %v3132 = vadd.f32 %v2857, %v3081
        %v3133 = vadd.f32 %v2858, %v3084
        %v3134 = vadd.f32 %v2859, %v3087
        %v3135 = vadd.f32 %v2860, %v3090
        %v3136 = vadd.f32 %v2861, %v3093
        %v3137 = vadd.f32 %v2862, %v3096
        %v3138 = vadd.f32 %v2863, %v3099
        %v3139 = vadd.f32 %v2864, %v3102
        %v3140 = vadd.f32 %v2865, %v3105
        %v3141 = vadd.f32 %v2866, %v3108
        %s3142 = scalar_lea.vmem %s1, 80
        %v3143 = vld [vmem:[%s3142] sm:$0xff]
        %v3145 = vsel %vm537, %v432, 0
        %v3148 = vsel %vm537, %v433, 0
        %3150 = vmatpush.msra.mxu0 0.0
        %3151 = vmatpush.msra.mxu0 0.0
        %3152 = vmatpush.msra.mxu0 0.0
        %3153 = vmatpush.msra.mxu0 0.0
        %3154 = vmatpush.msra.mxu0 0.0
        %3155 = vmatpush.msra.mxu0 0.0
        %3156 = vmatpush.msra.mxu0 0.0
        %3157 = vmatpush.msra.mxu0 0.0
        %3158 = vmatpush.msra.mxu0 0.0
        %3159 = vmatpush.msra.mxu0 0.0
        %3160 = vmatpush.msra.mxu0 0.0
        %3161 = vmatpush.msra.mxu0 0.0
        %3162 = vmatpush.msra.mxu0 0.0
        %3163 = vmatpush.msra.mxu0 0.0
        %3164 = vmatpush.msra.mxu0 0.0
        %3165 = vmatpush.msra.mxu0 %v3143
        %3166 = vmatmul.f32.gmra.mxu0 %v719
        %v3167 = vpop.f32.mrf.mxu0
        %v3168 = vadd.f32 0.0, %v3167
        %3169 = vmatmul.f32.gmra.mxu0 %v721
        %v3170 = vpop.f32.mrf.mxu0
        %v3171 = vadd.f32 0.0, %v3170
        %3172 = vmatmul.f32.gmra.mxu0 %v723
        %v3173 = vpop.f32.mrf.mxu0
        %v3174 = vadd.f32 0.0, %v3173
        %3175 = vmatmul.f32.gmra.mxu0 %v725
        %v3176 = vpop.f32.mrf.mxu0
        %v3177 = vadd.f32 0.0, %v3176
        %3178 = vmatmul.f32.gmra.mxu0 %v727
        %v3179 = vpop.f32.mrf.mxu0
        %v3180 = vadd.f32 0.0, %v3179
        %3181 = vmatmul.f32.gmra.mxu0 %v729
        %v3182 = vpop.f32.mrf.mxu0
        %v3183 = vadd.f32 0.0, %v3182
        %3184 = vmatmul.f32.gmra.mxu0 %v731
        %v3185 = vpop.f32.mrf.mxu0
        %v3186 = vadd.f32 0.0, %v3185
        %3187 = vmatmul.f32.gmra.mxu0 %v733
        %v3188 = vpop.f32.mrf.mxu0
        %v3189 = vadd.f32 0.0, %v3188
        %3190 = vmatmul.f32.gmra.mxu0 %v735
        %v3191 = vpop.f32.mrf.mxu0
        %v3192 = vadd.f32 0.0, %v3191
        %3193 = vmatmul.f32.gmra.mxu0 %v737
        %v3194 = vpop.f32.mrf.mxu0
        %v3195 = vadd.f32 0.0, %v3194
        %3196 = vmatmul.f32.gmra.mxu0 %v739
        %v3197 = vpop.f32.mrf.mxu0
        %v3198 = vadd.f32 0.0, %v3197
        %3199 = vmatmul.f32.gmra.mxu0 %v741
        %v3200 = vpop.f32.mrf.mxu0
        %v3201 = vadd.f32 0.0, %v3200
        %3202 = vmatmul.f32.gmra.mxu0 %v743
        %v3203 = vpop.f32.mrf.mxu0
        %v3204 = vadd.f32 0.0, %v3203
        %3205 = vmatmul.f32.gmra.mxu0 %v745
        %v3206 = vpop.f32.mrf.mxu0
        %v3207 = vadd.f32 0.0, %v3206
        %3208 = vmatmul.f32.gmra.mxu0 %v747
        %v3209 = vpop.f32.mrf.mxu0
        %v3210 = vadd.f32 0.0, %v3209
        %3211 = vmatmul.f32.gmra.mxu0 %v749
        %v3212 = vpop.f32.mrf.mxu0
        %v3213 = vadd.f32 0.0, %v3212
        %3214 = vmatmul.f32.gmra.mxu0 %v751
        %v3215 = vpop.f32.mrf.mxu0
        %v3216 = vadd.f32 0.0, %v3215
        %3217 = vmatmul.f32.gmra.mxu0 %v753
        %v3218 = vpop.f32.mrf.mxu0
        %v3219 = vadd.f32 0.0, %v3218
        %3220 = vmatmul.f32.gmra.mxu0 %v755
        %v3221 = vpop.f32.mrf.mxu0
        %v3222 = vadd.f32 0.0, %v3221
        %3223 = vmatmul.f32.gmra.mxu0 %v757
        %v3224 = vpop.f32.mrf.mxu0
        %v3225 = vadd.f32 0.0, %v3224
        %3226 = vmatmul.f32.gmra.mxu0 %v759
        %v3227 = vpop.f32.mrf.mxu0
        %v3228 = vadd.f32 0.0, %v3227
        %3229 = vmatmul.f32.gmra.mxu0 %v761
        %v3230 = vpop.f32.mrf.mxu0
        %v3231 = vadd.f32 0.0, %v3230
        %3232 = vmatmul.f32.gmra.mxu0 %v763
        %v3233 = vpop.f32.mrf.mxu0
        %v3234 = vadd.f32 0.0, %v3233
        %3235 = vmatmul.f32.gmra.mxu0 %v765
        %v3236 = vpop.f32.mrf.mxu0
        %v3237 = vadd.f32 0.0, %v3236
        %3238 = vmatmul.f32.gmra.mxu0 %v767
        %v3239 = vpop.f32.mrf.mxu0
        %v3240 = vadd.f32 0.0, %v3239
        %3241 = vmatmul.f32.gmra.mxu0 %v769
        %v3242 = vpop.f32.mrf.mxu0
        %v3243 = vadd.f32 0.0, %v3242
        %3244 = vmatmul.f32.gmra.mxu0 %v771
        %v3245 = vpop.f32.mrf.mxu0
        %v3246 = vadd.f32 0.0, %v3245
        %3247 = vmatmul.f32.gmra.mxu0 %v773
        %v3248 = vpop.f32.mrf.mxu0
        %v3249 = vadd.f32 0.0, %v3248
        %3250 = vmatmul.f32.gmra.mxu0 %v775
        %v3251 = vpop.f32.mrf.mxu0
        %v3252 = vadd.f32 0.0, %v3251
        %3253 = vmatmul.f32.gmra.mxu0 %v777
        %v3254 = vpop.f32.mrf.mxu0
        %v3255 = vadd.f32 0.0, %v3254
        %3256 = vmatmul.f32.gmra.mxu0 %v3145
        %v3257 = vpop.f32.mrf.mxu0
        %v3258 = vadd.f32 0.0, %v3257
        %3259 = vmatmul.f32.gmra.mxu0 %v3148
        %v3260 = vpop.f32.mrf.mxu0
        %v3261 = vadd.f32 0.0, %v3260
        %3262 = vdwg.mxu0
        %v3263 = vadd.f32 %v3110, %v3168
        %v3264 = vadd.f32 %v3111, %v3171
        %v3265 = vadd.f32 %v3112, %v3174
        %v3266 = vadd.f32 %v3113, %v3177
        %v3267 = vadd.f32 %v3114, %v3180
        %v3268 = vadd.f32 %v3115, %v3183
        %v3269 = vadd.f32 %v3116, %v3186
        %v3270 = vadd.f32 %v3117, %v3189
        %v3271 = vadd.f32 %v3118, %v3192
        %v3272 = vadd.f32 %v3119, %v3195
        %v3273 = vadd.f32 %v3120, %v3198
        %v3274 = vadd.f32 %v3121, %v3201
        %v3275 = vadd.f32 %v3122, %v3204
        %v3276 = vadd.f32 %v3123, %v3207
        %v3277 = vadd.f32 %v3124, %v3210
        %v3278 = vadd.f32 %v3125, %v3213
        %v3279 = vadd.f32 %v3126, %v3216
        %v3280 = vadd.f32 %v3127, %v3219
        %v3281 = vadd.f32 %v3128, %v3222
        %v3282 = vadd.f32 %v3129, %v3225
        %v3283 = vadd.f32 %v3130, %v3228
        %v3284 = vadd.f32 %v3131, %v3231
        %v3285 = vadd.f32 %v3132, %v3234
        %v3286 = vadd.f32 %v3133, %v3237
        %v3287 = vadd.f32 %v3134, %v3240
        %v3288 = vadd.f32 %v3135, %v3243
        %v3289 = vadd.f32 %v3136, %v3246
        %v3290 = vadd.f32 %v3137, %v3249
        %v3291 = vadd.f32 %v3138, %v3252
        %v3292 = vadd.f32 %v3139, %v3255
        %v3293 = vadd.f32 %v3140, %v3258
        %v3294 = vadd.f32 %v3141, %v3261
        %s3295 = scalar_lea.vmem %s1, 88
        %v3296 = vld [vmem:[%s3295] sm:$0xff]
        %3297 = vrot.lane.b32.xlu0 %v432, 120
        %v3298 = vpop.permute.xlu0 %3297
        %3299 = vrot.lane.b32.xlu0 %v433, 120
        %v3300 = vpop.permute.xlu0 %3299
        %v3301 = vsel %vm537, %v3298, 0
        %v3303 = vsel %vm537, %v3300, 0
        %3305 = vmatpush.msra.mxu0 0.0
        %3306 = vmatpush.msra.mxu0 0.0
        %3307 = vmatpush.msra.mxu0 0.0
        %3308 = vmatpush.msra.mxu0 0.0
        %3309 = vmatpush.msra.mxu0 0.0
        %3310 = vmatpush.msra.mxu0 0.0
        %3311 = vmatpush.msra.mxu0 0.0
        %3312 = vmatpush.msra.mxu0 0.0
        %3313 = vmatpush.msra.mxu0 0.0
        %3314 = vmatpush.msra.mxu0 0.0
        %3315 = vmatpush.msra.mxu0 0.0
        %3316 = vmatpush.msra.mxu0 0.0
        %3317 = vmatpush.msra.mxu0 0.0
        %3318 = vmatpush.msra.mxu0 0.0
        %3319 = vmatpush.msra.mxu0 0.0
        %3320 = vmatpush.msra.mxu0 %v3296
        %3321 = vmatmul.f32.gmra.mxu0 %v542
        %v3322 = vpop.f32.mrf.mxu0
        %v3323 = vadd.f32 0.0, %v3322
        %3324 = vmatmul.f32.gmra.mxu0 %v544
        %v3325 = vpop.f32.mrf.mxu0
        %v3326 = vadd.f32 0.0, %v3325
        %3327 = vmatmul.f32.gmra.mxu0 %v546
        %v3328 = vpop.f32.mrf.mxu0
        %v3329 = vadd.f32 0.0, %v3328
        %3330 = vmatmul.f32.gmra.mxu0 %v548
        %v3331 = vpop.f32.mrf.mxu0
        %v3332 = vadd.f32 0.0, %v3331
        %3333 = vmatmul.f32.gmra.mxu0 %v550
        %v3334 = vpop.f32.mrf.mxu0
        %v3335 = vadd.f32 0.0, %v3334
        %3336 = vmatmul.f32.gmra.mxu0 %v552
        %v3337 = vpop.f32.mrf.mxu0
        %v3338 = vadd.f32 0.0, %v3337
        %3339 = vmatmul.f32.gmra.mxu0 %v554
        %v3340 = vpop.f32.mrf.mxu0
        %v3341 = vadd.f32 0.0, %v3340
        %3342 = vmatmul.f32.gmra.mxu0 %v556
        %v3343 = vpop.f32.mrf.mxu0
        %v3344 = vadd.f32 0.0, %v3343
        %3345 = vmatmul.f32.gmra.mxu0 %v558
        %v3346 = vpop.f32.mrf.mxu0
        %v3347 = vadd.f32 0.0, %v3346
        %3348 = vmatmul.f32.gmra.mxu0 %v560
        %v3349 = vpop.f32.mrf.mxu0
        %v3350 = vadd.f32 0.0, %v3349
        %3351 = vmatmul.f32.gmra.mxu0 %v562
        %v3352 = vpop.f32.mrf.mxu0
        %v3353 = vadd.f32 0.0, %v3352
        %3354 = vmatmul.f32.gmra.mxu0 %v564
        %v3355 = vpop.f32.mrf.mxu0
        %v3356 = vadd.f32 0.0, %v3355
        %3357 = vmatmul.f32.gmra.mxu0 %v566
        %v3358 = vpop.f32.mrf.mxu0
        %v3359 = vadd.f32 0.0, %v3358
        %3360 = vmatmul.f32.gmra.mxu0 %v568
        %v3361 = vpop.f32.mrf.mxu0
        %v3362 = vadd.f32 0.0, %v3361
        %3363 = vmatmul.f32.gmra.mxu0 %v570
        %v3364 = vpop.f32.mrf.mxu0
        %v3365 = vadd.f32 0.0, %v3364
        %3366 = vmatmul.f32.gmra.mxu0 %v572
        %v3367 = vpop.f32.mrf.mxu0
        %v3368 = vadd.f32 0.0, %v3367
        %3369 = vmatmul.f32.gmra.mxu0 %v574
        %v3370 = vpop.f32.mrf.mxu0
        %v3371 = vadd.f32 0.0, %v3370
        %3372 = vmatmul.f32.gmra.mxu0 %v576
        %v3373 = vpop.f32.mrf.mxu0
        %v3374 = vadd.f32 0.0, %v3373
        %3375 = vmatmul.f32.gmra.mxu0 %v578
        %v3376 = vpop.f32.mrf.mxu0
        %v3377 = vadd.f32 0.0, %v3376
        %3378 = vmatmul.f32.gmra.mxu0 %v580
        %v3379 = vpop.f32.mrf.mxu0
        %v3380 = vadd.f32 0.0, %v3379
        %3381 = vmatmul.f32.gmra.mxu0 %v582
        %v3382 = vpop.f32.mrf.mxu0
        %v3383 = vadd.f32 0.0, %v3382
        %3384 = vmatmul.f32.gmra.mxu0 %v584
        %v3385 = vpop.f32.mrf.mxu0
        %v3386 = vadd.f32 0.0, %v3385
        %3387 = vmatmul.f32.gmra.mxu0 %v586
        %v3388 = vpop.f32.mrf.mxu0
        %v3389 = vadd.f32 0.0, %v3388
        %3390 = vmatmul.f32.gmra.mxu0 %v588
        %v3391 = vpop.f32.mrf.mxu0
        %v3392 = vadd.f32 0.0, %v3391
        %3393 = vmatmul.f32.gmra.mxu0 %v590
        %v3394 = vpop.f32.mrf.mxu0
        %v3395 = vadd.f32 0.0, %v3394
        %3396 = vmatmul.f32.gmra.mxu0 %v592
        %v3397 = vpop.f32.mrf.mxu0
        %v3398 = vadd.f32 0.0, %v3397
        %3399 = vmatmul.f32.gmra.mxu0 %v594
        %v3400 = vpop.f32.mrf.mxu0
        %v3401 = vadd.f32 0.0, %v3400
        %3402 = vmatmul.f32.gmra.mxu0 %v596
        %v3403 = vpop.f32.mrf.mxu0
        %v3404 = vadd.f32 0.0, %v3403
        %3405 = vmatmul.f32.gmra.mxu0 %v598
        %v3406 = vpop.f32.mrf.mxu0
        %v3407 = vadd.f32 0.0, %v3406
        %3408 = vmatmul.f32.gmra.mxu0 %v600
        %v3409 = vpop.f32.mrf.mxu0
        %v3410 = vadd.f32 0.0, %v3409
        %3411 = vmatmul.f32.gmra.mxu0 %v3301
        %v3412 = vpop.f32.mrf.mxu0
        %v3413 = vadd.f32 0.0, %v3412
        %3414 = vmatmul.f32.gmra.mxu0 %v3303
        %v3415 = vpop.f32.mrf.mxu0
        %v3416 = vadd.f32 0.0, %v3415
        %3417 = vdwg.mxu0
        %v3418 = vadd.f32 %v3263, %v3323
        %v3419 = vadd.f32 %v3264, %v3326
        %v3420 = vadd.f32 %v3265, %v3329
        %v3421 = vadd.f32 %v3266, %v3332
        %v3422 = vadd.f32 %v3267, %v3335
        %v3423 = vadd.f32 %v3268, %v3338
        %v3424 = vadd.f32 %v3269, %v3341
        %v3425 = vadd.f32 %v3270, %v3344
        %v3426 = vadd.f32 %v3271, %v3347
        %v3427 = vadd.f32 %v3272, %v3350
        %v3428 = vadd.f32 %v3273, %v3353
        %v3429 = vadd.f32 %v3274, %v3356
        %v3430 = vadd.f32 %v3275, %v3359
        %v3431 = vadd.f32 %v3276, %v3362
        %v3432 = vadd.f32 %v3277, %v3365
        %v3433 = vadd.f32 %v3278, %v3368
        %v3434 = vadd.f32 %v3279, %v3371
        %v3435 = vadd.f32 %v3280, %v3374
        %v3436 = vadd.f32 %v3281, %v3377
        %v3437 = vadd.f32 %v3282, %v3380
        %v3438 = vadd.f32 %v3283, %v3383
        %v3439 = vadd.f32 %v3284, %v3386
        %v3440 = vadd.f32 %v3285, %v3389
        %v3441 = vadd.f32 %v3286, %v3392
        %v3442 = vadd.f32 %v3287, %v3395
        %v3443 = vadd.f32 %v3288, %v3398
        %v3444 = vadd.f32 %v3289, %v3401
        %v3445 = vadd.f32 %v3290, %v3404
        %v3446 = vadd.f32 %v3291, %v3407
        %v3447 = vadd.f32 %v3292, %v3410
        %v3448 = vadd.f32 %v3293, %v3413
        %v3449 = vadd.f32 %v3294, %v3416
        %v3451 = vrot.slane %v432, 1
        %v3452 = vrot.slane %v433, 1
        %v3453 = vsel %vm908, %v3451, %v3452
        %v3454 = vrot.slane %v434, 1
        %v3455 = vsel %vm908, %v3452, %v3454
        %s3456 = scalar_lea.vmem %s1, 96
        %v3457 = vld [vmem:[%s3456] sm:$0xff]
        %v3458 = vsel %vm537, %v3453, 0
        %v3460 = vsel %vm537, %v3455, 0
        %3462 = vmatpush.msra.mxu0 0.0
        %3463 = vmatpush.msra.mxu0 0.0
        %3464 = vmatpush.msra.mxu0 0.0
        %3465 = vmatpush.msra.mxu0 0.0
        %3466 = vmatpush.msra.mxu0 0.0
        %3467 = vmatpush.msra.mxu0 0.0
        %3468 = vmatpush.msra.mxu0 0.0
        %3469 = vmatpush.msra.mxu0 0.0
        %3470 = vmatpush.msra.mxu0 0.0
        %3471 = vmatpush.msra.mxu0 0.0
        %3472 = vmatpush.msra.mxu0 0.0
        %3473 = vmatpush.msra.mxu0 0.0
        %3474 = vmatpush.msra.mxu0 0.0
        %3475 = vmatpush.msra.mxu0 0.0
        %3476 = vmatpush.msra.mxu0 0.0
        %3477 = vmatpush.msra.mxu0 %v3457
        %3478 = vmatmul.f32.gmra.mxu0 %v995
        %v3479 = vpop.f32.mrf.mxu0
        %v3480 = vadd.f32 0.0, %v3479
        %3481 = vmatmul.f32.gmra.mxu0 %v997
        %v3482 = vpop.f32.mrf.mxu0
        %v3483 = vadd.f32 0.0, %v3482
        %3484 = vmatmul.f32.gmra.mxu0 %v999
        %v3485 = vpop.f32.mrf.mxu0
        %v3486 = vadd.f32 0.0, %v3485
        %3487 = vmatmul.f32.gmra.mxu0 %v1001
        %v3488 = vpop.f32.mrf.mxu0
        %v3489 = vadd.f32 0.0, %v3488
        %3490 = vmatmul.f32.gmra.mxu0 %v1003
        %v3491 = vpop.f32.mrf.mxu0
        %v3492 = vadd.f32 0.0, %v3491
        %3493 = vmatmul.f32.gmra.mxu0 %v1005
        %v3494 = vpop.f32.mrf.mxu0
        %v3495 = vadd.f32 0.0, %v3494
        %3496 = vmatmul.f32.gmra.mxu0 %v1007
        %v3497 = vpop.f32.mrf.mxu0
        %v3498 = vadd.f32 0.0, %v3497
        %3499 = vmatmul.f32.gmra.mxu0 %v1009
        %v3500 = vpop.f32.mrf.mxu0
        %v3501 = vadd.f32 0.0, %v3500
        %3502 = vmatmul.f32.gmra.mxu0 %v1011
        %v3503 = vpop.f32.mrf.mxu0
        %v3504 = vadd.f32 0.0, %v3503
        %3505 = vmatmul.f32.gmra.mxu0 %v1013
        %v3506 = vpop.f32.mrf.mxu0
        %v3507 = vadd.f32 0.0, %v3506
        %3508 = vmatmul.f32.gmra.mxu0 %v1015
        %v3509 = vpop.f32.mrf.mxu0
        %v3510 = vadd.f32 0.0, %v3509
        %3511 = vmatmul.f32.gmra.mxu0 %v1017
        %v3512 = vpop.f32.mrf.mxu0
        %v3513 = vadd.f32 0.0, %v3512
        %3514 = vmatmul.f32.gmra.mxu0 %v1019
        %v3515 = vpop.f32.mrf.mxu0
        %v3516 = vadd.f32 0.0, %v3515
        %3517 = vmatmul.f32.gmra.mxu0 %v1021
        %v3518 = vpop.f32.mrf.mxu0
        %v3519 = vadd.f32 0.0, %v3518
        %3520 = vmatmul.f32.gmra.mxu0 %v1023
        %v3521 = vpop.f32.mrf.mxu0
        %v3522 = vadd.f32 0.0, %v3521
        %3523 = vmatmul.f32.gmra.mxu0 %v1025
        %v3524 = vpop.f32.mrf.mxu0
        %v3525 = vadd.f32 0.0, %v3524
        %3526 = vmatmul.f32.gmra.mxu0 %v1027
        %v3527 = vpop.f32.mrf.mxu0
        %v3528 = vadd.f32 0.0, %v3527
        %3529 = vmatmul.f32.gmra.mxu0 %v1029
        %v3530 = vpop.f32.mrf.mxu0
        %v3531 = vadd.f32 0.0, %v3530
        %3532 = vmatmul.f32.gmra.mxu0 %v1031
        %v3533 = vpop.f32.mrf.mxu0
        %v3534 = vadd.f32 0.0, %v3533
        %3535 = vmatmul.f32.gmra.mxu0 %v1033
        %v3536 = vpop.f32.mrf.mxu0
        %v3537 = vadd.f32 0.0, %v3536
        %3538 = vmatmul.f32.gmra.mxu0 %v1035
        %v3539 = vpop.f32.mrf.mxu0
        %v3540 = vadd.f32 0.0, %v3539
        %3541 = vmatmul.f32.gmra.mxu0 %v1037
        %v3542 = vpop.f32.mrf.mxu0
        %v3543 = vadd.f32 0.0, %v3542
        %3544 = vmatmul.f32.gmra.mxu0 %v1039
        %v3545 = vpop.f32.mrf.mxu0
        %v3546 = vadd.f32 0.0, %v3545
        %3547 = vmatmul.f32.gmra.mxu0 %v1041
        %v3548 = vpop.f32.mrf.mxu0
        %v3549 = vadd.f32 0.0, %v3548
        %3550 = vmatmul.f32.gmra.mxu0 %v1043
        %v3551 = vpop.f32.mrf.mxu0
        %v3552 = vadd.f32 0.0, %v3551
        %3553 = vmatmul.f32.gmra.mxu0 %v1045
        %v3554 = vpop.f32.mrf.mxu0
        %v3555 = vadd.f32 0.0, %v3554
        %3556 = vmatmul.f32.gmra.mxu0 %v1047
        %v3557 = vpop.f32.mrf.mxu0
        %v3558 = vadd.f32 0.0, %v3557
        %3559 = vmatmul.f32.gmra.mxu0 %v1049
        %v3560 = vpop.f32.mrf.mxu0
        %v3561 = vadd.f32 0.0, %v3560
        %3562 = vmatmul.f32.gmra.mxu0 %v1051
        %v3563 = vpop.f32.mrf.mxu0
        %v3564 = vadd.f32 0.0, %v3563
        %3565 = vmatmul.f32.gmra.mxu0 %v1053
        %v3566 = vpop.f32.mrf.mxu0
        %v3567 = vadd.f32 0.0, %v3566
        %3568 = vmatmul.f32.gmra.mxu0 %v3458
        %v3569 = vpop.f32.mrf.mxu0
        %v3570 = vadd.f32 0.0, %v3569
        %3571 = vmatmul.f32.gmra.mxu0 %v3460
        %v3572 = vpop.f32.mrf.mxu0
        %v3573 = vadd.f32 0.0, %v3572
        %3574 = vdwg.mxu0
        %v3575 = vadd.f32 %v3418, %v3480
        %v3576 = vadd.f32 %v3419, %v3483
        %v3577 = vadd.f32 %v3420, %v3486
        %v3578 = vadd.f32 %v3421, %v3489
        %v3579 = vadd.f32 %v3422, %v3492
        %v3580 = vadd.f32 %v3423, %v3495
        %v3581 = vadd.f32 %v3424, %v3498
        %v3582 = vadd.f32 %v3425, %v3501
        %v3583 = vadd.f32 %v3426, %v3504
        %v3584 = vadd.f32 %v3427, %v3507
        %v3585 = vadd.f32 %v3428, %v3510
        %v3586 = vadd.f32 %v3429, %v3513
        %v3587 = vadd.f32 %v3430, %v3516
        %v3588 = vadd.f32 %v3431, %v3519
        %v3589 = vadd.f32 %v3432, %v3522
        %v3590 = vadd.f32 %v3433, %v3525
        %v3591 = vadd.f32 %v3434, %v3528
        %v3592 = vadd.f32 %v3435, %v3531
        %v3593 = vadd.f32 %v3436, %v3534
        %v3594 = vadd.f32 %v3437, %v3537
        %v3595 = vadd.f32 %v3438, %v3540
        %v3596 = vadd.f32 %v3439, %v3543
        %v3597 = vadd.f32 %v3440, %v3546
        %v3598 = vadd.f32 %v3441, %v3549
        %v3599 = vadd.f32 %v3442, %v3552
        %v3600 = vadd.f32 %v3443, %v3555
        %v3601 = vadd.f32 %v3444, %v3558
        %v3602 = vadd.f32 %v3445, %v3561
        %v3603 = vadd.f32 %v3446, %v3564
        %v3604 = vadd.f32 %v3447, %v3567
        %v3605 = vadd.f32 %v3448, %v3570
        %v3606 = vadd.f32 %v3449, %v3573
        %s3607 = scalar_lea.vmem %s1, 104
        %v3608 = vld [vmem:[%s3607] sm:$0xff]
        %3609 = vrot.lane.b32.xlu0 %v3453, 120
        %v3610 = vpop.permute.xlu0 %3609
        %3611 = vrot.lane.b32.xlu0 %v3455, 120
        %v3612 = vpop.permute.xlu0 %3611
        %v3613 = vsel %vm537, %v3610, 0
        %v3615 = vsel %vm537, %v3612, 0
        %3617 = vmatpush.msra.mxu0 0.0
        %3618 = vmatpush.msra.mxu0 0.0
        %3619 = vmatpush.msra.mxu0 0.0
        %3620 = vmatpush.msra.mxu0 0.0
        %3621 = vmatpush.msra.mxu0 0.0
        %3622 = vmatpush.msra.mxu0 0.0
        %3623 = vmatpush.msra.mxu0 0.0
        %3624 = vmatpush.msra.mxu0 0.0
        %3625 = vmatpush.msra.mxu0 0.0
        %3626 = vmatpush.msra.mxu0 0.0
        %3627 = vmatpush.msra.mxu0 0.0
        %3628 = vmatpush.msra.mxu0 0.0
        %3629 = vmatpush.msra.mxu0 0.0
        %3630 = vmatpush.msra.mxu0 0.0
        %3631 = vmatpush.msra.mxu0 0.0
        %3632 = vmatpush.msra.mxu0 %v3608
        %3633 = vmatmul.f32.gmra.mxu0 %v1270
        %v3634 = vpop.f32.mrf.mxu0
        %v3635 = vadd.f32 0.0, %v3634
        %3636 = vmatmul.f32.gmra.mxu0 %v1272
        %v3637 = vpop.f32.mrf.mxu0
        %v3638 = vadd.f32 0.0, %v3637
        %3639 = vmatmul.f32.gmra.mxu0 %v1274
        %v3640 = vpop.f32.mrf.mxu0
        %v3641 = vadd.f32 0.0, %v3640
        %3642 = vmatmul.f32.gmra.mxu0 %v1276
        %v3643 = vpop.f32.mrf.mxu0
        %v3644 = vadd.f32 0.0, %v3643
        %3645 = vmatmul.f32.gmra.mxu0 %v1278
        %v3646 = vpop.f32.mrf.mxu0
        %v3647 = vadd.f32 0.0, %v3646
        %3648 = vmatmul.f32.gmra.mxu0 %v1280
        %v3649 = vpop.f32.mrf.mxu0
        %v3650 = vadd.f32 0.0, %v3649
        %3651 = vmatmul.f32.gmra.mxu0 %v1282
        %v3652 = vpop.f32.mrf.mxu0
        %v3653 = vadd.f32 0.0, %v3652
        %3654 = vmatmul.f32.gmra.mxu0 %v1284
        %v3655 = vpop.f32.mrf.mxu0
        %v3656 = vadd.f32 0.0, %v3655
        %3657 = vmatmul.f32.gmra.mxu0 %v1286
        %v3658 = vpop.f32.mrf.mxu0
        %v3659 = vadd.f32 0.0, %v3658
        %3660 = vmatmul.f32.gmra.mxu0 %v1288
        %v3661 = vpop.f32.mrf.mxu0
        %v3662 = vadd.f32 0.0, %v3661
        %3663 = vmatmul.f32.gmra.mxu0 %v1290
        %v3664 = vpop.f32.mrf.mxu0
        %v3665 = vadd.f32 0.0, %v3664
        %3666 = vmatmul.f32.gmra.mxu0 %v1292
        %v3667 = vpop.f32.mrf.mxu0
        %v3668 = vadd.f32 0.0, %v3667
        %3669 = vmatmul.f32.gmra.mxu0 %v1294
        %v3670 = vpop.f32.mrf.mxu0
        %v3671 = vadd.f32 0.0, %v3670
        %3672 = vmatmul.f32.gmra.mxu0 %v1296
        %v3673 = vpop.f32.mrf.mxu0
        %v3674 = vadd.f32 0.0, %v3673
        %3675 = vmatmul.f32.gmra.mxu0 %v1298
        %v3676 = vpop.f32.mrf.mxu0
        %v3677 = vadd.f32 0.0, %v3676
        %3678 = vmatmul.f32.gmra.mxu0 %v1300
        %v3679 = vpop.f32.mrf.mxu0
        %v3680 = vadd.f32 0.0, %v3679
        %3681 = vmatmul.f32.gmra.mxu0 %v1302
        %v3682 = vpop.f32.mrf.mxu0
        %v3683 = vadd.f32 0.0, %v3682
        %3684 = vmatmul.f32.gmra.mxu0 %v1304
        %v3685 = vpop.f32.mrf.mxu0
        %v3686 = vadd.f32 0.0, %v3685
        %3687 = vmatmul.f32.gmra.mxu0 %v1306
        %v3688 = vpop.f32.mrf.mxu0
        %v3689 = vadd.f32 0.0, %v3688
        %3690 = vmatmul.f32.gmra.mxu0 %v1308
        %v3691 = vpop.f32.mrf.mxu0
        %v3692 = vadd.f32 0.0, %v3691
        %3693 = vmatmul.f32.gmra.mxu0 %v1310
        %v3694 = vpop.f32.mrf.mxu0
        %v3695 = vadd.f32 0.0, %v3694
        %3696 = vmatmul.f32.gmra.mxu0 %v1312
        %v3697 = vpop.f32.mrf.mxu0
        %v3698 = vadd.f32 0.0, %v3697
        %3699 = vmatmul.f32.gmra.mxu0 %v1314
        %v3700 = vpop.f32.mrf.mxu0
        %v3701 = vadd.f32 0.0, %v3700
        %3702 = vmatmul.f32.gmra.mxu0 %v1316
        %v3703 = vpop.f32.mrf.mxu0
        %v3704 = vadd.f32 0.0, %v3703
        %3705 = vmatmul.f32.gmra.mxu0 %v1318
        %v3706 = vpop.f32.mrf.mxu0
        %v3707 = vadd.f32 0.0, %v3706
        %3708 = vmatmul.f32.gmra.mxu0 %v1320
        %v3709 = vpop.f32.mrf.mxu0
        %v3710 = vadd.f32 0.0, %v3709
        %3711 = vmatmul.f32.gmra.mxu0 %v1322
        %v3712 = vpop.f32.mrf.mxu0
        %v3713 = vadd.f32 0.0, %v3712
        %3714 = vmatmul.f32.gmra.mxu0 %v1324
        %v3715 = vpop.f32.mrf.mxu0
        %v3716 = vadd.f32 0.0, %v3715
        %3717 = vmatmul.f32.gmra.mxu0 %v1326
        %v3718 = vpop.f32.mrf.mxu0
        %v3719 = vadd.f32 0.0, %v3718
        %3720 = vmatmul.f32.gmra.mxu0 %v1328
        %v3721 = vpop.f32.mrf.mxu0
        %v3722 = vadd.f32 0.0, %v3721
        %3723 = vmatmul.f32.gmra.mxu0 %v3613
        %v3724 = vpop.f32.mrf.mxu0
        %v3725 = vadd.f32 0.0, %v3724
        %3726 = vmatmul.f32.gmra.mxu0 %v3615
        %v3727 = vpop.f32.mrf.mxu0
        %v3728 = vadd.f32 0.0, %v3727
        %3729 = vdwg.mxu0
        %v3730 = vadd.f32 %v3575, %v3635
        %v3731 = vadd.f32 %v3576, %v3638
        %v3732 = vadd.f32 %v3577, %v3641
        %v3733 = vadd.f32 %v3578, %v3644
        %v3734 = vadd.f32 %v3579, %v3647
        %v3735 = vadd.f32 %v3580, %v3650
        %v3736 = vadd.f32 %v3581, %v3653
        %v3737 = vadd.f32 %v3582, %v3656
        %v3738 = vadd.f32 %v3583, %v3659
        %v3739 = vadd.f32 %v3584, %v3662
        %v3740 = vadd.f32 %v3585, %v3665
        %v3741 = vadd.f32 %v3586, %v3668
        %v3742 = vadd.f32 %v3587, %v3671
        %v3743 = vadd.f32 %v3588, %v3674
        %v3744 = vadd.f32 %v3589, %v3677
        %v3745 = vadd.f32 %v3590, %v3680
        %v3746 = vadd.f32 %v3591, %v3683
        %v3747 = vadd.f32 %v3592, %v3686
        %v3748 = vadd.f32 %v3593, %v3689
        %v3749 = vadd.f32 %v3594, %v3692
        %v3750 = vadd.f32 %v3595, %v3695
        %v3751 = vadd.f32 %v3596, %v3698
        %v3752 = vadd.f32 %v3597, %v3701
        %v3753 = vadd.f32 %v3598, %v3704
        %v3754 = vadd.f32 %v3599, %v3707
        %v3755 = vadd.f32 %v3600, %v3710
        %v3756 = vadd.f32 %v3601, %v3713
        %v3757 = vadd.f32 %v3602, %v3716
        %v3758 = vadd.f32 %v3603, %v3719
        %v3759 = vadd.f32 %v3604, %v3722
        %v3760 = vadd.f32 %v3605, %v3725
        %v3761 = vadd.f32 %v3606, %v3728
        %v3762 = vrot.slane %v432, 2
        %v3763 = vrot.slane %v433, 2
        %v3764 = vsel %vm1475, %v3762, %v3763
        %v3765 = vrot.slane %v434, 2
        %v3766 = vsel %vm1475, %v3763, %v3765
        %s3767 = scalar_lea.vmem %s1, 112
        %v3768 = vld [vmem:[%s3767] sm:$0xff]
        %v3769 = vsel %vm537, %v3764, 0
        %v3771 = vsel %vm537, %v3766, 0
        %3773 = vmatpush.msra.mxu0 0.0
        %3774 = vmatpush.msra.mxu0 0.0
        %3775 = vmatpush.msra.mxu0 0.0
        %3776 = vmatpush.msra.mxu0 0.0
        %3777 = vmatpush.msra.mxu0 0.0
        %3778 = vmatpush.msra.mxu0 0.0
        %3779 = vmatpush.msra.mxu0 0.0
        %3780 = vmatpush.msra.mxu0 0.0
        %3781 = vmatpush.msra.mxu0 0.0
        %3782 = vmatpush.msra.mxu0 0.0
        %3783 = vmatpush.msra.mxu0 0.0
        %3784 = vmatpush.msra.mxu0 0.0
        %3785 = vmatpush.msra.mxu0 0.0
        %3786 = vmatpush.msra.mxu0 0.0
        %3787 = vmatpush.msra.mxu0 0.0
        %3788 = vmatpush.msra.mxu0 %v3768
        %3789 = vmatmul.f32.gmra.mxu0 %v1562
        %v3790 = vpop.f32.mrf.mxu0
        %v3791 = vadd.f32 0.0, %v3790
        %3792 = vmatmul.f32.gmra.mxu0 %v1564
        %v3793 = vpop.f32.mrf.mxu0
        %v3794 = vadd.f32 0.0, %v3793
        %3795 = vmatmul.f32.gmra.mxu0 %v1566
        %v3796 = vpop.f32.mrf.mxu0
        %v3797 = vadd.f32 0.0, %v3796
        %3798 = vmatmul.f32.gmra.mxu0 %v1568
        %v3799 = vpop.f32.mrf.mxu0
        %v3800 = vadd.f32 0.0, %v3799
        %3801 = vmatmul.f32.gmra.mxu0 %v1570
        %v3802 = vpop.f32.mrf.mxu0
        %v3803 = vadd.f32 0.0, %v3802
        %3804 = vmatmul.f32.gmra.mxu0 %v1572
        %v3805 = vpop.f32.mrf.mxu0
        %v3806 = vadd.f32 0.0, %v3805
        %3807 = vmatmul.f32.gmra.mxu0 %v1574
        %v3808 = vpop.f32.mrf.mxu0
        %v3809 = vadd.f32 0.0, %v3808
        %3810 = vmatmul.f32.gmra.mxu0 %v1576
        %v3811 = vpop.f32.mrf.mxu0
        %v3812 = vadd.f32 0.0, %v3811
        %3813 = vmatmul.f32.gmra.mxu0 %v1578
        %v3814 = vpop.f32.mrf.mxu0
        %v3815 = vadd.f32 0.0, %v3814
        %3816 = vmatmul.f32.gmra.mxu0 %v1580
        %v3817 = vpop.f32.mrf.mxu0
        %v3818 = vadd.f32 0.0, %v3817
        %3819 = vmatmul.f32.gmra.mxu0 %v1582
        %v3820 = vpop.f32.mrf.mxu0
        %v3821 = vadd.f32 0.0, %v3820
        %3822 = vmatmul.f32.gmra.mxu0 %v1584
        %v3823 = vpop.f32.mrf.mxu0
        %v3824 = vadd.f32 0.0, %v3823
        %3825 = vmatmul.f32.gmra.mxu0 %v1586
        %v3826 = vpop.f32.mrf.mxu0
        %v3827 = vadd.f32 0.0, %v3826
        %3828 = vmatmul.f32.gmra.mxu0 %v1588
        %v3829 = vpop.f32.mrf.mxu0
        %v3830 = vadd.f32 0.0, %v3829
        %3831 = vmatmul.f32.gmra.mxu0 %v1590
        %v3832 = vpop.f32.mrf.mxu0
        %v3833 = vadd.f32 0.0, %v3832
        %3834 = vmatmul.f32.gmra.mxu0 %v1592
        %v3835 = vpop.f32.mrf.mxu0
        %v3836 = vadd.f32 0.0, %v3835
        %3837 = vmatmul.f32.gmra.mxu0 %v1594
        %v3838 = vpop.f32.mrf.mxu0
        %v3839 = vadd.f32 0.0, %v3838
        %3840 = vmatmul.f32.gmra.mxu0 %v1596
        %v3841 = vpop.f32.mrf.mxu0
        %v3842 = vadd.f32 0.0, %v3841
        %3843 = vmatmul.f32.gmra.mxu0 %v1598
        %v3844 = vpop.f32.mrf.mxu0
        %v3845 = vadd.f32 0.0, %v3844
        %3846 = vmatmul.f32.gmra.mxu0 %v1600
        %v3847 = vpop.f32.mrf.mxu0
        %v3848 = vadd.f32 0.0, %v3847
        %3849 = vmatmul.f32.gmra.mxu0 %v1602
        %v3850 = vpop.f32.mrf.mxu0
        %v3851 = vadd.f32 0.0, %v3850
        %3852 = vmatmul.f32.gmra.mxu0 %v1604
        %v3853 = vpop.f32.mrf.mxu0
        %v3854 = vadd.f32 0.0, %v3853
        %3855 = vmatmul.f32.gmra.mxu0 %v1606
        %v3856 = vpop.f32.mrf.mxu0
        %v3857 = vadd.f32 0.0, %v3856
        %3858 = vmatmul.f32.gmra.mxu0 %v1608
        %v3859 = vpop.f32.mrf.mxu0
        %v3860 = vadd.f32 0.0, %v3859
        %3861 = vmatmul.f32.gmra.mxu0 %v1610
        %v3862 = vpop.f32.mrf.mxu0
        %v3863 = vadd.f32 0.0, %v3862
        %3864 = vmatmul.f32.gmra.mxu0 %v1612
        %v3865 = vpop.f32.mrf.mxu0
        %v3866 = vadd.f32 0.0, %v3865
        %3867 = vmatmul.f32.gmra.mxu0 %v1614
        %v3868 = vpop.f32.mrf.mxu0
        %v3869 = vadd.f32 0.0, %v3868
        %3870 = vmatmul.f32.gmra.mxu0 %v1616
        %v3871 = vpop.f32.mrf.mxu0
        %v3872 = vadd.f32 0.0, %v3871
        %3873 = vmatmul.f32.gmra.mxu0 %v1618
        %v3874 = vpop.f32.mrf.mxu0
        %v3875 = vadd.f32 0.0, %v3874
        %3876 = vmatmul.f32.gmra.mxu0 %v1620
        %v3877 = vpop.f32.mrf.mxu0
        %v3878 = vadd.f32 0.0, %v3877
        %3879 = vmatmul.f32.gmra.mxu0 %v3769
        %v3880 = vpop.f32.mrf.mxu0
        %v3881 = vadd.f32 0.0, %v3880
        %3882 = vmatmul.f32.gmra.mxu0 %v3771
        %v3883 = vpop.f32.mrf.mxu0
        %v3884 = vadd.f32 0.0, %v3883
        %3885 = vdwg.mxu0
        %v3886 = vadd.f32 %v3730, %v3791
        %v3887 = vadd.f32 %v3731, %v3794
        %v3888 = vadd.f32 %v3732, %v3797
        %v3889 = vadd.f32 %v3733, %v3800
        %v3890 = vadd.f32 %v3734, %v3803
        %v3891 = vadd.f32 %v3735, %v3806
        %v3892 = vadd.f32 %v3736, %v3809
        %v3893 = vadd.f32 %v3737, %v3812
        %v3894 = vadd.f32 %v3738, %v3815
        %v3895 = vadd.f32 %v3739, %v3818
        %v3896 = vadd.f32 %v3740, %v3821
        %v3897 = vadd.f32 %v3741, %v3824
        %v3898 = vadd.f32 %v3742, %v3827
        %v3899 = vadd.f32 %v3743, %v3830
        %v3900 = vadd.f32 %v3744, %v3833
        %v3901 = vadd.f32 %v3745, %v3836
        %v3902 = vadd.f32 %v3746, %v3839
        %v3903 = vadd.f32 %v3747, %v3842
        %v3904 = vadd.f32 %v3748, %v3845
        %v3905 = vadd.f32 %v3749, %v3848
        %v3906 = vadd.f32 %v3750, %v3851
        %v3907 = vadd.f32 %v3751, %v3854
        %v3908 = vadd.f32 %v3752, %v3857
        %v3909 = vadd.f32 %v3753, %v3860
        %v3910 = vadd.f32 %v3754, %v3863
        %v3911 = vadd.f32 %v3755, %v3866
        %v3912 = vadd.f32 %v3756, %v3869
        %v3913 = vadd.f32 %v3757, %v3872
        %v3914 = vadd.f32 %v3758, %v3875
        %v3915 = vadd.f32 %v3759, %v3878
        %v3916 = vadd.f32 %v3760, %v3881
        %v3917 = vadd.f32 %v3761, %v3884
        %s3918 = scalar_lea.vmem %s1, 120
        %v3919 = vld [vmem:[%s3918] sm:$0xff]
        %3920 = vrot.lane.b32.xlu0 %v432, 112
        %v3921 = vpop.permute.xlu0 %3920
        %3922 = vrot.lane.b32.xlu0 %v433, 112
        %v3923 = vpop.permute.xlu0 %3922
        %v3924 = vsel %vm537, %v3921, 0
        %v3926 = vsel %vm537, %v3923, 0
        %3928 = vmatpush.msra.mxu0 0.0
        %3929 = vmatpush.msra.mxu0 0.0
        %3930 = vmatpush.msra.mxu0 0.0
        %3931 = vmatpush.msra.mxu0 0.0
        %3932 = vmatpush.msra.mxu0 0.0
        %3933 = vmatpush.msra.mxu0 0.0
        %3934 = vmatpush.msra.mxu0 0.0
        %3935 = vmatpush.msra.mxu0 0.0
        %3936 = vmatpush.msra.mxu0 0.0
        %3937 = vmatpush.msra.mxu0 0.0
        %3938 = vmatpush.msra.mxu0 0.0
        %3939 = vmatpush.msra.mxu0 0.0
        %3940 = vmatpush.msra.mxu0 0.0
        %3941 = vmatpush.msra.mxu0 0.0
        %3942 = vmatpush.msra.mxu0 0.0
        %3943 = vmatpush.msra.mxu0 %v3919
        %3944 = vmatmul.f32.gmra.mxu0 %v1837
        %v3945 = vpop.f32.mrf.mxu0
        %v3946 = vadd.f32 0.0, %v3945
        %3947 = vmatmul.f32.gmra.mxu0 %v1839
        %v3948 = vpop.f32.mrf.mxu0
        %v3949 = vadd.f32 0.0, %v3948
        %3950 = vmatmul.f32.gmra.mxu0 %v1841
        %v3951 = vpop.f32.mrf.mxu0
        %v3952 = vadd.f32 0.0, %v3951
        %3953 = vmatmul.f32.gmra.mxu0 %v1843
        %v3954 = vpop.f32.mrf.mxu0
        %v3955 = vadd.f32 0.0, %v3954
        %3956 = vmatmul.f32.gmra.mxu0 %v1845
        %v3957 = vpop.f32.mrf.mxu0
        %v3958 = vadd.f32 0.0, %v3957
        %3959 = vmatmul.f32.gmra.mxu0 %v1847
        %v3960 = vpop.f32.mrf.mxu0
        %v3961 = vadd.f32 0.0, %v3960
        %3962 = vmatmul.f32.gmra.mxu0 %v1849
        %v3963 = vpop.f32.mrf.mxu0
        %v3964 = vadd.f32 0.0, %v3963
        %3965 = vmatmul.f32.gmra.mxu0 %v1851
        %v3966 = vpop.f32.mrf.mxu0
        %v3967 = vadd.f32 0.0, %v3966
        %3968 = vmatmul.f32.gmra.mxu0 %v1853
        %v3969 = vpop.f32.mrf.mxu0
        %v3970 = vadd.f32 0.0, %v3969
        %3971 = vmatmul.f32.gmra.mxu0 %v1855
        %v3972 = vpop.f32.mrf.mxu0
        %v3973 = vadd.f32 0.0, %v3972
        %3974 = vmatmul.f32.gmra.mxu0 %v1857
        %v3975 = vpop.f32.mrf.mxu0
        %v3976 = vadd.f32 0.0, %v3975
        %3977 = vmatmul.f32.gmra.mxu0 %v1859
        %v3978 = vpop.f32.mrf.mxu0
        %v3979 = vadd.f32 0.0, %v3978
        %3980 = vmatmul.f32.gmra.mxu0 %v1861
        %v3981 = vpop.f32.mrf.mxu0
        %v3982 = vadd.f32 0.0, %v3981
        %3983 = vmatmul.f32.gmra.mxu0 %v1863
        %v3984 = vpop.f32.mrf.mxu0
        %v3985 = vadd.f32 0.0, %v3984
        %3986 = vmatmul.f32.gmra.mxu0 %v1865
        %v3987 = vpop.f32.mrf.mxu0
        %v3988 = vadd.f32 0.0, %v3987
        %3989 = vmatmul.f32.gmra.mxu0 %v1867
        %v3990 = vpop.f32.mrf.mxu0
        %v3991 = vadd.f32 0.0, %v3990
        %3992 = vmatmul.f32.gmra.mxu0 %v1869
        %v3993 = vpop.f32.mrf.mxu0
        %v3994 = vadd.f32 0.0, %v3993
        %3995 = vmatmul.f32.gmra.mxu0 %v1871
        %v3996 = vpop.f32.mrf.mxu0
        %v3997 = vadd.f32 0.0, %v3996
        %3998 = vmatmul.f32.gmra.mxu0 %v1873
        %v3999 = vpop.f32.mrf.mxu0
        %v4000 = vadd.f32 0.0, %v3999
        %4001 = vmatmul.f32.gmra.mxu0 %v1875
        %v4002 = vpop.f32.mrf.mxu0
        %v4003 = vadd.f32 0.0, %v4002
        %4004 = vmatmul.f32.gmra.mxu0 %v1877
        %v4005 = vpop.f32.mrf.mxu0
        %v4006 = vadd.f32 0.0, %v4005
        %4007 = vmatmul.f32.gmra.mxu0 %v1879
        %v4008 = vpop.f32.mrf.mxu0
        %v4009 = vadd.f32 0.0, %v4008
        %4010 = vmatmul.f32.gmra.mxu0 %v1881
        %v4011 = vpop.f32.mrf.mxu0
        %v4012 = vadd.f32 0.0, %v4011
        %4013 = vmatmul.f32.gmra.mxu0 %v1883
        %v4014 = vpop.f32.mrf.mxu0
        %v4015 = vadd.f32 0.0, %v4014
        %4016 = vmatmul.f32.gmra.mxu0 %v1885
        %v4017 = vpop.f32.mrf.mxu0
        %v4018 = vadd.f32 0.0, %v4017
        %4019 = vmatmul.f32.gmra.mxu0 %v1887
        %v4020 = vpop.f32.mrf.mxu0
        %v4021 = vadd.f32 0.0, %v4020
        %4022 = vmatmul.f32.gmra.mxu0 %v1889
        %v4023 = vpop.f32.mrf.mxu0
        %v4024 = vadd.f32 0.0, %v4023
        %4025 = vmatmul.f32.gmra.mxu0 %v1891
        %v4026 = vpop.f32.mrf.mxu0
        %v4027 = vadd.f32 0.0, %v4026
        %4028 = vmatmul.f32.gmra.mxu0 %v1893
        %v4029 = vpop.f32.mrf.mxu0
        %v4030 = vadd.f32 0.0, %v4029
        %4031 = vmatmul.f32.gmra.mxu0 %v1895
        %v4032 = vpop.f32.mrf.mxu0
        %v4033 = vadd.f32 0.0, %v4032
        %4034 = vmatmul.f32.gmra.mxu0 %v3924
        %v4035 = vpop.f32.mrf.mxu0
        %v4036 = vadd.f32 0.0, %v4035
        %4037 = vmatmul.f32.gmra.mxu0 %v3926
        %v4038 = vpop.f32.mrf.mxu0
        %v4039 = vadd.f32 0.0, %v4038
        %4040 = vdwg.mxu0
        %v4041 = vadd.f32 %v3886, %v3946
        %v4042 = vadd.f32 %v3887, %v3949
        %v4043 = vadd.f32 %v3888, %v3952
        %v4044 = vadd.f32 %v3889, %v3955
        %v4045 = vadd.f32 %v3890, %v3958
        %v4046 = vadd.f32 %v3891, %v3961
        %v4047 = vadd.f32 %v3892, %v3964
        %v4048 = vadd.f32 %v3893, %v3967
        %v4049 = vadd.f32 %v3894, %v3970
        %v4050 = vadd.f32 %v3895, %v3973
        %v4051 = vadd.f32 %v3896, %v3976
        %v4052 = vadd.f32 %v3897, %v3979
        %v4053 = vadd.f32 %v3898, %v3982
        %v4054 = vadd.f32 %v3899, %v3985
        %v4055 = vadd.f32 %v3900, %v3988
        %v4056 = vadd.f32 %v3901, %v3991
        %v4057 = vadd.f32 %v3902, %v3994
        %v4058 = vadd.f32 %v3903, %v3997
        %v4059 = vadd.f32 %v3904, %v4000
        %v4060 = vadd.f32 %v3905, %v4003
        %v4061 = vadd.f32 %v3906, %v4006
        %v4062 = vadd.f32 %v3907, %v4009
        %v4063 = vadd.f32 %v3908, %v4012
        %v4064 = vadd.f32 %v3909, %v4015
        %v4065 = vadd.f32 %v3910, %v4018
        %v4066 = vadd.f32 %v3911, %v4021
        %v4067 = vadd.f32 %v3912, %v4024
        %v4068 = vadd.f32 %v3913, %v4027
        %v4069 = vadd.f32 %v3914, %v4030
        %v4070 = vadd.f32 %v3915, %v4033
        %v4071 = vadd.f32 %v3916, %v4036
        %v4072 = vadd.f32 %v3917, %v4039
        %s4073 = scalar_lea.vmem %s1, 128
        %v4074 = vld [vmem:[%s4073] sm:$0xff]
        %4075 = vrot.lane.b32.xlu0 %v432, 104
        %v4076 = vpop.permute.xlu0 %4075
        %4077 = vrot.lane.b32.xlu0 %v433, 104
        %v4078 = vpop.permute.xlu0 %4077
        %v4079 = vsel %vm537, %v4076, 0
        %v4081 = vsel %vm537, %v4078, 0
        %4083 = vmatpush.msra.mxu0 0.0
        %4084 = vmatpush.msra.mxu0 0.0
        %4085 = vmatpush.msra.mxu0 0.0
        %4086 = vmatpush.msra.mxu0 0.0
        %4087 = vmatpush.msra.mxu0 0.0
        %4088 = vmatpush.msra.mxu0 0.0
        %4089 = vmatpush.msra.mxu0 0.0
        %4090 = vmatpush.msra.mxu0 0.0
        %4091 = vmatpush.msra.mxu0 0.0
        %4092 = vmatpush.msra.mxu0 0.0
        %4093 = vmatpush.msra.mxu0 0.0
        %4094 = vmatpush.msra.mxu0 0.0
        %4095 = vmatpush.msra.mxu0 0.0
        %4096 = vmatpush.msra.mxu0 0.0
        %4097 = vmatpush.msra.mxu0 0.0
        %4098 = vmatpush.msra.mxu0 %v4074
        %4099 = vmatmul.f32.gmra.mxu0 %v2112
        %v4100 = vpop.f32.mrf.mxu0
        %v4101 = vadd.f32 0.0, %v4100
        %4102 = vmatmul.f32.gmra.mxu0 %v2114
        %v4103 = vpop.f32.mrf.mxu0
        %v4104 = vadd.f32 0.0, %v4103
        %4105 = vmatmul.f32.gmra.mxu0 %v2116
        %v4106 = vpop.f32.mrf.mxu0
        %v4107 = vadd.f32 0.0, %v4106
        %4108 = vmatmul.f32.gmra.mxu0 %v2118
        %v4109 = vpop.f32.mrf.mxu0
        %v4110 = vadd.f32 0.0, %v4109
        %4111 = vmatmul.f32.gmra.mxu0 %v2120
        %v4112 = vpop.f32.mrf.mxu0
        %v4113 = vadd.f32 0.0, %v4112
        %4114 = vmatmul.f32.gmra.mxu0 %v2122
        %v4115 = vpop.f32.mrf.mxu0
        %v4116 = vadd.f32 0.0, %v4115
        %4117 = vmatmul.f32.gmra.mxu0 %v2124
        %v4118 = vpop.f32.mrf.mxu0
        %v4119 = vadd.f32 0.0, %v4118
        %4120 = vmatmul.f32.gmra.mxu0 %v2126
        %v4121 = vpop.f32.mrf.mxu0
        %v4122 = vadd.f32 0.0, %v4121
        %4123 = vmatmul.f32.gmra.mxu0 %v2128
        %v4124 = vpop.f32.mrf.mxu0
        %v4125 = vadd.f32 0.0, %v4124
        %4126 = vmatmul.f32.gmra.mxu0 %v2130
        %v4127 = vpop.f32.mrf.mxu0
        %v4128 = vadd.f32 0.0, %v4127
        %4129 = vmatmul.f32.gmra.mxu0 %v2132
        %v4130 = vpop.f32.mrf.mxu0
        %v4131 = vadd.f32 0.0, %v4130
        %4132 = vmatmul.f32.gmra.mxu0 %v2134
        %v4133 = vpop.f32.mrf.mxu0
        %v4134 = vadd.f32 0.0, %v4133
        %4135 = vmatmul.f32.gmra.mxu0 %v2136
        %v4136 = vpop.f32.mrf.mxu0
        %v4137 = vadd.f32 0.0, %v4136
        %4138 = vmatmul.f32.gmra.mxu0 %v2138
        %v4139 = vpop.f32.mrf.mxu0
        %v4140 = vadd.f32 0.0, %v4139
        %4141 = vmatmul.f32.gmra.mxu0 %v2140
        %v4142 = vpop.f32.mrf.mxu0
        %v4143 = vadd.f32 0.0, %v4142
        %4144 = vmatmul.f32.gmra.mxu0 %v2142
        %v4145 = vpop.f32.mrf.mxu0
        %v4146 = vadd.f32 0.0, %v4145
        %4147 = vmatmul.f32.gmra.mxu0 %v2144
        %v4148 = vpop.f32.mrf.mxu0
        %v4149 = vadd.f32 0.0, %v4148
        %4150 = vmatmul.f32.gmra.mxu0 %v2146
        %v4151 = vpop.f32.mrf.mxu0
        %v4152 = vadd.f32 0.0, %v4151
        %4153 = vmatmul.f32.gmra.mxu0 %v2148
        %v4154 = vpop.f32.mrf.mxu0
        %v4155 = vadd.f32 0.0, %v4154
        %4156 = vmatmul.f32.gmra.mxu0 %v2150
        %v4157 = vpop.f32.mrf.mxu0
        %v4158 = vadd.f32 0.0, %v4157
        %4159 = vmatmul.f32.gmra.mxu0 %v2152
        %v4160 = vpop.f32.mrf.mxu0
        %v4161 = vadd.f32 0.0, %v4160
        %4162 = vmatmul.f32.gmra.mxu0 %v2154
        %v4163 = vpop.f32.mrf.mxu0
        %v4164 = vadd.f32 0.0, %v4163
        %4165 = vmatmul.f32.gmra.mxu0 %v2156
        %v4166 = vpop.f32.mrf.mxu0
        %v4167 = vadd.f32 0.0, %v4166
        %4168 = vmatmul.f32.gmra.mxu0 %v2158
        %v4169 = vpop.f32.mrf.mxu0
        %v4170 = vadd.f32 0.0, %v4169
        %4171 = vmatmul.f32.gmra.mxu0 %v2160
        %v4172 = vpop.f32.mrf.mxu0
        %v4173 = vadd.f32 0.0, %v4172
        %4174 = vmatmul.f32.gmra.mxu0 %v2162
        %v4175 = vpop.f32.mrf.mxu0
        %v4176 = vadd.f32 0.0, %v4175
        %4177 = vmatmul.f32.gmra.mxu0 %v2164
        %v4178 = vpop.f32.mrf.mxu0
        %v4179 = vadd.f32 0.0, %v4178
        %4180 = vmatmul.f32.gmra.mxu0 %v2166
        %v4181 = vpop.f32.mrf.mxu0
        %v4182 = vadd.f32 0.0, %v4181
        %4183 = vmatmul.f32.gmra.mxu0 %v2168
        %v4184 = vpop.f32.mrf.mxu0
        %v4185 = vadd.f32 0.0, %v4184
        %4186 = vmatmul.f32.gmra.mxu0 %v2170
        %v4187 = vpop.f32.mrf.mxu0
        %v4188 = vadd.f32 0.0, %v4187
        %4189 = vmatmul.f32.gmra.mxu0 %v4079
        %v4190 = vpop.f32.mrf.mxu0
        %v4191 = vadd.f32 0.0, %v4190
        %4192 = vmatmul.f32.gmra.mxu0 %v4081
        %v4193 = vpop.f32.mrf.mxu0
        %v4194 = vadd.f32 0.0, %v4193
        %4195 = vdwg.mxu0
        %v4196 = vadd.f32 %v4041, %v4101
        %v4197 = vadd.f32 %v4042, %v4104
        %v4198 = vadd.f32 %v4043, %v4107
        %v4199 = vadd.f32 %v4044, %v4110
        %v4200 = vadd.f32 %v4045, %v4113
        %v4201 = vadd.f32 %v4046, %v4116
        %v4202 = vadd.f32 %v4047, %v4119
        %v4203 = vadd.f32 %v4048, %v4122
        %v4204 = vadd.f32 %v4049, %v4125
        %v4205 = vadd.f32 %v4050, %v4128
        %v4206 = vadd.f32 %v4051, %v4131
        %v4207 = vadd.f32 %v4052, %v4134
        %v4208 = vadd.f32 %v4053, %v4137
        %v4209 = vadd.f32 %v4054, %v4140
        %v4210 = vadd.f32 %v4055, %v4143
        %v4211 = vadd.f32 %v4056, %v4146
        %v4212 = vadd.f32 %v4057, %v4149
        %v4213 = vadd.f32 %v4058, %v4152
        %v4214 = vadd.f32 %v4059, %v4155
        %v4215 = vadd.f32 %v4060, %v4158
        %v4216 = vadd.f32 %v4061, %v4161
        %v4217 = vadd.f32 %v4062, %v4164
        %v4218 = vadd.f32 %v4063, %v4167
        %v4219 = vadd.f32 %v4064, %v4170
        %v4220 = vadd.f32 %v4065, %v4173
        %v4221 = vadd.f32 %v4066, %v4176
        %v4222 = vadd.f32 %v4067, %v4179
        %v4223 = vadd.f32 %v4068, %v4182
        %v4224 = vadd.f32 %v4069, %v4185
        %v4225 = vadd.f32 %v4070, %v4188
        %v4226 = vadd.f32 %v4071, %v4191
        %v4227 = vadd.f32 %v4072, %v4194
        %s4228 = scalar_lea.vmem %s1, 136
        %v4229 = vld [vmem:[%s4228] sm:$0xff]
        %4230 = vrot.lane.b32.xlu0 %v3453, 112
        %v4231 = vpop.permute.xlu0 %4230
        %4232 = vrot.lane.b32.xlu0 %v3455, 112
        %v4233 = vpop.permute.xlu0 %4232
        %v4234 = vsel %vm537, %v4231, 0
        %v4236 = vsel %vm537, %v4233, 0
        %4238 = vmatpush.msra.mxu0 0.0
        %4239 = vmatpush.msra.mxu0 0.0
        %4240 = vmatpush.msra.mxu0 0.0
        %4241 = vmatpush.msra.mxu0 0.0
        %4242 = vmatpush.msra.mxu0 0.0
        %4243 = vmatpush.msra.mxu0 0.0
        %4244 = vmatpush.msra.mxu0 0.0
        %4245 = vmatpush.msra.mxu0 0.0
        %4246 = vmatpush.msra.mxu0 0.0
        %4247 = vmatpush.msra.mxu0 0.0
        %4248 = vmatpush.msra.mxu0 0.0
        %4249 = vmatpush.msra.mxu0 0.0
        %4250 = vmatpush.msra.mxu0 0.0
        %4251 = vmatpush.msra.mxu0 0.0
        %4252 = vmatpush.msra.mxu0 0.0
        %4253 = vmatpush.msra.mxu0 %v4229
        %4254 = vmatmul.f32.gmra.mxu0 %v2387
        %v4255 = vpop.f32.mrf.mxu0
        %v4256 = vadd.f32 0.0, %v4255
        %4257 = vmatmul.f32.gmra.mxu0 %v2389
        %v4258 = vpop.f32.mrf.mxu0
        %v4259 = vadd.f32 0.0, %v4258
        %4260 = vmatmul.f32.gmra.mxu0 %v2391
        %v4261 = vpop.f32.mrf.mxu0
        %v4262 = vadd.f32 0.0, %v4261
        %4263 = vmatmul.f32.gmra.mxu0 %v2393
        %v4264 = vpop.f32.mrf.mxu0
        %v4265 = vadd.f32 0.0, %v4264
        %4266 = vmatmul.f32.gmra.mxu0 %v2395
        %v4267 = vpop.f32.mrf.mxu0
        %v4268 = vadd.f32 0.0, %v4267
        %4269 = vmatmul.f32.gmra.mxu0 %v2397
        %v4270 = vpop.f32.mrf.mxu0
        %v4271 = vadd.f32 0.0, %v4270
        %4272 = vmatmul.f32.gmra.mxu0 %v2399
        %v4273 = vpop.f32.mrf.mxu0
        %v4274 = vadd.f32 0.0, %v4273
        %4275 = vmatmul.f32.gmra.mxu0 %v2401
        %v4276 = vpop.f32.mrf.mxu0
        %v4277 = vadd.f32 0.0, %v4276
        %4278 = vmatmul.f32.gmra.mxu0 %v2403
        %v4279 = vpop.f32.mrf.mxu0
        %v4280 = vadd.f32 0.0, %v4279
        %4281 = vmatmul.f32.gmra.mxu0 %v2405
        %v4282 = vpop.f32.mrf.mxu0
        %v4283 = vadd.f32 0.0, %v4282
        %4284 = vmatmul.f32.gmra.mxu0 %v2407
        %v4285 = vpop.f32.mrf.mxu0
        %v4286 = vadd.f32 0.0, %v4285
        %4287 = vmatmul.f32.gmra.mxu0 %v2409
        %v4288 = vpop.f32.mrf.mxu0
        %v4289 = vadd.f32 0.0, %v4288
        %4290 = vmatmul.f32.gmra.mxu0 %v2411
        %v4291 = vpop.f32.mrf.mxu0
        %v4292 = vadd.f32 0.0, %v4291
        %4293 = vmatmul.f32.gmra.mxu0 %v2413
        %v4294 = vpop.f32.mrf.mxu0
        %v4295 = vadd.f32 0.0, %v4294
        %4296 = vmatmul.f32.gmra.mxu0 %v2415
        %v4297 = vpop.f32.mrf.mxu0
        %v4298 = vadd.f32 0.0, %v4297
        %4299 = vmatmul.f32.gmra.mxu0 %v2417
        %v4300 = vpop.f32.mrf.mxu0
        %v4301 = vadd.f32 0.0, %v4300
        %4302 = vmatmul.f32.gmra.mxu0 %v2419
        %v4303 = vpop.f32.mrf.mxu0
        %v4304 = vadd.f32 0.0, %v4303
        %4305 = vmatmul.f32.gmra.mxu0 %v2421
        %v4306 = vpop.f32.mrf.mxu0
        %v4307 = vadd.f32 0.0, %v4306
        %4308 = vmatmul.f32.gmra.mxu0 %v2423
        %v4309 = vpop.f32.mrf.mxu0
        %v4310 = vadd.f32 0.0, %v4309
        %4311 = vmatmul.f32.gmra.mxu0 %v2425
        %v4312 = vpop.f32.mrf.mxu0
        %v4313 = vadd.f32 0.0, %v4312
        %4314 = vmatmul.f32.gmra.mxu0 %v2427
        %v4315 = vpop.f32.mrf.mxu0
        %v4316 = vadd.f32 0.0, %v4315
        %4317 = vmatmul.f32.gmra.mxu0 %v2429
        %v4318 = vpop.f32.mrf.mxu0
        %v4319 = vadd.f32 0.0, %v4318
        %4320 = vmatmul.f32.gmra.mxu0 %v2431
        %v4321 = vpop.f32.mrf.mxu0
        %v4322 = vadd.f32 0.0, %v4321
        %4323 = vmatmul.f32.gmra.mxu0 %v2433
        %v4324 = vpop.f32.mrf.mxu0
        %v4325 = vadd.f32 0.0, %v4324
        %4326 = vmatmul.f32.gmra.mxu0 %v2435
        %v4327 = vpop.f32.mrf.mxu0
        %v4328 = vadd.f32 0.0, %v4327
        %4329 = vmatmul.f32.gmra.mxu0 %v2437
        %v4330 = vpop.f32.mrf.mxu0
        %v4331 = vadd.f32 0.0, %v4330
        %4332 = vmatmul.f32.gmra.mxu0 %v2439
        %v4333 = vpop.f32.mrf.mxu0
        %v4334 = vadd.f32 0.0, %v4333
        %4335 = vmatmul.f32.gmra.mxu0 %v2441
        %v4336 = vpop.f32.mrf.mxu0
        %v4337 = vadd.f32 0.0, %v4336
        %4338 = vmatmul.f32.gmra.mxu0 %v2443
        %v4339 = vpop.f32.mrf.mxu0
        %v4340 = vadd.f32 0.0, %v4339
        %4341 = vmatmul.f32.gmra.mxu0 %v2445
        %v4342 = vpop.f32.mrf.mxu0
        %v4343 = vadd.f32 0.0, %v4342
        %4344 = vmatmul.f32.gmra.mxu0 %v4234
        %v4345 = vpop.f32.mrf.mxu0
        %v4346 = vadd.f32 0.0, %v4345
        %4347 = vmatmul.f32.gmra.mxu0 %v4236
        %v4348 = vpop.f32.mrf.mxu0
        %v4349 = vadd.f32 0.0, %v4348
        %4350 = vdwg.mxu0
        %v4351 = vadd.f32 %v4196, %v4256
        %v4352 = vadd.f32 %v4197, %v4259
        %v4353 = vadd.f32 %v4198, %v4262
        %v4354 = vadd.f32 %v4199, %v4265
        %v4355 = vadd.f32 %v4200, %v4268
        %v4356 = vadd.f32 %v4201, %v4271
        %v4357 = vadd.f32 %v4202, %v4274
        %v4358 = vadd.f32 %v4203, %v4277
        %v4359 = vadd.f32 %v4204, %v4280
        %v4360 = vadd.f32 %v4205, %v4283
        %v4361 = vadd.f32 %v4206, %v4286
        %v4362 = vadd.f32 %v4207, %v4289
        %v4363 = vadd.f32 %v4208, %v4292
        %v4364 = vadd.f32 %v4209, %v4295
        %v4365 = vadd.f32 %v4210, %v4298
        %v4366 = vadd.f32 %v4211, %v4301
        %v4367 = vadd.f32 %v4212, %v4304
        %v4368 = vadd.f32 %v4213, %v4307
        %v4369 = vadd.f32 %v4214, %v4310
        %v4370 = vadd.f32 %v4215, %v4313
        %v4371 = vadd.f32 %v4216, %v4316
        %v4372 = vadd.f32 %v4217, %v4319
        %v4373 = vadd.f32 %v4218, %v4322
        %v4374 = vadd.f32 %v4219, %v4325
        %v4375 = vadd.f32 %v4220, %v4328
        %v4376 = vadd.f32 %v4221, %v4331
        %v4377 = vadd.f32 %v4222, %v4334
        %v4378 = vadd.f32 %v4223, %v4337
        %v4379 = vadd.f32 %v4224, %v4340
        %v4380 = vadd.f32 %v4225, %v4343
        %v4381 = vadd.f32 %v4226, %v4346
        %v4382 = vadd.f32 %v4227, %v4349
        %s4383 = scalar_lea.vmem %s1, 144
        %v4384 = vld [vmem:[%s4383] sm:$0xff]
        %4385 = vrot.lane.b32.xlu0 %v3453, 104
        %v4386 = vpop.permute.xlu0 %4385
        %4387 = vrot.lane.b32.xlu0 %v3455, 104
        %v4388 = vpop.permute.xlu0 %4387
        %v4389 = vsel %vm537, %v4386, 0
        %v4391 = vsel %vm537, %v4388, 0
        %4393 = vmatpush.msra.mxu0 0.0
        %4394 = vmatpush.msra.mxu0 0.0
        %4395 = vmatpush.msra.mxu0 0.0
        %4396 = vmatpush.msra.mxu0 0.0
        %4397 = vmatpush.msra.mxu0 0.0
        %4398 = vmatpush.msra.mxu0 0.0
        %4399 = vmatpush.msra.mxu0 0.0
        %4400 = vmatpush.msra.mxu0 0.0
        %4401 = vmatpush.msra.mxu0 0.0
        %4402 = vmatpush.msra.mxu0 0.0
        %4403 = vmatpush.msra.mxu0 0.0
        %4404 = vmatpush.msra.mxu0 0.0
        %4405 = vmatpush.msra.mxu0 0.0
        %4406 = vmatpush.msra.mxu0 0.0
        %4407 = vmatpush.msra.mxu0 0.0
        %4408 = vmatpush.msra.mxu0 %v4384
        %4409 = vmatmul.f32.gmra.mxu0 %v2662
        %v4410 = vpop.f32.mrf.mxu0
        %v4411 = vadd.f32 0.0, %v4410
        %4412 = vmatmul.f32.gmra.mxu0 %v2664
        %v4413 = vpop.f32.mrf.mxu0
        %v4414 = vadd.f32 0.0, %v4413
        %4415 = vmatmul.f32.gmra.mxu0 %v2666
        %v4416 = vpop.f32.mrf.mxu0
        %v4417 = vadd.f32 0.0, %v4416
        %4418 = vmatmul.f32.gmra.mxu0 %v2668
        %v4419 = vpop.f32.mrf.mxu0
        %v4420 = vadd.f32 0.0, %v4419
        %4421 = vmatmul.f32.gmra.mxu0 %v2670
        %v4422 = vpop.f32.mrf.mxu0
        %v4423 = vadd.f32 0.0, %v4422
        %4424 = vmatmul.f32.gmra.mxu0 %v2672
        %v4425 = vpop.f32.mrf.mxu0
        %v4426 = vadd.f32 0.0, %v4425
        %4427 = vmatmul.f32.gmra.mxu0 %v2674
        %v4428 = vpop.f32.mrf.mxu0
        %v4429 = vadd.f32 0.0, %v4428
        %4430 = vmatmul.f32.gmra.mxu0 %v2676
        %v4431 = vpop.f32.mrf.mxu0
        %v4432 = vadd.f32 0.0, %v4431
        %4433 = vmatmul.f32.gmra.mxu0 %v2678
        %v4434 = vpop.f32.mrf.mxu0
        %v4435 = vadd.f32 0.0, %v4434
        %4436 = vmatmul.f32.gmra.mxu0 %v2680
        %v4437 = vpop.f32.mrf.mxu0
        %v4438 = vadd.f32 0.0, %v4437
        %4439 = vmatmul.f32.gmra.mxu0 %v2682
        %v4440 = vpop.f32.mrf.mxu0
        %v4441 = vadd.f32 0.0, %v4440
        %4442 = vmatmul.f32.gmra.mxu0 %v2684
        %v4443 = vpop.f32.mrf.mxu0
        %v4444 = vadd.f32 0.0, %v4443
        %4445 = vmatmul.f32.gmra.mxu0 %v2686
        %v4446 = vpop.f32.mrf.mxu0
        %v4447 = vadd.f32 0.0, %v4446
        %4448 = vmatmul.f32.gmra.mxu0 %v2688
        %v4449 = vpop.f32.mrf.mxu0
        %v4450 = vadd.f32 0.0, %v4449
        %4451 = vmatmul.f32.gmra.mxu0 %v2690
        %v4452 = vpop.f32.mrf.mxu0
        %v4453 = vadd.f32 0.0, %v4452
        %4454 = vmatmul.f32.gmra.mxu0 %v2692
        %v4455 = vpop.f32.mrf.mxu0
        %v4456 = vadd.f32 0.0, %v4455
        %4457 = vmatmul.f32.gmra.mxu0 %v2694
        %v4458 = vpop.f32.mrf.mxu0
        %v4459 = vadd.f32 0.0, %v4458
        %4460 = vmatmul.f32.gmra.mxu0 %v2696
        %v4461 = vpop.f32.mrf.mxu0
        %v4462 = vadd.f32 0.0, %v4461
        %4463 = vmatmul.f32.gmra.mxu0 %v2698
        %v4464 = vpop.f32.mrf.mxu0
        %v4465 = vadd.f32 0.0, %v4464
        %4466 = vmatmul.f32.gmra.mxu0 %v2700
        %v4467 = vpop.f32.mrf.mxu0
        %v4468 = vadd.f32 0.0, %v4467
        %4469 = vmatmul.f32.gmra.mxu0 %v2702
        %v4470 = vpop.f32.mrf.mxu0
        %v4471 = vadd.f32 0.0, %v4470
        %4472 = vmatmul.f32.gmra.mxu0 %v2704
        %v4473 = vpop.f32.mrf.mxu0
        %v4474 = vadd.f32 0.0, %v4473
        %4475 = vmatmul.f32.gmra.mxu0 %v2706
        %v4476 = vpop.f32.mrf.mxu0
        %v4477 = vadd.f32 0.0, %v4476
        %4478 = vmatmul.f32.gmra.mxu0 %v2708
        %v4479 = vpop.f32.mrf.mxu0
        %v4480 = vadd.f32 0.0, %v4479
        %4481 = vmatmul.f32.gmra.mxu0 %v2710
        %v4482 = vpop.f32.mrf.mxu0
        %v4483 = vadd.f32 0.0, %v4482
        %4484 = vmatmul.f32.gmra.mxu0 %v2712
        %v4485 = vpop.f32.mrf.mxu0
        %v4486 = vadd.f32 0.0, %v4485
        %4487 = vmatmul.f32.gmra.mxu0 %v2714
        %v4488 = vpop.f32.mrf.mxu0
        %v4489 = vadd.f32 0.0, %v4488
        %4490 = vmatmul.f32.gmra.mxu0 %v2716
        %v4491 = vpop.f32.mrf.mxu0
        %v4492 = vadd.f32 0.0, %v4491
        %4493 = vmatmul.f32.gmra.mxu0 %v2718
        %v4494 = vpop.f32.mrf.mxu0
        %v4495 = vadd.f32 0.0, %v4494
        %4496 = vmatmul.f32.gmra.mxu0 %v2720
        %v4497 = vpop.f32.mrf.mxu0
        %v4498 = vadd.f32 0.0, %v4497
        %4499 = vmatmul.f32.gmra.mxu0 %v4389
        %v4500 = vpop.f32.mrf.mxu0
        %v4501 = vadd.f32 0.0, %v4500
        %4502 = vmatmul.f32.gmra.mxu0 %v4391
        %v4503 = vpop.f32.mrf.mxu0
        %v4504 = vadd.f32 0.0, %v4503
        %4505 = vdwg.mxu0
        %v4506 = vadd.f32 %v4351, %v4411
        %v4507 = vadd.f32 %v4352, %v4414
        %v4508 = vadd.f32 %v4353, %v4417
        %v4509 = vadd.f32 %v4354, %v4420
        %v4510 = vadd.f32 %v4355, %v4423
        %v4511 = vadd.f32 %v4356, %v4426
        %v4512 = vadd.f32 %v4357, %v4429
        %v4513 = vadd.f32 %v4358, %v4432
        %v4514 = vadd.f32 %v4359, %v4435
        %v4515 = vadd.f32 %v4360, %v4438
        %v4516 = vadd.f32 %v4361, %v4441
        %v4517 = vadd.f32 %v4362, %v4444
        %v4518 = vadd.f32 %v4363, %v4447
        %v4519 = vadd.f32 %v4364, %v4450
        %v4520 = vadd.f32 %v4365, %v4453
        %v4521 = vadd.f32 %v4366, %v4456
        %v4522 = vadd.f32 %v4367, %v4459
        %v4523 = vadd.f32 %v4368, %v4462
        %v4524 = vadd.f32 %v4369, %v4465
        %v4525 = vadd.f32 %v4370, %v4468
        %v4526 = vadd.f32 %v4371, %v4471
        %v4527 = vadd.f32 %v4372, %v4474
        %v4528 = vadd.f32 %v4373, %v4477
        %v4529 = vadd.f32 %v4374, %v4480
        %v4530 = vadd.f32 %v4375, %v4483
        %v4531 = vadd.f32 %v4376, %v4486
        %v4532 = vadd.f32 %v4377, %v4489
        %v4533 = vadd.f32 %v4378, %v4492
        %v4534 = vadd.f32 %v4379, %v4495
        %v4535 = vadd.f32 %v4380, %v4498
        %v4536 = vadd.f32 %v4381, %v4501
        %v4537 = vadd.f32 %v4382, %v4504
        %s4538 = scalar_lea.vmem %s1, 152
        %v4539 = vld [vmem:[%s4538] sm:$0xff]
        %4540 = vrot.lane.b32.xlu0 %v3764, 112
        %v4541 = vpop.permute.xlu0 %4540
        %4542 = vrot.lane.b32.xlu0 %v3766, 112
        %v4543 = vpop.permute.xlu0 %4542
        %v4544 = vsel %vm537, %v4541, 0
        %v4546 = vsel %vm537, %v4543, 0
        %4548 = vmatpush.msra.mxu0 0.0
        %4549 = vmatpush.msra.mxu0 0.0
        %4550 = vmatpush.msra.mxu0 0.0
        %4551 = vmatpush.msra.mxu0 0.0
        %4552 = vmatpush.msra.mxu0 0.0
        %4553 = vmatpush.msra.mxu0 0.0
        %4554 = vmatpush.msra.mxu0 0.0
        %4555 = vmatpush.msra.mxu0 0.0
        %4556 = vmatpush.msra.mxu0 0.0
        %4557 = vmatpush.msra.mxu0 0.0
        %4558 = vmatpush.msra.mxu0 0.0
        %4559 = vmatpush.msra.mxu0 0.0
        %4560 = vmatpush.msra.mxu0 0.0
        %4561 = vmatpush.msra.mxu0 0.0
        %4562 = vmatpush.msra.mxu0 0.0
        %4563 = vmatpush.msra.mxu0 %v4539
        %4564 = vmatmul.f32.gmra.mxu0 %v2937
        %v4565 = vpop.f32.mrf.mxu0
        %v4566 = vadd.f32 0.0, %v4565
        %4567 = vmatmul.f32.gmra.mxu0 %v2939
        %v4568 = vpop.f32.mrf.mxu0
        %v4569 = vadd.f32 0.0, %v4568
        %4570 = vmatmul.f32.gmra.mxu0 %v2941
        %v4571 = vpop.f32.mrf.mxu0
        %v4572 = vadd.f32 0.0, %v4571
        %4573 = vmatmul.f32.gmra.mxu0 %v2943
        %v4574 = vpop.f32.mrf.mxu0
        %v4575 = vadd.f32 0.0, %v4574
        %4576 = vmatmul.f32.gmra.mxu0 %v2945
        %v4577 = vpop.f32.mrf.mxu0
        %v4578 = vadd.f32 0.0, %v4577
        %4579 = vmatmul.f32.gmra.mxu0 %v2947
        %v4580 = vpop.f32.mrf.mxu0
        %v4581 = vadd.f32 0.0, %v4580
        %4582 = vmatmul.f32.gmra.mxu0 %v2949
        %v4583 = vpop.f32.mrf.mxu0
        %v4584 = vadd.f32 0.0, %v4583
        %4585 = vmatmul.f32.gmra.mxu0 %v2951
        %v4586 = vpop.f32.mrf.mxu0
        %v4587 = vadd.f32 0.0, %v4586
        %4588 = vmatmul.f32.gmra.mxu0 %v2953
        %v4589 = vpop.f32.mrf.mxu0
        %v4590 = vadd.f32 0.0, %v4589
        %4591 = vmatmul.f32.gmra.mxu0 %v2955
        %v4592 = vpop.f32.mrf.mxu0
        %v4593 = vadd.f32 0.0, %v4592
        %4594 = vmatmul.f32.gmra.mxu0 %v2957
        %v4595 = vpop.f32.mrf.mxu0
        %v4596 = vadd.f32 0.0, %v4595
        %4597 = vmatmul.f32.gmra.mxu0 %v2959
        %v4598 = vpop.f32.mrf.mxu0
        %v4599 = vadd.f32 0.0, %v4598
        %4600 = vmatmul.f32.gmra.mxu0 %v2961
        %v4601 = vpop.f32.mrf.mxu0
        %v4602 = vadd.f32 0.0, %v4601
        %4603 = vmatmul.f32.gmra.mxu0 %v2963
        %v4604 = vpop.f32.mrf.mxu0
        %v4605 = vadd.f32 0.0, %v4604
        %4606 = vmatmul.f32.gmra.mxu0 %v2965
        %v4607 = vpop.f32.mrf.mxu0
        %v4608 = vadd.f32 0.0, %v4607
        %4609 = vmatmul.f32.gmra.mxu0 %v2967
        %v4610 = vpop.f32.mrf.mxu0
        %v4611 = vadd.f32 0.0, %v4610
        %4612 = vmatmul.f32.gmra.mxu0 %v2969
        %v4613 = vpop.f32.mrf.mxu0
        %v4614 = vadd.f32 0.0, %v4613
        %4615 = vmatmul.f32.gmra.mxu0 %v2971
        %v4616 = vpop.f32.mrf.mxu0
        %v4617 = vadd.f32 0.0, %v4616
        %4618 = vmatmul.f32.gmra.mxu0 %v2973
        %v4619 = vpop.f32.mrf.mxu0
        %v4620 = vadd.f32 0.0, %v4619
        %4621 = vmatmul.f32.gmra.mxu0 %v2975
        %v4622 = vpop.f32.mrf.mxu0
        %v4623 = vadd.f32 0.0, %v4622
        %4624 = vmatmul.f32.gmra.mxu0 %v2977
        %v4625 = vpop.f32.mrf.mxu0
        %v4626 = vadd.f32 0.0, %v4625
        %4627 = vmatmul.f32.gmra.mxu0 %v2979
        %v4628 = vpop.f32.mrf.mxu0
        %v4629 = vadd.f32 0.0, %v4628
        %4630 = vmatmul.f32.gmra.mxu0 %v2981
        %v4631 = vpop.f32.mrf.mxu0
        %v4632 = vadd.f32 0.0, %v4631
        %4633 = vmatmul.f32.gmra.mxu0 %v2983
        %v4634 = vpop.f32.mrf.mxu0
        %v4635 = vadd.f32 0.0, %v4634
        %4636 = vmatmul.f32.gmra.mxu0 %v2985
        %v4637 = vpop.f32.mrf.mxu0
        %v4638 = vadd.f32 0.0, %v4637
        %4639 = vmatmul.f32.gmra.mxu0 %v2987
        %v4640 = vpop.f32.mrf.mxu0
        %v4641 = vadd.f32 0.0, %v4640
        %4642 = vmatmul.f32.gmra.mxu0 %v2989
        %v4643 = vpop.f32.mrf.mxu0
        %v4644 = vadd.f32 0.0, %v4643
        %4645 = vmatmul.f32.gmra.mxu0 %v2991
        %v4646 = vpop.f32.mrf.mxu0
        %v4647 = vadd.f32 0.0, %v4646
        %4648 = vmatmul.f32.gmra.mxu0 %v2993
        %v4649 = vpop.f32.mrf.mxu0
        %v4650 = vadd.f32 0.0, %v4649
        %4651 = vmatmul.f32.gmra.mxu0 %v2995
        %v4652 = vpop.f32.mrf.mxu0
        %v4653 = vadd.f32 0.0, %v4652
        %4654 = vmatmul.f32.gmra.mxu0 %v4544
        %v4655 = vpop.f32.mrf.mxu0
        %v4656 = vadd.f32 0.0, %v4655
        %4657 = vmatmul.f32.gmra.mxu0 %v4546
        %v4658 = vpop.f32.mrf.mxu0
        %v4659 = vadd.f32 0.0, %v4658
        %4660 = vdwg.mxu0
        %v4661 = vadd.f32 %v4506, %v4566
        %v4662 = vadd.f32 %v4507, %v4569
        %v4663 = vadd.f32 %v4508, %v4572
        %v4664 = vadd.f32 %v4509, %v4575
        %v4665 = vadd.f32 %v4510, %v4578
        %v4666 = vadd.f32 %v4511, %v4581
        %v4667 = vadd.f32 %v4512, %v4584
        %v4668 = vadd.f32 %v4513, %v4587
        %v4669 = vadd.f32 %v4514, %v4590
        %v4670 = vadd.f32 %v4515, %v4593
        %v4671 = vadd.f32 %v4516, %v4596
        %v4672 = vadd.f32 %v4517, %v4599
        %v4673 = vadd.f32 %v4518, %v4602
        %v4674 = vadd.f32 %v4519, %v4605
        %v4675 = vadd.f32 %v4520, %v4608
        %v4676 = vadd.f32 %v4521, %v4611
        %v4677 = vadd.f32 %v4522, %v4614
        %v4678 = vadd.f32 %v4523, %v4617
        %v4679 = vadd.f32 %v4524, %v4620
        %v4680 = vadd.f32 %v4525, %v4623
        %v4681 = vadd.f32 %v4526, %v4626
        %v4682 = vadd.f32 %v4527, %v4629
        %v4683 = vadd.f32 %v4528, %v4632
        %v4684 = vadd.f32 %v4529, %v4635
        %v4685 = vadd.f32 %v4530, %v4638
        %v4686 = vadd.f32 %v4531, %v4641
        %v4687 = vadd.f32 %v4532, %v4644
        %v4688 = vadd.f32 %v4533, %v4647
        %v4689 = vadd.f32 %v4534, %v4650
        %v4690 = vadd.f32 %v4535, %v4653
        %v4691 = vadd.f32 %v4536, %v4656
        %v4692 = vadd.f32 %v4537, %v4659
        %s4693 = scalar_lea.vmem %s1, 160
        %v4694 = vld [vmem:[%s4693] sm:$0xff]
        %v4696 = vsel %vm537, %v435, 0
        %v4699 = vsel %vm537, %v436, 0
        %4701 = vmatpush.msra.mxu0 0.0
        %4702 = vmatpush.msra.mxu0 0.0
        %4703 = vmatpush.msra.mxu0 0.0
        %4704 = vmatpush.msra.mxu0 0.0
        %4705 = vmatpush.msra.mxu0 0.0
        %4706 = vmatpush.msra.mxu0 0.0
        %4707 = vmatpush.msra.mxu0 0.0
        %4708 = vmatpush.msra.mxu0 0.0
        %4709 = vmatpush.msra.mxu0 0.0
        %4710 = vmatpush.msra.mxu0 0.0
        %4711 = vmatpush.msra.mxu0 0.0
        %4712 = vmatpush.msra.mxu0 0.0
        %4713 = vmatpush.msra.mxu0 0.0
        %4714 = vmatpush.msra.mxu0 0.0
        %4715 = vmatpush.msra.mxu0 0.0
        %4716 = vmatpush.msra.mxu0 %v4694
        %4717 = vmatmul.f32.gmra.mxu0 %v723
        %v4718 = vpop.f32.mrf.mxu0
        %v4719 = vadd.f32 0.0, %v4718
        %4720 = vmatmul.f32.gmra.mxu0 %v725
        %v4721 = vpop.f32.mrf.mxu0
        %v4722 = vadd.f32 0.0, %v4721
        %4723 = vmatmul.f32.gmra.mxu0 %v727
        %v4724 = vpop.f32.mrf.mxu0
        %v4725 = vadd.f32 0.0, %v4724
        %4726 = vmatmul.f32.gmra.mxu0 %v729
        %v4727 = vpop.f32.mrf.mxu0
        %v4728 = vadd.f32 0.0, %v4727
        %4729 = vmatmul.f32.gmra.mxu0 %v731
        %v4730 = vpop.f32.mrf.mxu0
        %v4731 = vadd.f32 0.0, %v4730
        %4732 = vmatmul.f32.gmra.mxu0 %v733
        %v4733 = vpop.f32.mrf.mxu0
        %v4734 = vadd.f32 0.0, %v4733
        %4735 = vmatmul.f32.gmra.mxu0 %v735
        %v4736 = vpop.f32.mrf.mxu0
        %v4737 = vadd.f32 0.0, %v4736
        %4738 = vmatmul.f32.gmra.mxu0 %v737
        %v4739 = vpop.f32.mrf.mxu0
        %v4740 = vadd.f32 0.0, %v4739
        %4741 = vmatmul.f32.gmra.mxu0 %v739
        %v4742 = vpop.f32.mrf.mxu0
        %v4743 = vadd.f32 0.0, %v4742
        %4744 = vmatmul.f32.gmra.mxu0 %v741
        %v4745 = vpop.f32.mrf.mxu0
        %v4746 = vadd.f32 0.0, %v4745
        %4747 = vmatmul.f32.gmra.mxu0 %v743
        %v4748 = vpop.f32.mrf.mxu0
        %v4749 = vadd.f32 0.0, %v4748
        %4750 = vmatmul.f32.gmra.mxu0 %v745
        %v4751 = vpop.f32.mrf.mxu0
        %v4752 = vadd.f32 0.0, %v4751
        %4753 = vmatmul.f32.gmra.mxu0 %v747
        %v4754 = vpop.f32.mrf.mxu0
        %v4755 = vadd.f32 0.0, %v4754
        %4756 = vmatmul.f32.gmra.mxu0 %v749
        %v4757 = vpop.f32.mrf.mxu0
        %v4758 = vadd.f32 0.0, %v4757
        %4759 = vmatmul.f32.gmra.mxu0 %v751
        %v4760 = vpop.f32.mrf.mxu0
        %v4761 = vadd.f32 0.0, %v4760
        %4762 = vmatmul.f32.gmra.mxu0 %v753
        %v4763 = vpop.f32.mrf.mxu0
        %v4764 = vadd.f32 0.0, %v4763
        %4765 = vmatmul.f32.gmra.mxu0 %v755
        %v4766 = vpop.f32.mrf.mxu0
        %v4767 = vadd.f32 0.0, %v4766
        %4768 = vmatmul.f32.gmra.mxu0 %v757
        %v4769 = vpop.f32.mrf.mxu0
        %v4770 = vadd.f32 0.0, %v4769
        %4771 = vmatmul.f32.gmra.mxu0 %v759
        %v4772 = vpop.f32.mrf.mxu0
        %v4773 = vadd.f32 0.0, %v4772
        %4774 = vmatmul.f32.gmra.mxu0 %v761
        %v4775 = vpop.f32.mrf.mxu0
        %v4776 = vadd.f32 0.0, %v4775
        %4777 = vmatmul.f32.gmra.mxu0 %v763
        %v4778 = vpop.f32.mrf.mxu0
        %v4779 = vadd.f32 0.0, %v4778
        %4780 = vmatmul.f32.gmra.mxu0 %v765
        %v4781 = vpop.f32.mrf.mxu0
        %v4782 = vadd.f32 0.0, %v4781
        %4783 = vmatmul.f32.gmra.mxu0 %v767
        %v4784 = vpop.f32.mrf.mxu0
        %v4785 = vadd.f32 0.0, %v4784
        %4786 = vmatmul.f32.gmra.mxu0 %v769
        %v4787 = vpop.f32.mrf.mxu0
        %v4788 = vadd.f32 0.0, %v4787
        %4789 = vmatmul.f32.gmra.mxu0 %v771
        %v4790 = vpop.f32.mrf.mxu0
        %v4791 = vadd.f32 0.0, %v4790
        %4792 = vmatmul.f32.gmra.mxu0 %v773
        %v4793 = vpop.f32.mrf.mxu0
        %v4794 = vadd.f32 0.0, %v4793
        %4795 = vmatmul.f32.gmra.mxu0 %v775
        %v4796 = vpop.f32.mrf.mxu0
        %v4797 = vadd.f32 0.0, %v4796
        %4798 = vmatmul.f32.gmra.mxu0 %v777
        %v4799 = vpop.f32.mrf.mxu0
        %v4800 = vadd.f32 0.0, %v4799
        %4801 = vmatmul.f32.gmra.mxu0 %v3145
        %v4802 = vpop.f32.mrf.mxu0
        %v4803 = vadd.f32 0.0, %v4802
        %4804 = vmatmul.f32.gmra.mxu0 %v3148
        %v4805 = vpop.f32.mrf.mxu0
        %v4806 = vadd.f32 0.0, %v4805
        %4807 = vmatmul.f32.gmra.mxu0 %v4696
        %v4808 = vpop.f32.mrf.mxu0
        %v4809 = vadd.f32 0.0, %v4808
        %4810 = vmatmul.f32.gmra.mxu0 %v4699
        %v4811 = vpop.f32.mrf.mxu0
        %v4812 = vadd.f32 0.0, %v4811
        %4813 = vdwg.mxu0
        %v4814 = vadd.f32 %v4661, %v4719
        %v4815 = vadd.f32 %v4662, %v4722
        %v4816 = vadd.f32 %v4663, %v4725
        %v4817 = vadd.f32 %v4664, %v4728
        %v4818 = vadd.f32 %v4665, %v4731
        %v4819 = vadd.f32 %v4666, %v4734
        %v4820 = vadd.f32 %v4667, %v4737
        %v4821 = vadd.f32 %v4668, %v4740
        %v4822 = vadd.f32 %v4669, %v4743
        %v4823 = vadd.f32 %v4670, %v4746
        %v4824 = vadd.f32 %v4671, %v4749
        %v4825 = vadd.f32 %v4672, %v4752
        %v4826 = vadd.f32 %v4673, %v4755
        %v4827 = vadd.f32 %v4674, %v4758
        %v4828 = vadd.f32 %v4675, %v4761
        %v4829 = vadd.f32 %v4676, %v4764
        %v4830 = vadd.f32 %v4677, %v4767
        %v4831 = vadd.f32 %v4678, %v4770
        %v4832 = vadd.f32 %v4679, %v4773
        %v4833 = vadd.f32 %v4680, %v4776
        %v4834 = vadd.f32 %v4681, %v4779
        %v4835 = vadd.f32 %v4682, %v4782
        %v4836 = vadd.f32 %v4683, %v4785
        %v4837 = vadd.f32 %v4684, %v4788
        %v4838 = vadd.f32 %v4685, %v4791
        %v4839 = vadd.f32 %v4686, %v4794
        %v4840 = vadd.f32 %v4687, %v4797
        %v4841 = vadd.f32 %v4688, %v4800
        %v4842 = vadd.f32 %v4689, %v4803
        %v4843 = vadd.f32 %v4690, %v4806
        %v4844 = vadd.f32 %v4691, %v4809
        %v4845 = vadd.f32 %v4692, %v4812
        %s4846 = scalar_lea.vmem %s1, 168
        %v4847 = vld [vmem:[%s4846] sm:$0xff]
        %4848 = vrot.lane.b32.xlu0 %v435, 120
        %v4849 = vpop.permute.xlu0 %4848
        %4850 = vrot.lane.b32.xlu0 %v436, 120
        %v4851 = vpop.permute.xlu0 %4850
        %v4852 = vsel %vm537, %v4849, 0
        %v4854 = vsel %vm537, %v4851, 0
        %4856 = vmatpush.msra.mxu0 0.0
        %4857 = vmatpush.msra.mxu0 0.0
        %4858 = vmatpush.msra.mxu0 0.0
        %4859 = vmatpush.msra.mxu0 0.0
        %4860 = vmatpush.msra.mxu0 0.0
        %4861 = vmatpush.msra.mxu0 0.0
        %4862 = vmatpush.msra.mxu0 0.0
        %4863 = vmatpush.msra.mxu0 0.0
        %4864 = vmatpush.msra.mxu0 0.0
        %4865 = vmatpush.msra.mxu0 0.0
        %4866 = vmatpush.msra.mxu0 0.0
        %4867 = vmatpush.msra.mxu0 0.0
        %4868 = vmatpush.msra.mxu0 0.0
        %4869 = vmatpush.msra.mxu0 0.0
        %4870 = vmatpush.msra.mxu0 0.0
        %4871 = vmatpush.msra.mxu0 %v4847
        %4872 = vmatmul.f32.gmra.mxu0 %v546
        %v4873 = vpop.f32.mrf.mxu0
        %v4874 = vadd.f32 0.0, %v4873
        %4875 = vmatmul.f32.gmra.mxu0 %v548
        %v4876 = vpop.f32.mrf.mxu0
        %v4877 = vadd.f32 0.0, %v4876
        %4878 = vmatmul.f32.gmra.mxu0 %v550
        %v4879 = vpop.f32.mrf.mxu0
        %v4880 = vadd.f32 0.0, %v4879
        %4881 = vmatmul.f32.gmra.mxu0 %v552
        %v4882 = vpop.f32.mrf.mxu0
        %v4883 = vadd.f32 0.0, %v4882
        %4884 = vmatmul.f32.gmra.mxu0 %v554
        %v4885 = vpop.f32.mrf.mxu0
        %v4886 = vadd.f32 0.0, %v4885
        %4887 = vmatmul.f32.gmra.mxu0 %v556
        %v4888 = vpop.f32.mrf.mxu0
        %v4889 = vadd.f32 0.0, %v4888
        %4890 = vmatmul.f32.gmra.mxu0 %v558
        %v4891 = vpop.f32.mrf.mxu0
        %v4892 = vadd.f32 0.0, %v4891
        %4893 = vmatmul.f32.gmra.mxu0 %v560
        %v4894 = vpop.f32.mrf.mxu0
        %v4895 = vadd.f32 0.0, %v4894
        %4896 = vmatmul.f32.gmra.mxu0 %v562
        %v4897 = vpop.f32.mrf.mxu0
        %v4898 = vadd.f32 0.0, %v4897
        %4899 = vmatmul.f32.gmra.mxu0 %v564
        %v4900 = vpop.f32.mrf.mxu0
        %v4901 = vadd.f32 0.0, %v4900
        %4902 = vmatmul.f32.gmra.mxu0 %v566
        %v4903 = vpop.f32.mrf.mxu0
        %v4904 = vadd.f32 0.0, %v4903
        %4905 = vmatmul.f32.gmra.mxu0 %v568
        %v4906 = vpop.f32.mrf.mxu0
        %v4907 = vadd.f32 0.0, %v4906
        %4908 = vmatmul.f32.gmra.mxu0 %v570
        %v4909 = vpop.f32.mrf.mxu0
        %v4910 = vadd.f32 0.0, %v4909
        %4911 = vmatmul.f32.gmra.mxu0 %v572
        %v4912 = vpop.f32.mrf.mxu0
        %v4913 = vadd.f32 0.0, %v4912
        %4914 = vmatmul.f32.gmra.mxu0 %v574
        %v4915 = vpop.f32.mrf.mxu0
        %v4916 = vadd.f32 0.0, %v4915
        %4917 = vmatmul.f32.gmra.mxu0 %v576
        %v4918 = vpop.f32.mrf.mxu0
        %v4919 = vadd.f32 0.0, %v4918
        %4920 = vmatmul.f32.gmra.mxu0 %v578
        %v4921 = vpop.f32.mrf.mxu0
        %v4922 = vadd.f32 0.0, %v4921
        %4923 = vmatmul.f32.gmra.mxu0 %v580
        %v4924 = vpop.f32.mrf.mxu0
        %v4925 = vadd.f32 0.0, %v4924
        %4926 = vmatmul.f32.gmra.mxu0 %v582
        %v4927 = vpop.f32.mrf.mxu0
        %v4928 = vadd.f32 0.0, %v4927
        %4929 = vmatmul.f32.gmra.mxu0 %v584
        %v4930 = vpop.f32.mrf.mxu0
        %v4931 = vadd.f32 0.0, %v4930
        %4932 = vmatmul.f32.gmra.mxu0 %v586
        %v4933 = vpop.f32.mrf.mxu0
        %v4934 = vadd.f32 0.0, %v4933
        %4935 = vmatmul.f32.gmra.mxu0 %v588
        %v4936 = vpop.f32.mrf.mxu0
        %v4937 = vadd.f32 0.0, %v4936
        %4938 = vmatmul.f32.gmra.mxu0 %v590
        %v4939 = vpop.f32.mrf.mxu0
        %v4940 = vadd.f32 0.0, %v4939
        %4941 = vmatmul.f32.gmra.mxu0 %v592
        %v4942 = vpop.f32.mrf.mxu0
        %v4943 = vadd.f32 0.0, %v4942
        %4944 = vmatmul.f32.gmra.mxu0 %v594
        %v4945 = vpop.f32.mrf.mxu0
        %v4946 = vadd.f32 0.0, %v4945
        %4947 = vmatmul.f32.gmra.mxu0 %v596
        %v4948 = vpop.f32.mrf.mxu0
        %v4949 = vadd.f32 0.0, %v4948
        %4950 = vmatmul.f32.gmra.mxu0 %v598
        %v4951 = vpop.f32.mrf.mxu0
        %v4952 = vadd.f32 0.0, %v4951
        %4953 = vmatmul.f32.gmra.mxu0 %v600
        %v4954 = vpop.f32.mrf.mxu0
        %v4955 = vadd.f32 0.0, %v4954
        %4956 = vmatmul.f32.gmra.mxu0 %v3301
        %v4957 = vpop.f32.mrf.mxu0
        %v4958 = vadd.f32 0.0, %v4957
        %4959 = vmatmul.f32.gmra.mxu0 %v3303
        %v4960 = vpop.f32.mrf.mxu0
        %v4961 = vadd.f32 0.0, %v4960
        %4962 = vmatmul.f32.gmra.mxu0 %v4852
        %v4963 = vpop.f32.mrf.mxu0
        %v4964 = vadd.f32 0.0, %v4963
        %4965 = vmatmul.f32.gmra.mxu0 %v4854
        %v4966 = vpop.f32.mrf.mxu0
        %v4967 = vadd.f32 0.0, %v4966
        %4968 = vdwg.mxu0
        %v4969 = vadd.f32 %v4814, %v4874
        %v4970 = vadd.f32 %v4815, %v4877
        %v4971 = vadd.f32 %v4816, %v4880
        %v4972 = vadd.f32 %v4817, %v4883
        %v4973 = vadd.f32 %v4818, %v4886
        %v4974 = vadd.f32 %v4819, %v4889
        %v4975 = vadd.f32 %v4820, %v4892
        %v4976 = vadd.f32 %v4821, %v4895
        %v4977 = vadd.f32 %v4822, %v4898
        %v4978 = vadd.f32 %v4823, %v4901
        %v4979 = vadd.f32 %v4824, %v4904
        %v4980 = vadd.f32 %v4825, %v4907
        %v4981 = vadd.f32 %v4826, %v4910
        %v4982 = vadd.f32 %v4827, %v4913
        %v4983 = vadd.f32 %v4828, %v4916
        %v4984 = vadd.f32 %v4829, %v4919
        %v4985 = vadd.f32 %v4830, %v4922
        %v4986 = vadd.f32 %v4831, %v4925
        %v4987 = vadd.f32 %v4832, %v4928
        %v4988 = vadd.f32 %v4833, %v4931
        %v4989 = vadd.f32 %v4834, %v4934
        %v4990 = vadd.f32 %v4835, %v4937
        %v4991 = vadd.f32 %v4836, %v4940
        %v4992 = vadd.f32 %v4837, %v4943
        %v4993 = vadd.f32 %v4838, %v4946
        %v4994 = vadd.f32 %v4839, %v4949
        %v4995 = vadd.f32 %v4840, %v4952
        %v4996 = vadd.f32 %v4841, %v4955
        %v4997 = vadd.f32 %v4842, %v4958
        %v4998 = vadd.f32 %v4843, %v4961
        %v4999 = vadd.f32 %v4844, %v4964
        %v5000 = vadd.f32 %v4845, %v4967
        %v5002 = vrot.slane %v435, 1
        %v5003 = vrot.slane %v436, 1
        %v5004 = vsel %vm908, %v5002, %v5003
        %v5005 = vrot.slane %v437, 1
        %v5006 = vsel %vm908, %v5003, %v5005
        %s5007 = scalar_lea.vmem %s1, 176
        %v5008 = vld [vmem:[%s5007] sm:$0xff]
        %v5009 = vsel %vm537, %v5004, 0
        %v5011 = vsel %vm537, %v5006, 0
        %5013 = vmatpush.msra.mxu0 0.0
        %5014 = vmatpush.msra.mxu0 0.0
        %5015 = vmatpush.msra.mxu0 0.0
        %5016 = vmatpush.msra.mxu0 0.0
        %5017 = vmatpush.msra.mxu0 0.0
        %5018 = vmatpush.msra.mxu0 0.0
        %5019 = vmatpush.msra.mxu0 0.0
        %5020 = vmatpush.msra.mxu0 0.0
        %5021 = vmatpush.msra.mxu0 0.0
        %5022 = vmatpush.msra.mxu0 0.0
        %5023 = vmatpush.msra.mxu0 0.0
        %5024 = vmatpush.msra.mxu0 0.0
        %5025 = vmatpush.msra.mxu0 0.0
        %5026 = vmatpush.msra.mxu0 0.0
        %5027 = vmatpush.msra.mxu0 0.0
        %5028 = vmatpush.msra.mxu0 %v5008
        %5029 = vmatmul.f32.gmra.mxu0 %v999
        %v5030 = vpop.f32.mrf.mxu0
        %v5031 = vadd.f32 0.0, %v5030
        %5032 = vmatmul.f32.gmra.mxu0 %v1001
        %v5033 = vpop.f32.mrf.mxu0
        %v5034 = vadd.f32 0.0, %v5033
        %5035 = vmatmul.f32.gmra.mxu0 %v1003
        %v5036 = vpop.f32.mrf.mxu0
        %v5037 = vadd.f32 0.0, %v5036
        %5038 = vmatmul.f32.gmra.mxu0 %v1005
        %v5039 = vpop.f32.mrf.mxu0
        %v5040 = vadd.f32 0.0, %v5039
        %5041 = vmatmul.f32.gmra.mxu0 %v1007
        %v5042 = vpop.f32.mrf.mxu0
        %v5043 = vadd.f32 0.0, %v5042
        %5044 = vmatmul.f32.gmra.mxu0 %v1009
        %v5045 = vpop.f32.mrf.mxu0
        %v5046 = vadd.f32 0.0, %v5045
        %5047 = vmatmul.f32.gmra.mxu0 %v1011
        %v5048 = vpop.f32.mrf.mxu0
        %v5049 = vadd.f32 0.0, %v5048
        %5050 = vmatmul.f32.gmra.mxu0 %v1013
        %v5051 = vpop.f32.mrf.mxu0
        %v5052 = vadd.f32 0.0, %v5051
        %5053 = vmatmul.f32.gmra.mxu0 %v1015
        %v5054 = vpop.f32.mrf.mxu0
        %v5055 = vadd.f32 0.0, %v5054
        %5056 = vmatmul.f32.gmra.mxu0 %v1017
        %v5057 = vpop.f32.mrf.mxu0
        %v5058 = vadd.f32 0.0, %v5057
        %5059 = vmatmul.f32.gmra.mxu0 %v1019
        %v5060 = vpop.f32.mrf.mxu0
        %v5061 = vadd.f32 0.0, %v5060
        %5062 = vmatmul.f32.gmra.mxu0 %v1021
        %v5063 = vpop.f32.mrf.mxu0
        %v5064 = vadd.f32 0.0, %v5063
        %5065 = vmatmul.f32.gmra.mxu0 %v1023
        %v5066 = vpop.f32.mrf.mxu0
        %v5067 = vadd.f32 0.0, %v5066
        %5068 = vmatmul.f32.gmra.mxu0 %v1025
        %v5069 = vpop.f32.mrf.mxu0
        %v5070 = vadd.f32 0.0, %v5069
        %5071 = vmatmul.f32.gmra.mxu0 %v1027
        %v5072 = vpop.f32.mrf.mxu0
        %v5073 = vadd.f32 0.0, %v5072
        %5074 = vmatmul.f32.gmra.mxu0 %v1029
        %v5075 = vpop.f32.mrf.mxu0
        %v5076 = vadd.f32 0.0, %v5075
        %5077 = vmatmul.f32.gmra.mxu0 %v1031
        %v5078 = vpop.f32.mrf.mxu0
        %v5079 = vadd.f32 0.0, %v5078
        %5080 = vmatmul.f32.gmra.mxu0 %v1033
        %v5081 = vpop.f32.mrf.mxu0
        %v5082 = vadd.f32 0.0, %v5081
        %5083 = vmatmul.f32.gmra.mxu0 %v1035
        %v5084 = vpop.f32.mrf.mxu0
        %v5085 = vadd.f32 0.0, %v5084
        %5086 = vmatmul.f32.gmra.mxu0 %v1037
        %v5087 = vpop.f32.mrf.mxu0
        %v5088 = vadd.f32 0.0, %v5087
        %5089 = vmatmul.f32.gmra.mxu0 %v1039
        %v5090 = vpop.f32.mrf.mxu0
        %v5091 = vadd.f32 0.0, %v5090
        %5092 = vmatmul.f32.gmra.mxu0 %v1041
        %v5093 = vpop.f32.mrf.mxu0
        %v5094 = vadd.f32 0.0, %v5093
        %5095 = vmatmul.f32.gmra.mxu0 %v1043
        %v5096 = vpop.f32.mrf.mxu0
        %v5097 = vadd.f32 0.0, %v5096
        %5098 = vmatmul.f32.gmra.mxu0 %v1045
        %v5099 = vpop.f32.mrf.mxu0
        %v5100 = vadd.f32 0.0, %v5099
        %5101 = vmatmul.f32.gmra.mxu0 %v1047
        %v5102 = vpop.f32.mrf.mxu0
        %v5103 = vadd.f32 0.0, %v5102
        %5104 = vmatmul.f32.gmra.mxu0 %v1049
        %v5105 = vpop.f32.mrf.mxu0
        %v5106 = vadd.f32 0.0, %v5105
        %5107 = vmatmul.f32.gmra.mxu0 %v1051
        %v5108 = vpop.f32.mrf.mxu0
        %v5109 = vadd.f32 0.0, %v5108
        %5110 = vmatmul.f32.gmra.mxu0 %v1053
        %v5111 = vpop.f32.mrf.mxu0
        %v5112 = vadd.f32 0.0, %v5111
        %5113 = vmatmul.f32.gmra.mxu0 %v3458
        %v5114 = vpop.f32.mrf.mxu0
        %v5115 = vadd.f32 0.0, %v5114
        %5116 = vmatmul.f32.gmra.mxu0 %v3460
        %v5117 = vpop.f32.mrf.mxu0
        %v5118 = vadd.f32 0.0, %v5117
        %5119 = vmatmul.f32.gmra.mxu0 %v5009
        %v5120 = vpop.f32.mrf.mxu0
        %v5121 = vadd.f32 0.0, %v5120
        %5122 = vmatmul.f32.gmra.mxu0 %v5011
        %v5123 = vpop.f32.mrf.mxu0
        %v5124 = vadd.f32 0.0, %v5123
        %5125 = vdwg.mxu0
        %v5126 = vadd.f32 %v4969, %v5031
        %v5127 = vadd.f32 %v4970, %v5034
        %v5128 = vadd.f32 %v4971, %v5037
        %v5129 = vadd.f32 %v4972, %v5040
        %v5130 = vadd.f32 %v4973, %v5043
        %v5131 = vadd.f32 %v4974, %v5046
        %v5132 = vadd.f32 %v4975, %v5049
        %v5133 = vadd.f32 %v4976, %v5052
        %v5134 = vadd.f32 %v4977, %v5055
        %v5135 = vadd.f32 %v4978, %v5058
        %v5136 = vadd.f32 %v4979, %v5061
        %v5137 = vadd.f32 %v4980, %v5064
        %v5138 = vadd.f32 %v4981, %v5067
        %v5139 = vadd.f32 %v4982, %v5070
        %v5140 = vadd.f32 %v4983, %v5073
        %v5141 = vadd.f32 %v4984, %v5076
        %v5142 = vadd.f32 %v4985, %v5079
        %v5143 = vadd.f32 %v4986, %v5082
        %v5144 = vadd.f32 %v4987, %v5085
        %v5145 = vadd.f32 %v4988, %v5088
        %v5146 = vadd.f32 %v4989, %v5091
        %v5147 = vadd.f32 %v4990, %v5094
        %v5148 = vadd.f32 %v4991, %v5097
        %v5149 = vadd.f32 %v4992, %v5100
        %v5150 = vadd.f32 %v4993, %v5103
        %v5151 = vadd.f32 %v4994, %v5106
        %v5152 = vadd.f32 %v4995, %v5109
        %v5153 = vadd.f32 %v4996, %v5112
        %v5154 = vadd.f32 %v4997, %v5115
        %v5155 = vadd.f32 %v4998, %v5118
        %v5156 = vadd.f32 %v4999, %v5121
        %v5157 = vadd.f32 %v5000, %v5124
        %s5158 = scalar_lea.vmem %s1, 184
        %v5159 = vld [vmem:[%s5158] sm:$0xff]
        %5160 = vrot.lane.b32.xlu0 %v5004, 120
        %v5161 = vpop.permute.xlu0 %5160
        %5162 = vrot.lane.b32.xlu0 %v5006, 120
        %v5163 = vpop.permute.xlu0 %5162
        %v5164 = vsel %vm537, %v5161, 0
        %v5166 = vsel %vm537, %v5163, 0
        %5168 = vmatpush.msra.mxu0 0.0
        %5169 = vmatpush.msra.mxu0 0.0
        %5170 = vmatpush.msra.mxu0 0.0
        %5171 = vmatpush.msra.mxu0 0.0
        %5172 = vmatpush.msra.mxu0 0.0
        %5173 = vmatpush.msra.mxu0 0.0
        %5174 = vmatpush.msra.mxu0 0.0
        %5175 = vmatpush.msra.mxu0 0.0
        %5176 = vmatpush.msra.mxu0 0.0
        %5177 = vmatpush.msra.mxu0 0.0
        %5178 = vmatpush.msra.mxu0 0.0
        %5179 = vmatpush.msra.mxu0 0.0
        %5180 = vmatpush.msra.mxu0 0.0
        %5181 = vmatpush.msra.mxu0 0.0
        %5182 = vmatpush.msra.mxu0 0.0
        %5183 = vmatpush.msra.mxu0 %v5159
        %5184 = vmatmul.f32.gmra.mxu0 %v1274
        %v5185 = vpop.f32.mrf.mxu0
        %v5186 = vadd.f32 0.0, %v5185
        %5187 = vmatmul.f32.gmra.mxu0 %v1276
        %v5188 = vpop.f32.mrf.mxu0
        %v5189 = vadd.f32 0.0, %v5188
        %5190 = vmatmul.f32.gmra.mxu0 %v1278
        %v5191 = vpop.f32.mrf.mxu0
        %v5192 = vadd.f32 0.0, %v5191
        %5193 = vmatmul.f32.gmra.mxu0 %v1280
        %v5194 = vpop.f32.mrf.mxu0
        %v5195 = vadd.f32 0.0, %v5194
        %5196 = vmatmul.f32.gmra.mxu0 %v1282
        %v5197 = vpop.f32.mrf.mxu0
        %v5198 = vadd.f32 0.0, %v5197
        %5199 = vmatmul.f32.gmra.mxu0 %v1284
        %v5200 = vpop.f32.mrf.mxu0
        %v5201 = vadd.f32 0.0, %v5200
        %5202 = vmatmul.f32.gmra.mxu0 %v1286
        %v5203 = vpop.f32.mrf.mxu0
        %v5204 = vadd.f32 0.0, %v5203
        %5205 = vmatmul.f32.gmra.mxu0 %v1288
        %v5206 = vpop.f32.mrf.mxu0
        %v5207 = vadd.f32 0.0, %v5206
        %5208 = vmatmul.f32.gmra.mxu0 %v1290
        %v5209 = vpop.f32.mrf.mxu0
        %v5210 = vadd.f32 0.0, %v5209
        %5211 = vmatmul.f32.gmra.mxu0 %v1292
        %v5212 = vpop.f32.mrf.mxu0
        %v5213 = vadd.f32 0.0, %v5212
        %5214 = vmatmul.f32.gmra.mxu0 %v1294
        %v5215 = vpop.f32.mrf.mxu0
        %v5216 = vadd.f32 0.0, %v5215
        %5217 = vmatmul.f32.gmra.mxu0 %v1296
        %v5218 = vpop.f32.mrf.mxu0
        %v5219 = vadd.f32 0.0, %v5218
        %5220 = vmatmul.f32.gmra.mxu0 %v1298
        %v5221 = vpop.f32.mrf.mxu0
        %v5222 = vadd.f32 0.0, %v5221
        %5223 = vmatmul.f32.gmra.mxu0 %v1300
        %v5224 = vpop.f32.mrf.mxu0
        %v5225 = vadd.f32 0.0, %v5224
        %5226 = vmatmul.f32.gmra.mxu0 %v1302
        %v5227 = vpop.f32.mrf.mxu0
        %v5228 = vadd.f32 0.0, %v5227
        %5229 = vmatmul.f32.gmra.mxu0 %v1304
        %v5230 = vpop.f32.mrf.mxu0
        %v5231 = vadd.f32 0.0, %v5230
        %5232 = vmatmul.f32.gmra.mxu0 %v1306
        %v5233 = vpop.f32.mrf.mxu0
        %v5234 = vadd.f32 0.0, %v5233
        %5235 = vmatmul.f32.gmra.mxu0 %v1308
        %v5236 = vpop.f32.mrf.mxu0
        %v5237 = vadd.f32 0.0, %v5236
        %5238 = vmatmul.f32.gmra.mxu0 %v1310
        %v5239 = vpop.f32.mrf.mxu0
        %v5240 = vadd.f32 0.0, %v5239
        %5241 = vmatmul.f32.gmra.mxu0 %v1312
        %v5242 = vpop.f32.mrf.mxu0
        %v5243 = vadd.f32 0.0, %v5242
        %5244 = vmatmul.f32.gmra.mxu0 %v1314
        %v5245 = vpop.f32.mrf.mxu0
        %v5246 = vadd.f32 0.0, %v5245
        %5247 = vmatmul.f32.gmra.mxu0 %v1316
        %v5248 = vpop.f32.mrf.mxu0
        %v5249 = vadd.f32 0.0, %v5248
        %5250 = vmatmul.f32.gmra.mxu0 %v1318
        %v5251 = vpop.f32.mrf.mxu0
        %v5252 = vadd.f32 0.0, %v5251
        %5253 = vmatmul.f32.gmra.mxu0 %v1320
        %v5254 = vpop.f32.mrf.mxu0
        %v5255 = vadd.f32 0.0, %v5254
        %5256 = vmatmul.f32.gmra.mxu0 %v1322
        %v5257 = vpop.f32.mrf.mxu0
        %v5258 = vadd.f32 0.0, %v5257
        %5259 = vmatmul.f32.gmra.mxu0 %v1324
        %v5260 = vpop.f32.mrf.mxu0
        %v5261 = vadd.f32 0.0, %v5260
        %5262 = vmatmul.f32.gmra.mxu0 %v1326
        %v5263 = vpop.f32.mrf.mxu0
        %v5264 = vadd.f32 0.0, %v5263
        %5265 = vmatmul.f32.gmra.mxu0 %v1328
        %v5266 = vpop.f32.mrf.mxu0
        %v5267 = vadd.f32 0.0, %v5266
        %5268 = vmatmul.f32.gmra.mxu0 %v3613
        %v5269 = vpop.f32.mrf.mxu0
        %v5270 = vadd.f32 0.0, %v5269
        %5271 = vmatmul.f32.gmra.mxu0 %v3615
        %v5272 = vpop.f32.mrf.mxu0
        %v5273 = vadd.f32 0.0, %v5272
        %5274 = vmatmul.f32.gmra.mxu0 %v5164
        %v5275 = vpop.f32.mrf.mxu0
        %v5276 = vadd.f32 0.0, %v5275
        %5277 = vmatmul.f32.gmra.mxu0 %v5166
        %v5278 = vpop.f32.mrf.mxu0
        %v5279 = vadd.f32 0.0, %v5278
        %5280 = vdwg.mxu0
        %v5281 = vadd.f32 %v5126, %v5186
        %v5282 = vadd.f32 %v5127, %v5189
        %v5283 = vadd.f32 %v5128, %v5192
        %v5284 = vadd.f32 %v5129, %v5195
        %v5285 = vadd.f32 %v5130, %v5198
        %v5286 = vadd.f32 %v5131, %v5201
        %v5287 = vadd.f32 %v5132, %v5204
        %v5288 = vadd.f32 %v5133, %v5207
        %v5289 = vadd.f32 %v5134, %v5210
        %v5290 = vadd.f32 %v5135, %v5213
        %v5291 = vadd.f32 %v5136, %v5216
        %v5292 = vadd.f32 %v5137, %v5219
        %v5293 = vadd.f32 %v5138, %v5222
        %v5294 = vadd.f32 %v5139, %v5225
        %v5295 = vadd.f32 %v5140, %v5228
        %v5296 = vadd.f32 %v5141, %v5231
        %v5297 = vadd.f32 %v5142, %v5234
        %v5298 = vadd.f32 %v5143, %v5237
        %v5299 = vadd.f32 %v5144, %v5240
        %v5300 = vadd.f32 %v5145, %v5243
        %v5301 = vadd.f32 %v5146, %v5246
        %v5302 = vadd.f32 %v5147, %v5249
        %v5303 = vadd.f32 %v5148, %v5252
        %v5304 = vadd.f32 %v5149, %v5255
        %v5305 = vadd.f32 %v5150, %v5258
        %v5306 = vadd.f32 %v5151, %v5261
        %v5307 = vadd.f32 %v5152, %v5264
        %v5308 = vadd.f32 %v5153, %v5267
        %v5309 = vadd.f32 %v5154, %v5270
        %v5310 = vadd.f32 %v5155, %v5273
        %v5311 = vadd.f32 %v5156, %v5276
        %v5312 = vadd.f32 %v5157, %v5279
        %v5313 = vrot.slane %v435, 2
        %v5314 = vrot.slane %v436, 2
        %v5315 = vsel %vm1475, %v5313, %v5314
        %v5316 = vrot.slane %v437, 2
        %v5317 = vsel %vm1475, %v5314, %v5316
        %s5318 = scalar_lea.vmem %s1, 192
        %v5319 = vld [vmem:[%s5318] sm:$0xff]
        %v5320 = vsel %vm537, %v5315, 0
        %v5322 = vsel %vm537, %v5317, 0
        %5324 = vmatpush.msra.mxu0 0.0
        %5325 = vmatpush.msra.mxu0 0.0
        %5326 = vmatpush.msra.mxu0 0.0
        %5327 = vmatpush.msra.mxu0 0.0
        %5328 = vmatpush.msra.mxu0 0.0
        %5329 = vmatpush.msra.mxu0 0.0
        %5330 = vmatpush.msra.mxu0 0.0
        %5331 = vmatpush.msra.mxu0 0.0
        %5332 = vmatpush.msra.mxu0 0.0
        %5333 = vmatpush.msra.mxu0 0.0
        %5334 = vmatpush.msra.mxu0 0.0
        %5335 = vmatpush.msra.mxu0 0.0
        %5336 = vmatpush.msra.mxu0 0.0
        %5337 = vmatpush.msra.mxu0 0.0
        %5338 = vmatpush.msra.mxu0 0.0
        %5339 = vmatpush.msra.mxu0 %v5319
        %5340 = vmatmul.f32.gmra.mxu0 %v1566
        %v5341 = vpop.f32.mrf.mxu0
        %v5342 = vadd.f32 0.0, %v5341
        %5343 = vmatmul.f32.gmra.mxu0 %v1568
        %v5344 = vpop.f32.mrf.mxu0
        %v5345 = vadd.f32 0.0, %v5344
        %5346 = vmatmul.f32.gmra.mxu0 %v1570
        %v5347 = vpop.f32.mrf.mxu0
        %v5348 = vadd.f32 0.0, %v5347
        %5349 = vmatmul.f32.gmra.mxu0 %v1572
        %v5350 = vpop.f32.mrf.mxu0
        %v5351 = vadd.f32 0.0, %v5350
        %5352 = vmatmul.f32.gmra.mxu0 %v1574
        %v5353 = vpop.f32.mrf.mxu0
        %v5354 = vadd.f32 0.0, %v5353
        %5355 = vmatmul.f32.gmra.mxu0 %v1576
        %v5356 = vpop.f32.mrf.mxu0
        %v5357 = vadd.f32 0.0, %v5356
        %5358 = vmatmul.f32.gmra.mxu0 %v1578
        %v5359 = vpop.f32.mrf.mxu0
        %v5360 = vadd.f32 0.0, %v5359
        %5361 = vmatmul.f32.gmra.mxu0 %v1580
        %v5362 = vpop.f32.mrf.mxu0
        %v5363 = vadd.f32 0.0, %v5362
        %5364 = vmatmul.f32.gmra.mxu0 %v1582
        %v5365 = vpop.f32.mrf.mxu0
        %v5366 = vadd.f32 0.0, %v5365
        %5367 = vmatmul.f32.gmra.mxu0 %v1584
        %v5368 = vpop.f32.mrf.mxu0
        %v5369 = vadd.f32 0.0, %v5368
        %5370 = vmatmul.f32.gmra.mxu0 %v1586
        %v5371 = vpop.f32.mrf.mxu0
        %v5372 = vadd.f32 0.0, %v5371
        %5373 = vmatmul.f32.gmra.mxu0 %v1588
        %v5374 = vpop.f32.mrf.mxu0
        %v5375 = vadd.f32 0.0, %v5374
        %5376 = vmatmul.f32.gmra.mxu0 %v1590
        %v5377 = vpop.f32.mrf.mxu0
        %v5378 = vadd.f32 0.0, %v5377
        %5379 = vmatmul.f32.gmra.mxu0 %v1592
        %v5380 = vpop.f32.mrf.mxu0
        %v5381 = vadd.f32 0.0, %v5380
        %5382 = vmatmul.f32.gmra.mxu0 %v1594
        %v5383 = vpop.f32.mrf.mxu0
        %v5384 = vadd.f32 0.0, %v5383
        %5385 = vmatmul.f32.gmra.mxu0 %v1596
        %v5386 = vpop.f32.mrf.mxu0
        %v5387 = vadd.f32 0.0, %v5386
        %5388 = vmatmul.f32.gmra.mxu0 %v1598
        %v5389 = vpop.f32.mrf.mxu0
        %v5390 = vadd.f32 0.0, %v5389
        %5391 = vmatmul.f32.gmra.mxu0 %v1600
        %v5392 = vpop.f32.mrf.mxu0
        %v5393 = vadd.f32 0.0, %v5392
        %5394 = vmatmul.f32.gmra.mxu0 %v1602
        %v5395 = vpop.f32.mrf.mxu0
        %v5396 = vadd.f32 0.0, %v5395
        %5397 = vmatmul.f32.gmra.mxu0 %v1604
        %v5398 = vpop.f32.mrf.mxu0
        %v5399 = vadd.f32 0.0, %v5398
        %5400 = vmatmul.f32.gmra.mxu0 %v1606
        %v5401 = vpop.f32.mrf.mxu0
        %v5402 = vadd.f32 0.0, %v5401
        %5403 = vmatmul.f32.gmra.mxu0 %v1608
        %v5404 = vpop.f32.mrf.mxu0
        %v5405 = vadd.f32 0.0, %v5404
        %5406 = vmatmul.f32.gmra.mxu0 %v1610
        %v5407 = vpop.f32.mrf.mxu0
        %v5408 = vadd.f32 0.0, %v5407
        %5409 = vmatmul.f32.gmra.mxu0 %v1612
        %v5410 = vpop.f32.mrf.mxu0
        %v5411 = vadd.f32 0.0, %v5410
        %5412 = vmatmul.f32.gmra.mxu0 %v1614
        %v5413 = vpop.f32.mrf.mxu0
        %v5414 = vadd.f32 0.0, %v5413
        %5415 = vmatmul.f32.gmra.mxu0 %v1616
        %v5416 = vpop.f32.mrf.mxu0
        %v5417 = vadd.f32 0.0, %v5416
        %5418 = vmatmul.f32.gmra.mxu0 %v1618
        %v5419 = vpop.f32.mrf.mxu0
        %v5420 = vadd.f32 0.0, %v5419
        %5421 = vmatmul.f32.gmra.mxu0 %v1620
        %v5422 = vpop.f32.mrf.mxu0
        %v5423 = vadd.f32 0.0, %v5422
        %5424 = vmatmul.f32.gmra.mxu0 %v3769
        %v5425 = vpop.f32.mrf.mxu0
        %v5426 = vadd.f32 0.0, %v5425
        %5427 = vmatmul.f32.gmra.mxu0 %v3771
        %v5428 = vpop.f32.mrf.mxu0
        %v5429 = vadd.f32 0.0, %v5428
        %5430 = vmatmul.f32.gmra.mxu0 %v5320
        %v5431 = vpop.f32.mrf.mxu0
        %v5432 = vadd.f32 0.0, %v5431
        %5433 = vmatmul.f32.gmra.mxu0 %v5322
        %v5434 = vpop.f32.mrf.mxu0
        %v5435 = vadd.f32 0.0, %v5434
        %5436 = vdwg.mxu0
        %v5437 = vadd.f32 %v5281, %v5342
        %v5438 = vadd.f32 %v5282, %v5345
        %v5439 = vadd.f32 %v5283, %v5348
        %v5440 = vadd.f32 %v5284, %v5351
        %v5441 = vadd.f32 %v5285, %v5354
        %v5442 = vadd.f32 %v5286, %v5357
        %v5443 = vadd.f32 %v5287, %v5360
        %v5444 = vadd.f32 %v5288, %v5363
        %v5445 = vadd.f32 %v5289, %v5366
        %v5446 = vadd.f32 %v5290, %v5369
        %v5447 = vadd.f32 %v5291, %v5372
        %v5448 = vadd.f32 %v5292, %v5375
        %v5449 = vadd.f32 %v5293, %v5378
        %v5450 = vadd.f32 %v5294, %v5381
        %v5451 = vadd.f32 %v5295, %v5384
        %v5452 = vadd.f32 %v5296, %v5387
        %v5453 = vadd.f32 %v5297, %v5390
        %v5454 = vadd.f32 %v5298, %v5393
        %v5455 = vadd.f32 %v5299, %v5396
        %v5456 = vadd.f32 %v5300, %v5399
        %v5457 = vadd.f32 %v5301, %v5402
        %v5458 = vadd.f32 %v5302, %v5405
        %v5459 = vadd.f32 %v5303, %v5408
        %v5460 = vadd.f32 %v5304, %v5411
        %v5461 = vadd.f32 %v5305, %v5414
        %v5462 = vadd.f32 %v5306, %v5417
        %v5463 = vadd.f32 %v5307, %v5420
        %v5464 = vadd.f32 %v5308, %v5423
        %v5465 = vadd.f32 %v5309, %v5426
        %v5466 = vadd.f32 %v5310, %v5429
        %v5467 = vadd.f32 %v5311, %v5432
        %v5468 = vadd.f32 %v5312, %v5435
        %v5469 = vld [vmem:[%s2] sm:$0x1]
        %v5471 = vperm.slane %v5469, 0
        %v5473 = vadd.f32 %v5437, %v5471
        %v5474 = vadd.f32 %v5438, %v5471
        %v5475 = vadd.f32 %v5439, %v5471
        %v5476 = vadd.f32 %v5440, %v5471
        %v5477 = vadd.f32 %v5441, %v5471
        %v5478 = vadd.f32 %v5442, %v5471
        %v5479 = vadd.f32 %v5443, %v5471
        %v5480 = vadd.f32 %v5444, %v5471
        %v5481 = vadd.f32 %v5445, %v5471
        %v5482 = vadd.f32 %v5446, %v5471
        %v5483 = vadd.f32 %v5447, %v5471
        %v5484 = vadd.f32 %v5448, %v5471
        %v5485 = vadd.f32 %v5449, %v5471
        %v5486 = vadd.f32 %v5450, %v5471
        %v5487 = vadd.f32 %v5451, %v5471
        %v5488 = vadd.f32 %v5452, %v5471
        %v5489 = vadd.f32 %v5453, %v5471
        %v5490 = vadd.f32 %v5454, %v5471
        %v5491 = vadd.f32 %v5455, %v5471
        %v5492 = vadd.f32 %v5456, %v5471
        %v5493 = vadd.f32 %v5457, %v5471
        %v5494 = vadd.f32 %v5458, %v5471
        %v5495 = vadd.f32 %v5459, %v5471
        %v5496 = vadd.f32 %v5460, %v5471
        %v5497 = vadd.f32 %v5461, %v5471
        %v5498 = vadd.f32 %v5462, %v5471
        %v5499 = vadd.f32 %v5463, %v5471
        %v5500 = vadd.f32 %v5464, %v5471
        %v5501 = vadd.f32 %v5465, %v5471
        %v5502 = vadd.f32 %v5466, %v5471
        %v5503 = vadd.f32 %v5467, %v5471
        %v5504 = vadd.f32 %v5468, %v5471
        %v5505 = vmax.f32 %v5473, 0.0
        %v5506 = vmax.f32 %v5474, 0.0
        %v5507 = vmax.f32 %v5475, 0.0
        %v5508 = vmax.f32 %v5476, 0.0
        %v5509 = vmax.f32 %v5477, 0.0
        %v5510 = vmax.f32 %v5478, 0.0
        %v5511 = vmax.f32 %v5479, 0.0
        %v5512 = vmax.f32 %v5480, 0.0
        %v5513 = vmax.f32 %v5481, 0.0
        %v5514 = vmax.f32 %v5482, 0.0
        %v5515 = vmax.f32 %v5483, 0.0
        %v5516 = vmax.f32 %v5484, 0.0
        %v5517 = vmax.f32 %v5485, 0.0
        %v5518 = vmax.f32 %v5486, 0.0
        %v5519 = vmax.f32 %v5487, 0.0
        %v5520 = vmax.f32 %v5488, 0.0
        %v5521 = vmax.f32 %v5489, 0.0
        %v5522 = vmax.f32 %v5490, 0.0
        %v5523 = vmax.f32 %v5491, 0.0
        %v5524 = vmax.f32 %v5492, 0.0
        %v5525 = vmax.f32 %v5493, 0.0
        %v5526 = vmax.f32 %v5494, 0.0
        %v5527 = vmax.f32 %v5495, 0.0
        %v5528 = vmax.f32 %v5496, 0.0
        %v5529 = vmax.f32 %v5497, 0.0
        %v5530 = vmax.f32 %v5498, 0.0
        %v5531 = vmax.f32 %v5499, 0.0
        %v5532 = vmax.f32 %v5500, 0.0
        %v5533 = vmax.f32 %v5501, 0.0
        %v5534 = vmax.f32 %v5502, 0.0
        %v5535 = vmax.f32 %v5503, 0.0
        %v5536 = vmax.f32 %v5504, 0.0
        %v5569 = vrot.slane %v5505, 2
        %v5570 = vrot.slane %v5505, 4
        %v5571 = vrot.slane %v5505, 6
        %v5572 = vrot.slane %v5506, 2
        %v5573 = vrot.slane %v5506, 4
        %v5574 = vrot.slane %v5506, 6
        %v5575 = vrot.slane %v5507, 2
        %v5576 = vrot.slane %v5507, 4
        %v5577 = vrot.slane %v5507, 6
        %v5578 = vrot.slane %v5508, 2
        %v5579 = vrot.slane %v5508, 4
        %v5580 = vrot.slane %v5508, 6
        %v5581 = vrot.slane %v5509, 2
        %v5582 = vrot.slane %v5509, 4
        %v5583 = vrot.slane %v5509, 6
        %v5584 = vrot.slane %v5510, 2
        %v5585 = vrot.slane %v5510, 4
        %v5586 = vrot.slane %v5510, 6
        %v5587 = vrot.slane %v5511, 2
        %v5588 = vrot.slane %v5511, 4
        %v5589 = vrot.slane %v5511, 6
        %v5590 = vrot.slane %v5512, 2
        %v5591 = vrot.slane %v5512, 4
        %v5592 = vrot.slane %v5512, 6
        %v5593 = vrot.slane %v5513, 2
        %v5594 = vrot.slane %v5513, 4
        %v5595 = vrot.slane %v5513, 6
        %v5596 = vrot.slane %v5514, 2
        %v5597 = vrot.slane %v5514, 4
        %v5598 = vrot.slane %v5514, 6
        %v5599 = vrot.slane %v5515, 2
        %v5600 = vrot.slane %v5515, 4
        %v5601 = vrot.slane %v5515, 6
        %v5602 = vrot.slane %v5516, 2
        %v5603 = vrot.slane %v5516, 4
        %v5604 = vrot.slane %v5516, 6
        %v5605 = vrot.slane %v5517, 2
        %v5606 = vrot.slane %v5517, 4
        %v5607 = vrot.slane %v5517, 6
        %v5608 = vrot.slane %v5518, 2
        %v5609 = vrot.slane %v5518, 4
        %v5610 = vrot.slane %v5518, 6
        %v5611 = vrot.slane %v5519, 2
        %v5612 = vrot.slane %v5519, 4
        %v5613 = vrot.slane %v5519, 6
        %v5614 = vrot.slane %v5520, 2
        %v5615 = vrot.slane %v5520, 4
        %v5616 = vrot.slane %v5520, 6
        %v5617 = vrot.slane %v5521, 2
        %v5618 = vrot.slane %v5521, 4
        %v5619 = vrot.slane %v5521, 6
        %v5620 = vrot.slane %v5522, 2
        %v5621 = vrot.slane %v5522, 4
        %v5622 = vrot.slane %v5522, 6
        %v5623 = vrot.slane %v5523, 2
        %v5624 = vrot.slane %v5523, 4
        %v5625 = vrot.slane %v5523, 6
        %v5626 = vrot.slane %v5524, 2
        %v5627 = vrot.slane %v5524, 4
        %v5628 = vrot.slane %v5524, 6
        %v5629 = vrot.slane %v5525, 2
        %v5630 = vrot.slane %v5525, 4
        %v5631 = vrot.slane %v5525, 6
        %v5632 = vrot.slane %v5526, 2
        %v5633 = vrot.slane %v5526, 4
        %v5634 = vrot.slane %v5526, 6
        %v5635 = vrot.slane %v5527, 2
        %v5636 = vrot.slane %v5527, 4
        %v5637 = vrot.slane %v5527, 6
        %v5638 = vrot.slane %v5528, 2
        %v5639 = vrot.slane %v5528, 4
        %v5640 = vrot.slane %v5528, 6
        %v5641 = vrot.slane %v5529, 2
        %v5642 = vrot.slane %v5529, 4
        %v5643 = vrot.slane %v5529, 6
        %v5644 = vrot.slane %v5530, 2
        %v5645 = vrot.slane %v5530, 4
        %v5646 = vrot.slane %v5530, 6
        %v5647 = vrot.slane %v5531, 2
        %v5648 = vrot.slane %v5531, 4
        %v5649 = vrot.slane %v5531, 6
        %v5650 = vrot.slane %v5532, 2
        %v5651 = vrot.slane %v5532, 4
        %v5652 = vrot.slane %v5532, 6
        %v5653 = vrot.slane %v5533, 2
        %v5654 = vrot.slane %v5533, 4
        %v5655 = vrot.slane %v5533, 6
        %v5656 = vrot.slane %v5534, 2
        %v5657 = vrot.slane %v5534, 4
        %v5658 = vrot.slane %v5534, 6
        %v5659 = vrot.slane %v5535, 2
        %v5660 = vrot.slane %v5535, 4
        %v5661 = vrot.slane %v5535, 6
        %v5662 = vrot.slane %v5536, 2
        %v5663 = vrot.slane %v5536, 4
        %v5664 = vrot.slane %v5536, 6
        %vm5761 = vcmask 58368
        %v5762 = vsel %vm5761, %v5505, -inf
        %v5763 = vrot.slane %v5762, 4
        %v5764 = vmax.f32 %v5762, %v5763
        %v5765 = vrot.slane %v5764, 2
        %v5766 = vmax.f32 %v5764, %v5765
        %v5767 = vrot.slane %v5766, 1
        %v5768 = vmax.f32 %v5766, %v5767
        %v5769 = vsel %vm5761, %v5569, -inf
        %v5770 = vrot.slane %v5769, 4
        %v5771 = vmax.f32 %v5769, %v5770
        %v5772 = vrot.slane %v5771, 2
        %v5773 = vmax.f32 %v5771, %v5772
        %v5774 = vrot.slane %v5773, 1
        %v5775 = vmax.f32 %v5773, %v5774
        %v5776 = vsel %vm5761, %v5570, -inf
        %v5777 = vrot.slane %v5776, 4
        %v5778 = vmax.f32 %v5776, %v5777
        %v5779 = vrot.slane %v5778, 2
        %v5780 = vmax.f32 %v5778, %v5779
        %v5781 = vrot.slane %v5780, 1
        %v5782 = vmax.f32 %v5780, %v5781
        %v5783 = vsel %vm5761, %v5571, -inf
        %v5784 = vrot.slane %v5783, 4
        %v5785 = vmax.f32 %v5783, %v5784
        %v5786 = vrot.slane %v5785, 2
        %v5787 = vmax.f32 %v5785, %v5786
        %v5788 = vrot.slane %v5787, 1
        %v5789 = vmax.f32 %v5787, %v5788
        %v5790 = vsel %vm5761, %v5506, -inf
        %v5791 = vrot.slane %v5790, 4
        %v5792 = vmax.f32 %v5790, %v5791
        %v5793 = vrot.slane %v5792, 2
        %v5794 = vmax.f32 %v5792, %v5793
        %v5795 = vrot.slane %v5794, 1
        %v5796 = vmax.f32 %v5794, %v5795
        %v5797 = vsel %vm5761, %v5572, -inf
        %v5798 = vrot.slane %v5797, 4
        %v5799 = vmax.f32 %v5797, %v5798
        %v5800 = vrot.slane %v5799, 2
        %v5801 = vmax.f32 %v5799, %v5800
        %v5802 = vrot.slane %v5801, 1
        %v5803 = vmax.f32 %v5801, %v5802
        %v5804 = vsel %vm5761, %v5573, -inf
        %v5805 = vrot.slane %v5804, 4
        %v5806 = vmax.f32 %v5804, %v5805
        %v5807 = vrot.slane %v5806, 2
        %v5808 = vmax.f32 %v5806, %v5807
        %v5809 = vrot.slane %v5808, 1
        %v5810 = vmax.f32 %v5808, %v5809
        %v5811 = vsel %vm5761, %v5574, -inf
        %v5812 = vrot.slane %v5811, 4
        %v5813 = vmax.f32 %v5811, %v5812
        %v5814 = vrot.slane %v5813, 2
        %v5815 = vmax.f32 %v5813, %v5814
        %v5816 = vrot.slane %v5815, 1
        %v5817 = vmax.f32 %v5815, %v5816
        %v5818 = vsel %vm5761, %v5507, -inf
        %v5819 = vrot.slane %v5818, 4
        %v5820 = vmax.f32 %v5818, %v5819
        %v5821 = vrot.slane %v5820, 2
        %v5822 = vmax.f32 %v5820, %v5821
        %v5823 = vrot.slane %v5822, 1
        %v5824 = vmax.f32 %v5822, %v5823
        %v5825 = vsel %vm5761, %v5575, -inf
        %v5826 = vrot.slane %v5825, 4
        %v5827 = vmax.f32 %v5825, %v5826
        %v5828 = vrot.slane %v5827, 2
        %v5829 = vmax.f32 %v5827, %v5828
        %v5830 = vrot.slane %v5829, 1
        %v5831 = vmax.f32 %v5829, %v5830
        %v5832 = vsel %vm5761, %v5576, -inf
        %v5833 = vrot.slane %v5832, 4
        %v5834 = vmax.f32 %v5832, %v5833
        %v5835 = vrot.slane %v5834, 2
        %v5836 = vmax.f32 %v5834, %v5835
        %v5837 = vrot.slane %v5836, 1
        %v5838 = vmax.f32 %v5836, %v5837
        %v5839 = vsel %vm5761, %v5577, -inf
        %v5840 = vrot.slane %v5839, 4
        %v5841 = vmax.f32 %v5839, %v5840
        %v5842 = vrot.slane %v5841, 2
        %v5843 = vmax.f32 %v5841, %v5842
        %v5844 = vrot.slane %v5843, 1
        %v5845 = vmax.f32 %v5843, %v5844
        %v5846 = vsel %vm5761, %v5508, -inf
        %v5847 = vrot.slane %v5846, 4
        %v5848 = vmax.f32 %v5846, %v5847
        %v5849 = vrot.slane %v5848, 2
        %v5850 = vmax.f32 %v5848, %v5849
        %v5851 = vrot.slane %v5850, 1
        %v5852 = vmax.f32 %v5850, %v5851
        %v5853 = vsel %vm5761, %v5578, -inf
        %v5854 = vrot.slane %v5853, 4
        %v5855 = vmax.f32 %v5853, %v5854
        %v5856 = vrot.slane %v5855, 2
        %v5857 = vmax.f32 %v5855, %v5856
        %v5858 = vrot.slane %v5857, 1
        %v5859 = vmax.f32 %v5857, %v5858
        %v5860 = vsel %vm5761, %v5579, -inf
        %v5861 = vrot.slane %v5860, 4
        %v5862 = vmax.f32 %v5860, %v5861
        %v5863 = vrot.slane %v5862, 2
        %v5864 = vmax.f32 %v5862, %v5863
        %v5865 = vrot.slane %v5864, 1
        %v5866 = vmax.f32 %v5864, %v5865
        %v5867 = vsel %vm5761, %v5580, -inf
        %v5868 = vrot.slane %v5867, 4
        %v5869 = vmax.f32 %v5867, %v5868
        %v5870 = vrot.slane %v5869, 2
        %v5871 = vmax.f32 %v5869, %v5870
        %v5872 = vrot.slane %v5871, 1
        %v5873 = vmax.f32 %v5871, %v5872
        %v5874 = vsel %vm5761, %v5509, -inf
        %v5875 = vrot.slane %v5874, 4
        %v5876 = vmax.f32 %v5874, %v5875
        %v5877 = vrot.slane %v5876, 2
        %v5878 = vmax.f32 %v5876, %v5877
        %v5879 = vrot.slane %v5878, 1
        %v5880 = vmax.f32 %v5878, %v5879
        %v5881 = vsel %vm5761, %v5581, -inf
        %v5882 = vrot.slane %v5881, 4
        %v5883 = vmax.f32 %v5881, %v5882
        %v5884 = vrot.slane %v5883, 2
        %v5885 = vmax.f32 %v5883, %v5884
        %v5886 = vrot.slane %v5885, 1
        %v5887 = vmax.f32 %v5885, %v5886
        %v5888 = vsel %vm5761, %v5582, -inf
        %v5889 = vrot.slane %v5888, 4
        %v5890 = vmax.f32 %v5888, %v5889
        %v5891 = vrot.slane %v5890, 2
        %v5892 = vmax.f32 %v5890, %v5891
        %v5893 = vrot.slane %v5892, 1
        %v5894 = vmax.f32 %v5892, %v5893
        %v5895 = vsel %vm5761, %v5583, -inf
        %v5896 = vrot.slane %v5895, 4
        %v5897 = vmax.f32 %v5895, %v5896
        %v5898 = vrot.slane %v5897, 2
        %v5899 = vmax.f32 %v5897, %v5898
        %v5900 = vrot.slane %v5899, 1
        %v5901 = vmax.f32 %v5899, %v5900
        %v5902 = vsel %vm5761, %v5510, -inf
        %v5903 = vrot.slane %v5902, 4
        %v5904 = vmax.f32 %v5902, %v5903
        %v5905 = vrot.slane %v5904, 2
        %v5906 = vmax.f32 %v5904, %v5905
        %v5907 = vrot.slane %v5906, 1
        %v5908 = vmax.f32 %v5906, %v5907
        %v5909 = vsel %vm5761, %v5584, -inf
        %v5910 = vrot.slane %v5909, 4
        %v5911 = vmax.f32 %v5909, %v5910
        %v5912 = vrot.slane %v5911, 2
        %v5913 = vmax.f32 %v5911, %v5912
        %v5914 = vrot.slane %v5913, 1
        %v5915 = vmax.f32 %v5913, %v5914
        %v5916 = vsel %vm5761, %v5585, -inf
        %v5917 = vrot.slane %v5916, 4
        %v5918 = vmax.f32 %v5916, %v5917
        %v5919 = vrot.slane %v5918, 2
        %v5920 = vmax.f32 %v5918, %v5919
        %v5921 = vrot.slane %v5920, 1
        %v5922 = vmax.f32 %v5920, %v5921
        %v5923 = vsel %vm5761, %v5586, -inf
        %v5924 = vrot.slane %v5923, 4
        %v5925 = vmax.f32 %v5923, %v5924
        %v5926 = vrot.slane %v5925, 2
        %v5927 = vmax.f32 %v5925, %v5926
        %v5928 = vrot.slane %v5927, 1
        %v5929 = vmax.f32 %v5927, %v5928
        %v5930 = vsel %vm5761, %v5511, -inf
        %v5931 = vrot.slane %v5930, 4
        %v5932 = vmax.f32 %v5930, %v5931
        %v5933 = vrot.slane %v5932, 2
        %v5934 = vmax.f32 %v5932, %v5933
        %v5935 = vrot.slane %v5934, 1
        %v5936 = vmax.f32 %v5934, %v5935
        %v5937 = vsel %vm5761, %v5587, -inf
        %v5938 = vrot.slane %v5937, 4
        %v5939 = vmax.f32 %v5937, %v5938
        %v5940 = vrot.slane %v5939, 2
        %v5941 = vmax.f32 %v5939, %v5940
        %v5942 = vrot.slane %v5941, 1
        %v5943 = vmax.f32 %v5941, %v5942
        %v5944 = vsel %vm5761, %v5588, -inf
        %v5945 = vrot.slane %v5944, 4
        %v5946 = vmax.f32 %v5944, %v5945
        %v5947 = vrot.slane %v5946, 2
        %v5948 = vmax.f32 %v5946, %v5947
        %v5949 = vrot.slane %v5948, 1
        %v5950 = vmax.f32 %v5948, %v5949
        %v5951 = vsel %vm5761, %v5589, -inf
        %v5952 = vrot.slane %v5951, 4
        %v5953 = vmax.f32 %v5951, %v5952
        %v5954 = vrot.slane %v5953, 2
        %v5955 = vmax.f32 %v5953, %v5954
        %v5956 = vrot.slane %v5955, 1
        %v5957 = vmax.f32 %v5955, %v5956
        %v5958 = vsel %vm5761, %v5512, -inf
        %v5959 = vrot.slane %v5958, 4
        %v5960 = vmax.f32 %v5958, %v5959
        %v5961 = vrot.slane %v5960, 2
        %v5962 = vmax.f32 %v5960, %v5961
        %v5963 = vrot.slane %v5962, 1
        %v5964 = vmax.f32 %v5962, %v5963
        %v5965 = vsel %vm5761, %v5590, -inf
        %v5966 = vrot.slane %v5965, 4
        %v5967 = vmax.f32 %v5965, %v5966
        %v5968 = vrot.slane %v5967, 2
        %v5969 = vmax.f32 %v5967, %v5968
        %v5970 = vrot.slane %v5969, 1
        %v5971 = vmax.f32 %v5969, %v5970
        %v5972 = vsel %vm5761, %v5591, -inf
        %v5973 = vrot.slane %v5972, 4
        %v5974 = vmax.f32 %v5972, %v5973
        %v5975 = vrot.slane %v5974, 2
        %v5976 = vmax.f32 %v5974, %v5975
        %v5977 = vrot.slane %v5976, 1
        %v5978 = vmax.f32 %v5976, %v5977
        %v5979 = vsel %vm5761, %v5592, -inf
        %v5980 = vrot.slane %v5979, 4
        %v5981 = vmax.f32 %v5979, %v5980
        %v5982 = vrot.slane %v5981, 2
        %v5983 = vmax.f32 %v5981, %v5982
        %v5984 = vrot.slane %v5983, 1
        %v5985 = vmax.f32 %v5983, %v5984
        %v5986 = vsel %vm5761, %v5513, -inf
        %v5987 = vrot.slane %v5986, 4
        %v5988 = vmax.f32 %v5986, %v5987
        %v5989 = vrot.slane %v5988, 2
        %v5990 = vmax.f32 %v5988, %v5989
        %v5991 = vrot.slane %v5990, 1
        %v5992 = vmax.f32 %v5990, %v5991
        %v5993 = vsel %vm5761, %v5593, -inf
        %v5994 = vrot.slane %v5993, 4
        %v5995 = vmax.f32 %v5993, %v5994
        %v5996 = vrot.slane %v5995, 2
        %v5997 = vmax.f32 %v5995, %v5996
        %v5998 = vrot.slane %v5997, 1
        %v5999 = vmax.f32 %v5997, %v5998
        %v6000 = vsel %vm5761, %v5594, -inf
        %v6001 = vrot.slane %v6000, 4
        %v6002 = vmax.f32 %v6000, %v6001
        %v6003 = vrot.slane %v6002, 2
        %v6004 = vmax.f32 %v6002, %v6003
        %v6005 = vrot.slane %v6004, 1
        %v6006 = vmax.f32 %v6004, %v6005
        %v6007 = vsel %vm5761, %v5595, -inf
        %v6008 = vrot.slane %v6007, 4
        %v6009 = vmax.f32 %v6007, %v6008
        %v6010 = vrot.slane %v6009, 2
        %v6011 = vmax.f32 %v6009, %v6010
        %v6012 = vrot.slane %v6011, 1
        %v6013 = vmax.f32 %v6011, %v6012
        %v6014 = vsel %vm5761, %v5514, -inf
        %v6015 = vrot.slane %v6014, 4
        %v6016 = vmax.f32 %v6014, %v6015
        %v6017 = vrot.slane %v6016, 2
        %v6018 = vmax.f32 %v6016, %v6017
        %v6019 = vrot.slane %v6018, 1
        %v6020 = vmax.f32 %v6018, %v6019
        %v6021 = vsel %vm5761, %v5596, -inf
        %v6022 = vrot.slane %v6021, 4
        %v6023 = vmax.f32 %v6021, %v6022
        %v6024 = vrot.slane %v6023, 2
        %v6025 = vmax.f32 %v6023, %v6024
        %v6026 = vrot.slane %v6025, 1
        %v6027 = vmax.f32 %v6025, %v6026
        %v6028 = vsel %vm5761, %v5597, -inf
        %v6029 = vrot.slane %v6028, 4
        %v6030 = vmax.f32 %v6028, %v6029
        %v6031 = vrot.slane %v6030, 2
        %v6032 = vmax.f32 %v6030, %v6031
        %v6033 = vrot.slane %v6032, 1
        %v6034 = vmax.f32 %v6032, %v6033
        %v6035 = vsel %vm5761, %v5598, -inf
        %v6036 = vrot.slane %v6035, 4
        %v6037 = vmax.f32 %v6035, %v6036
        %v6038 = vrot.slane %v6037, 2
        %v6039 = vmax.f32 %v6037, %v6038
        %v6040 = vrot.slane %v6039, 1
        %v6041 = vmax.f32 %v6039, %v6040
        %v6042 = vsel %vm5761, %v5515, -inf
        %v6043 = vrot.slane %v6042, 4
        %v6044 = vmax.f32 %v6042, %v6043
        %v6045 = vrot.slane %v6044, 2
        %v6046 = vmax.f32 %v6044, %v6045
        %v6047 = vrot.slane %v6046, 1
        %v6048 = vmax.f32 %v6046, %v6047
        %v6049 = vsel %vm5761, %v5599, -inf
        %v6050 = vrot.slane %v6049, 4
        %v6051 = vmax.f32 %v6049, %v6050
        %v6052 = vrot.slane %v6051, 2
        %v6053 = vmax.f32 %v6051, %v6052
        %v6054 = vrot.slane %v6053, 1
        %v6055 = vmax.f32 %v6053, %v6054
        %v6056 = vsel %vm5761, %v5600, -inf
        %v6057 = vrot.slane %v6056, 4
        %v6058 = vmax.f32 %v6056, %v6057
        %v6059 = vrot.slane %v6058, 2
        %v6060 = vmax.f32 %v6058, %v6059
        %v6061 = vrot.slane %v6060, 1
        %v6062 = vmax.f32 %v6060, %v6061
        %v6063 = vsel %vm5761, %v5601, -inf
        %v6064 = vrot.slane %v6063, 4
        %v6065 = vmax.f32 %v6063, %v6064
        %v6066 = vrot.slane %v6065, 2
        %v6067 = vmax.f32 %v6065, %v6066
        %v6068 = vrot.slane %v6067, 1
        %v6069 = vmax.f32 %v6067, %v6068
        %v6070 = vsel %vm5761, %v5516, -inf
        %v6071 = vrot.slane %v6070, 4
        %v6072 = vmax.f32 %v6070, %v6071
        %v6073 = vrot.slane %v6072, 2
        %v6074 = vmax.f32 %v6072, %v6073
        %v6075 = vrot.slane %v6074, 1
        %v6076 = vmax.f32 %v6074, %v6075
        %v6077 = vsel %vm5761, %v5602, -inf
        %v6078 = vrot.slane %v6077, 4
        %v6079 = vmax.f32 %v6077, %v6078
        %v6080 = vrot.slane %v6079, 2
        %v6081 = vmax.f32 %v6079, %v6080
        %v6082 = vrot.slane %v6081, 1
        %v6083 = vmax.f32 %v6081, %v6082
        %v6084 = vsel %vm5761, %v5603, -inf
        %v6085 = vrot.slane %v6084, 4
        %v6086 = vmax.f32 %v6084, %v6085
        %v6087 = vrot.slane %v6086, 2
        %v6088 = vmax.f32 %v6086, %v6087
        %v6089 = vrot.slane %v6088, 1
        %v6090 = vmax.f32 %v6088, %v6089
        %v6091 = vsel %vm5761, %v5604, -inf
        %v6092 = vrot.slane %v6091, 4
        %v6093 = vmax.f32 %v6091, %v6092
        %v6094 = vrot.slane %v6093, 2
        %v6095 = vmax.f32 %v6093, %v6094
        %v6096 = vrot.slane %v6095, 1
        %v6097 = vmax.f32 %v6095, %v6096
        %v6098 = vsel %vm5761, %v5517, -inf
        %v6099 = vrot.slane %v6098, 4
        %v6100 = vmax.f32 %v6098, %v6099
        %v6101 = vrot.slane %v6100, 2
        %v6102 = vmax.f32 %v6100, %v6101
        %v6103 = vrot.slane %v6102, 1
        %v6104 = vmax.f32 %v6102, %v6103
        %v6105 = vsel %vm5761, %v5605, -inf
        %v6106 = vrot.slane %v6105, 4
        %v6107 = vmax.f32 %v6105, %v6106
        %v6108 = vrot.slane %v6107, 2
        %v6109 = vmax.f32 %v6107, %v6108
        %v6110 = vrot.slane %v6109, 1
        %v6111 = vmax.f32 %v6109, %v6110
        %v6112 = vsel %vm5761, %v5606, -inf
        %v6113 = vrot.slane %v6112, 4
        %v6114 = vmax.f32 %v6112, %v6113
        %v6115 = vrot.slane %v6114, 2
        %v6116 = vmax.f32 %v6114, %v6115
        %v6117 = vrot.slane %v6116, 1
        %v6118 = vmax.f32 %v6116, %v6117
        %v6119 = vsel %vm5761, %v5607, -inf
        %v6120 = vrot.slane %v6119, 4
        %v6121 = vmax.f32 %v6119, %v6120
        %v6122 = vrot.slane %v6121, 2
        %v6123 = vmax.f32 %v6121, %v6122
        %v6124 = vrot.slane %v6123, 1
        %v6125 = vmax.f32 %v6123, %v6124
        %v6126 = vsel %vm5761, %v5518, -inf
        %v6127 = vrot.slane %v6126, 4
        %v6128 = vmax.f32 %v6126, %v6127
        %v6129 = vrot.slane %v6128, 2
        %v6130 = vmax.f32 %v6128, %v6129
        %v6131 = vrot.slane %v6130, 1
        %v6132 = vmax.f32 %v6130, %v6131
        %v6133 = vsel %vm5761, %v5608, -inf
        %v6134 = vrot.slane %v6133, 4
        %v6135 = vmax.f32 %v6133, %v6134
        %v6136 = vrot.slane %v6135, 2
        %v6137 = vmax.f32 %v6135, %v6136
        %v6138 = vrot.slane %v6137, 1
        %v6139 = vmax.f32 %v6137, %v6138
        %v6140 = vsel %vm5761, %v5609, -inf
        %v6141 = vrot.slane %v6140, 4
        %v6142 = vmax.f32 %v6140, %v6141
        %v6143 = vrot.slane %v6142, 2
        %v6144 = vmax.f32 %v6142, %v6143
        %v6145 = vrot.slane %v6144, 1
        %v6146 = vmax.f32 %v6144, %v6145
        %v6147 = vsel %vm5761, %v5610, -inf
        %v6148 = vrot.slane %v6147, 4
        %v6149 = vmax.f32 %v6147, %v6148
        %v6150 = vrot.slane %v6149, 2
        %v6151 = vmax.f32 %v6149, %v6150
        %v6152 = vrot.slane %v6151, 1
        %v6153 = vmax.f32 %v6151, %v6152
        %v6154 = vsel %vm5761, %v5519, -inf
        %v6155 = vrot.slane %v6154, 4
        %v6156 = vmax.f32 %v6154, %v6155
        %v6157 = vrot.slane %v6156, 2
        %v6158 = vmax.f32 %v6156, %v6157
        %v6159 = vrot.slane %v6158, 1
        %v6160 = vmax.f32 %v6158, %v6159
        %v6161 = vsel %vm5761, %v5611, -inf
        %v6162 = vrot.slane %v6161, 4
        %v6163 = vmax.f32 %v6161, %v6162
        %v6164 = vrot.slane %v6163, 2
        %v6165 = vmax.f32 %v6163, %v6164
        %v6166 = vrot.slane %v6165, 1
        %v6167 = vmax.f32 %v6165, %v6166
        %v6168 = vsel %vm5761, %v5612, -inf
        %v6169 = vrot.slane %v6168, 4
        %v6170 = vmax.f32 %v6168, %v6169
        %v6171 = vrot.slane %v6170, 2
        %v6172 = vmax.f32 %v6170, %v6171
        %v6173 = vrot.slane %v6172, 1
        %v6174 = vmax.f32 %v6172, %v6173
        %v6175 = vsel %vm5761, %v5613, -inf
        %v6176 = vrot.slane %v6175, 4
        %v6177 = vmax.f32 %v6175, %v6176
        %v6178 = vrot.slane %v6177, 2
        %v6179 = vmax.f32 %v6177, %v6178
        %v6180 = vrot.slane %v6179, 1
        %v6181 = vmax.f32 %v6179, %v6180
        %v6182 = vsel %vm5761, %v5520, -inf
        %v6183 = vrot.slane %v6182, 4
        %v6184 = vmax.f32 %v6182, %v6183
        %v6185 = vrot.slane %v6184, 2
        %v6186 = vmax.f32 %v6184, %v6185
        %v6187 = vrot.slane %v6186, 1
        %v6188 = vmax.f32 %v6186, %v6187
        %v6189 = vsel %vm5761, %v5614, -inf
        %v6190 = vrot.slane %v6189, 4
        %v6191 = vmax.f32 %v6189, %v6190
        %v6192 = vrot.slane %v6191, 2
        %v6193 = vmax.f32 %v6191, %v6192
        %v6194 = vrot.slane %v6193, 1
        %v6195 = vmax.f32 %v6193, %v6194
        %v6196 = vsel %vm5761, %v5615, -inf
        %v6197 = vrot.slane %v6196, 4
        %v6198 = vmax.f32 %v6196, %v6197
        %v6199 = vrot.slane %v6198, 2
        %v6200 = vmax.f32 %v6198, %v6199
        %v6201 = vrot.slane %v6200, 1
        %v6202 = vmax.f32 %v6200, %v6201
        %v6203 = vsel %vm5761, %v5616, -inf
        %v6204 = vrot.slane %v6203, 4
        %v6205 = vmax.f32 %v6203, %v6204
        %v6206 = vrot.slane %v6205, 2
        %v6207 = vmax.f32 %v6205, %v6206
        %v6208 = vrot.slane %v6207, 1
        %v6209 = vmax.f32 %v6207, %v6208
        %v6210 = vsel %vm5761, %v5521, -inf
        %v6211 = vrot.slane %v6210, 4
        %v6212 = vmax.f32 %v6210, %v6211
        %v6213 = vrot.slane %v6212, 2
        %v6214 = vmax.f32 %v6212, %v6213
        %v6215 = vrot.slane %v6214, 1
        %v6216 = vmax.f32 %v6214, %v6215
        %v6217 = vsel %vm5761, %v5617, -inf
        %v6218 = vrot.slane %v6217, 4
        %v6219 = vmax.f32 %v6217, %v6218
        %v6220 = vrot.slane %v6219, 2
        %v6221 = vmax.f32 %v6219, %v6220
        %v6222 = vrot.slane %v6221, 1
        %v6223 = vmax.f32 %v6221, %v6222
        %v6224 = vsel %vm5761, %v5618, -inf
        %v6225 = vrot.slane %v6224, 4
        %v6226 = vmax.f32 %v6224, %v6225
        %v6227 = vrot.slane %v6226, 2
        %v6228 = vmax.f32 %v6226, %v6227
        %v6229 = vrot.slane %v6228, 1
        %v6230 = vmax.f32 %v6228, %v6229
        %v6231 = vsel %vm5761, %v5619, -inf
        %v6232 = vrot.slane %v6231, 4
        %v6233 = vmax.f32 %v6231, %v6232
        %v6234 = vrot.slane %v6233, 2
        %v6235 = vmax.f32 %v6233, %v6234
        %v6236 = vrot.slane %v6235, 1
        %v6237 = vmax.f32 %v6235, %v6236
        %v6238 = vsel %vm5761, %v5522, -inf
        %v6239 = vrot.slane %v6238, 4
        %v6240 = vmax.f32 %v6238, %v6239
        %v6241 = vrot.slane %v6240, 2
        %v6242 = vmax.f32 %v6240, %v6241
        %v6243 = vrot.slane %v6242, 1
        %v6244 = vmax.f32 %v6242, %v6243
        %v6245 = vsel %vm5761, %v5620, -inf
        %v6246 = vrot.slane %v6245, 4
        %v6247 = vmax.f32 %v6245, %v6246
        %v6248 = vrot.slane %v6247, 2
        %v6249 = vmax.f32 %v6247, %v6248
        %v6250 = vrot.slane %v6249, 1
        %v6251 = vmax.f32 %v6249, %v6250
        %v6252 = vsel %vm5761, %v5621, -inf
        %v6253 = vrot.slane %v6252, 4
        %v6254 = vmax.f32 %v6252, %v6253
        %v6255 = vrot.slane %v6254, 2
        %v6256 = vmax.f32 %v6254, %v6255
        %v6257 = vrot.slane %v6256, 1
        %v6258 = vmax.f32 %v6256, %v6257
        %v6259 = vsel %vm5761, %v5622, -inf
        %v6260 = vrot.slane %v6259, 4
        %v6261 = vmax.f32 %v6259, %v6260
        %v6262 = vrot.slane %v6261, 2
        %v6263 = vmax.f32 %v6261, %v6262
        %v6264 = vrot.slane %v6263, 1
        %v6265 = vmax.f32 %v6263, %v6264
        %v6266 = vsel %vm5761, %v5523, -inf
        %v6267 = vrot.slane %v6266, 4
        %v6268 = vmax.f32 %v6266, %v6267
        %v6269 = vrot.slane %v6268, 2
        %v6270 = vmax.f32 %v6268, %v6269
        %v6271 = vrot.slane %v6270, 1
        %v6272 = vmax.f32 %v6270, %v6271
        %v6273 = vsel %vm5761, %v5623, -inf
        %v6274 = vrot.slane %v6273, 4
        %v6275 = vmax.f32 %v6273, %v6274
        %v6276 = vrot.slane %v6275, 2
        %v6277 = vmax.f32 %v6275, %v6276
        %v6278 = vrot.slane %v6277, 1
        %v6279 = vmax.f32 %v6277, %v6278
        %v6280 = vsel %vm5761, %v5624, -inf
        %v6281 = vrot.slane %v6280, 4
        %v6282 = vmax.f32 %v6280, %v6281
        %v6283 = vrot.slane %v6282, 2
        %v6284 = vmax.f32 %v6282, %v6283
        %v6285 = vrot.slane %v6284, 1
        %v6286 = vmax.f32 %v6284, %v6285
        %v6287 = vsel %vm5761, %v5625, -inf
        %v6288 = vrot.slane %v6287, 4
        %v6289 = vmax.f32 %v6287, %v6288
        %v6290 = vrot.slane %v6289, 2
        %v6291 = vmax.f32 %v6289, %v6290
        %v6292 = vrot.slane %v6291, 1
        %v6293 = vmax.f32 %v6291, %v6292
        %v6294 = vsel %vm5761, %v5524, -inf
        %v6295 = vrot.slane %v6294, 4
        %v6296 = vmax.f32 %v6294, %v6295
        %v6297 = vrot.slane %v6296, 2
        %v6298 = vmax.f32 %v6296, %v6297
        %v6299 = vrot.slane %v6298, 1
        %v6300 = vmax.f32 %v6298, %v6299
        %v6301 = vsel %vm5761, %v5626, -inf
        %v6302 = vrot.slane %v6301, 4
        %v6303 = vmax.f32 %v6301, %v6302
        %v6304 = vrot.slane %v6303, 2
        %v6305 = vmax.f32 %v6303, %v6304
        %v6306 = vrot.slane %v6305, 1
        %v6307 = vmax.f32 %v6305, %v6306
        %v6308 = vsel %vm5761, %v5627, -inf
        %v6309 = vrot.slane %v6308, 4
        %v6310 = vmax.f32 %v6308, %v6309
        %v6311 = vrot.slane %v6310, 2
        %v6312 = vmax.f32 %v6310, %v6311
        %v6313 = vrot.slane %v6312, 1
        %v6314 = vmax.f32 %v6312, %v6313
        %v6315 = vsel %vm5761, %v5628, -inf
        %v6316 = vrot.slane %v6315, 4
        %v6317 = vmax.f32 %v6315, %v6316
        %v6318 = vrot.slane %v6317, 2
        %v6319 = vmax.f32 %v6317, %v6318
        %v6320 = vrot.slane %v6319, 1
        %v6321 = vmax.f32 %v6319, %v6320
        %v6322 = vsel %vm5761, %v5525, -inf
        %v6323 = vrot.slane %v6322, 4
        %v6324 = vmax.f32 %v6322, %v6323
        %v6325 = vrot.slane %v6324, 2
        %v6326 = vmax.f32 %v6324, %v6325
        %v6327 = vrot.slane %v6326, 1
        %v6328 = vmax.f32 %v6326, %v6327
        %v6329 = vsel %vm5761, %v5629, -inf
        %v6330 = vrot.slane %v6329, 4
        %v6331 = vmax.f32 %v6329, %v6330
        %v6332 = vrot.slane %v6331, 2
        %v6333 = vmax.f32 %v6331, %v6332
        %v6334 = vrot.slane %v6333, 1
        %v6335 = vmax.f32 %v6333, %v6334
        %v6336 = vsel %vm5761, %v5630, -inf
        %v6337 = vrot.slane %v6336, 4
        %v6338 = vmax.f32 %v6336, %v6337
        %v6339 = vrot.slane %v6338, 2
        %v6340 = vmax.f32 %v6338, %v6339
        %v6341 = vrot.slane %v6340, 1
        %v6342 = vmax.f32 %v6340, %v6341
        %v6343 = vsel %vm5761, %v5631, -inf
        %v6344 = vrot.slane %v6343, 4
        %v6345 = vmax.f32 %v6343, %v6344
        %v6346 = vrot.slane %v6345, 2
        %v6347 = vmax.f32 %v6345, %v6346
        %v6348 = vrot.slane %v6347, 1
        %v6349 = vmax.f32 %v6347, %v6348
        %v6350 = vsel %vm5761, %v5526, -inf
        %v6351 = vrot.slane %v6350, 4
        %v6352 = vmax.f32 %v6350, %v6351
        %v6353 = vrot.slane %v6352, 2
        %v6354 = vmax.f32 %v6352, %v6353
        %v6355 = vrot.slane %v6354, 1
        %v6356 = vmax.f32 %v6354, %v6355
        %v6357 = vsel %vm5761, %v5632, -inf
        %v6358 = vrot.slane %v6357, 4
        %v6359 = vmax.f32 %v6357, %v6358
        %v6360 = vrot.slane %v6359, 2
        %v6361 = vmax.f32 %v6359, %v6360
        %v6362 = vrot.slane %v6361, 1
        %v6363 = vmax.f32 %v6361, %v6362
        %v6364 = vsel %vm5761, %v5633, -inf
        %v6365 = vrot.slane %v6364, 4
        %v6366 = vmax.f32 %v6364, %v6365
        %v6367 = vrot.slane %v6366, 2
        %v6368 = vmax.f32 %v6366, %v6367
        %v6369 = vrot.slane %v6368, 1
        %v6370 = vmax.f32 %v6368, %v6369
        %v6371 = vsel %vm5761, %v5634, -inf
        %v6372 = vrot.slane %v6371, 4
        %v6373 = vmax.f32 %v6371, %v6372
        %v6374 = vrot.slane %v6373, 2
        %v6375 = vmax.f32 %v6373, %v6374
        %v6376 = vrot.slane %v6375, 1
        %v6377 = vmax.f32 %v6375, %v6376
        %v6378 = vsel %vm5761, %v5527, -inf
        %v6379 = vrot.slane %v6378, 4
        %v6380 = vmax.f32 %v6378, %v6379
        %v6381 = vrot.slane %v6380, 2
        %v6382 = vmax.f32 %v6380, %v6381
        %v6383 = vrot.slane %v6382, 1
        %v6384 = vmax.f32 %v6382, %v6383
        %v6385 = vsel %vm5761, %v5635, -inf
        %v6386 = vrot.slane %v6385, 4
        %v6387 = vmax.f32 %v6385, %v6386
        %v6388 = vrot.slane %v6387, 2
        %v6389 = vmax.f32 %v6387, %v6388
        %v6390 = vrot.slane %v6389, 1
        %v6391 = vmax.f32 %v6389, %v6390
        %v6392 = vsel %vm5761, %v5636, -inf
        %v6393 = vrot.slane %v6392, 4
        %v6394 = vmax.f32 %v6392, %v6393
        %v6395 = vrot.slane %v6394, 2
        %v6396 = vmax.f32 %v6394, %v6395
        %v6397 = vrot.slane %v6396, 1
        %v6398 = vmax.f32 %v6396, %v6397
        %v6399 = vsel %vm5761, %v5637, -inf
        %v6400 = vrot.slane %v6399, 4
        %v6401 = vmax.f32 %v6399, %v6400
        %v6402 = vrot.slane %v6401, 2
        %v6403 = vmax.f32 %v6401, %v6402
        %v6404 = vrot.slane %v6403, 1
        %v6405 = vmax.f32 %v6403, %v6404
        %v6406 = vsel %vm5761, %v5528, -inf
        %v6407 = vrot.slane %v6406, 4
        %v6408 = vmax.f32 %v6406, %v6407
        %v6409 = vrot.slane %v6408, 2
        %v6410 = vmax.f32 %v6408, %v6409
        %v6411 = vrot.slane %v6410, 1
        %v6412 = vmax.f32 %v6410, %v6411
        %v6413 = vsel %vm5761, %v5638, -inf
        %v6414 = vrot.slane %v6413, 4
        %v6415 = vmax.f32 %v6413, %v6414
        %v6416 = vrot.slane %v6415, 2
        %v6417 = vmax.f32 %v6415, %v6416
        %v6418 = vrot.slane %v6417, 1
        %v6419 = vmax.f32 %v6417, %v6418
        %v6420 = vsel %vm5761, %v5639, -inf
        %v6421 = vrot.slane %v6420, 4
        %v6422 = vmax.f32 %v6420, %v6421
        %v6423 = vrot.slane %v6422, 2
        %v6424 = vmax.f32 %v6422, %v6423
        %v6425 = vrot.slane %v6424, 1
        %v6426 = vmax.f32 %v6424, %v6425
        %v6427 = vsel %vm5761, %v5640, -inf
        %v6428 = vrot.slane %v6427, 4
        %v6429 = vmax.f32 %v6427, %v6428
        %v6430 = vrot.slane %v6429, 2
        %v6431 = vmax.f32 %v6429, %v6430
        %v6432 = vrot.slane %v6431, 1
        %v6433 = vmax.f32 %v6431, %v6432
        %v6434 = vsel %vm5761, %v5529, -inf
        %v6435 = vrot.slane %v6434, 4
        %v6436 = vmax.f32 %v6434, %v6435
        %v6437 = vrot.slane %v6436, 2
        %v6438 = vmax.f32 %v6436, %v6437
        %v6439 = vrot.slane %v6438, 1
        %v6440 = vmax.f32 %v6438, %v6439
        %v6441 = vsel %vm5761, %v5641, -inf
        %v6442 = vrot.slane %v6441, 4
        %v6443 = vmax.f32 %v6441, %v6442
        %v6444 = vrot.slane %v6443, 2
        %v6445 = vmax.f32 %v6443, %v6444
        %v6446 = vrot.slane %v6445, 1
        %v6447 = vmax.f32 %v6445, %v6446
        %v6448 = vsel %vm5761, %v5642, -inf
        %v6449 = vrot.slane %v6448, 4
        %v6450 = vmax.f32 %v6448, %v6449
        %v6451 = vrot.slane %v6450, 2
        %v6452 = vmax.f32 %v6450, %v6451
        %v6453 = vrot.slane %v6452, 1
        %v6454 = vmax.f32 %v6452, %v6453
        %v6455 = vsel %vm5761, %v5643, -inf
        %v6456 = vrot.slane %v6455, 4
        %v6457 = vmax.f32 %v6455, %v6456
        %v6458 = vrot.slane %v6457, 2
        %v6459 = vmax.f32 %v6457, %v6458
        %v6460 = vrot.slane %v6459, 1
        %v6461 = vmax.f32 %v6459, %v6460
        %v6462 = vsel %vm5761, %v5530, -inf
        %v6463 = vrot.slane %v6462, 4
        %v6464 = vmax.f32 %v6462, %v6463
        %v6465 = vrot.slane %v6464, 2
        %v6466 = vmax.f32 %v6464, %v6465
        %v6467 = vrot.slane %v6466, 1
        %v6468 = vmax.f32 %v6466, %v6467
        %v6469 = vsel %vm5761, %v5644, -inf
        %v6470 = vrot.slane %v6469, 4
        %v6471 = vmax.f32 %v6469, %v6470
        %v6472 = vrot.slane %v6471, 2
        %v6473 = vmax.f32 %v6471, %v6472
        %v6474 = vrot.slane %v6473, 1
        %v6475 = vmax.f32 %v6473, %v6474
        %v6476 = vsel %vm5761, %v5645, -inf
        %v6477 = vrot.slane %v6476, 4
        %v6478 = vmax.f32 %v6476, %v6477
        %v6479 = vrot.slane %v6478, 2
        %v6480 = vmax.f32 %v6478, %v6479
        %v6481 = vrot.slane %v6480, 1
        %v6482 = vmax.f32 %v6480, %v6481
        %v6483 = vsel %vm5761, %v5646, -inf
        %v6484 = vrot.slane %v6483, 4
        %v6485 = vmax.f32 %v6483, %v6484
        %v6486 = vrot.slane %v6485, 2
        %v6487 = vmax.f32 %v6485, %v6486
        %v6488 = vrot.slane %v6487, 1
        %v6489 = vmax.f32 %v6487, %v6488
        %v6490 = vsel %vm5761, %v5531, -inf
        %v6491 = vrot.slane %v6490, 4
        %v6492 = vmax.f32 %v6490, %v6491
        %v6493 = vrot.slane %v6492, 2
        %v6494 = vmax.f32 %v6492, %v6493
        %v6495 = vrot.slane %v6494, 1
        %v6496 = vmax.f32 %v6494, %v6495
        %v6497 = vsel %vm5761, %v5647, -inf
        %v6498 = vrot.slane %v6497, 4
        %v6499 = vmax.f32 %v6497, %v6498
        %v6500 = vrot.slane %v6499, 2
        %v6501 = vmax.f32 %v6499, %v6500
        %v6502 = vrot.slane %v6501, 1
        %v6503 = vmax.f32 %v6501, %v6502
        %v6504 = vsel %vm5761, %v5648, -inf
        %v6505 = vrot.slane %v6504, 4
        %v6506 = vmax.f32 %v6504, %v6505
        %v6507 = vrot.slane %v6506, 2
        %v6508 = vmax.f32 %v6506, %v6507
        %v6509 = vrot.slane %v6508, 1
        %v6510 = vmax.f32 %v6508, %v6509
        %v6511 = vsel %vm5761, %v5649, -inf
        %v6512 = vrot.slane %v6511, 4
        %v6513 = vmax.f32 %v6511, %v6512
        %v6514 = vrot.slane %v6513, 2
        %v6515 = vmax.f32 %v6513, %v6514
        %v6516 = vrot.slane %v6515, 1
        %v6517 = vmax.f32 %v6515, %v6516
        %v6518 = vsel %vm5761, %v5532, -inf
        %v6519 = vrot.slane %v6518, 4
        %v6520 = vmax.f32 %v6518, %v6519
        %v6521 = vrot.slane %v6520, 2
        %v6522 = vmax.f32 %v6520, %v6521
        %v6523 = vrot.slane %v6522, 1
        %v6524 = vmax.f32 %v6522, %v6523
        %v6525 = vsel %vm5761, %v5650, -inf
        %v6526 = vrot.slane %v6525, 4
        %v6527 = vmax.f32 %v6525, %v6526
        %v6528 = vrot.slane %v6527, 2
        %v6529 = vmax.f32 %v6527, %v6528
        %v6530 = vrot.slane %v6529, 1
        %v6531 = vmax.f32 %v6529, %v6530
        %v6532 = vsel %vm5761, %v5651, -inf
        %v6533 = vrot.slane %v6532, 4
        %v6534 = vmax.f32 %v6532, %v6533
        %v6535 = vrot.slane %v6534, 2
        %v6536 = vmax.f32 %v6534, %v6535
        %v6537 = vrot.slane %v6536, 1
        %v6538 = vmax.f32 %v6536, %v6537
        %v6539 = vsel %vm5761, %v5652, -inf
        %v6540 = vrot.slane %v6539, 4
        %v6541 = vmax.f32 %v6539, %v6540
        %v6542 = vrot.slane %v6541, 2
        %v6543 = vmax.f32 %v6541, %v6542
        %v6544 = vrot.slane %v6543, 1
        %v6545 = vmax.f32 %v6543, %v6544
        %v6546 = vsel %vm5761, %v5533, -inf
        %v6547 = vrot.slane %v6546, 4
        %v6548 = vmax.f32 %v6546, %v6547
        %v6549 = vrot.slane %v6548, 2
        %v6550 = vmax.f32 %v6548, %v6549
        %v6551 = vrot.slane %v6550, 1
        %v6552 = vmax.f32 %v6550, %v6551
        %v6553 = vsel %vm5761, %v5653, -inf
        %v6554 = vrot.slane %v6553, 4
        %v6555 = vmax.f32 %v6553, %v6554
        %v6556 = vrot.slane %v6555, 2
        %v6557 = vmax.f32 %v6555, %v6556
        %v6558 = vrot.slane %v6557, 1
        %v6559 = vmax.f32 %v6557, %v6558
        %v6560 = vsel %vm5761, %v5654, -inf
        %v6561 = vrot.slane %v6560, 4
        %v6562 = vmax.f32 %v6560, %v6561
        %v6563 = vrot.slane %v6562, 2
        %v6564 = vmax.f32 %v6562, %v6563
        %v6565 = vrot.slane %v6564, 1
        %v6566 = vmax.f32 %v6564, %v6565
        %v6567 = vsel %vm5761, %v5655, -inf
        %v6568 = vrot.slane %v6567, 4
        %v6569 = vmax.f32 %v6567, %v6568
        %v6570 = vrot.slane %v6569, 2
        %v6571 = vmax.f32 %v6569, %v6570
        %v6572 = vrot.slane %v6571, 1
        %v6573 = vmax.f32 %v6571, %v6572
        %v6574 = vsel %vm5761, %v5534, -inf
        %v6575 = vrot.slane %v6574, 4
        %v6576 = vmax.f32 %v6574, %v6575
        %v6577 = vrot.slane %v6576, 2
        %v6578 = vmax.f32 %v6576, %v6577
        %v6579 = vrot.slane %v6578, 1
        %v6580 = vmax.f32 %v6578, %v6579
        %v6581 = vsel %vm5761, %v5656, -inf
        %v6582 = vrot.slane %v6581, 4
        %v6583 = vmax.f32 %v6581, %v6582
        %v6584 = vrot.slane %v6583, 2
        %v6585 = vmax.f32 %v6583, %v6584
        %v6586 = vrot.slane %v6585, 1
        %v6587 = vmax.f32 %v6585, %v6586
        %v6588 = vsel %vm5761, %v5657, -inf
        %v6589 = vrot.slane %v6588, 4
        %v6590 = vmax.f32 %v6588, %v6589
        %v6591 = vrot.slane %v6590, 2
        %v6592 = vmax.f32 %v6590, %v6591
        %v6593 = vrot.slane %v6592, 1
        %v6594 = vmax.f32 %v6592, %v6593
        %v6595 = vsel %vm5761, %v5658, -inf
        %v6596 = vrot.slane %v6595, 4
        %v6597 = vmax.f32 %v6595, %v6596
        %v6598 = vrot.slane %v6597, 2
        %v6599 = vmax.f32 %v6597, %v6598
        %v6600 = vrot.slane %v6599, 1
        %v6601 = vmax.f32 %v6599, %v6600
        %v6602 = vsel %vm5761, %v5535, -inf
        %v6603 = vrot.slane %v6602, 4
        %v6604 = vmax.f32 %v6602, %v6603
        %v6605 = vrot.slane %v6604, 2
        %v6606 = vmax.f32 %v6604, %v6605
        %v6607 = vrot.slane %v6606, 1
        %v6608 = vmax.f32 %v6606, %v6607
        %v6609 = vsel %vm5761, %v5659, -inf
        %v6610 = vrot.slane %v6609, 4
        %v6611 = vmax.f32 %v6609, %v6610
        %v6612 = vrot.slane %v6611, 2
        %v6613 = vmax.f32 %v6611, %v6612
        %v6614 = vrot.slane %v6613, 1
        %v6615 = vmax.f32 %v6613, %v6614
        %v6616 = vsel %vm5761, %v5660, -inf
        %v6617 = vrot.slane %v6616, 4
        %v6618 = vmax.f32 %v6616, %v6617
        %v6619 = vrot.slane %v6618, 2
        %v6620 = vmax.f32 %v6618, %v6619
        %v6621 = vrot.slane %v6620, 1
        %v6622 = vmax.f32 %v6620, %v6621
        %v6623 = vsel %vm5761, %v5661, -inf
        %v6624 = vrot.slane %v6623, 4
        %v6625 = vmax.f32 %v6623, %v6624
        %v6626 = vrot.slane %v6625, 2
        %v6627 = vmax.f32 %v6625, %v6626
        %v6628 = vrot.slane %v6627, 1
        %v6629 = vmax.f32 %v6627, %v6628
        %v6630 = vsel %vm5761, %v5536, -inf
        %v6631 = vrot.slane %v6630, 4
        %v6632 = vmax.f32 %v6630, %v6631
        %v6633 = vrot.slane %v6632, 2
        %v6634 = vmax.f32 %v6632, %v6633
        %v6635 = vrot.slane %v6634, 1
        %v6636 = vmax.f32 %v6634, %v6635
        %v6637 = vsel %vm5761, %v5662, -inf
        %v6638 = vrot.slane %v6637, 4
        %v6639 = vmax.f32 %v6637, %v6638
        %v6640 = vrot.slane %v6639, 2
        %v6641 = vmax.f32 %v6639, %v6640
        %v6642 = vrot.slane %v6641, 1
        %v6643 = vmax.f32 %v6641, %v6642
        %v6644 = vsel %vm5761, %v5663, -inf
        %v6645 = vrot.slane %v6644, 4
        %v6646 = vmax.f32 %v6644, %v6645
        %v6647 = vrot.slane %v6646, 2
        %v6648 = vmax.f32 %v6646, %v6647
        %v6649 = vrot.slane %v6648, 1
        %v6650 = vmax.f32 %v6648, %v6649
        %v6651 = vsel %vm5761, %v5664, -inf
        %v6652 = vrot.slane %v6651, 4
        %v6653 = vmax.f32 %v6651, %v6652
        %v6654 = vrot.slane %v6653, 2
        %v6655 = vmax.f32 %v6653, %v6654
        %v6656 = vrot.slane %v6655, 1
        %v6657 = vmax.f32 %v6655, %v6656
        %v6658 = vmax.f32 %v5768, %v5824
        %v6659 = vmax.f32 %v5775, %v5831
        %v6660 = vmax.f32 %v5782, %v5838
        %v6661 = vmax.f32 %v5789, %v5845
        %v6662 = vmax.f32 %v5796, %v5852
        %v6663 = vmax.f32 %v5803, %v5859
        %v6664 = vmax.f32 %v5810, %v5866
        %v6665 = vmax.f32 %v5817, %v5873
        %v6666 = vmax.f32 %v5880, %v5936
        %v6667 = vmax.f32 %v5887, %v5943
        %v6668 = vmax.f32 %v5894, %v5950
        %v6669 = vmax.f32 %v5901, %v5957
        %v6670 = vmax.f32 %v5908, %v5964
        %v6671 = vmax.f32 %v5915, %v5971
        %v6672 = vmax.f32 %v5922, %v5978
        %v6673 = vmax.f32 %v5929, %v5985
        %v6674 = vmax.f32 %v5992, %v6048
        %v6675 = vmax.f32 %v5999, %v6055
        %v6676 = vmax.f32 %v6006, %v6062
        %v6677 = vmax.f32 %v6013, %v6069
        %v6678 = vmax.f32 %v6020, %v6076
        %v6679 = vmax.f32 %v6027, %v6083
        %v6680 = vmax.f32 %v6034, %v6090
        %v6681 = vmax.f32 %v6041, %v6097
        %v6682 = vmax.f32 %v6104, %v6160
        %v6683 = vmax.f32 %v6111, %v6167
        %v6684 = vmax.f32 %v6118, %v6174
        %v6685 = vmax.f32 %v6125, %v6181
        %v6686 = vmax.f32 %v6132, %v6188
        %v6687 = vmax.f32 %v6139, %v6195
        %v6688 = vmax.f32 %v6146, %v6202
        %v6689 = vmax.f32 %v6153, %v6209
        %v6690 = vmax.f32 %v6216, %v6272
        %v6691 = vmax.f32 %v6223, %v6279
        %v6692 = vmax.f32 %v6230, %v6286
        %v6693 = vmax.f32 %v6237, %v6293
        %v6694 = vmax.f32 %v6244, %v6300
        %v6695 = vmax.f32 %v6251, %v6307
        %v6696 = vmax.f32 %v6258, %v6314
        %v6697 = vmax.f32 %v6265, %v6321
        %v6698 = vmax.f32 %v6328, %v6384
        %v6699 = vmax.f32 %v6335, %v6391
        %v6700 = vmax.f32 %v6342, %v6398
        %v6701 = vmax.f32 %v6349, %v6405
        %v6702 = vmax.f32 %v6356, %v6412
        %v6703 = vmax.f32 %v6363, %v6419
        %v6704 = vmax.f32 %v6370, %v6426
        %v6705 = vmax.f32 %v6377, %v6433
        %v6706 = vmax.f32 %v6440, %v6496
        %v6707 = vmax.f32 %v6447, %v6503
        %v6708 = vmax.f32 %v6454, %v6510
        %v6709 = vmax.f32 %v6461, %v6517
        %v6710 = vmax.f32 %v6468, %v6524
        %v6711 = vmax.f32 %v6475, %v6531
        %v6712 = vmax.f32 %v6482, %v6538
        %v6713 = vmax.f32 %v6489, %v6545
        %v6714 = vmax.f32 %v6552, %v6608
        %v6715 = vmax.f32 %v6559, %v6615
        %v6716 = vmax.f32 %v6566, %v6622
        %v6717 = vmax.f32 %v6573, %v6629
        %v6718 = vmax.f32 %v6580, %v6636
        %v6719 = vmax.f32 %v6587, %v6643
        %v6720 = vmax.f32 %v6594, %v6650
        %v6721 = vmax.f32 %v6601, %v6657
        %6722 = vst.msk [vmem:[#allocation2] sm:$0xff] %vm537, 0.0
        %6723 = vst.msk [vmem:[#allocation2 + $0x8] sm:$0x3] %vm5761, 0.0
        %6724 = vst.msk [vmem:[#allocation2 + $0x10] sm:$0xff] %vm537, 0.0
        %6725 = vst.msk [vmem:[#allocation2 + $0x18] sm:$0x3] %vm5761, 0.0
        %6726 = vst.msk [vmem:[#allocation2 + $0x20] sm:$0xff] %vm537, 0.0
        %6727 = vst.msk [vmem:[#allocation2 + $0x28] sm:$0x3] %vm5761, 0.0
        %6728 = vst.msk [vmem:[#allocation2 + $0x30] sm:$0xff] %vm537, 0.0
        %6729 = vst.msk [vmem:[#allocation2 + $0x38] sm:$0x3] %vm5761, 0.0
        %6730 = vst.msk [vmem:[#allocation2 + $0x40] sm:$0xff] %vm537, 0.0
        %6731 = vst.msk [vmem:[#allocation2 + $0x48] sm:$0x3] %vm5761, 0.0
        %6732 = vst.msk [vmem:[#allocation2 + $0x50] sm:$0xff] %vm537, 0.0
        %6733 = vst.msk [vmem:[#allocation2 + $0x58] sm:$0x3] %vm5761, 0.0
        %6734 = vst.msk [vmem:[#allocation2 + $0x60] sm:$0xff] %vm537, 0.0
        %6735 = vst.msk [vmem:[#allocation2 + $0x68] sm:$0x3] %vm5761, 0.0
        %6736 = vst.msk [vmem:[#allocation2 + $0x70] sm:$0xff] %vm537, 0.0
        %6737 = vst.msk [vmem:[#allocation2 + $0x78] sm:$0x3] %vm5761, 0.0
        %6738 = vst.msk [vmem:[#allocation2 + $0x80] sm:$0xff] %vm537, 0.0
        %6739 = vst.msk [vmem:[#allocation2 + $0x88] sm:$0x3] %vm5761, 0.0
        %6740 = vst.msk [vmem:[#allocation2 + $0x90] sm:$0xff] %vm537, 0.0
        %6741 = vst.msk [vmem:[#allocation2 + $0x98] sm:$0x3] %vm5761, 0.0
        %vm6806 = vcmask 1041409
        %v6807 = vsel %vm6806, %v6659, %v6658
        %vm6808 = vcmask 1042434
        %v6809 = vsel %vm6808, %v6660, %v6807
        %vm6810 = vcmask 1043459
        %v6811 = vsel %vm6810, %v6661, %v6809
        %vm6812 = vcmask 1044484
        %v6813 = vsel %vm6812, %v6662, %v6811
        %vm6814 = vcmask 1045509
        %v6815 = vsel %vm6814, %v6663, %v6813
        %vm6816 = vcmask 1046534
        %v6817 = vsel %vm6816, %v6664, %v6815
        %vm6818 = vcmask 1047559
        %v6819 = vsel %vm6818, %v6665, %v6817
        %v6820 = vsel %vm6806, %v6667, %v6666
        %v6821 = vsel %vm6808, %v6668, %v6820
        %v6822 = vsel %vm6810, %v6669, %v6821
        %v6823 = vsel %vm6812, %v6670, %v6822
        %v6824 = vsel %vm6814, %v6671, %v6823
        %v6825 = vsel %vm6816, %v6672, %v6824
        %v6826 = vsel %vm6818, %v6673, %v6825
        %v6827 = vsel %vm6806, %v6675, %v6674
        %v6828 = vsel %vm6808, %v6676, %v6827
        %v6829 = vsel %vm6810, %v6677, %v6828
        %v6830 = vsel %vm6812, %v6678, %v6829
        %v6831 = vsel %vm6814, %v6679, %v6830
        %v6832 = vsel %vm6816, %v6680, %v6831
        %v6833 = vsel %vm6818, %v6681, %v6832
        %v6834 = vsel %vm6806, %v6683, %v6682
        %v6835 = vsel %vm6808, %v6684, %v6834
        %v6836 = vsel %vm6810, %v6685, %v6835
        %v6837 = vsel %vm6812, %v6686, %v6836
        %v6838 = vsel %vm6814, %v6687, %v6837
        %v6839 = vsel %vm6816, %v6688, %v6838
        %v6840 = vsel %vm6818, %v6689, %v6839
        %v6841 = vsel %vm6806, %v6691, %v6690
        %v6842 = vsel %vm6808, %v6692, %v6841
        %v6843 = vsel %vm6810, %v6693, %v6842
        %v6844 = vsel %vm6812, %v6694, %v6843
        %v6845 = vsel %vm6814, %v6695, %v6844
        %v6846 = vsel %vm6816, %v6696, %v6845
        %v6847 = vsel %vm6818, %v6697, %v6846
        %v6848 = vsel %vm6806, %v6699, %v6698
        %v6849 = vsel %vm6808, %v6700, %v6848
        %v6850 = vsel %vm6810, %v6701, %v6849
        %v6851 = vsel %vm6812, %v6702, %v6850
        %v6852 = vsel %vm6814, %v6703, %v6851
        %v6853 = vsel %vm6816, %v6704, %v6852
        %v6854 = vsel %vm6818, %v6705, %v6853
        %v6855 = vsel %vm6806, %v6707, %v6706
        %v6856 = vsel %vm6808, %v6708, %v6855
        %v6857 = vsel %vm6810, %v6709, %v6856
        %v6858 = vsel %vm6812, %v6710, %v6857
        %v6859 = vsel %vm6814, %v6711, %v6858
        %v6860 = vsel %vm6816, %v6712, %v6859
        %v6861 = vsel %vm6818, %v6713, %v6860
        %v6862 = vsel %vm6806, %v6715, %v6714
        %v6863 = vsel %vm6808, %v6716, %v6862
        %v6864 = vsel %vm6810, %v6717, %v6863
        %v6865 = vsel %vm6812, %v6718, %v6864
        %v6866 = vsel %vm6814, %v6719, %v6865
        %v6867 = vsel %vm6816, %v6720, %v6866
        %v6868 = vsel %vm6818, %v6721, %v6867
        %s6877 = scalar_lea.vmem [#allocation2], 16
        %6878 = vst.msk [vmem:[%s6877 + $0x1] sm:$0xff] %vm537, %v6819
        %6879 = vst.msk [vmem:[%s6877 + $0x11] sm:$0xff] %vm537, %v6826
        %6880 = vst.msk [vmem:[%s6877 + $0x21] sm:$0xff] %vm537, %v6833
        %6881 = vst.msk [vmem:[%s6877 + $0x31] sm:$0xff] %vm537, %v6840
        %6882 = vst.msk [vmem:[%s6877 + $0x41] sm:$0xff] %vm537, %v6847
        %6883 = vst.msk [vmem:[%s6877 + $0x51] sm:$0xff] %vm537, %v6854
        %6884 = vst.msk [vmem:[%s6877 + $0x61] sm:$0xff] %vm537, %v6861
        %6885 = vst.msk [vmem:[%s6877 + $0x71] sm:$0xff] %vm537, %v6868
        %v6886 = vld [vmem:[#allocation2] sm:$0xff]
        %v6887 = vld [vmem:[#allocation2 + $0x10] sm:$0xff]
        %v6888 = vld [vmem:[#allocation2 + $0x20] sm:$0xff]
        %v6889 = vld [vmem:[#allocation2 + $0x30] sm:$0xff]
        %v6890 = vld [vmem:[#allocation2 + $0x40] sm:$0xff]
        %v6891 = vld [vmem:[#allocation2 + $0x50] sm:$0xff]
        %v6892 = vld [vmem:[#allocation2 + $0x60] sm:$0xff]
        %v6893 = vld [vmem:[#allocation2 + $0x70] sm:$0xff]
        %v6894 = vld [vmem:[%s3] sm:$0xff]
        %v6895 = vld [vmem:[#allocation2 + $0x1] sm:$0xff]
        %v6896 = vld [vmem:[#allocation2 + $0x11] sm:$0xff]
        %v6897 = vld [vmem:[#allocation2 + $0x21] sm:$0xff]
        %v6898 = vld [vmem:[#allocation2 + $0x31] sm:$0xff]
        %v6899 = vld [vmem:[#allocation2 + $0x41] sm:$0xff]
        %v6900 = vld [vmem:[#allocation2 + $0x51] sm:$0xff]
        %v6901 = vld [vmem:[#allocation2 + $0x61] sm:$0xff]
        %v6902 = vld [vmem:[#allocation2 + $0x71] sm:$0xff]
        %s6903 = scalar_lea.vmem %s3, 8
        %v6904 = vld [vmem:[%s6903] sm:$0xff]
        %v6906 = vsel %vm537, %v6895, 0
        %v6909 = vsel %vm537, %v6896, 0
        %v6912 = vsel %vm537, %v6897, 0
        %v6915 = vsel %vm537, %v6898, 0
        %v6918 = vsel %vm537, %v6899, 0
        %v6921 = vsel %vm537, %v6900, 0
        %v6924 = vsel %vm537, %v6901, 0
        %v6927 = vsel %vm537, %v6902, 0
        %6929 = vmatpush.msra.mxu0 0.0
        %6930 = vmatpush.msra.mxu0 0.0
        %6931 = vmatpush.msra.mxu0 0.0
        %6932 = vmatpush.msra.mxu0 0.0
        %6933 = vmatpush.msra.mxu0 0.0
        %6934 = vmatpush.msra.mxu0 0.0
        %6935 = vmatpush.msra.mxu0 0.0
        %6936 = vmatpush.msra.mxu0 0.0
        %6937 = vmatpush.msra.mxu0 0.0
        %6938 = vmatpush.msra.mxu0 0.0
        %6939 = vmatpush.msra.mxu0 0.0
        %6940 = vmatpush.msra.mxu0 0.0
        %6941 = vmatpush.msra.mxu0 0.0
        %6942 = vmatpush.msra.mxu0 0.0
        %6943 = vmatpush.msra.mxu0 0.0
        %6944 = vmatpush.msra.mxu0 %v6904
        %6945 = vmatmul.f32.gmra.mxu0 %v6906
        %v6946 = vpop.f32.mrf.mxu0
        %v6947 = vadd.f32 0.0, %v6946
        %6948 = vmatmul.f32.gmra.mxu0 %v6909
        %v6949 = vpop.f32.mrf.mxu0
        %v6950 = vadd.f32 0.0, %v6949
        %6951 = vmatmul.f32.gmra.mxu0 %v6912
        %v6952 = vpop.f32.mrf.mxu0
        %v6953 = vadd.f32 0.0, %v6952
        %6954 = vmatmul.f32.gmra.mxu0 %v6915
        %v6955 = vpop.f32.mrf.mxu0
        %v6956 = vadd.f32 0.0, %v6955
        %6957 = vmatmul.f32.gmra.mxu0 %v6918
        %v6958 = vpop.f32.mrf.mxu0
        %v6959 = vadd.f32 0.0, %v6958
        %6960 = vmatmul.f32.gmra.mxu0 %v6921
        %v6961 = vpop.f32.mrf.mxu0
        %v6962 = vadd.f32 0.0, %v6961
        %6963 = vmatmul.f32.gmra.mxu0 %v6924
        %v6964 = vpop.f32.mrf.mxu0
        %v6965 = vadd.f32 0.0, %v6964
        %6966 = vmatmul.f32.gmra.mxu0 %v6927
        %v6967 = vpop.f32.mrf.mxu0
        %v6968 = vadd.f32 0.0, %v6967
        %6969 = vdwg.mxu0
        %v6971 = vsel %vm537, %v6886, 0
        %v6974 = vsel %vm537, %v6887, 0
        %v6977 = vsel %vm537, %v6888, 0
        %v6980 = vsel %vm537, %v6889, 0
        %v6983 = vsel %vm537, %v6890, 0
        %v6986 = vsel %vm537, %v6891, 0
        %v6989 = vsel %vm537, %v6892, 0
        %v6992 = vsel %vm537, %v6893, 0
        %6994 = vmatpush.msra.mxu0 0.0
        %6995 = vmatpush.msra.mxu0 0.0
        %6996 = vmatpush.msra.mxu0 0.0
        %6997 = vmatpush.msra.mxu0 0.0
        %6998 = vmatpush.msra.mxu0 0.0
        %6999 = vmatpush.msra.mxu0 0.0
        %7000 = vmatpush.msra.mxu0 0.0
        %7001 = vmatpush.msra.mxu0 0.0
        %7002 = vmatpush.msra.mxu0 0.0
        %7003 = vmatpush.msra.mxu0 0.0
        %7004 = vmatpush.msra.mxu0 0.0
        %7005 = vmatpush.msra.mxu0 0.0
        %7006 = vmatpush.msra.mxu0 0.0
        %7007 = vmatpush.msra.mxu0 0.0
        %7008 = vmatpush.msra.mxu0 0.0
        %7009 = vmatpush.msra.mxu0 %v6894
        %7010 = vmatmul.f32.gmra.mxu0 %v6971
        %v7011 = vpop.f32.mrf.mxu0
        %v7012 = vadd.f32 %v6947, %v7011
        %7013 = vmatmul.f32.gmra.mxu0 %v6974
        %v7014 = vpop.f32.mrf.mxu0
        %v7015 = vadd.f32 %v6950, %v7014
        %7016 = vmatmul.f32.gmra.mxu0 %v6977
        %v7017 = vpop.f32.mrf.mxu0
        %v7018 = vadd.f32 %v6953, %v7017
        %7019 = vmatmul.f32.gmra.mxu0 %v6980
        %v7020 = vpop.f32.mrf.mxu0
        %v7021 = vadd.f32 %v6956, %v7020
        %7022 = vmatmul.f32.gmra.mxu0 %v6983
        %v7023 = vpop.f32.mrf.mxu0
        %v7024 = vadd.f32 %v6959, %v7023
        %7025 = vmatmul.f32.gmra.mxu0 %v6986
        %v7026 = vpop.f32.mrf.mxu0
        %v7027 = vadd.f32 %v6962, %v7026
        %7028 = vmatmul.f32.gmra.mxu0 %v6989
        %v7029 = vpop.f32.mrf.mxu0
        %v7030 = vadd.f32 %v6965, %v7029
        %7031 = vmatmul.f32.gmra.mxu0 %v6992
        %v7032 = vpop.f32.mrf.mxu0
        %v7033 = vadd.f32 %v6968, %v7032
        %7034 = vdwg.mxu0
        %v7035 = vld [vmem:[#allocation2 + $0x2] sm:$0xff]
        %v7036 = vld [vmem:[#allocation2 + $0x12] sm:$0xff]
        %v7037 = vld [vmem:[#allocation2 + $0x22] sm:$0xff]
        %v7038 = vld [vmem:[#allocation2 + $0x32] sm:$0xff]
        %v7039 = vld [vmem:[#allocation2 + $0x42] sm:$0xff]
        %v7040 = vld [vmem:[#allocation2 + $0x52] sm:$0xff]
        %v7041 = vld [vmem:[#allocation2 + $0x62] sm:$0xff]
        %v7042 = vld [vmem:[#allocation2 + $0x72] sm:$0xff]
        %s7043 = scalar_lea.vmem %s3, 16
        %v7044 = vld [vmem:[%s7043] sm:$0xff]
        %v7046 = vsel %vm537, %v7035, 0
        %v7049 = vsel %vm537, %v7036, 0
        %v7052 = vsel %vm537, %v7037, 0
        %v7055 = vsel %vm537, %v7038, 0
        %v7058 = vsel %vm537, %v7039, 0
        %v7061 = vsel %vm537, %v7040, 0
        %v7064 = vsel %vm537, %v7041, 0
        %v7067 = vsel %vm537, %v7042, 0
        %7069 = vmatpush.msra.mxu0 0.0
        %7070 = vmatpush.msra.mxu0 0.0
        %7071 = vmatpush.msra.mxu0 0.0
        %7072 = vmatpush.msra.mxu0 0.0
        %7073 = vmatpush.msra.mxu0 0.0
        %7074 = vmatpush.msra.mxu0 0.0
        %7075 = vmatpush.msra.mxu0 0.0
        %7076 = vmatpush.msra.mxu0 0.0
        %7077 = vmatpush.msra.mxu0 0.0
        %7078 = vmatpush.msra.mxu0 0.0
        %7079 = vmatpush.msra.mxu0 0.0
        %7080 = vmatpush.msra.mxu0 0.0
        %7081 = vmatpush.msra.mxu0 0.0
        %7082 = vmatpush.msra.mxu0 0.0
        %7083 = vmatpush.msra.mxu0 0.0
        %7084 = vmatpush.msra.mxu0 %v7044
        %7085 = vmatmul.f32.gmra.mxu0 %v7046
        %v7086 = vpop.f32.mrf.mxu0
        %v7087 = vadd.f32 0.0, %v7086
        %7088 = vmatmul.f32.gmra.mxu0 %v7049
        %v7089 = vpop.f32.mrf.mxu0
        %v7090 = vadd.f32 0.0, %v7089
        %7091 = vmatmul.f32.gmra.mxu0 %v7052
        %v7092 = vpop.f32.mrf.mxu0
        %v7093 = vadd.f32 0.0, %v7092
        %7094 = vmatmul.f32.gmra.mxu0 %v7055
        %v7095 = vpop.f32.mrf.mxu0
        %v7096 = vadd.f32 0.0, %v7095
        %7097 = vmatmul.f32.gmra.mxu0 %v7058
        %v7098 = vpop.f32.mrf.mxu0
        %v7099 = vadd.f32 0.0, %v7098
        %7100 = vmatmul.f32.gmra.mxu0 %v7061
        %v7101 = vpop.f32.mrf.mxu0
        %v7102 = vadd.f32 0.0, %v7101
        %7103 = vmatmul.f32.gmra.mxu0 %v7064
        %v7104 = vpop.f32.mrf.mxu0
        %v7105 = vadd.f32 0.0, %v7104
        %7106 = vmatmul.f32.gmra.mxu0 %v7067
        %v7107 = vpop.f32.mrf.mxu0
        %v7108 = vadd.f32 0.0, %v7107
        %7109 = vdwg.mxu0
        %v7110 = vadd.f32 %v7012, %v7087
        %v7111 = vadd.f32 %v7015, %v7090
        %v7112 = vadd.f32 %v7018, %v7093
        %v7113 = vadd.f32 %v7021, %v7096
        %v7114 = vadd.f32 %v7024, %v7099
        %v7115 = vadd.f32 %v7027, %v7102
        %v7116 = vadd.f32 %v7030, %v7105
        %v7117 = vadd.f32 %v7033, %v7108
        %v7118 = vld [vmem:[%s6877] sm:$0xff]
        %v7119 = vld [vmem:[%s6877 + $0x10] sm:$0xff]
        %v7120 = vld [vmem:[%s6877 + $0x20] sm:$0xff]
        %v7121 = vld [vmem:[%s6877 + $0x30] sm:$0xff]
        %v7122 = vld [vmem:[%s6877 + $0x40] sm:$0xff]
        %v7123 = vld [vmem:[%s6877 + $0x50] sm:$0xff]
        %v7124 = vld [vmem:[%s6877 + $0x60] sm:$0xff]
        %v7125 = vld [vmem:[%s6877 + $0x70] sm:$0xff]
        %s7126 = scalar_lea.vmem %s3, 24
        %v7127 = vld [vmem:[%s7126] sm:$0xff]
        %v7129 = vsel %vm537, %v7118, 0
        %v7132 = vsel %vm537, %v7119, 0
        %v7135 = vsel %vm537, %v7120, 0
        %v7138 = vsel %vm537, %v7121, 0
        %v7141 = vsel %vm537, %v7122, 0
        %v7144 = vsel %vm537, %v7123, 0
        %v7147 = vsel %vm537, %v7124, 0
        %v7150 = vsel %vm537, %v7125, 0
        %7152 = vmatpush.msra.mxu0 0.0
        %7153 = vmatpush.msra.mxu0 0.0
        %7154 = vmatpush.msra.mxu0 0.0
        %7155 = vmatpush.msra.mxu0 0.0
        %7156 = vmatpush.msra.mxu0 0.0
        %7157 = vmatpush.msra.mxu0 0.0
        %7158 = vmatpush.msra.mxu0 0.0
        %7159 = vmatpush.msra.mxu0 0.0
        %7160 = vmatpush.msra.mxu0 0.0
        %7161 = vmatpush.msra.mxu0 0.0
        %7162 = vmatpush.msra.mxu0 0.0
        %7163 = vmatpush.msra.mxu0 0.0
        %7164 = vmatpush.msra.mxu0 0.0
        %7165 = vmatpush.msra.mxu0 0.0
        %7166 = vmatpush.msra.mxu0 0.0
        %7167 = vmatpush.msra.mxu0 %v7127
        %7168 = vmatmul.f32.gmra.mxu0 %v7129
        %v7169 = vpop.f32.mrf.mxu0
        %v7170 = vadd.f32 0.0, %v7169
        %7171 = vmatmul.f32.gmra.mxu0 %v7132
        %v7172 = vpop.f32.mrf.mxu0
        %v7173 = vadd.f32 0.0, %v7172
        %7174 = vmatmul.f32.gmra.mxu0 %v7135
        %v7175 = vpop.f32.mrf.mxu0
        %v7176 = vadd.f32 0.0, %v7175
        %7177 = vmatmul.f32.gmra.mxu0 %v7138
        %v7178 = vpop.f32.mrf.mxu0
        %v7179 = vadd.f32 0.0, %v7178
        %7180 = vmatmul.f32.gmra.mxu0 %v7141
        %v7181 = vpop.f32.mrf.mxu0
        %v7182 = vadd.f32 0.0, %v7181
        %7183 = vmatmul.f32.gmra.mxu0 %v7144
        %v7184 = vpop.f32.mrf.mxu0
        %v7185 = vadd.f32 0.0, %v7184
        %7186 = vmatmul.f32.gmra.mxu0 %v7147
        %v7187 = vpop.f32.mrf.mxu0
        %v7188 = vadd.f32 0.0, %v7187
        %7189 = vmatmul.f32.gmra.mxu0 %v7150
        %v7190 = vpop.f32.mrf.mxu0
        %v7191 = vadd.f32 0.0, %v7190
        %7192 = vdwg.mxu0
        %v7193 = vadd.f32 %v7110, %v7170
        %v7194 = vadd.f32 %v7111, %v7173
        %v7195 = vadd.f32 %v7112, %v7176
        %v7196 = vadd.f32 %v7113, %v7179
        %v7197 = vadd.f32 %v7114, %v7182
        %v7198 = vadd.f32 %v7115, %v7185
        %v7199 = vadd.f32 %v7116, %v7188
        %v7200 = vadd.f32 %v7117, %v7191
        %v7201 = vld [vmem:[%s6877 + $0x1] sm:$0xff]
        %v7202 = vld [vmem:[%s6877 + $0x11] sm:$0xff]
        %v7203 = vld [vmem:[%s6877 + $0x21] sm:$0xff]
        %v7204 = vld [vmem:[%s6877 + $0x31] sm:$0xff]
        %v7205 = vld [vmem:[%s6877 + $0x41] sm:$0xff]
        %v7206 = vld [vmem:[%s6877 + $0x51] sm:$0xff]
        %v7207 = vld [vmem:[%s6877 + $0x61] sm:$0xff]
        %v7208 = vld [vmem:[%s6877 + $0x71] sm:$0xff]
        %s7209 = scalar_lea.vmem %s3, 32
        %v7210 = vld [vmem:[%s7209] sm:$0xff]
        %v7212 = vsel %vm537, %v7201, 0
        %v7215 = vsel %vm537, %v7202, 0
        %v7218 = vsel %vm537, %v7203, 0
        %v7221 = vsel %vm537, %v7204, 0
        %v7224 = vsel %vm537, %v7205, 0
        %v7227 = vsel %vm537, %v7206, 0
        %v7230 = vsel %vm537, %v7207, 0
        %v7233 = vsel %vm537, %v7208, 0
        %7235 = vmatpush.msra.mxu0 0.0
        %7236 = vmatpush.msra.mxu0 0.0
        %7237 = vmatpush.msra.mxu0 0.0
        %7238 = vmatpush.msra.mxu0 0.0
        %7239 = vmatpush.msra.mxu0 0.0
        %7240 = vmatpush.msra.mxu0 0.0
        %7241 = vmatpush.msra.mxu0 0.0
        %7242 = vmatpush.msra.mxu0 0.0
        %7243 = vmatpush.msra.mxu0 0.0
        %7244 = vmatpush.msra.mxu0 0.0
        %7245 = vmatpush.msra.mxu0 0.0
        %7246 = vmatpush.msra.mxu0 0.0
        %7247 = vmatpush.msra.mxu0 0.0
        %7248 = vmatpush.msra.mxu0 0.0
        %7249 = vmatpush.msra.mxu0 0.0
        %7250 = vmatpush.msra.mxu0 %v7210
        %7251 = vmatmul.f32.gmra.mxu0 %v7212
        %v7252 = vpop.f32.mrf.mxu0
        %v7253 = vadd.f32 0.0, %v7252
        %7254 = vmatmul.f32.gmra.mxu0 %v7215
        %v7255 = vpop.f32.mrf.mxu0
        %v7256 = vadd.f32 0.0, %v7255
        %7257 = vmatmul.f32.gmra.mxu0 %v7218
        %v7258 = vpop.f32.mrf.mxu0
        %v7259 = vadd.f32 0.0, %v7258
        %7260 = vmatmul.f32.gmra.mxu0 %v7221
        %v7261 = vpop.f32.mrf.mxu0
        %v7262 = vadd.f32 0.0, %v7261
        %7263 = vmatmul.f32.gmra.mxu0 %v7224
        %v7264 = vpop.f32.mrf.mxu0
        %v7265 = vadd.f32 0.0, %v7264
        %7266 = vmatmul.f32.gmra.mxu0 %v7227
        %v7267 = vpop.f32.mrf.mxu0
        %v7268 = vadd.f32 0.0, %v7267
        %7269 = vmatmul.f32.gmra.mxu0 %v7230
        %v7270 = vpop.f32.mrf.mxu0
        %v7271 = vadd.f32 0.0, %v7270
        %7272 = vmatmul.f32.gmra.mxu0 %v7233
        %v7273 = vpop.f32.mrf.mxu0
        %v7274 = vadd.f32 0.0, %v7273
        %7275 = vdwg.mxu0
        %v7276 = vadd.f32 %v7193, %v7253
        %v7277 = vadd.f32 %v7194, %v7256
        %v7278 = vadd.f32 %v7195, %v7259
        %v7279 = vadd.f32 %v7196, %v7262
        %v7280 = vadd.f32 %v7197, %v7265
        %v7281 = vadd.f32 %v7198, %v7268
        %v7282 = vadd.f32 %v7199, %v7271
        %v7283 = vadd.f32 %v7200, %v7274
        %v7284 = vld [vmem:[%s6877 + $0x2] sm:$0xff]
        %v7285 = vld [vmem:[%s6877 + $0x12] sm:$0xff]
        %v7286 = vld [vmem:[%s6877 + $0x22] sm:$0xff]
        %v7287 = vld [vmem:[%s6877 + $0x32] sm:$0xff]
        %v7288 = vld [vmem:[%s6877 + $0x42] sm:$0xff]
        %v7289 = vld [vmem:[%s6877 + $0x52] sm:$0xff]
        %v7290 = vld [vmem:[%s6877 + $0x62] sm:$0xff]
        %v7291 = vld [vmem:[%s6877 + $0x72] sm:$0xff]
        %s7292 = scalar_lea.vmem %s3, 40
        %v7293 = vld [vmem:[%s7292] sm:$0xff]
        %v7295 = vsel %vm537, %v7284, 0
        %v7298 = vsel %vm537, %v7285, 0
        %v7301 = vsel %vm537, %v7286, 0
        %v7304 = vsel %vm537, %v7287, 0
        %v7307 = vsel %vm537, %v7288, 0
        %v7310 = vsel %vm537, %v7289, 0
        %v7313 = vsel %vm537, %v7290, 0
        %v7316 = vsel %vm537, %v7291, 0
        %7318 = vmatpush.msra.mxu0 0.0
        %7319 = vmatpush.msra.mxu0 0.0
        %7320 = vmatpush.msra.mxu0 0.0
        %7321 = vmatpush.msra.mxu0 0.0
        %7322 = vmatpush.msra.mxu0 0.0
        %7323 = vmatpush.msra.mxu0 0.0
        %7324 = vmatpush.msra.mxu0 0.0
        %7325 = vmatpush.msra.mxu0 0.0
        %7326 = vmatpush.msra.mxu0 0.0
        %7327 = vmatpush.msra.mxu0 0.0
        %7328 = vmatpush.msra.mxu0 0.0
        %7329 = vmatpush.msra.mxu0 0.0
        %7330 = vmatpush.msra.mxu0 0.0
        %7331 = vmatpush.msra.mxu0 0.0
        %7332 = vmatpush.msra.mxu0 0.0
        %7333 = vmatpush.msra.mxu0 %v7293
        %7334 = vmatmul.f32.gmra.mxu0 %v7295
        %v7335 = vpop.f32.mrf.mxu0
        %v7336 = vadd.f32 0.0, %v7335
        %7337 = vmatmul.f32.gmra.mxu0 %v7298
        %v7338 = vpop.f32.mrf.mxu0
        %v7339 = vadd.f32 0.0, %v7338
        %7340 = vmatmul.f32.gmra.mxu0 %v7301
        %v7341 = vpop.f32.mrf.mxu0
        %v7342 = vadd.f32 0.0, %v7341
        %7343 = vmatmul.f32.gmra.mxu0 %v7304
        %v7344 = vpop.f32.mrf.mxu0
        %v7345 = vadd.f32 0.0, %v7344
        %7346 = vmatmul.f32.gmra.mxu0 %v7307
        %v7347 = vpop.f32.mrf.mxu0
        %v7348 = vadd.f32 0.0, %v7347
        %7349 = vmatmul.f32.gmra.mxu0 %v7310
        %v7350 = vpop.f32.mrf.mxu0
        %v7351 = vadd.f32 0.0, %v7350
        %7352 = vmatmul.f32.gmra.mxu0 %v7313
        %v7353 = vpop.f32.mrf.mxu0
        %v7354 = vadd.f32 0.0, %v7353
        %7355 = vmatmul.f32.gmra.mxu0 %v7316
        %v7356 = vpop.f32.mrf.mxu0
        %v7357 = vadd.f32 0.0, %v7356
        %7358 = vdwg.mxu0
        %v7359 = vadd.f32 %v7276, %v7336
        %v7360 = vadd.f32 %v7277, %v7339
        %v7361 = vadd.f32 %v7278, %v7342
        %v7362 = vadd.f32 %v7279, %v7345
        %v7363 = vadd.f32 %v7280, %v7348
        %v7364 = vadd.f32 %v7281, %v7351
        %v7365 = vadd.f32 %v7282, %v7354
        %v7366 = vadd.f32 %v7283, %v7357
        %s7367 = scalar_lea.vmem [#allocation2], 32
        %v7368 = vld [vmem:[%s7367] sm:$0xff]
        %v7369 = vld [vmem:[%s7367 + $0x10] sm:$0xff]
        %v7370 = vld [vmem:[%s7367 + $0x20] sm:$0xff]
        %v7371 = vld [vmem:[%s7367 + $0x30] sm:$0xff]
        %v7372 = vld [vmem:[%s7367 + $0x40] sm:$0xff]
        %v7373 = vld [vmem:[%s7367 + $0x50] sm:$0xff]
        %v7374 = vld [vmem:[%s7367 + $0x60] sm:$0xff]
        %v7375 = vld [vmem:[%s7367 + $0x70] sm:$0xff]
        %s7376 = scalar_lea.vmem %s3, 48
        %v7377 = vld [vmem:[%s7376] sm:$0xff]
        %v7379 = vsel %vm537, %v7368, 0
        %v7382 = vsel %vm537, %v7369, 0
        %v7385 = vsel %vm537, %v7370, 0
        %v7388 = vsel %vm537, %v7371, 0
        %v7391 = vsel %vm537, %v7372, 0
        %v7394 = vsel %vm537, %v7373, 0
        %v7397 = vsel %vm537, %v7374, 0
        %v7400 = vsel %vm537, %v7375, 0
        %7402 = vmatpush.msra.mxu0 0.0
        %7403 = vmatpush.msra.mxu0 0.0
        %7404 = vmatpush.msra.mxu0 0.0
        %7405 = vmatpush.msra.mxu0 0.0
        %7406 = vmatpush.msra.mxu0 0.0
        %7407 = vmatpush.msra.mxu0 0.0
        %7408 = vmatpush.msra.mxu0 0.0
        %7409 = vmatpush.msra.mxu0 0.0
        %7410 = vmatpush.msra.mxu0 0.0
        %7411 = vmatpush.msra.mxu0 0.0
        %7412 = vmatpush.msra.mxu0 0.0
        %7413 = vmatpush.msra.mxu0 0.0
        %7414 = vmatpush.msra.mxu0 0.0
        %7415 = vmatpush.msra.mxu0 0.0
        %7416 = vmatpush.msra.mxu0 0.0
        %7417 = vmatpush.msra.mxu0 %v7377
        %7418 = vmatmul.f32.gmra.mxu0 %v7379
        %v7419 = vpop.f32.mrf.mxu0
        %v7420 = vadd.f32 0.0, %v7419
        %7421 = vmatmul.f32.gmra.mxu0 %v7382
        %v7422 = vpop.f32.mrf.mxu0
        %v7423 = vadd.f32 0.0, %v7422
        %7424 = vmatmul.f32.gmra.mxu0 %v7385
        %v7425 = vpop.f32.mrf.mxu0
        %v7426 = vadd.f32 0.0, %v7425
        %7427 = vmatmul.f32.gmra.mxu0 %v7388
        %v7428 = vpop.f32.mrf.mxu0
        %v7429 = vadd.f32 0.0, %v7428
        %7430 = vmatmul.f32.gmra.mxu0 %v7391
        %v7431 = vpop.f32.mrf.mxu0
        %v7432 = vadd.f32 0.0, %v7431
        %7433 = vmatmul.f32.gmra.mxu0 %v7394
        %v7434 = vpop.f32.mrf.mxu0
        %v7435 = vadd.f32 0.0, %v7434
        %7436 = vmatmul.f32.gmra.mxu0 %v7397
        %v7437 = vpop.f32.mrf.mxu0
        %v7438 = vadd.f32 0.0, %v7437
        %7439 = vmatmul.f32.gmra.mxu0 %v7400
        %v7440 = vpop.f32.mrf.mxu0
        %v7441 = vadd.f32 0.0, %v7440
        %7442 = vdwg.mxu0
        %v7443 = vadd.f32 %v7359, %v7420
        %v7444 = vadd.f32 %v7360, %v7423
        %v7445 = vadd.f32 %v7361, %v7426
        %v7446 = vadd.f32 %v7362, %v7429
        %v7447 = vadd.f32 %v7363, %v7432
        %v7448 = vadd.f32 %v7364, %v7435
        %v7449 = vadd.f32 %v7365, %v7438
        %v7450 = vadd.f32 %v7366, %v7441
        %v7451 = vld [vmem:[%s7367 + $0x1] sm:$0xff]
        %v7452 = vld [vmem:[%s7367 + $0x11] sm:$0xff]
        %v7453 = vld [vmem:[%s7367 + $0x21] sm:$0xff]
        %v7454 = vld [vmem:[%s7367 + $0x31] sm:$0xff]
        %v7455 = vld [vmem:[%s7367 + $0x41] sm:$0xff]
        %v7456 = vld [vmem:[%s7367 + $0x51] sm:$0xff]
        %v7457 = vld [vmem:[%s7367 + $0x61] sm:$0xff]
        %v7458 = vld [vmem:[%s7367 + $0x71] sm:$0xff]
        %s7459 = scalar_lea.vmem %s3, 56
        %v7460 = vld [vmem:[%s7459] sm:$0xff]
        %v7462 = vsel %vm537, %v7451, 0
        %v7465 = vsel %vm537, %v7452, 0
        %v7468 = vsel %vm537, %v7453, 0
        %v7471 = vsel %vm537, %v7454, 0
        %v7474 = vsel %vm537, %v7455, 0
        %v7477 = vsel %vm537, %v7456, 0
        %v7480 = vsel %vm537, %v7457, 0
        %v7483 = vsel %vm537, %v7458, 0
        %7485 = vmatpush.msra.mxu0 0.0
        %7486 = vmatpush.msra.mxu0 0.0
        %7487 = vmatpush.msra.mxu0 0.0
        %7488 = vmatpush.msra.mxu0 0.0
        %7489 = vmatpush.msra.mxu0 0.0
        %7490 = vmatpush.msra.mxu0 0.0
        %7491 = vmatpush.msra.mxu0 0.0
        %7492 = vmatpush.msra.mxu0 0.0
        %7493 = vmatpush.msra.mxu0 0.0
        %7494 = vmatpush.msra.mxu0 0.0
        %7495 = vmatpush.msra.mxu0 0.0
        %7496 = vmatpush.msra.mxu0 0.0
        %7497 = vmatpush.msra.mxu0 0.0
        %7498 = vmatpush.msra.mxu0 0.0
        %7499 = vmatpush.msra.mxu0 0.0
        %7500 = vmatpush.msra.mxu0 %v7460
        %7501 = vmatmul.f32.gmra.mxu0 %v7462
        %v7502 = vpop.f32.mrf.mxu0
        %v7503 = vadd.f32 0.0, %v7502
        %7504 = vmatmul.f32.gmra.mxu0 %v7465
        %v7505 = vpop.f32.mrf.mxu0
        %v7506 = vadd.f32 0.0, %v7505
        %7507 = vmatmul.f32.gmra.mxu0 %v7468
        %v7508 = vpop.f32.mrf.mxu0
        %v7509 = vadd.f32 0.0, %v7508
        %7510 = vmatmul.f32.gmra.mxu0 %v7471
        %v7511 = vpop.f32.mrf.mxu0
        %v7512 = vadd.f32 0.0, %v7511
        %7513 = vmatmul.f32.gmra.mxu0 %v7474
        %v7514 = vpop.f32.mrf.mxu0
        %v7515 = vadd.f32 0.0, %v7514
        %7516 = vmatmul.f32.gmra.mxu0 %v7477
        %v7517 = vpop.f32.mrf.mxu0
        %v7518 = vadd.f32 0.0, %v7517
        %7519 = vmatmul.f32.gmra.mxu0 %v7480
        %v7520 = vpop.f32.mrf.mxu0
        %v7521 = vadd.f32 0.0, %v7520
        %7522 = vmatmul.f32.gmra.mxu0 %v7483
        %v7523 = vpop.f32.mrf.mxu0
        %v7524 = vadd.f32 0.0, %v7523
        %7525 = vdwg.mxu0
        %v7526 = vadd.f32 %v7443, %v7503
        %v7527 = vadd.f32 %v7444, %v7506
        %v7528 = vadd.f32 %v7445, %v7509
        %v7529 = vadd.f32 %v7446, %v7512
        %v7530 = vadd.f32 %v7447, %v7515
        %v7531 = vadd.f32 %v7448, %v7518
        %v7532 = vadd.f32 %v7449, %v7521
        %v7533 = vadd.f32 %v7450, %v7524
        %v7534 = vld [vmem:[%s7367 + $0x2] sm:$0xff]
        %v7535 = vld [vmem:[%s7367 + $0x12] sm:$0xff]
        %v7536 = vld [vmem:[%s7367 + $0x22] sm:$0xff]
        %v7537 = vld [vmem:[%s7367 + $0x32] sm:$0xff]
        %v7538 = vld [vmem:[%s7367 + $0x42] sm:$0xff]
        %v7539 = vld [vmem:[%s7367 + $0x52] sm:$0xff]
        %v7540 = vld [vmem:[%s7367 + $0x62] sm:$0xff]
        %v7541 = vld [vmem:[%s7367 + $0x72] sm:$0xff]
        %s7542 = scalar_lea.vmem %s3, 64
        %v7543 = vld [vmem:[%s7542] sm:$0xff]
        %v7545 = vsel %vm537, %v7534, 0
        %v7548 = vsel %vm537, %v7535, 0
        %v7551 = vsel %vm537, %v7536, 0
        %v7554 = vsel %vm537, %v7537, 0
        %v7557 = vsel %vm537, %v7538, 0
        %v7560 = vsel %vm537, %v7539, 0
        %v7563 = vsel %vm537, %v7540, 0
        %v7566 = vsel %vm537, %v7541, 0
        %7568 = vmatpush.msra.mxu0 0.0
        %7569 = vmatpush.msra.mxu0 0.0
        %7570 = vmatpush.msra.mxu0 0.0
        %7571 = vmatpush.msra.mxu0 0.0
        %7572 = vmatpush.msra.mxu0 0.0
        %7573 = vmatpush.msra.mxu0 0.0
        %7574 = vmatpush.msra.mxu0 0.0
        %7575 = vmatpush.msra.mxu0 0.0
        %7576 = vmatpush.msra.mxu0 0.0
        %7577 = vmatpush.msra.mxu0 0.0
        %7578 = vmatpush.msra.mxu0 0.0
        %7579 = vmatpush.msra.mxu0 0.0
        %7580 = vmatpush.msra.mxu0 0.0
        %7581 = vmatpush.msra.mxu0 0.0
        %7582 = vmatpush.msra.mxu0 0.0
        %7583 = vmatpush.msra.mxu0 %v7543
        %7584 = vmatmul.f32.gmra.mxu0 %v7545
        %v7585 = vpop.f32.mrf.mxu0
        %v7586 = vadd.f32 0.0, %v7585
        %7587 = vmatmul.f32.gmra.mxu0 %v7548
        %v7588 = vpop.f32.mrf.mxu0
        %v7589 = vadd.f32 0.0, %v7588
        %7590 = vmatmul.f32.gmra.mxu0 %v7551
        %v7591 = vpop.f32.mrf.mxu0
        %v7592 = vadd.f32 0.0, %v7591
        %7593 = vmatmul.f32.gmra.mxu0 %v7554
        %v7594 = vpop.f32.mrf.mxu0
        %v7595 = vadd.f32 0.0, %v7594
        %7596 = vmatmul.f32.gmra.mxu0 %v7557
        %v7597 = vpop.f32.mrf.mxu0
        %v7598 = vadd.f32 0.0, %v7597
        %7599 = vmatmul.f32.gmra.mxu0 %v7560
        %v7600 = vpop.f32.mrf.mxu0
        %v7601 = vadd.f32 0.0, %v7600
        %7602 = vmatmul.f32.gmra.mxu0 %v7563
        %v7603 = vpop.f32.mrf.mxu0
        %v7604 = vadd.f32 0.0, %v7603
        %7605 = vmatmul.f32.gmra.mxu0 %v7566
        %v7606 = vpop.f32.mrf.mxu0
        %v7607 = vadd.f32 0.0, %v7606
        %7608 = vdwg.mxu0
        %v7609 = vadd.f32 %v7526, %v7586
        %v7610 = vadd.f32 %v7527, %v7589
        %v7611 = vadd.f32 %v7528, %v7592
        %v7612 = vadd.f32 %v7529, %v7595
        %v7613 = vadd.f32 %v7530, %v7598
        %v7614 = vadd.f32 %v7531, %v7601
        %v7615 = vadd.f32 %v7532, %v7604
        %v7616 = vadd.f32 %v7533, %v7607
        %v7617 = vld [vmem:[%s4] sm:$0x1]
        %v7619 = vperm.slane %v7617, 0
        %v7621 = vadd.f32 %v7609, %v7619
        %v7622 = vadd.f32 %v7610, %v7619
        %v7623 = vadd.f32 %v7611, %v7619
        %v7624 = vadd.f32 %v7612, %v7619
        %v7625 = vadd.f32 %v7613, %v7619
        %v7626 = vadd.f32 %v7614, %v7619
        %v7627 = vadd.f32 %v7615, %v7619
        %v7628 = vadd.f32 %v7616, %v7619
        %v7629 = vmax.f32 %v7621, 0.0
        %v7630 = vmax.f32 %v7622, 0.0
        %v7631 = vmax.f32 %v7623, 0.0
        %v7632 = vmax.f32 %v7624, 0.0
        %v7633 = vmax.f32 %v7625, 0.0
        %v7634 = vmax.f32 %v7626, 0.0
        %v7635 = vmax.f32 %v7627, 0.0
        %v7636 = vmax.f32 %v7628, 0.0
        %v7645 = vrot.slane %v7629, 2
        %v7646 = vrot.slane %v7629, 4
        %v7647 = vrot.slane %v7629, 6
        %v7648 = vrot.slane %v7630, 2
        %v7649 = vrot.slane %v7630, 4
        %v7650 = vrot.slane %v7630, 6
        %v7651 = vrot.slane %v7631, 2
        %v7652 = vrot.slane %v7631, 4
        %v7653 = vrot.slane %v7631, 6
        %v7654 = vrot.slane %v7632, 2
        %v7655 = vrot.slane %v7632, 4
        %v7656 = vrot.slane %v7632, 6
        %v7657 = vrot.slane %v7633, 2
        %v7658 = vrot.slane %v7633, 4
        %v7659 = vrot.slane %v7633, 6
        %v7660 = vrot.slane %v7634, 2
        %v7661 = vrot.slane %v7634, 4
        %v7662 = vrot.slane %v7634, 6
        %v7663 = vrot.slane %v7635, 2
        %v7664 = vrot.slane %v7635, 4
        %v7665 = vrot.slane %v7635, 6
        %v7666 = vrot.slane %v7636, 2
        %v7667 = vrot.slane %v7636, 4
        %v7668 = vrot.slane %v7636, 6
        %vm7693 = vcmask 123904
        %v7694 = vsel %vm7693, %v7629, -inf
        %v7695 = vrot.slane %v7694, 4
        %v7696 = vmax.f32 %v7694, %v7695
        %v7697 = vrot.slane %v7696, 2
        %v7698 = vmax.f32 %v7696, %v7697
        %v7699 = vrot.slane %v7698, 1
        %v7700 = vmax.f32 %v7698, %v7699
        %v7701 = vsel %vm7693, %v7645, -inf
        %v7702 = vrot.slane %v7701, 4
        %v7703 = vmax.f32 %v7701, %v7702
        %v7704 = vrot.slane %v7703, 2
        %v7705 = vmax.f32 %v7703, %v7704
        %v7706 = vrot.slane %v7705, 1
        %v7707 = vmax.f32 %v7705, %v7706
        %v7708 = vsel %vm7693, %v7646, -inf
        %v7709 = vrot.slane %v7708, 4
        %v7710 = vmax.f32 %v7708, %v7709
        %v7711 = vrot.slane %v7710, 2
        %v7712 = vmax.f32 %v7710, %v7711
        %v7713 = vrot.slane %v7712, 1
        %v7714 = vmax.f32 %v7712, %v7713
        %v7715 = vsel %vm7693, %v7647, -inf
        %v7716 = vrot.slane %v7715, 4
        %v7717 = vmax.f32 %v7715, %v7716
        %v7718 = vrot.slane %v7717, 2
        %v7719 = vmax.f32 %v7717, %v7718
        %v7720 = vrot.slane %v7719, 1
        %v7721 = vmax.f32 %v7719, %v7720
        %v7722 = vsel %vm7693, %v7630, -inf
        %v7723 = vrot.slane %v7722, 4
        %v7724 = vmax.f32 %v7722, %v7723
        %v7725 = vrot.slane %v7724, 2
        %v7726 = vmax.f32 %v7724, %v7725
        %v7727 = vrot.slane %v7726, 1
        %v7728 = vmax.f32 %v7726, %v7727
        %v7729 = vsel %vm7693, %v7648, -inf
        %v7730 = vrot.slane %v7729, 4
        %v7731 = vmax.f32 %v7729, %v7730
        %v7732 = vrot.slane %v7731, 2
        %v7733 = vmax.f32 %v7731, %v7732
        %v7734 = vrot.slane %v7733, 1
        %v7735 = vmax.f32 %v7733, %v7734
        %v7736 = vsel %vm7693, %v7649, -inf
        %v7737 = vrot.slane %v7736, 4
        %v7738 = vmax.f32 %v7736, %v7737
        %v7739 = vrot.slane %v7738, 2
        %v7740 = vmax.f32 %v7738, %v7739
        %v7741 = vrot.slane %v7740, 1
        %v7742 = vmax.f32 %v7740, %v7741
        %v7743 = vsel %vm7693, %v7650, -inf
        %v7744 = vrot.slane %v7743, 4
        %v7745 = vmax.f32 %v7743, %v7744
        %v7746 = vrot.slane %v7745, 2
        %v7747 = vmax.f32 %v7745, %v7746
        %v7748 = vrot.slane %v7747, 1
        %v7749 = vmax.f32 %v7747, %v7748
        %v7750 = vsel %vm7693, %v7631, -inf
        %v7751 = vrot.slane %v7750, 4
        %v7752 = vmax.f32 %v7750, %v7751
        %v7753 = vrot.slane %v7752, 2
        %v7754 = vmax.f32 %v7752, %v7753
        %v7755 = vrot.slane %v7754, 1
        %v7756 = vmax.f32 %v7754, %v7755
        %v7757 = vsel %vm7693, %v7651, -inf
        %v7758 = vrot.slane %v7757, 4
        %v7759 = vmax.f32 %v7757, %v7758
        %v7760 = vrot.slane %v7759, 2
        %v7761 = vmax.f32 %v7759, %v7760
        %v7762 = vrot.slane %v7761, 1
        %v7763 = vmax.f32 %v7761, %v7762
        %v7764 = vsel %vm7693, %v7652, -inf
        %v7765 = vrot.slane %v7764, 4
        %v7766 = vmax.f32 %v7764, %v7765
        %v7767 = vrot.slane %v7766, 2
        %v7768 = vmax.f32 %v7766, %v7767
        %v7769 = vrot.slane %v7768, 1
        %v7770 = vmax.f32 %v7768, %v7769
        %v7771 = vsel %vm7693, %v7653, -inf
        %v7772 = vrot.slane %v7771, 4
        %v7773 = vmax.f32 %v7771, %v7772
        %v7774 = vrot.slane %v7773, 2
        %v7775 = vmax.f32 %v7773, %v7774
        %v7776 = vrot.slane %v7775, 1
        %v7777 = vmax.f32 %v7775, %v7776
        %v7778 = vsel %vm7693, %v7632, -inf
        %v7779 = vrot.slane %v7778, 4
        %v7780 = vmax.f32 %v7778, %v7779
        %v7781 = vrot.slane %v7780, 2
        %v7782 = vmax.f32 %v7780, %v7781
        %v7783 = vrot.slane %v7782, 1
        %v7784 = vmax.f32 %v7782, %v7783
        %v7785 = vsel %vm7693, %v7654, -inf
        %v7786 = vrot.slane %v7785, 4
        %v7787 = vmax.f32 %v7785, %v7786
        %v7788 = vrot.slane %v7787, 2
        %v7789 = vmax.f32 %v7787, %v7788
        %v7790 = vrot.slane %v7789, 1
        %v7791 = vmax.f32 %v7789, %v7790
        %v7792 = vsel %vm7693, %v7655, -inf
        %v7793 = vrot.slane %v7792, 4
        %v7794 = vmax.f32 %v7792, %v7793
        %v7795 = vrot.slane %v7794, 2
        %v7796 = vmax.f32 %v7794, %v7795
        %v7797 = vrot.slane %v7796, 1
        %v7798 = vmax.f32 %v7796, %v7797
        %v7799 = vsel %vm7693, %v7656, -inf
        %v7800 = vrot.slane %v7799, 4
        %v7801 = vmax.f32 %v7799, %v7800
        %v7802 = vrot.slane %v7801, 2
        %v7803 = vmax.f32 %v7801, %v7802
        %v7804 = vrot.slane %v7803, 1
        %v7805 = vmax.f32 %v7803, %v7804
        %v7806 = vsel %vm7693, %v7633, -inf
        %v7807 = vrot.slane %v7806, 4
        %v7808 = vmax.f32 %v7806, %v7807
        %v7809 = vrot.slane %v7808, 2
        %v7810 = vmax.f32 %v7808, %v7809
        %v7811 = vrot.slane %v7810, 1
        %v7812 = vmax.f32 %v7810, %v7811
        %v7813 = vsel %vm7693, %v7657, -inf
        %v7814 = vrot.slane %v7813, 4
        %v7815 = vmax.f32 %v7813, %v7814
        %v7816 = vrot.slane %v7815, 2
        %v7817 = vmax.f32 %v7815, %v7816
        %v7818 = vrot.slane %v7817, 1
        %v7819 = vmax.f32 %v7817, %v7818
        %v7820 = vsel %vm7693, %v7658, -inf
        %v7821 = vrot.slane %v7820, 4
        %v7822 = vmax.f32 %v7820, %v7821
        %v7823 = vrot.slane %v7822, 2
        %v7824 = vmax.f32 %v7822, %v7823
        %v7825 = vrot.slane %v7824, 1
        %v7826 = vmax.f32 %v7824, %v7825
        %v7827 = vsel %vm7693, %v7659, -inf
        %v7828 = vrot.slane %v7827, 4
        %v7829 = vmax.f32 %v7827, %v7828
        %v7830 = vrot.slane %v7829, 2
        %v7831 = vmax.f32 %v7829, %v7830
        %v7832 = vrot.slane %v7831, 1
        %v7833 = vmax.f32 %v7831, %v7832
        %v7834 = vsel %vm7693, %v7634, -inf
        %v7835 = vrot.slane %v7834, 4
        %v7836 = vmax.f32 %v7834, %v7835
        %v7837 = vrot.slane %v7836, 2
        %v7838 = vmax.f32 %v7836, %v7837
        %v7839 = vrot.slane %v7838, 1
        %v7840 = vmax.f32 %v7838, %v7839
        %v7841 = vsel %vm7693, %v7660, -inf
        %v7842 = vrot.slane %v7841, 4
        %v7843 = vmax.f32 %v7841, %v7842
        %v7844 = vrot.slane %v7843, 2
        %v7845 = vmax.f32 %v7843, %v7844
        %v7846 = vrot.slane %v7845, 1
        %v7847 = vmax.f32 %v7845, %v7846
        %v7848 = vsel %vm7693, %v7661, -inf
        %v7849 = vrot.slane %v7848, 4
        %v7850 = vmax.f32 %v7848, %v7849
        %v7851 = vrot.slane %v7850, 2
        %v7852 = vmax.f32 %v7850, %v7851
        %v7853 = vrot.slane %v7852, 1
        %v7854 = vmax.f32 %v7852, %v7853
        %v7855 = vsel %vm7693, %v7662, -inf
        %v7856 = vrot.slane %v7855, 4
        %v7857 = vmax.f32 %v7855, %v7856
        %v7858 = vrot.slane %v7857, 2
        %v7859 = vmax.f32 %v7857, %v7858
        %v7860 = vrot.slane %v7859, 1
        %v7861 = vmax.f32 %v7859, %v7860
        %v7862 = vsel %vm7693, %v7635, -inf
        %v7863 = vrot.slane %v7862, 4
        %v7864 = vmax.f32 %v7862, %v7863
        %v7865 = vrot.slane %v7864, 2
        %v7866 = vmax.f32 %v7864, %v7865
        %v7867 = vrot.slane %v7866, 1
        %v7868 = vmax.f32 %v7866, %v7867
        %v7869 = vsel %vm7693, %v7663, -inf
        %v7870 = vrot.slane %v7869, 4
        %v7871 = vmax.f32 %v7869, %v7870
        %v7872 = vrot.slane %v7871, 2
        %v7873 = vmax.f32 %v7871, %v7872
        %v7874 = vrot.slane %v7873, 1
        %v7875 = vmax.f32 %v7873, %v7874
        %v7876 = vsel %vm7693, %v7664, -inf
        %v7877 = vrot.slane %v7876, 4
        %v7878 = vmax.f32 %v7876, %v7877
        %v7879 = vrot.slane %v7878, 2
        %v7880 = vmax.f32 %v7878, %v7879
        %v7881 = vrot.slane %v7880, 1
        %v7882 = vmax.f32 %v7880, %v7881
        %v7883 = vsel %vm7693, %v7665, -inf
        %v7884 = vrot.slane %v7883, 4
        %v7885 = vmax.f32 %v7883, %v7884
        %v7886 = vrot.slane %v7885, 2
        %v7887 = vmax.f32 %v7885, %v7886
        %v7888 = vrot.slane %v7887, 1
        %v7889 = vmax.f32 %v7887, %v7888
        %v7890 = vsel %vm7693, %v7636, -inf
        %v7891 = vrot.slane %v7890, 4
        %v7892 = vmax.f32 %v7890, %v7891
        %v7893 = vrot.slane %v7892, 2
        %v7894 = vmax.f32 %v7892, %v7893
        %v7895 = vrot.slane %v7894, 1
        %v7896 = vmax.f32 %v7894, %v7895
        %v7897 = vsel %vm7693, %v7666, -inf
        %v7898 = vrot.slane %v7897, 4
        %v7899 = vmax.f32 %v7897, %v7898
        %v7900 = vrot.slane %v7899, 2
        %v7901 = vmax.f32 %v7899, %v7900
        %v7902 = vrot.slane %v7901, 1
        %v7903 = vmax.f32 %v7901, %v7902
        %v7904 = vsel %vm7693, %v7667, -inf
        %v7905 = vrot.slane %v7904, 4
        %v7906 = vmax.f32 %v7904, %v7905
        %v7907 = vrot.slane %v7906, 2
        %v7908 = vmax.f32 %v7906, %v7907
        %v7909 = vrot.slane %v7908, 1
        %v7910 = vmax.f32 %v7908, %v7909
        %v7911 = vsel %vm7693, %v7668, -inf
        %v7912 = vrot.slane %v7911, 4
        %v7913 = vmax.f32 %v7911, %v7912
        %v7914 = vrot.slane %v7913, 2
        %v7915 = vmax.f32 %v7913, %v7914
        %v7916 = vrot.slane %v7915, 1
        %v7917 = vmax.f32 %v7915, %v7916
        %v7918 = vmax.f32 %v7700, %v7728
        %v7919 = vmax.f32 %v7707, %v7735
        %v7920 = vmax.f32 %v7714, %v7742
        %v7921 = vmax.f32 %v7721, %v7749
        %v7922 = vmax.f32 %v7756, %v7784
        %v7923 = vmax.f32 %v7763, %v7791
        %v7924 = vmax.f32 %v7770, %v7798
        %v7925 = vmax.f32 %v7777, %v7805
        %v7926 = vmax.f32 %v7812, %v7840
        %v7927 = vmax.f32 %v7819, %v7847
        %v7928 = vmax.f32 %v7826, %v7854
        %v7929 = vmax.f32 %v7833, %v7861
        %v7930 = vmax.f32 %v7868, %v7896
        %v7931 = vmax.f32 %v7875, %v7903
        %v7932 = vmax.f32 %v7882, %v7910
        %v7933 = vmax.f32 %v7889, %v7917
        %vm7934 = vcmask 128000
        %7935 = vst.msk [vmem:[#allocation3] sm:$0x3f] %vm7934, 0.0
        %7936 = vst.msk [vmem:[#allocation3 + $0x8] sm:$0x3f] %vm7934, 0.0
        %7937 = vst.msk [vmem:[#allocation3 + $0x10] sm:$0x3f] %vm7934, 0.0
        %7938 = vst.msk [vmem:[#allocation3 + $0x18] sm:$0x3f] %vm7934, 0.0
        %7939 = vst.msk [vmem:[#allocation3 + $0x20] sm:$0x3f] %vm7934, 0.0
        %7940 = vst.msk [vmem:[#allocation3 + $0x28] sm:$0x3f] %vm7934, 0.0
        %v7957 = vsel %vm6806, %v7919, %v7918
        %v7958 = vsel %vm6808, %v7920, %v7957
        %v7959 = vsel %vm6810, %v7921, %v7958
        %v7960 = vsel %vm6806, %v7923, %v7922
        %v7961 = vsel %vm6808, %v7924, %v7960
        %v7962 = vsel %vm6810, %v7925, %v7961
        %v7963 = vsel %vm6806, %v7927, %v7926
        %v7964 = vsel %vm6808, %v7928, %v7963
        %v7965 = vsel %vm6810, %v7929, %v7964
        %v7966 = vsel %vm6806, %v7931, %v7930
        %v7967 = vsel %vm6808, %v7932, %v7966
        %v7968 = vsel %vm6810, %v7933, %v7967
        %s7973 = scalar_lea.vmem [#allocation3], 8
        %vm7974 = vcmask 125952
        %7975 = vst.msk [vmem:[%s7973 + $0x1] sm:$0xf] %vm7974, %v7959
        %7976 = vst.msk [vmem:[%s7973 + $0x9] sm:$0xf] %vm7974, %v7962
        %7977 = vst.msk [vmem:[%s7973 + $0x11] sm:$0xf] %vm7974, %v7965
        %7978 = vst.msk [vmem:[%s7973 + $0x19] sm:$0xf] %vm7974, %v7968
        %v7979 = vld [vmem:[#allocation3] sm:$0xf]
        %v7980 = vld [vmem:[#allocation3 + $0x8] sm:$0xf]
        %v7981 = vld [vmem:[#allocation3 + $0x10] sm:$0xf]
        %v7982 = vld [vmem:[#allocation3 + $0x18] sm:$0xf]
        %v7983 = vld [vmem:[%s5] sm:$0xff]
        %v7984 = vld [vmem:[%s5 + $0x8] sm:$0xff]
        %v7985 = vld [vmem:[#allocation3 + $0x1] sm:$0xf]
        %v7986 = vld [vmem:[#allocation3 + $0x9] sm:$0xf]
        %v7987 = vld [vmem:[#allocation3 + $0x11] sm:$0xf]
        %v7988 = vld [vmem:[#allocation3 + $0x19] sm:$0xf]
        %s7989 = scalar_lea.vmem %s5, 16
        %v7990 = vld [vmem:[%s7989] sm:$0xff]
        %v7991 = vld [vmem:[%s7989 + $0x8] sm:$0xff]
        %7996 = vst [vmem:[#allocation1] ss:$2 sm:$0xff] %v7985
        %s7997 = scalar_lea.vmem [#allocation1], 1
        %7998 = vst [vmem:[%s7997] ss:$2 sm:$0xff] %v7986
        %s7999 = scalar_lea.vmem [#allocation1], 16
        %8000 = vst [vmem:[%s7999] ss:$2 sm:$0xff] %v7987
        %s8001 = scalar_lea.vmem [#allocation1], 17
        %8002 = vst [vmem:[%s8001] ss:$2 sm:$0xff] %v7988
        %v8003 = vld.sshfl [vmem:[#allocation1] sm:$0xff pattern:$0x75316420]
        %v8004 = vld.sshfl [vmem:[#allocation1 + $0x10] sm:$0xff pattern:$0x75316420]
        %vm8005 = vcmask 130048
        %v8006 = vsel %vm8005, %v8003, 0
        %v8008 = vsel %vm8005, %v8004, 0
        %8010 = vmatpush.msra.mxu0 0.0
        %8011 = vmatpush.msra.mxu0 0.0
        %8012 = vmatpush.msra.mxu0 0.0
        %8013 = vmatpush.msra.mxu0 0.0
        %8014 = vmatpush.msra.mxu0 0.0
        %8015 = vmatpush.msra.mxu0 0.0
        %8016 = vmatpush.msra.mxu0 0.0
        %8017 = vmatpush.msra.mxu0 0.0
        %8018 = vmatpush.msra.mxu0 0.0
        %8019 = vmatpush.msra.mxu0 0.0
        %8020 = vmatpush.msra.mxu0 0.0
        %8021 = vmatpush.msra.mxu0 0.0
        %8022 = vmatpush.msra.mxu0 0.0
        %8023 = vmatpush.msra.mxu0 0.0
        %8024 = vmatpush.msra.mxu0 %v7991
        %8025 = vmatpush.msra.mxu0 %v7990
        %8026 = vmatmul.f32.gmra.mxu0 %v8006
        %v8027 = vpop.f32.mrf.mxu0
        %v8028 = vadd.f32 0.0, %v8027
        %8029 = vmatmul.f32.gmra.mxu0 %v8008
        %v8030 = vpop.f32.mrf.mxu0
        %v8031 = vadd.f32 0.0, %v8030
        %8032 = vdwg.mxu0
        %8037 = vst [vmem:[#allocation1] ss:$2 sm:$0xff] %v7979
        %s8038 = scalar_lea.vmem [#allocation1], 1
        %8039 = vst [vmem:[%s8038] ss:$2 sm:$0xff] %v7980
        %s8040 = scalar_lea.vmem [#allocation1], 16
        %8041 = vst [vmem:[%s8040] ss:$2 sm:$0xff] %v7981
        %s8042 = scalar_lea.vmem [#allocation1], 17
        %8043 = vst [vmem:[%s8042] ss:$2 sm:$0xff] %v7982
        %v8044 = vld.sshfl [vmem:[#allocation1] sm:$0xff pattern:$0x75316420]
        %v8045 = vld.sshfl [vmem:[#allocation1 + $0x10] sm:$0xff pattern:$0x75316420]
        %v8046 = vsel %vm8005, %v8044, 0
        %v8048 = vsel %vm8005, %v8045, 0
        %8050 = vmatpush.msra.mxu0 0.0
        %8051 = vmatpush.msra.mxu0 0.0
        %8052 = vmatpush.msra.mxu0 0.0
        %8053 = vmatpush.msra.mxu0 0.0
        %8054 = vmatpush.msra.mxu0 0.0
        %8055 = vmatpush.msra.mxu0 0.0
        %8056 = vmatpush.msra.mxu0 0.0
        %8057 = vmatpush.msra.mxu0 0.0
        %8058 = vmatpush.msra.mxu0 0.0
        %8059 = vmatpush.msra.mxu0 0.0
        %8060 = vmatpush.msra.mxu0 0.0
        %8061 = vmatpush.msra.mxu0 0.0
        %8062 = vmatpush.msra.mxu0 0.0
        %8063 = vmatpush.msra.mxu0 0.0
        %8064 = vmatpush.msra.mxu0 %v7984
        %8065 = vmatpush.msra.mxu0 %v7983
        %8066 = vmatmul.f32.gmra.mxu0 %v8046
        %v8067 = vpop.f32.mrf.mxu0
        %v8068 = vadd.f32 %v8028, %v8067
        %8069 = vmatmul.f32.gmra.mxu0 %v8048
        %v8070 = vpop.f32.mrf.mxu0
        %v8071 = vadd.f32 %v8031, %v8070
        %8072 = vdwg.mxu0
        %v8073 = vld [vmem:[#allocation3 + $0x2] sm:$0xf]
        %v8074 = vld [vmem:[#allocation3 + $0xa] sm:$0xf]
        %v8075 = vld [vmem:[#allocation3 + $0x12] sm:$0xf]
        %v8076 = vld [vmem:[#allocation3 + $0x1a] sm:$0xf]
        %s8077 = scalar_lea.vmem %s5, 32
        %v8078 = vld [vmem:[%s8077] sm:$0xff]
        %v8079 = vld [vmem:[%s8077 + $0x8] sm:$0xff]
        %8084 = vst [vmem:[#allocation1] ss:$2 sm:$0xff] %v8073
        %s8085 = scalar_lea.vmem [#allocation1], 1
        %8086 = vst [vmem:[%s8085] ss:$2 sm:$0xff] %v8074
        %s8087 = scalar_lea.vmem [#allocation1], 16
        %8088 = vst [vmem:[%s8087] ss:$2 sm:$0xff] %v8075
        %s8089 = scalar_lea.vmem [#allocation1], 17
        %8090 = vst [vmem:[%s8089] ss:$2 sm:$0xff] %v8076
        %v8091 = vld.sshfl [vmem:[#allocation1] sm:$0xff pattern:$0x75316420]
        %v8092 = vld.sshfl [vmem:[#allocation1 + $0x10] sm:$0xff pattern:$0x75316420]
        %v8093 = vsel %vm8005, %v8091, 0
        %v8095 = vsel %vm8005, %v8092, 0
        %8097 = vmatpush.msra.mxu0 0.0
        %8098 = vmatpush.msra.mxu0 0.0
        %8099 = vmatpush.msra.mxu0 0.0
        %8100 = vmatpush.msra.mxu0 0.0
        %8101 = vmatpush.msra.mxu0 0.0
        %8102 = vmatpush.msra.mxu0 0.0
        %8103 = vmatpush.msra.mxu0 0.0
        %8104 = vmatpush.msra.mxu0 0.0
        %8105 = vmatpush.msra.mxu0 0.0
        %8106 = vmatpush.msra.mxu0 0.0
        %8107 = vmatpush.msra.mxu0 0.0
        %8108 = vmatpush.msra.mxu0 0.0
        %8109 = vmatpush.msra.mxu0 0.0
        %8110 = vmatpush.msra.mxu0 0.0
        %8111 = vmatpush.msra.mxu0 %v8079
        %8112 = vmatpush.msra.mxu0 %v8078
        %8113 = vmatmul.f32.gmra.mxu0 %v8093
        %v8114 = vpop.f32.mrf.mxu0
        %v8115 = vadd.f32 0.0, %v8114
        %8116 = vmatmul.f32.gmra.mxu0 %v8095
        %v8117 = vpop.f32.mrf.mxu0
        %v8118 = vadd.f32 0.0, %v8117
        %8119 = vdwg.mxu0
        %v8120 = vadd.f32 %v8068, %v8115
        %v8121 = vadd.f32 %v8071, %v8118
        %v8122 = vld [vmem:[%s7973] sm:$0xf]
        %v8123 = vld [vmem:[%s7973 + $0x8] sm:$0xf]
        %v8124 = vld [vmem:[%s7973 + $0x10] sm:$0xf]
        %v8125 = vld [vmem:[%s7973 + $0x18] sm:$0xf]
        %s8126 = scalar_lea.vmem %s5, 48
        %v8127 = vld [vmem:[%s8126] sm:$0xff]
        %v8128 = vld [vmem:[%s8126 + $0x8] sm:$0xff]
        %8133 = vst [vmem:[#allocation1] ss:$2 sm:$0xff] %v8122
        %s8134 = scalar_lea.vmem [#allocation1], 1
        %8135 = vst [vmem:[%s8134] ss:$2 sm:$0xff] %v8123
        %s8136 = scalar_lea.vmem [#allocation1], 16
        %8137 = vst [vmem:[%s8136] ss:$2 sm:$0xff] %v8124
        %s8138 = scalar_lea.vmem [#allocation1], 17
        %8139 = vst [vmem:[%s8138] ss:$2 sm:$0xff] %v8125
        %v8140 = vld.sshfl [vmem:[#allocation1] sm:$0xff pattern:$0x75316420]
        %v8141 = vld.sshfl [vmem:[#allocation1 + $0x10] sm:$0xff pattern:$0x75316420]
        %v8142 = vsel %vm8005, %v8140, 0
        %v8144 = vsel %vm8005, %v8141, 0
        %8146 = vmatpush.msra.mxu0 0.0
        %8147 = vmatpush.msra.mxu0 0.0
        %8148 = vmatpush.msra.mxu0 0.0
        %8149 = vmatpush.msra.mxu0 0.0
        %8150 = vmatpush.msra.mxu0 0.0
        %8151 = vmatpush.msra.mxu0 0.0
        %8152 = vmatpush.msra.mxu0 0.0
        %8153 = vmatpush.msra.mxu0 0.0
        %8154 = vmatpush.msra.mxu0 0.0
        %8155 = vmatpush.msra.mxu0 0.0
        %8156 = vmatpush.msra.mxu0 0.0
        %8157 = vmatpush.msra.mxu0 0.0
        %8158 = vmatpush.msra.mxu0 0.0
        %8159 = vmatpush.msra.mxu0 0.0
        %8160 = vmatpush.msra.mxu0 %v8128
        %8161 = vmatpush.msra.mxu0 %v8127
        %8162 = vmatmul.f32.gmra.mxu0 %v8142
        %v8163 = vpop.f32.mrf.mxu0
        %v8164 = vadd.f32 0.0, %v8163
        %8165 = vmatmul.f32.gmra.mxu0 %v8144
        %v8166 = vpop.f32.mrf.mxu0
        %v8167 = vadd.f32 0.0, %v8166
        %8168 = vdwg.mxu0
        %v8169 = vadd.f32 %v8120, %v8164
        %v8170 = vadd.f32 %v8121, %v8167
        %v8171 = vld [vmem:[%s7973 + $0x1] sm:$0xf]
        %v8172 = vld [vmem:[%s7973 + $0x9] sm:$0xf]
        %v8173 = vld [vmem:[%s7973 + $0x11] sm:$0xf]
        %v8174 = vld [vmem:[%s7973 + $0x19] sm:$0xf]
        %s8175 = scalar_lea.vmem %s5, 64
        %v8176 = vld [vmem:[%s8175] sm:$0xff]
        %v8177 = vld [vmem:[%s8175 + $0x8] sm:$0xff]
        %8182 = vst [vmem:[#allocation1] ss:$2 sm:$0xff] %v8171
        %s8183 = scalar_lea.vmem [#allocation1], 1
        %8184 = vst [vmem:[%s8183] ss:$2 sm:$0xff] %v8172
        %s8185 = scalar_lea.vmem [#allocation1], 16
        %8186 = vst [vmem:[%s8185] ss:$2 sm:$0xff] %v8173
        %s8187 = scalar_lea.vmem [#allocation1], 17
        %8188 = vst [vmem:[%s8187] ss:$2 sm:$0xff] %v8174
        %v8189 = vld.sshfl [vmem:[#allocation1] sm:$0xff pattern:$0x75316420]
        %v8190 = vld.sshfl [vmem:[#allocation1 + $0x10] sm:$0xff pattern:$0x75316420]
        %v8191 = vsel %vm8005, %v8189, 0
        %v8193 = vsel %vm8005, %v8190, 0
        %8195 = vmatpush.msra.mxu0 0.0
        %8196 = vmatpush.msra.mxu0 0.0
        %8197 = vmatpush.msra.mxu0 0.0
        %8198 = vmatpush.msra.mxu0 0.0
        %8199 = vmatpush.msra.mxu0 0.0
        %8200 = vmatpush.msra.mxu0 0.0
        %8201 = vmatpush.msra.mxu0 0.0
        %8202 = vmatpush.msra.mxu0 0.0
        %8203 = vmatpush.msra.mxu0 0.0
        %8204 = vmatpush.msra.mxu0 0.0
        %8205 = vmatpush.msra.mxu0 0.0
        %8206 = vmatpush.msra.mxu0 0.0
        %8207 = vmatpush.msra.mxu0 0.0
        %8208 = vmatpush.msra.mxu0 0.0
        %8209 = vmatpush.msra.mxu0 %v8177
        %8210 = vmatpush.msra.mxu0 %v8176
        %8211 = vmatmul.f32.gmra.mxu0 %v8191
        %v8212 = vpop.f32.mrf.mxu0
        %v8213 = vadd.f32 0.0, %v8212
        %8214 = vmatmul.f32.gmra.mxu0 %v8193
        %v8215 = vpop.f32.mrf.mxu0
        %v8216 = vadd.f32 0.0, %v8215
        %8217 = vdwg.mxu0
        %v8218 = vadd.f32 %v8169, %v8213
        %v8219 = vadd.f32 %v8170, %v8216
        %v8220 = vld [vmem:[%s7973 + $0x2] sm:$0xf]
        %v8221 = vld [vmem:[%s7973 + $0xa] sm:$0xf]
        %v8222 = vld [vmem:[%s7973 + $0x12] sm:$0xf]
        %v8223 = vld [vmem:[%s7973 + $0x1a] sm:$0xf]
        %s8224 = scalar_lea.vmem %s5, 80
        %v8225 = vld [vmem:[%s8224] sm:$0xff]
        %v8226 = vld [vmem:[%s8224 + $0x8] sm:$0xff]
        %8231 = vst [vmem:[#allocation1] ss:$2 sm:$0xff] %v8220
        %s8232 = scalar_lea.vmem [#allocation1], 1
        %8233 = vst [vmem:[%s8232] ss:$2 sm:$0xff] %v8221
        %s8234 = scalar_lea.vmem [#allocation1], 16
        %8235 = vst [vmem:[%s8234] ss:$2 sm:$0xff] %v8222
        %s8236 = scalar_lea.vmem [#allocation1], 17
        %8237 = vst [vmem:[%s8236] ss:$2 sm:$0xff] %v8223
        %v8238 = vld.sshfl [vmem:[#allocation1] sm:$0xff pattern:$0x75316420]
        %v8239 = vld.sshfl [vmem:[#allocation1 + $0x10] sm:$0xff pattern:$0x75316420]
        %v8240 = vsel %vm8005, %v8238, 0
        %v8242 = vsel %vm8005, %v8239, 0
        %8244 = vmatpush.msra.mxu0 0.0
        %8245 = vmatpush.msra.mxu0 0.0
        %8246 = vmatpush.msra.mxu0 0.0
        %8247 = vmatpush.msra.mxu0 0.0
        %8248 = vmatpush.msra.mxu0 0.0
        %8249 = vmatpush.msra.mxu0 0.0
        %8250 = vmatpush.msra.mxu0 0.0
        %8251 = vmatpush.msra.mxu0 0.0
        %8252 = vmatpush.msra.mxu0 0.0
        %8253 = vmatpush.msra.mxu0 0.0
        %8254 = vmatpush.msra.mxu0 0.0
        %8255 = vmatpush.msra.mxu0 0.0
        %8256 = vmatpush.msra.mxu0 0.0
        %8257 = vmatpush.msra.mxu0 0.0
        %8258 = vmatpush.msra.mxu0 %v8226
        %8259 = vmatpush.msra.mxu0 %v8225
        %8260 = vmatmul.f32.gmra.mxu0 %v8240
        %v8261 = vpop.f32.mrf.mxu0
        %v8262 = vadd.f32 0.0, %v8261
        %8263 = vmatmul.f32.gmra.mxu0 %v8242
        %v8264 = vpop.f32.mrf.mxu0
        %v8265 = vadd.f32 0.0, %v8264
        %8266 = vdwg.mxu0
        %v8267 = vadd.f32 %v8218, %v8262
        %v8268 = vadd.f32 %v8219, %v8265
        %s8269 = scalar_lea.vmem [#allocation3], 16
        %v8270 = vld [vmem:[%s8269] sm:$0xf]
        %v8271 = vld [vmem:[%s8269 + $0x8] sm:$0xf]
        %v8272 = vld [vmem:[%s8269 + $0x10] sm:$0xf]
        %v8273 = vld [vmem:[%s8269 + $0x18] sm:$0xf]
        %s8274 = scalar_lea.vmem %s5, 96
        %v8275 = vld [vmem:[%s8274] sm:$0xff]
        %v8276 = vld [vmem:[%s8274 + $0x8] sm:$0xff]
        %8281 = vst [vmem:[#allocation1] ss:$2 sm:$0xff] %v8270
        %s8282 = scalar_lea.vmem [#allocation1], 1
        %8283 = vst [vmem:[%s8282] ss:$2 sm:$0xff] %v8271
        %s8284 = scalar_lea.vmem [#allocation1], 16
        %8285 = vst [vmem:[%s8284] ss:$2 sm:$0xff] %v8272
        %s8286 = scalar_lea.vmem [#allocation1], 17
        %8287 = vst [vmem:[%s8286] ss:$2 sm:$0xff] %v8273
        %v8288 = vld.sshfl [vmem:[#allocation1] sm:$0xff pattern:$0x75316420]
        %v8289 = vld.sshfl [vmem:[#allocation1 + $0x10] sm:$0xff pattern:$0x75316420]
        %v8290 = vsel %vm8005, %v8288, 0
        %v8292 = vsel %vm8005, %v8289, 0
        %8294 = vmatpush.msra.mxu0 0.0
        %8295 = vmatpush.msra.mxu0 0.0
        %8296 = vmatpush.msra.mxu0 0.0
        %8297 = vmatpush.msra.mxu0 0.0
        %8298 = vmatpush.msra.mxu0 0.0
        %8299 = vmatpush.msra.mxu0 0.0
        %8300 = vmatpush.msra.mxu0 0.0
        %8301 = vmatpush.msra.mxu0 0.0
        %8302 = vmatpush.msra.mxu0 0.0
        %8303 = vmatpush.msra.mxu0 0.0
        %8304 = vmatpush.msra.mxu0 0.0
        %8305 = vmatpush.msra.mxu0 0.0
        %8306 = vmatpush.msra.mxu0 0.0
        %8307 = vmatpush.msra.mxu0 0.0
        %8308 = vmatpush.msra.mxu0 %v8276
        %8309 = vmatpush.msra.mxu0 %v8275
        %8310 = vmatmul.f32.gmra.mxu0 %v8290
        %v8311 = vpop.f32.mrf.mxu0
        %v8312 = vadd.f32 0.0, %v8311
        %8313 = vmatmul.f32.gmra.mxu0 %v8292
        %v8314 = vpop.f32.mrf.mxu0
        %v8315 = vadd.f32 0.0, %v8314
        %8316 = vdwg.mxu0
        %v8317 = vadd.f32 %v8267, %v8312
        %v8318 = vadd.f32 %v8268, %v8315
        %v8319 = vld [vmem:[%s8269 + $0x1] sm:$0xf]
        %v8320 = vld [vmem:[%s8269 + $0x9] sm:$0xf]
        %v8321 = vld [vmem:[%s8269 + $0x11] sm:$0xf]
        %v8322 = vld [vmem:[%s8269 + $0x19] sm:$0xf]
        %s8323 = scalar_lea.vmem %s5, 112
        %v8324 = vld [vmem:[%s8323] sm:$0xff]
        %v8325 = vld [vmem:[%s8323 + $0x8] sm:$0xff]
        %8330 = vst [vmem:[#allocation1] ss:$2 sm:$0xff] %v8319
        %s8331 = scalar_lea.vmem [#allocation1], 1
        %8332 = vst [vmem:[%s8331] ss:$2 sm:$0xff] %v8320
        %s8333 = scalar_lea.vmem [#allocation1], 16
        %8334 = vst [vmem:[%s8333] ss:$2 sm:$0xff] %v8321
        %s8335 = scalar_lea.vmem [#allocation1], 17
        %8336 = vst [vmem:[%s8335] ss:$2 sm:$0xff] %v8322
        %v8337 = vld.sshfl [vmem:[#allocation1] sm:$0xff pattern:$0x75316420]
        %v8338 = vld.sshfl [vmem:[#allocation1 + $0x10] sm:$0xff pattern:$0x75316420]
        %v8339 = vsel %vm8005, %v8337, 0
        %v8341 = vsel %vm8005, %v8338, 0
        %8343 = vmatpush.msra.mxu0 0.0
        %8344 = vmatpush.msra.mxu0 0.0
        %8345 = vmatpush.msra.mxu0 0.0
        %8346 = vmatpush.msra.mxu0 0.0
        %8347 = vmatpush.msra.mxu0 0.0
        %8348 = vmatpush.msra.mxu0 0.0
        %8349 = vmatpush.msra.mxu0 0.0
        %8350 = vmatpush.msra.mxu0 0.0
        %8351 = vmatpush.msra.mxu0 0.0
        %8352 = vmatpush.msra.mxu0 0.0
        %8353 = vmatpush.msra.mxu0 0.0
        %8354 = vmatpush.msra.mxu0 0.0
        %8355 = vmatpush.msra.mxu0 0.0
        %8356 = vmatpush.msra.mxu0 0.0
        %8357 = vmatpush.msra.mxu0 %v8325
        %8358 = vmatpush.msra.mxu0 %v8324
        %8359 = vmatmul.f32.gmra.mxu0 %v8339
        %v8360 = vpop.f32.mrf.mxu0
        %v8361 = vadd.f32 0.0, %v8360
        %8362 = vmatmul.f32.gmra.mxu0 %v8341
        %v8363 = vpop.f32.mrf.mxu0
        %v8364 = vadd.f32 0.0, %v8363
        %8365 = vdwg.mxu0
        %v8366 = vadd.f32 %v8317, %v8361
        %v8367 = vadd.f32 %v8318, %v8364
        %v8368 = vld [vmem:[%s8269 + $0x2] sm:$0xf]
        %v8369 = vld [vmem:[%s8269 + $0xa] sm:$0xf]
        %v8370 = vld [vmem:[%s8269 + $0x12] sm:$0xf]
        %v8371 = vld [vmem:[%s8269 + $0x1a] sm:$0xf]
        %s8372 = scalar_lea.vmem %s5, 128
        %v8373 = vld [vmem:[%s8372] sm:$0xff]
        %v8374 = vld [vmem:[%s8372 + $0x8] sm:$0xff]
        %8379 = vst [vmem:[#allocation1] ss:$2 sm:$0xff] %v8368
        %s8380 = scalar_lea.vmem [#allocation1], 1
        %8381 = vst [vmem:[%s8380] ss:$2 sm:$0xff] %v8369
        %s8382 = scalar_lea.vmem [#allocation1], 16
        %8383 = vst [vmem:[%s8382] ss:$2 sm:$0xff] %v8370
        %s8384 = scalar_lea.vmem [#allocation1], 17
        %8385 = vst [vmem:[%s8384] ss:$2 sm:$0xff] %v8371
        %v8386 = vld.sshfl [vmem:[#allocation1] sm:$0xff pattern:$0x75316420]
        %v8387 = vld.sshfl [vmem:[#allocation1 + $0x10] sm:$0xff pattern:$0x75316420]
        %v8388 = vsel %vm8005, %v8386, 0
        %v8390 = vsel %vm8005, %v8387, 0
        %8392 = vmatpush.msra.mxu0 0.0
        %8393 = vmatpush.msra.mxu0 0.0
        %8394 = vmatpush.msra.mxu0 0.0
        %8395 = vmatpush.msra.mxu0 0.0
        %8396 = vmatpush.msra.mxu0 0.0
        %8397 = vmatpush.msra.mxu0 0.0
        %8398 = vmatpush.msra.mxu0 0.0
        %8399 = vmatpush.msra.mxu0 0.0
        %8400 = vmatpush.msra.mxu0 0.0
        %8401 = vmatpush.msra.mxu0 0.0
        %8402 = vmatpush.msra.mxu0 0.0
        %8403 = vmatpush.msra.mxu0 0.0
        %8404 = vmatpush.msra.mxu0 0.0
        %8405 = vmatpush.msra.mxu0 0.0
        %8406 = vmatpush.msra.mxu0 %v8374
        %8407 = vmatpush.msra.mxu0 %v8373
        %8408 = vmatmul.f32.gmra.mxu0 %v8388
        %v8409 = vpop.f32.mrf.mxu0
        %v8410 = vadd.f32 0.0, %v8409
        %8411 = vmatmul.f32.gmra.mxu0 %v8390
        %v8412 = vpop.f32.mrf.mxu0
        %v8413 = vadd.f32 0.0, %v8412
        %8414 = vdwg.mxu0
        %v8415 = vadd.f32 %v8366, %v8410
        %v8416 = vadd.f32 %v8367, %v8413
        %v8417 = vld [vmem:[%s6] sm:$0x1]
        %v8419 = vperm.slane %v8417, 0
        %v8421 = vadd.f32 %v8415, %v8419
        %v8422 = vadd.f32 %v8416, %v8419
        %v8423 = vmax.f32 %v8421, 0.0
        %v8424 = vmax.f32 %v8422, 0.0
        %v8427 = vrot.slane %v8423, 2
        %v8428 = vrot.slane %v8423, 4
        %v8429 = vrot.slane %v8423, 6
        %v8430 = vrot.slane %v8424, 2
        %v8431 = vrot.slane %v8424, 4
        %v8432 = vrot.slane %v8424, 6
        %vm8439 = vcmask 254976
        %v8440 = vsel %vm8439, %v8423, -inf
        %v8441 = vrot.slane %v8440, 4
        %v8442 = vmax.f32 %v8440, %v8441
        %v8443 = vrot.slane %v8442, 2
        %v8444 = vmax.f32 %v8442, %v8443
        %v8445 = vrot.slane %v8444, 1
        %v8446 = vmax.f32 %v8444, %v8445
        %v8447 = vsel %vm8439, %v8427, -inf
        %v8448 = vrot.slane %v8447, 4
        %v8449 = vmax.f32 %v8447, %v8448
        %v8450 = vrot.slane %v8449, 2
        %v8451 = vmax.f32 %v8449, %v8450
        %v8452 = vrot.slane %v8451, 1
        %v8453 = vmax.f32 %v8451, %v8452
        %v8454 = vsel %vm8439, %v8428, -inf
        %v8455 = vrot.slane %v8454, 4
        %v8456 = vmax.f32 %v8454, %v8455
        %v8457 = vrot.slane %v8456, 2
        %v8458 = vmax.f32 %v8456, %v8457
        %v8459 = vrot.slane %v8458, 1
        %v8460 = vmax.f32 %v8458, %v8459
        %v8461 = vsel %vm8439, %v8429, -inf
        %v8462 = vrot.slane %v8461, 4
        %v8463 = vmax.f32 %v8461, %v8462
        %v8464 = vrot.slane %v8463, 2
        %v8465 = vmax.f32 %v8463, %v8464
        %v8466 = vrot.slane %v8465, 1
        %v8467 = vmax.f32 %v8465, %v8466
        %v8468 = vsel %vm8439, %v8424, -inf
        %v8469 = vrot.slane %v8468, 4
        %v8470 = vmax.f32 %v8468, %v8469
        %v8471 = vrot.slane %v8470, 2
        %v8472 = vmax.f32 %v8470, %v8471
        %v8473 = vrot.slane %v8472, 1
        %v8474 = vmax.f32 %v8472, %v8473
        %v8475 = vsel %vm8439, %v8430, -inf
        %v8476 = vrot.slane %v8475, 4
        %v8477 = vmax.f32 %v8475, %v8476
        %v8478 = vrot.slane %v8477, 2
        %v8479 = vmax.f32 %v8477, %v8478
        %v8480 = vrot.slane %v8479, 1
        %v8481 = vmax.f32 %v8479, %v8480
        %v8482 = vsel %vm8439, %v8431, -inf
        %v8483 = vrot.slane %v8482, 4
        %v8484 = vmax.f32 %v8482, %v8483
        %v8485 = vrot.slane %v8484, 2
        %v8486 = vmax.f32 %v8484, %v8485
        %v8487 = vrot.slane %v8486, 1
        %v8488 = vmax.f32 %v8486, %v8487
        %v8489 = vsel %vm8439, %v8432, -inf
        %v8490 = vrot.slane %v8489, 4
        %v8491 = vmax.f32 %v8489, %v8490
        %v8492 = vrot.slane %v8491, 2
        %v8493 = vmax.f32 %v8491, %v8492
        %v8494 = vrot.slane %v8493, 1
        %v8495 = vmax.f32 %v8493, %v8494
        %v8496 = vmax.f32 %v8446, %v8460
        %v8497 = vmax.f32 %v8453, %v8467
        %v8498 = vmax.f32 %v8474, %v8488
        %v8499 = vmax.f32 %v8481, %v8495
        %v8500 = vld [vmem:[%s8] sm:$0xf]
        %v8501 = vld [vmem:[%s7] sm:$0xff]
        %v8502 = vld [vmem:[%s7 + $0x8] sm:$0xff]
        %v8503 = vld [vmem:[%s7 + $0x10] sm:$0xff]
        %v8504 = vld [vmem:[%s7 + $0x18] sm:$0xff]
        %v8505 = vld [vmem:[%s7 + $0x20] sm:$0xff]
        %v8506 = vld [vmem:[%s7 + $0x28] sm:$0xff]
        %v8507 = vld [vmem:[%s7 + $0x30] sm:$0xff]
        %v8508 = vld [vmem:[%s7 + $0x38] sm:$0xff]
        %v8509 = vld [vmem:[%s7 + $0x40] sm:$0xff]
        %v8510 = vld [vmem:[%s7 + $0x48] sm:$0xff]
        %v8511 = vld [vmem:[%s7 + $0x50] sm:$0xff]
        %v8512 = vld [vmem:[%s7 + $0x58] sm:$0xff]
        %v8513 = vld [vmem:[%s7 + $0x60] sm:$0xff]
        %v8514 = vld [vmem:[%s7 + $0x68] sm:$0xff]
        %v8515 = vld [vmem:[%s7 + $0x70] sm:$0xff]
        %v8516 = vld [vmem:[%s7 + $0x78] sm:$0xff]
        %vm8517 = vcmask 261120
        %v8519 = vsel %vm8517, %v8496, 0
        %8521 = vmatpush.msra.mxu0 0.0
        %8522 = vmatpush.msra.mxu0 0.0
        %8523 = vmatpush.msra.mxu0 0.0
        %8524 = vmatpush.msra.mxu0 0.0
        %8525 = vmatpush.msra.mxu0 0.0
        %8526 = vmatpush.msra.mxu0 0.0
        %8527 = vmatpush.msra.mxu0 0.0
        %8528 = vmatpush.msra.mxu0 0.0
        %8529 = vmatpush.msra.mxu0 0.0
        %8530 = vmatpush.msra.mxu0 0.0
        %8531 = vmatpush.msra.mxu0 0.0
        %8532 = vmatpush.msra.mxu0 0.0
        %8533 = vmatpush.msra.mxu0 %v8513
        %8534 = vmatpush.msra.mxu0 %v8509
        %8535 = vmatpush.msra.mxu0 %v8505
        %8536 = vmatpush.msra.mxu0 %v8501
        %8537 = vmatmul.f32.gmra.mxu0 %v8519
        %v8538 = vpop.f32.mrf.mxu0
        %v8539 = vadd.f32 0.0, %v8538
        %8540 = vdwg.mxu0
        %8541 = vmatpush.msra.mxu0 0.0
        %8542 = vmatpush.msra.mxu0 0.0
        %8543 = vmatpush.msra.mxu0 0.0
        %8544 = vmatpush.msra.mxu0 0.0
        %8545 = vmatpush.msra.mxu0 0.0
        %8546 = vmatpush.msra.mxu0 0.0
        %8547 = vmatpush.msra.mxu0 0.0
        %8548 = vmatpush.msra.mxu0 0.0
        %8549 = vmatpush.msra.mxu0 0.0
        %8550 = vmatpush.msra.mxu0 0.0
        %8551 = vmatpush.msra.mxu0 0.0
        %8552 = vmatpush.msra.mxu0 0.0
        %8553 = vmatpush.msra.mxu0 %v8514
        %8554 = vmatpush.msra.mxu0 %v8510
        %8555 = vmatpush.msra.mxu0 %v8506
        %8556 = vmatpush.msra.mxu0 %v8502
        %8557 = vmatmul.f32.gmra.mxu0 %v8519
        %v8558 = vpop.f32.mrf.mxu0
        %v8559 = vadd.f32 0.0, %v8558
        %8560 = vdwg.mxu0
        %8561 = vmatpush.msra.mxu0 0.0
        %8562 = vmatpush.msra.mxu0 0.0
        %8563 = vmatpush.msra.mxu0 0.0
        %8564 = vmatpush.msra.mxu0 0.0
        %8565 = vmatpush.msra.mxu0 0.0
        %8566 = vmatpush.msra.mxu0 0.0
        %8567 = vmatpush.msra.mxu0 0.0
        %8568 = vmatpush.msra.mxu0 0.0
        %8569 = vmatpush.msra.mxu0 0.0
        %8570 = vmatpush.msra.mxu0 0.0
        %8571 = vmatpush.msra.mxu0 0.0
        %8572 = vmatpush.msra.mxu0 0.0
        %8573 = vmatpush.msra.mxu0 %v8515
        %8574 = vmatpush.msra.mxu0 %v8511
        %8575 = vmatpush.msra.mxu0 %v8507
        %8576 = vmatpush.msra.mxu0 %v8503
        %8577 = vmatmul.f32.gmra.mxu0 %v8519
        %v8578 = vpop.f32.mrf.mxu0
        %v8579 = vadd.f32 0.0, %v8578
        %8580 = vdwg.mxu0
        %8581 = vmatpush.msra.mxu0 0.0
        %8582 = vmatpush.msra.mxu0 0.0
        %8583 = vmatpush.msra.mxu0 0.0
        %8584 = vmatpush.msra.mxu0 0.0
        %8585 = vmatpush.msra.mxu0 0.0
        %8586 = vmatpush.msra.mxu0 0.0
        %8587 = vmatpush.msra.mxu0 0.0
        %8588 = vmatpush.msra.mxu0 0.0
        %8589 = vmatpush.msra.mxu0 0.0
        %8590 = vmatpush.msra.mxu0 0.0
        %8591 = vmatpush.msra.mxu0 0.0
        %8592 = vmatpush.msra.mxu0 0.0
        %8593 = vmatpush.msra.mxu0 %v8516
        %8594 = vmatpush.msra.mxu0 %v8512
        %8595 = vmatpush.msra.mxu0 %v8508
        %8596 = vmatpush.msra.mxu0 %v8504
        %8597 = vmatmul.f32.gmra.mxu0 %v8519
        %v8598 = vpop.f32.mrf.mxu0
        %v8599 = vadd.f32 0.0, %v8598
        %8600 = vdwg.mxu0
        %v8605 = vrot.slane %v8559, 7
        %v8606 = vrot.slane %v8579, 6
        %v8607 = vrot.slane %v8599, 5
        %vm8608 = vcmask 1040384
        %v8609 = vsel %vm8608, %v8539, %v8605
        %v8610 = vsel %vm6808, %v8606, %v8607
        %vm8611 = vcmask 1041408
        %v8612 = vsel %vm8611, %v8609, %v8610
        %v8614 = vadd.f32 %v8500, %v8612
        %s8615 = scalar_lea.vmem %s7, 128
        %v8616 = vld [vmem:[%s8615] sm:$0xff]
        %v8617 = vld [vmem:[%s8615 + $0x8] sm:$0xff]
        %v8618 = vld [vmem:[%s8615 + $0x10] sm:$0xff]
        %v8619 = vld [vmem:[%s8615 + $0x18] sm:$0xff]
        %v8620 = vld [vmem:[%s8615 + $0x20] sm:$0xff]
        %v8621 = vld [vmem:[%s8615 + $0x28] sm:$0xff]
        %v8622 = vld [vmem:[%s8615 + $0x30] sm:$0xff]
        %v8623 = vld [vmem:[%s8615 + $0x38] sm:$0xff]
        %v8624 = vld [vmem:[%s8615 + $0x40] sm:$0xff]
        %v8625 = vld [vmem:[%s8615 + $0x48] sm:$0xff]
        %v8626 = vld [vmem:[%s8615 + $0x50] sm:$0xff]
        %v8627 = vld [vmem:[%s8615 + $0x58] sm:$0xff]
        %v8628 = vld [vmem:[%s8615 + $0x60] sm:$0xff]
        %v8629 = vld [vmem:[%s8615 + $0x68] sm:$0xff]
        %v8630 = vld [vmem:[%s8615 + $0x70] sm:$0xff]
        %v8631 = vld [vmem:[%s8615 + $0x78] sm:$0xff]
        %v8633 = vsel %vm8517, %v8497, 0
        %8635 = vmatpush.msra.mxu0 0.0
        %8636 = vmatpush.msra.mxu0 0.0
        %8637 = vmatpush.msra.mxu0 0.0
        %8638 = vmatpush.msra.mxu0 0.0
        %8639 = vmatpush.msra.mxu0 0.0
        %8640 = vmatpush.msra.mxu0 0.0
        %8641 = vmatpush.msra.mxu0 0.0
        %8642 = vmatpush.msra.mxu0 0.0
        %8643 = vmatpush.msra.mxu0 0.0
        %8644 = vmatpush.msra.mxu0 0.0
        %8645 = vmatpush.msra.mxu0 0.0
        %8646 = vmatpush.msra.mxu0 0.0
        %8647 = vmatpush.msra.mxu0 %v8628
        %8648 = vmatpush.msra.mxu0 %v8624
        %8649 = vmatpush.msra.mxu0 %v8620
        %8650 = vmatpush.msra.mxu0 %v8616
        %8651 = vmatmul.f32.gmra.mxu0 %v8633
        %v8652 = vpop.f32.mrf.mxu0
        %v8653 = vadd.f32 0.0, %v8652
        %8654 = vdwg.mxu0
        %8655 = vmatpush.msra.mxu0 0.0
        %8656 = vmatpush.msra.mxu0 0.0
        %8657 = vmatpush.msra.mxu0 0.0
        %8658 = vmatpush.msra.mxu0 0.0
        %8659 = vmatpush.msra.mxu0 0.0
        %8660 = vmatpush.msra.mxu0 0.0
        %8661 = vmatpush.msra.mxu0 0.0
        %8662 = vmatpush.msra.mxu0 0.0
        %8663 = vmatpush.msra.mxu0 0.0
        %8664 = vmatpush.msra.mxu0 0.0
        %8665 = vmatpush.msra.mxu0 0.0
        %8666 = vmatpush.msra.mxu0 0.0
        %8667 = vmatpush.msra.mxu0 %v8629
        %8668 = vmatpush.msra.mxu0 %v8625
        %8669 = vmatpush.msra.mxu0 %v8621
        %8670 = vmatpush.msra.mxu0 %v8617
        %8671 = vmatmul.f32.gmra.mxu0 %v8633
        %v8672 = vpop.f32.mrf.mxu0
        %v8673 = vadd.f32 0.0, %v8672
        %8674 = vdwg.mxu0
        %8675 = vmatpush.msra.mxu0 0.0
        %8676 = vmatpush.msra.mxu0 0.0
        %8677 = vmatpush.msra.mxu0 0.0
        %8678 = vmatpush.msra.mxu0 0.0
        %8679 = vmatpush.msra.mxu0 0.0
        %8680 = vmatpush.msra.mxu0 0.0
        %8681 = vmatpush.msra.mxu0 0.0
        %8682 = vmatpush.msra.mxu0 0.0
        %8683 = vmatpush.msra.mxu0 0.0
        %8684 = vmatpush.msra.mxu0 0.0
        %8685 = vmatpush.msra.mxu0 0.0
        %8686 = vmatpush.msra.mxu0 0.0
        %8687 = vmatpush.msra.mxu0 %v8630
        %8688 = vmatpush.msra.mxu0 %v8626
        %8689 = vmatpush.msra.mxu0 %v8622
        %8690 = vmatpush.msra.mxu0 %v8618
        %8691 = vmatmul.f32.gmra.mxu0 %v8633
        %v8692 = vpop.f32.mrf.mxu0
        %v8693 = vadd.f32 0.0, %v8692
        %8694 = vdwg.mxu0
        %8695 = vmatpush.msra.mxu0 0.0
        %8696 = vmatpush.msra.mxu0 0.0
        %8697 = vmatpush.msra.mxu0 0.0
        %8698 = vmatpush.msra.mxu0 0.0
        %8699 = vmatpush.msra.mxu0 0.0
        %8700 = vmatpush.msra.mxu0 0.0
        %8701 = vmatpush.msra.mxu0 0.0
        %8702 = vmatpush.msra.mxu0 0.0
        %8703 = vmatpush.msra.mxu0 0.0
        %8704 = vmatpush.msra.mxu0 0.0
        %8705 = vmatpush.msra.mxu0 0.0
        %8706 = vmatpush.msra.mxu0 0.0
        %8707 = vmatpush.msra.mxu0 %v8631
        %8708 = vmatpush.msra.mxu0 %v8627
        %8709 = vmatpush.msra.mxu0 %v8623
        %8710 = vmatpush.msra.mxu0 %v8619
        %8711 = vmatmul.f32.gmra.mxu0 %v8633
        %v8712 = vpop.f32.mrf.mxu0
        %v8713 = vadd.f32 0.0, %v8712
        %8714 = vdwg.mxu0
        %v8719 = vrot.slane %v8673, 7
        %v8720 = vrot.slane %v8693, 6
        %v8721 = vrot.slane %v8713, 5
        %v8722 = vsel %vm8608, %v8653, %v8719
        %v8723 = vsel %vm6808, %v8720, %v8721
        %v8724 = vsel %vm8611, %v8722, %v8723
        %v8726 = vadd.f32 %v8614, %v8724
        %s8727 = scalar_lea.vmem %s7, 256
        %v8728 = vld [vmem:[%s8727] sm:$0xff]
        %v8729 = vld [vmem:[%s8727 + $0x8] sm:$0xff]
        %v8730 = vld [vmem:[%s8727 + $0x10] sm:$0xff]
        %v8731 = vld [vmem:[%s8727 + $0x18] sm:$0xff]
        %v8732 = vld [vmem:[%s8727 + $0x20] sm:$0xff]
        %v8733 = vld [vmem:[%s8727 + $0x28] sm:$0xff]
        %v8734 = vld [vmem:[%s8727 + $0x30] sm:$0xff]
        %v8735 = vld [vmem:[%s8727 + $0x38] sm:$0xff]
        %v8736 = vld [vmem:[%s8727 + $0x40] sm:$0xff]
        %v8737 = vld [vmem:[%s8727 + $0x48] sm:$0xff]
        %v8738 = vld [vmem:[%s8727 + $0x50] sm:$0xff]
        %v8739 = vld [vmem:[%s8727 + $0x58] sm:$0xff]
        %v8740 = vld [vmem:[%s8727 + $0x60] sm:$0xff]
        %v8741 = vld [vmem:[%s8727 + $0x68] sm:$0xff]
        %v8742 = vld [vmem:[%s8727 + $0x70] sm:$0xff]
        %v8743 = vld [vmem:[%s8727 + $0x78] sm:$0xff]
        %v8745 = vsel %vm8517, %v8498, 0
        %8747 = vmatpush.msra.mxu0 0.0
        %8748 = vmatpush.msra.mxu0 0.0
        %8749 = vmatpush.msra.mxu0 0.0
        %8750 = vmatpush.msra.mxu0 0.0
        %8751 = vmatpush.msra.mxu0 0.0
        %8752 = vmatpush.msra.mxu0 0.0
        %8753 = vmatpush.msra.mxu0 0.0
        %8754 = vmatpush.msra.mxu0 0.0
        %8755 = vmatpush.msra.mxu0 0.0
        %8756 = vmatpush.msra.mxu0 0.0
        %8757 = vmatpush.msra.mxu0 0.0
        %8758 = vmatpush.msra.mxu0 0.0
        %8759 = vmatpush.msra.mxu0 %v8740
        %8760 = vmatpush.msra.mxu0 %v8736
        %8761 = vmatpush.msra.mxu0 %v8732
        %8762 = vmatpush.msra.mxu0 %v8728
        %8763 = vmatmul.f32.gmra.mxu0 %v8745
        %v8764 = vpop.f32.mrf.mxu0
        %v8765 = vadd.f32 0.0, %v8764
        %8766 = vdwg.mxu0
        %8767 = vmatpush.msra.mxu0 0.0
        %8768 = vmatpush.msra.mxu0 0.0
        %8769 = vmatpush.msra.mxu0 0.0
        %8770 = vmatpush.msra.mxu0 0.0
        %8771 = vmatpush.msra.mxu0 0.0
        %8772 = vmatpush.msra.mxu0 0.0
        %8773 = vmatpush.msra.mxu0 0.0
        %8774 = vmatpush.msra.mxu0 0.0
        %8775 = vmatpush.msra.mxu0 0.0
        %8776 = vmatpush.msra.mxu0 0.0
        %8777 = vmatpush.msra.mxu0 0.0
        %8778 = vmatpush.msra.mxu0 0.0
        %8779 = vmatpush.msra.mxu0 %v8741
        %8780 = vmatpush.msra.mxu0 %v8737
        %8781 = vmatpush.msra.mxu0 %v8733
        %8782 = vmatpush.msra.mxu0 %v8729
        %8783 = vmatmul.f32.gmra.mxu0 %v8745
        %v8784 = vpop.f32.mrf.mxu0
        %v8785 = vadd.f32 0.0, %v8784
        %8786 = vdwg.mxu0
        %8787 = vmatpush.msra.mxu0 0.0
        %8788 = vmatpush.msra.mxu0 0.0
        %8789 = vmatpush.msra.mxu0 0.0
        %8790 = vmatpush.msra.mxu0 0.0
        %8791 = vmatpush.msra.mxu0 0.0
        %8792 = vmatpush.msra.mxu0 0.0
        %8793 = vmatpush.msra.mxu0 0.0
        %8794 = vmatpush.msra.mxu0 0.0
        %8795 = vmatpush.msra.mxu0 0.0
        %8796 = vmatpush.msra.mxu0 0.0
        %8797 = vmatpush.msra.mxu0 0.0
        %8798 = vmatpush.msra.mxu0 0.0
        %8799 = vmatpush.msra.mxu0 %v8742
        %8800 = vmatpush.msra.mxu0 %v8738
        %8801 = vmatpush.msra.mxu0 %v8734
        %8802 = vmatpush.msra.mxu0 %v8730
        %8803 = vmatmul.f32.gmra.mxu0 %v8745
        %v8804 = vpop.f32.mrf.mxu0
        %v8805 = vadd.f32 0.0, %v8804
        %8806 = vdwg.mxu0
        %8807 = vmatpush.msra.mxu0 0.0
        %8808 = vmatpush.msra.mxu0 0.0
        %8809 = vmatpush.msra.mxu0 0.0
        %8810 = vmatpush.msra.mxu0 0.0
        %8811 = vmatpush.msra.mxu0 0.0
        %8812 = vmatpush.msra.mxu0 0.0
        %8813 = vmatpush.msra.mxu0 0.0
        %8814 = vmatpush.msra.mxu0 0.0
        %8815 = vmatpush.msra.mxu0 0.0
        %8816 = vmatpush.msra.mxu0 0.0
        %8817 = vmatpush.msra.mxu0 0.0
        %8818 = vmatpush.msra.mxu0 0.0
        %8819 = vmatpush.msra.mxu0 %v8743
        %8820 = vmatpush.msra.mxu0 %v8739
        %8821 = vmatpush.msra.mxu0 %v8735
        %8822 = vmatpush.msra.mxu0 %v8731
        %8823 = vmatmul.f32.gmra.mxu0 %v8745
        %v8824 = vpop.f32.mrf.mxu0
        %v8825 = vadd.f32 0.0, %v8824
        %8826 = vdwg.mxu0
        %v8831 = vrot.slane %v8785, 7
        %v8832 = vrot.slane %v8805, 6
        %v8833 = vrot.slane %v8825, 5
        %v8834 = vsel %vm8608, %v8765, %v8831
        %v8835 = vsel %vm6808, %v8832, %v8833
        %v8836 = vsel %vm8611, %v8834, %v8835
        %v8838 = vadd.f32 %v8726, %v8836
        %s8839 = scalar_lea.vmem %s7, 384
        %v8840 = vld [vmem:[%s8839] sm:$0xff]
        %v8841 = vld [vmem:[%s8839 + $0x8] sm:$0xff]
        %v8842 = vld [vmem:[%s8839 + $0x10] sm:$0xff]
        %v8843 = vld [vmem:[%s8839 + $0x18] sm:$0xff]
        %v8844 = vld [vmem:[%s8839 + $0x20] sm:$0xff]
        %v8845 = vld [vmem:[%s8839 + $0x28] sm:$0xff]
        %v8846 = vld [vmem:[%s8839 + $0x30] sm:$0xff]
        %v8847 = vld [vmem:[%s8839 + $0x38] sm:$0xff]
        %v8848 = vld [vmem:[%s8839 + $0x40] sm:$0xff]
        %v8849 = vld [vmem:[%s8839 + $0x48] sm:$0xff]
        %v8850 = vld [vmem:[%s8839 + $0x50] sm:$0xff]
        %v8851 = vld [vmem:[%s8839 + $0x58] sm:$0xff]
        %v8852 = vld [vmem:[%s8839 + $0x60] sm:$0xff]
        %v8853 = vld [vmem:[%s8839 + $0x68] sm:$0xff]
        %v8854 = vld [vmem:[%s8839 + $0x70] sm:$0xff]
        %v8855 = vld [vmem:[%s8839 + $0x78] sm:$0xff]
        %v8857 = vsel %vm8517, %v8499, 0
        %8859 = vmatpush.msra.mxu0 0.0
        %8860 = vmatpush.msra.mxu0 0.0
        %8861 = vmatpush.msra.mxu0 0.0
        %8862 = vmatpush.msra.mxu0 0.0
        %8863 = vmatpush.msra.mxu0 0.0
        %8864 = vmatpush.msra.mxu0 0.0
        %8865 = vmatpush.msra.mxu0 0.0
        %8866 = vmatpush.msra.mxu0 0.0
        %8867 = vmatpush.msra.mxu0 0.0
        %8868 = vmatpush.msra.mxu0 0.0
        %8869 = vmatpush.msra.mxu0 0.0
        %8870 = vmatpush.msra.mxu0 0.0
        %8871 = vmatpush.msra.mxu0 %v8852
        %8872 = vmatpush.msra.mxu0 %v8848
        %8873 = vmatpush.msra.mxu0 %v8844
        %8874 = vmatpush.msra.mxu0 %v8840
        %8875 = vmatmul.f32.gmra.mxu0 %v8857
        %v8876 = vpop.f32.mrf.mxu0
        %v8877 = vadd.f32 0.0, %v8876
        %8878 = vdwg.mxu0
        %8879 = vmatpush.msra.mxu0 0.0
        %8880 = vmatpush.msra.mxu0 0.0
        %8881 = vmatpush.msra.mxu0 0.0
        %8882 = vmatpush.msra.mxu0 0.0
        %8883 = vmatpush.msra.mxu0 0.0
        %8884 = vmatpush.msra.mxu0 0.0
        %8885 = vmatpush.msra.mxu0 0.0
        %8886 = vmatpush.msra.mxu0 0.0
        %8887 = vmatpush.msra.mxu0 0.0
        %8888 = vmatpush.msra.mxu0 0.0
        %8889 = vmatpush.msra.mxu0 0.0
        %8890 = vmatpush.msra.mxu0 0.0
        %8891 = vmatpush.msra.mxu0 %v8853
        %8892 = vmatpush.msra.mxu0 %v8849
        %8893 = vmatpush.msra.mxu0 %v8845
        %8894 = vmatpush.msra.mxu0 %v8841
        %8895 = vmatmul.f32.gmra.mxu0 %v8857
        %v8896 = vpop.f32.mrf.mxu0
        %v8897 = vadd.f32 0.0, %v8896
        %8898 = vdwg.mxu0
        %8899 = vmatpush.msra.mxu0 0.0
        %8900 = vmatpush.msra.mxu0 0.0
        %8901 = vmatpush.msra.mxu0 0.0
        %8902 = vmatpush.msra.mxu0 0.0
        %8903 = vmatpush.msra.mxu0 0.0
        %8904 = vmatpush.msra.mxu0 0.0
        %8905 = vmatpush.msra.mxu0 0.0
        %8906 = vmatpush.msra.mxu0 0.0
        %8907 = vmatpush.msra.mxu0 0.0
        %8908 = vmatpush.msra.mxu0 0.0
        %8909 = vmatpush.msra.mxu0 0.0
        %8910 = vmatpush.msra.mxu0 0.0
        %8911 = vmatpush.msra.mxu0 %v8854
        %8912 = vmatpush.msra.mxu0 %v8850
        %8913 = vmatpush.msra.mxu0 %v8846
        %8914 = vmatpush.msra.mxu0 %v8842
        %8915 = vmatmul.f32.gmra.mxu0 %v8857
        %v8916 = vpop.f32.mrf.mxu0
        %v8917 = vadd.f32 0.0, %v8916
        %8918 = vdwg.mxu0
        %8919 = vmatpush.msra.mxu0 0.0
        %8920 = vmatpush.msra.mxu0 0.0
        %8921 = vmatpush.msra.mxu0 0.0
        %8922 = vmatpush.msra.mxu0 0.0
        %8923 = vmatpush.msra.mxu0 0.0
        %8924 = vmatpush.msra.mxu0 0.0
        %8925 = vmatpush.msra.mxu0 0.0
        %8926 = vmatpush.msra.mxu0 0.0
        %8927 = vmatpush.msra.mxu0 0.0
        %8928 = vmatpush.msra.mxu0 0.0
        %8929 = vmatpush.msra.mxu0 0.0
        %8930 = vmatpush.msra.mxu0 0.0
        %8931 = vmatpush.msra.mxu0 %v8855
        %8932 = vmatpush.msra.mxu0 %v8851
        %8933 = vmatpush.msra.mxu0 %v8847
        %8934 = vmatpush.msra.mxu0 %v8843
        %8935 = vmatmul.f32.gmra.mxu0 %v8857
        %v8936 = vpop.f32.mrf.mxu0
        %v8937 = vadd.f32 0.0, %v8936
        %8938 = vdwg.mxu0
        %v8943 = vrot.slane %v8897, 7
        %v8944 = vrot.slane %v8917, 6
        %v8945 = vrot.slane %v8937, 5
        %v8946 = vsel %vm8608, %v8877, %v8943
        %v8947 = vsel %vm6808, %v8944, %v8945
        %v8948 = vsel %vm8611, %v8946, %v8947
        %v8950 = vadd.f32 %v8838, %v8948
        %v8951 = vmax.f32 %v8950, 0.0
        %v8952 = vld [vmem:[%s9] sm:$0xff]
        %v8953 = vld [vmem:[%s9 + $0x8] sm:$0xff]
        %v8954 = vld [vmem:[%s9 + $0x10] sm:$0xff]
        %v8955 = vld [vmem:[%s9 + $0x18] sm:$0xff]
        %v8956 = vld [vmem:[%s9 + $0x20] sm:$0xff]
        %v8957 = vld [vmem:[%s9 + $0x28] sm:$0xff]
        %v8958 = vld [vmem:[%s9 + $0x30] sm:$0xff]
        %v8959 = vld [vmem:[%s9 + $0x38] sm:$0xff]
        %v8960 = vld [vmem:[%s9 + $0x40] sm:$0xff]
        %v8961 = vld [vmem:[%s9 + $0x48] sm:$0xff]
        %v8962 = vld [vmem:[%s9 + $0x50] sm:$0xff]
        %v8963 = vld [vmem:[%s9 + $0x58] sm:$0xff]
        %v8964 = vld [vmem:[%s9 + $0x60] sm:$0xff]
        %v8965 = vld [vmem:[%s9 + $0x68] sm:$0xff]
        %v8966 = vld [vmem:[%s9 + $0x70] sm:$0xff]
        %v8967 = vld [vmem:[%s9 + $0x78] sm:$0xff]
        %v8968 = vld [vmem:[%s9 + $0x80] sm:$0xff]
        %v8969 = vld [vmem:[%s9 + $0x88] sm:$0xff]
        %v8970 = vld [vmem:[%s9 + $0x90] sm:$0xff]
        %v8971 = vld [vmem:[%s9 + $0x98] sm:$0xff]
        %v8972 = vld [vmem:[%s9 + $0xa0] sm:$0xff]
        %v8973 = vld [vmem:[%s9 + $0xa8] sm:$0xff]
        %v8974 = vld [vmem:[%s9 + $0xb0] sm:$0xff]
        %v8975 = vld [vmem:[%s9 + $0xb8] sm:$0xff]
        %v8976 = vld [vmem:[%s9 + $0xc0] sm:$0xff]
        %v8977 = vld [vmem:[%s9 + $0xc8] sm:$0xff]
        %v8978 = vld [vmem:[%s9 + $0xd0] sm:$0xff]
        %v8979 = vld [vmem:[%s9 + $0xd8] sm:$0xff]
        %v8980 = vld [vmem:[%s9 + $0xe0] sm:$0xff]
        %v8981 = vld [vmem:[%s9 + $0xe8] sm:$0xff]
        %v8982 = vld [vmem:[%s9 + $0xf0] sm:$0xff]
        %v8983 = vld [vmem:[%s9 + $0xf8] sm:$0xff]
        %v8984 = vld [vmem:[%s9 + $0x100] sm:$0xff]
        %v8985 = vld [vmem:[%s9 + $0x108] sm:$0xff]
        %v8986 = vld [vmem:[%s9 + $0x110] sm:$0xff]
        %v8987 = vld [vmem:[%s9 + $0x118] sm:$0xff]
        %v8988 = vld [vmem:[%s9 + $0x120] sm:$0xff]
        %v8989 = vld [vmem:[%s9 + $0x128] sm:$0xff]
        %v8990 = vld [vmem:[%s9 + $0x130] sm:$0xff]
        %v8991 = vld [vmem:[%s9 + $0x138] sm:$0xff]
        %v8992 = vld [vmem:[%s9 + $0x140] sm:$0xff]
        %v8993 = vld [vmem:[%s9 + $0x148] sm:$0xff]
        %v8994 = vld [vmem:[%s9 + $0x150] sm:$0xff]
        %v8995 = vld [vmem:[%s9 + $0x158] sm:$0xff]
        %v8996 = vld [vmem:[%s9 + $0x160] sm:$0xff]
        %v8997 = vld [vmem:[%s9 + $0x168] sm:$0xff]
        %v8998 = vld [vmem:[%s9 + $0x170] sm:$0xff]
        %v8999 = vld [vmem:[%s9 + $0x178] sm:$0xff]
        %v9000 = vld [vmem:[%s9 + $0x180] sm:$0xff]
        %v9001 = vld [vmem:[%s9 + $0x188] sm:$0xff]
        %v9002 = vld [vmem:[%s9 + $0x190] sm:$0xff]
        %v9003 = vld [vmem:[%s9 + $0x198] sm:$0xff]
        %v9004 = vld [vmem:[%s9 + $0x1a0] sm:$0xff]
        %v9005 = vld [vmem:[%s9 + $0x1a8] sm:$0xff]
        %v9006 = vld [vmem:[%s9 + $0x1b0] sm:$0xff]
        %v9007 = vld [vmem:[%s9 + $0x1b8] sm:$0xff]
        %v9008 = vld [vmem:[%s9 + $0x1c0] sm:$0xff]
        %v9009 = vld [vmem:[%s9 + $0x1c8] sm:$0xff]
        %v9010 = vld [vmem:[%s9 + $0x1d0] sm:$0xff]
        %v9011 = vld [vmem:[%s9 + $0x1d8] sm:$0xff]
        %v9012 = vld [vmem:[%s9 + $0x1e0] sm:$0xff]
        %v9013 = vld [vmem:[%s9 + $0x1e8] sm:$0xff]
        %v9014 = vld [vmem:[%s9 + $0x1f0] sm:$0xff]
        %v9015 = vld [vmem:[%s9 + $0x1f8] sm:$0xff]
        %v9016 = vld [vmem:[%s10] sm:$0x1]
        %v9018 = vperm.slane %v8951, 0
        %v9019 = vperm.slane %v8951, 1
        %v9020 = vperm.slane %v8951, 2
        %v9021 = vperm.slane %v8951, 3
        %9026 = vmatpush.msra.mxu0 %v8967
        %9027 = vmatpush.msra.mxu0 %v8966
        %9028 = vmatpush.msra.mxu0 %v8965
        %9029 = vmatpush.msra.mxu0 %v8964
        %9030 = vmatpush.msra.mxu0 %v8963
        %9031 = vmatpush.msra.mxu0 %v8962
        %9032 = vmatpush.msra.mxu0 %v8961
        %9033 = vmatpush.msra.mxu0 %v8960
        %9034 = vmatpush.msra.mxu0 %v8959
        %9035 = vmatpush.msra.mxu0 %v8958
        %9036 = vmatpush.msra.mxu0 %v8957
        %9037 = vmatpush.msra.mxu0 %v8956
        %9038 = vmatpush.msra.mxu0 %v8955
        %9039 = vmatpush.msra.mxu0 %v8954
        %9040 = vmatpush.msra.mxu0 %v8953
        %9041 = vmatpush.msra.mxu0 %v8952
        %9042 = vmatmul.f32.gmra.mxu0 %v9018
        %v9043 = vpop.f32.mrf.mxu0
        %v9044 = vadd.f32 %v9016, %v9043
        %9045 = vdwg.mxu0
        %9046 = vmatpush.msra.mxu0 %v8983
        %9047 = vmatpush.msra.mxu0 %v8982
        %9048 = vmatpush.msra.mxu0 %v8981
        %9049 = vmatpush.msra.mxu0 %v8980
        %9050 = vmatpush.msra.mxu0 %v8979
        %9051 = vmatpush.msra.mxu0 %v8978
        %9052 = vmatpush.msra.mxu0 %v8977
        %9053 = vmatpush.msra.mxu0 %v8976
        %9054 = vmatpush.msra.mxu0 %v8975
        %9055 = vmatpush.msra.mxu0 %v8974
        %9056 = vmatpush.msra.mxu0 %v8973
        %9057 = vmatpush.msra.mxu0 %v8972
        %9058 = vmatpush.msra.mxu0 %v8971
        %9059 = vmatpush.msra.mxu0 %v8970
        %9060 = vmatpush.msra.mxu0 %v8969
        %9061 = vmatpush.msra.mxu0 %v8968
        %9062 = vmatmul.f32.gmra.mxu0 %v9019
        %v9063 = vpop.f32.mrf.mxu0
        %v9064 = vadd.f32 %v9044, %v9063
        %9065 = vdwg.mxu0
        %9066 = vmatpush.msra.mxu0 %v8999
        %9067 = vmatpush.msra.mxu0 %v8998
        %9068 = vmatpush.msra.mxu0 %v8997
        %9069 = vmatpush.msra.mxu0 %v8996
        %9070 = vmatpush.msra.mxu0 %v8995
        %9071 = vmatpush.msra.mxu0 %v8994
        %9072 = vmatpush.msra.mxu0 %v8993
        %9073 = vmatpush.msra.mxu0 %v8992
        %9074 = vmatpush.msra.mxu0 %v8991
        %9075 = vmatpush.msra.mxu0 %v8990
        %9076 = vmatpush.msra.mxu0 %v8989
        %9077 = vmatpush.msra.mxu0 %v8988
        %9078 = vmatpush.msra.mxu0 %v8987
        %9079 = vmatpush.msra.mxu0 %v8986
        %9080 = vmatpush.msra.mxu0 %v8985
        %9081 = vmatpush.msra.mxu0 %v8984
        %9082 = vmatmul.f32.gmra.mxu0 %v9020
        %v9083 = vpop.f32.mrf.mxu0
        %v9084 = vadd.f32 %v9064, %v9083
        %9085 = vdwg.mxu0
        %9086 = vmatpush.msra.mxu0 %v9015
        %9087 = vmatpush.msra.mxu0 %v9014
        %9088 = vmatpush.msra.mxu0 %v9013
        %9089 = vmatpush.msra.mxu0 %v9012
        %9090 = vmatpush.msra.mxu0 %v9011
        %9091 = vmatpush.msra.mxu0 %v9010
        %9092 = vmatpush.msra.mxu0 %v9009
        %9093 = vmatpush.msra.mxu0 %v9008
        %9094 = vmatpush.msra.mxu0 %v9007
        %9095 = vmatpush.msra.mxu0 %v9006
        %9096 = vmatpush.msra.mxu0 %v9005
        %9097 = vmatpush.msra.mxu0 %v9004
        %9098 = vmatpush.msra.mxu0 %v9003
        %9099 = vmatpush.msra.mxu0 %v9002
        %9100 = vmatpush.msra.mxu0 %v9001
        %9101 = vmatpush.msra.mxu0 %v9000
        %9102 = vmatmul.f32.gmra.mxu0 %v9021
        %v9103 = vpop.f32.mrf.mxu0
        %v9104 = vadd.f32 %v9084, %v9103
        %9105 = vdwg.mxu0
        %vm9106 = vcmask 40960
        %9107 = vst.msk [vmem:[%s378] sm:$0x1] %vm9106, %v9104
        %s9108 = sand.u32 %s269, 1
        %s9109 = scalar_lea.sflag [#allocation5], %s9108
        %s9110 = sand.u32 %s269, 1
        %s9111 = scalar_lea.vmem [#allocation4], %s9110
        // Predicated region
        $region65: #{policy_net_forward.1} parent=63 // pred_check
          %p9112 = pneg %p279
        $region66: #{policy_net_forward.1} parent=63 // pred_check_branch
          %9114 = sbr.rel (%p9112) target = $region68
        $region67: #{policy_net_forward.1} parent=63 // pred_region
          %9116 = vsyncadd %s9109, 0
          %s9117 = scalar_lea.hbm %s11, %s25
          %s9119 = sshll.u32 %s9111, 4
          %s9120 = int_to_ptr.vmem [resolvable:$true] %s9119
          %s9121 = sshll.u32 %s9117, 4
          %s9122 = int_to_ptr.hbm [resolvable:$true] %s9121
          %9124 = dma.vmem_to_hbm [thread:$0]  %s9120, 16, %s9122, %s9109
        $region68: #{policy_net_forward.1} parent=63 // pred_fallthru
          _
      $region64: #{policy_net_forward.1} parent=5 // pred_fallthru
        _
      %p9125 = scmp.le.s32.totalorder 2, %s20
      // Predicated region
      $region69: #{policy_net_forward.1} parent=5 // pred_check
        %p9126 = pneg %p9125
      $region70: #{policy_net_forward.1} parent=5 // pred_check_branch
        %9128 = sbr.rel (%p9126) target = $region72
      $region71: #{policy_net_forward.1} parent=5 // pred_region
        %s9129 = ssub.s32 %s20, 2
        // Predicated region
        $region73: #{policy_net_forward.1} parent=71 // pred_check
          %p9130 = pneg %p285
        $region74: #{policy_net_forward.1} parent=71 // pred_check_branch
          %9132 = sbr.rel (%p9130) target = $region76
        $region75: #{policy_net_forward.1} parent=71 // pred_region
          %s9133 = sand.u32 %s270, 1
          %s9134 = scalar_lea.sflag [#allocation5], %s9133
          %s9135 = sand.u32 %s270, 1
          %s9136 = scalar_lea.vmem [#allocation4], %s9135
          %9138 = dma.done %s9134, 16
        $region76: #{policy_net_forward.1} parent=71 // pred_fallthru
          _
      $region72: #{policy_net_forward.1} parent=5 // pred_fallthru
        _
    $region6: #{policy_net_forward.1} parent=1 // loop_footer
      %s24 = sadd.s32 1, %s20
    $region7: #{policy_net_forward.1} parent=1 // loop_footer_branch
      %19 = sbr.rel target = $region3
    $region8: #{policy_net_forward.1} parent=1 // loop_exit
      _
    %9139 = vsyncpa [#allocation5], 1
    %s9140 = scalar_lea.sflag [#allocation5], 1
    %9141 = vsyncpa %s9140, 1

</llo_original>
